<compile_context>
chip_gen: v7x
topology: tpu7x:2x2x1
jax: 0.10.0
libtpu: 0.0.40
codegen_flags: <defaults>
</compile_context>

<pallas_src>
import jax
import jax.numpy as jnp
from jax.experimental import pallas as pl
from jax.experimental.pallas import tpu as pltpu

L_IN = 128          # sequence length implied by x.view(-1, 32*16): 16 * (L/4) = 512
C_HID = 16
NEG_SLOPE = 0.01    # nn.LeakyReLU default

L1 = L_IN           # conv1 output length (128)
L2 = L_IN // 2      # pool1 / conv2 / conv3 output length (64)
L3 = L_IN // 4      # pool3 output length (32)
F1 = L1 * C_HID     # 2048  conv1 output lanes: parity*1024 + u*16 + co  (t = 2u+parity)
F2 = L2 * C_HID     # 1024  conv2/conv3 input/output lanes: t*16 + c
F3 = L3 * C_HID     # 512   final lanes: co*32 + u   (== torch's channel-major view)


def _leaky(h):
    # max(h, 0.01*h) == LeakyReLU(0.01)(h) for all h (single VPU max, no select).
    return jnp.maximum(h, NEG_SLOPE * h)


def _round_up(a, m):
    return ((a + m - 1) // m) * m


def _build_kernel_operands(params):
    """Lower the three Conv1d layers to banded matrices whose column orderings
    also implement the maxpools (parity-split halves) and the final channel-major
    flatten. Weight matrices are returned in bf16 (matmul inputs); biases in f32
    (epilogue stays f32)."""
    w1, b1, w2, b2, w3, b3 = [jnp.asarray(p, jnp.float32) for p in params]

    # ---- K1: (128, 2048).  col = parity*1024 + u*16 + co, output time t = 2u+parity.
    s = jnp.arange(L_IN, dtype=jnp.int32)[:, None]            # input time (rows)
    c1 = jnp.arange(F1, dtype=jnp.int32)[None, :]
    parity1 = c1 // F2
    u1 = (c1 % F2) // C_HID
    co1 = c1 % C_HID
    t1 = 2 * u1 + parity1
    k1 = s - t1 + 3                                           # tap index, pad=3
    w1_taps = w1[:, 0, :]                                     # (16, 7)
    K1 = jnp.where((k1 >= 0) & (k1 < 7), w1_taps[co1, jnp.clip(k1, 0, 6)], 0.0)
    B1 = jnp.tile(b1, L1)[None, :]                            # b1[co] at every col (1, 2048)

    # ---- K2: (1024, 1024). row = u*16 + ci (pooled time u), col = t2*16 + co.
    r2 = jnp.arange(F2, dtype=jnp.int32)[:, None]
    u_in = r2 // C_HID
    ci2 = r2 % C_HID
    c2 = jnp.arange(F2, dtype=jnp.int32)[None, :]
    t2 = c2 // C_HID
    co2 = c2 % C_HID
    k2 = u_in - t2 + 2                                        # pad=2
    K2 = jnp.where((k2 >= 0) & (k2 < 5), w2[co2, ci2, jnp.clip(k2, 0, 4)], 0.0)
    B2 = jnp.tile(b2, L2)[None, :]                            # (1, 1024)

    # ---- K3: (1024, 1024). row = t2*16 + ci, col = parity*512 + co*32 + u3,
    #      output time t3 = 2*u3 + parity (so pool3 = max of the two 512-lane halves
    #      and the surviving half is already channel-major co*32 + u3).
    r3 = jnp.arange(F2, dtype=jnp.int32)[:, None]
    t2r = r3 // C_HID
    ci3 = r3 % C_HID
    c3 = jnp.arange(F2, dtype=jnp.int32)[None, :]
    parity3 = c3 // F3
    co3 = (c3 % F3) // L3
    u3 = c3 % L3
    t3 = 2 * u3 + parity3
    k3 = t2r - t3 + 2                                         # pad=2
    K3 = jnp.where((k3 >= 0) & (k3 < 5), w3[co3, ci3, jnp.clip(k3, 0, 4)], 0.0)
    B3 = jnp.tile(jnp.repeat(b3, L3), 2)[None, :]             # b3[co] at every col (1, 1024)

    bf = jnp.bfloat16
    return K1.astype(bf), B1, K2.astype(bf), B2, K3.astype(bf), B3


def ecg_kernel(x_ref, k1_ref, b1_ref, k2_ref, b2_ref, k3_ref, b3_ref, out_ref):
    x = x_ref[...]                                                        # (T, 128) bf16

    # conv1 (bf16 x bf16 -> f32 acc) + bias + LeakyReLU in f32
    a1 = _leaky(jnp.dot(x, k1_ref[...], preferred_element_type=jnp.float32)
                + b1_ref[...])                                            # (T, 2048) f32
    # maxpool1(2): max of the two contiguous 1024-lane parity halves (f32)
    p1 = jnp.maximum(a1[:, :F2], a1[:, F2:])                              # (T, 1024) f32

    # conv2: downcast LHS to bf16 just before the dot, accumulate f32
    a2 = _leaky(jnp.dot(p1.astype(jnp.bfloat16), k2_ref[...],
                        preferred_element_type=jnp.float32)
                + b2_ref[...])                                            # (T, 1024) f32

    # conv3 (columns already parity-split & channel-major)
    a3 = _leaky(jnp.dot(a2.astype(jnp.bfloat16), k3_ref[...],
                        preferred_element_type=jnp.float32)
                + b3_ref[...])                                            # (T, 1024) f32

    # maxpool3(2) + channel-major flatten == max of the two 512-lane halves
    out_ref[...] = jnp.maximum(a3[:, :F3], a3[:, F3:])                    # (T, 512) f32


def ecg_client_forward(x_ncl, params, *, tile_n=256):
    """x_ncl: (N, 1, 128) float32 (PyTorch NCW layout). Returns (N, 512) float32."""
    x_ncl = jnp.asarray(x_ncl, jnp.float32)
    N, cin, L = x_ncl.shape
    assert cin == 1 and L == L_IN

    K1, B1, K2, B2, K3, B3 = _build_kernel_operands(params)

    # Tile selection: default 256 (fills the 256-wide MXU on v6e/v7x and amortizes
    # per-grid-step overhead). For small N collapse to a SINGLE grid step so the
    # resident-weight DMA is not duplicated (esp. across v7x's two TCs).
    tile_n = max(16, (int(tile_n) // 16) * 16)                # 16-aligned (bf16 sublanes)
    n_min = _round_up(N, 16)
    if n_min <= tile_n:
        tile_n = n_min
    n_pad = _round_up(N, tile_n)

    x2 = x_ncl.reshape(N, L_IN).astype(jnp.bfloat16)          # free: NCW with C=1
    if n_pad != N:
        x2 = jnp.concatenate(
            [x2, jnp.zeros((n_pad - N, L_IN), jnp.bfloat16)], axis=0)

    # Grid-invariant operands: single-buffer them (no point double-buffering).
    resident = dict(pipeline_mode=pl.Buffered(1))

    out = pl.pallas_call(
        ecg_kernel,
        out_shape=jax.ShapeDtypeStruct((n_pad, F3), jnp.float32),
        grid=(n_pad // tile_n,),
        in_specs=[
            pl.BlockSpec((tile_n, L_IN), lambda b: (b, 0)),               # x batch tile
            pl.BlockSpec((L_IN, F1), lambda b: (0, 0), **resident),       # K1 (resident)
            pl.BlockSpec((1, F1), lambda b: (0, 0), **resident),          # b1
            pl.BlockSpec((F2, F2), lambda b: (0, 0), **resident),         # K2 (resident)
            pl.BlockSpec((1, F2), lambda b: (0, 0), **resident),          # b2
            pl.BlockSpec((F2, F2), lambda b: (0, 0), **resident),         # K3 (resident)
            pl.BlockSpec((1, F2), lambda b: (0, 0), **resident),          # b3
        ],
        out_specs=pl.BlockSpec((tile_n, F3), lambda b: (b, 0)),
        compiler_params=pltpu.CompilerParams(
            dimension_semantics=("parallel",),
            vmem_limit_bytes=32 * 1024 * 1024),
    )(x2, K1, B1, K2, B2, K3, B3)

    return out[:N]


def ref_forward(x_ncl, params):
    """Pure-JAX f32 reference matching the PyTorch module semantics."""
    w1, b1, w2, b2, w3, b3 = params

    def conv(x, w, b, pad):
        y = jax.lax.conv_general_dilated(
            x, w, window_strides=(1,), padding=[(pad, pad)],
            dimension_numbers=("NCH", "OIH", "NCH"))
        return y + b[None, :, None]

    def pool(h):
        n, c, l = h.shape
        return jnp.max(h.reshape(n, c, l // 2, 2), axis=-1)

    h = pool(_leaky(conv(x_ncl, w1, b1, 3)))
    h = _leaky(conv(h, w2, b2, 2))
    h = pool(_leaky(conv(h, w3, b3, 2)))
    return h.reshape(h.shape[0], -1)


def init_params(key):
    k1, k2, k3, k4, k5, k6 = jax.random.split(key, 6)

    def u(k, shape, fan_in):
        bound = 1.0 / jnp.sqrt(fan_in)
        return jax.random.uniform(k, shape, jnp.float32, -bound, bound)

    w1 = u(k1, (C_HID, 1, 7), 1 * 7)
    b1 = u(k2, (C_HID,), 1 * 7)
    w2 = u(k3, (C_HID, C_HID, 5), C_HID * 5)
    b2 = u(k4, (C_HID,), C_HID * 5)
    w3 = u(k5, (C_HID, C_HID, 5), C_HID * 5)
    b3 = u(k6, (C_HID,), C_HID * 5)
    return (w1, b1, w2, b2, w3, b3)


if __name__ == "__main__":
    key = jax.random.PRNGKey(0)
    kp, kx = jax.random.split(key)
    params = init_params(kp)
    x = jax.random.normal(kx, (16, 1, L_IN), jnp.float32)   # (N, 1, 128) ECG-style

    out = ecg_client_forward(x, params)                     # small N -> single grid step
    out = jax.block_until_ready(out)

    ref = ref_forward(x, params)
    assert out.shape == (16, 512), out.shape
    err = float(jnp.max(jnp.abs(out - ref)))
    # bf16 matmul inputs with f32 accumulation: loosen tolerance vs pure-f32 reference.
    assert jnp.allclose(out, ref, rtol=2e-2, atol=2e-2), err

    print("KERNEL_OK")
</pallas_src>

<mosaic_0001>
module attributes {stable_mosaic.version = 11 : i64} {
  func.func @ecg_kernel(%arg0: i32, %arg1: memref<16x128xbf16, #tpu.memory_space<vmem>>, %arg2: memref<128x2048xbf16, #tpu.memory_space<vmem>>, %arg3: memref<1x2048xf32, #tpu.memory_space<vmem>>, %arg4: memref<1024x1024xbf16, #tpu.memory_space<vmem>>, %arg5: memref<1x1024xf32, #tpu.memory_space<vmem>>, %arg6: memref<1024x1024xbf16, #tpu.memory_space<vmem>>, %arg7: memref<1x1024xf32, #tpu.memory_space<vmem>>, %arg8: memref<16x512xf32, #tpu.memory_space<vmem>>) attributes {dimension_semantics = [#tpu.dimension_semantics<parallel>], iteration_bounds = array<i64: 1>, scalar_prefetch = 0 : i64, scratch_operands = 0 : i64, tpu.core_type = #tpu.core_type<tc>, window_params = [{transform_indices = @transform_0, window_bounds = array<i64: 16, 128>}, {pipeline_mode = #tpu.pipeline_mode<synchronous>, transform_indices = @transform_1, window_bounds = array<i64: 128, 2048>}, {pipeline_mode = #tpu.pipeline_mode<synchronous>, transform_indices = @transform_2, window_bounds = array<i64: 1, 2048>}, {pipeline_mode = #tpu.pipeline_mode<synchronous>, transform_indices = @transform_3, window_bounds = array<i64: 1024, 1024>}, {pipeline_mode = #tpu.pipeline_mode<synchronous>, transform_indices = @transform_4, window_bounds = array<i64: 1, 1024>}, {pipeline_mode = #tpu.pipeline_mode<synchronous>, transform_indices = @transform_5, window_bounds = array<i64: 1024, 1024>}, {pipeline_mode = #tpu.pipeline_mode<synchronous>, transform_indices = @transform_6, window_bounds = array<i64: 1, 1024>}, {transform_indices = @transform_7, window_bounds = array<i64: 16, 512>}]} {
    %c0 = arith.constant 0 : index
    %c0_0 = arith.constant 0 : index
    %0 = vector.load %arg1[%c0, %c0_0] : memref<16x128xbf16, #tpu.memory_space<vmem>>, vector<16x128xbf16>
    %c0_1 = arith.constant 0 : index
    %c0_2 = arith.constant 0 : index
    %1 = vector.load %arg2[%c0_1, %c0_2] : memref<128x2048xbf16, #tpu.memory_space<vmem>>, vector<128x2048xbf16>
    %cst = arith.constant dense<0.000000e+00> : vector<16x2048xf32>
    %2 = tpu.matmul %0, %1, %cst {dimension_numbers = #tpu.dot_dimension_numbers<[1], [0], [0], [1], [0, 0, 1, 1], [], []>} : vector<16x128xbf16>, vector<128x2048xbf16>, vector<16x2048xf32> -> vector<16x2048xf32>
    %c0_3 = arith.constant 0 : index
    %c0_4 = arith.constant 0 : index
    %3 = vector.load %arg3[%c0_3, %c0_4] : memref<1x2048xf32, #tpu.memory_space<vmem>>, vector<1x2048xf32>
    %4 = vector.broadcast %3 : vector<1x2048xf32> to vector<16x2048xf32>
    %5 = arith.addf %2, %4 : vector<16x2048xf32>
    %cst_5 = arith.constant 0.00999999977 : f32
    %6 = vector.broadcast %cst_5 : f32 to vector<16x2048xf32>
    %7 = arith.mulf %6, %5 : vector<16x2048xf32>
    %8 = arith.maximumf %5, %7 : vector<16x2048xf32>
    %9 = vector.extract_strided_slice %8 {offsets = [0, 0], sizes = [16, 1024], strides = [1, 1]} : vector<16x2048xf32> to vector<16x1024xf32>
    %10 = vector.extract_strided_slice %8 {offsets = [0, 1024], sizes = [16, 1024], strides = [1, 1]} : vector<16x2048xf32> to vector<16x1024xf32>
    %11 = arith.maximumf %9, %10 : vector<16x1024xf32>
    %12 = arith.truncf %11 : vector<16x1024xf32> to vector<16x1024xbf16>
    %c0_6 = arith.constant 0 : index
    %c0_7 = arith.constant 0 : index
    %13 = vector.load %arg4[%c0_6, %c0_7] : memref<1024x1024xbf16, #tpu.memory_space<vmem>>, vector<1024x1024xbf16>
    %cst_8 = arith.constant dense<0.000000e+00> : vector<16x1024xf32>
    %14 = tpu.matmul %12, %13, %cst_8 {dimension_numbers = #tpu.dot_dimension_numbers<[1], [0], [0], [1], [0, 0, 1, 1], [], []>} : vector<16x1024xbf16>, vector<1024x1024xbf16>, vector<16x1024xf32> -> vector<16x1024xf32>
    %c0_9 = arith.constant 0 : index
    %c0_10 = arith.constant 0 : index
    %15 = vector.load %arg5[%c0_9, %c0_10] : memref<1x1024xf32, #tpu.memory_space<vmem>>, vector<1x1024xf32>
    %16 = vector.broadcast %15 : vector<1x1024xf32> to vector<16x1024xf32>
    %17 = arith.addf %14, %16 : vector<16x1024xf32>
    %cst_11 = arith.constant 0.00999999977 : f32
    %18 = vector.broadcast %cst_11 : f32 to vector<16x1024xf32>
    %19 = arith.mulf %18, %17 : vector<16x1024xf32>
    %20 = arith.maximumf %17, %19 : vector<16x1024xf32>
    %21 = arith.truncf %20 : vector<16x1024xf32> to vector<16x1024xbf16>
    %c0_12 = arith.constant 0 : index
    %c0_13 = arith.constant 0 : index
    %22 = vector.load %arg6[%c0_12, %c0_13] : memref<1024x1024xbf16, #tpu.memory_space<vmem>>, vector<1024x1024xbf16>
    %cst_14 = arith.constant dense<0.000000e+00> : vector<16x1024xf32>
    %23 = tpu.matmul %21, %22, %cst_14 {dimension_numbers = #tpu.dot_dimension_numbers<[1], [0], [0], [1], [0, 0, 1, 1], [], []>} : vector<16x1024xbf16>, vector<1024x1024xbf16>, vector<16x1024xf32> -> vector<16x1024xf32>
    %c0_15 = arith.constant 0 : index
    %c0_16 = arith.constant 0 : index
    %24 = vector.load %arg7[%c0_15, %c0_16] : memref<1x1024xf32, #tpu.memory_space<vmem>>, vector<1x1024xf32>
    %25 = vector.broadcast %24 : vector<1x1024xf32> to vector<16x1024xf32>
    %26 = arith.addf %23, %25 : vector<16x1024xf32>
    %cst_17 = arith.constant 0.00999999977 : f32
    %27 = vector.broadcast %cst_17 : f32 to vector<16x1024xf32>
    %28 = arith.mulf %27, %26 : vector<16x1024xf32>
    %29 = arith.maximumf %26, %28 : vector<16x1024xf32>
    %30 = vector.extract_strided_slice %29 {offsets = [0, 0], sizes = [16, 512], strides = [1, 1]} : vector<16x1024xf32> to vector<16x512xf32>
    %31 = vector.extract_strided_slice %29 {offsets = [0, 512], sizes = [16, 512], strides = [1, 1]} : vector<16x1024xf32> to vector<16x512xf32>
    %32 = arith.maximumf %30, %31 : vector<16x512xf32>
    %c0_18 = arith.constant 0 : index
    %c0_19 = arith.constant 0 : index
    %33 = vector.load %arg8[%c0_18, %c0_19] : memref<16x512xf32, #tpu.memory_space<vmem>>, vector<16x512xf32>
    tpu.vector_store %arg8[%c0_18, %c0_19], %32 {strides = array<i32>} : memref<16x512xf32, #tpu.memory_space<vmem>>, vector<16x512xf32>,
    return
  }
  func.func @transform_0(%arg0: i32) -> (i32, i32) {
    %c0_i32 = arith.constant 0 : i32
    %c0_i32_0 = arith.constant 0 : i32
    return %arg0, %c0_i32 : i32, i32
  }
  func.func @transform_1(%arg0: i32) -> (i32, i32) {
    %c0_i32 = arith.constant 0 : i32
    %c0_i32_0 = arith.constant 0 : i32
    %c0_i32_1 = arith.constant 0 : i32
    return %c0_i32, %c0_i32_0 : i32, i32
  }
  func.func @transform_2(%arg0: i32) -> (i32, i32) {
    %c0_i32 = arith.constant 0 : i32
    %c0_i32_0 = arith.constant 0 : i32
    %c0_i32_1 = arith.constant 0 : i32
    return %c0_i32, %c0_i32_0 : i32, i32
  }
  func.func @transform_3(%arg0: i32) -> (i32, i32) {
    %c0_i32 = arith.constant 0 : i32
    %c0_i32_0 = arith.constant 0 : i32
    %c0_i32_1 = arith.constant 0 : i32
    return %c0_i32, %c0_i32_0 : i32, i32
  }
  func.func @transform_4(%arg0: i32) -> (i32, i32) {
    %c0_i32 = arith.constant 0 : i32
    %c0_i32_0 = arith.constant 0 : i32
    %c0_i32_1 = arith.constant 0 : i32
    return %c0_i32, %c0_i32_0 : i32, i32
  }
  func.func @transform_5(%arg0: i32) -> (i32, i32) {
    %c0_i32 = arith.constant 0 : i32
    %c0_i32_0 = arith.constant 0 : i32
    %c0_i32_1 = arith.constant 0 : i32
    return %c0_i32, %c0_i32_0 : i32, i32
  }
  func.func @transform_6(%arg0: i32) -> (i32, i32) {
    %c0_i32 = arith.constant 0 : i32
    %c0_i32_0 = arith.constant 0 : i32
    %c0_i32_1 = arith.constant 0 : i32
    return %c0_i32, %c0_i32_0 : i32, i32
  }
  func.func @transform_7(%arg0: i32) -> (i32, i32) {
    %c0_i32 = arith.constant 0 : i32
    %c0_i32_0 = arith.constant 0 : i32
    return %arg0, %c0_i32 : i32, i32
  }
}

</mosaic_0001>

<llo_original>
// kernel: tpu_custom_call.1
$region0: #{tpu_custom_call.1}
  #allocation0 [shape = 'u32[]', space=smem, size = 0x4, offset = 0x4, fixed_abs, tag = 'smem constant byte address 0x4 - core index']
  #allocation1 [shape = 'u32[144,128]{1,0:T(1,128)}', space=vmem, size = 0x12000, scoped, tag = 'internal scratch']
  %s0 = inlined_call_operand.hbm [shape: bf16[16,128], index: 0, kind: input, shape index: {}]
  %s1 = inlined_call_operand.hbm [shape: bf16[128,2048], index: 1, kind: input, shape index: {}]
  %s2 = inlined_call_operand.hbm [shape: f32[1,2048], index: 2, kind: input, shape index: {}]
  %s3 = inlined_call_operand.hbm [shape: bf16[1024,1024], index: 3, kind: input, shape index: {}]
  %s4 = inlined_call_operand.hbm [shape: f32[1,1024], index: 4, kind: input, shape index: {}]
  %s5 = inlined_call_operand.hbm [shape: bf16[1024,1024], index: 5, kind: input, shape index: {}]
  %s6 = inlined_call_operand.hbm [shape: f32[1,1024], index: 6, kind: input, shape index: {}]
  %s7 = inlined_call_operand.hbm [shape: f32[16,512], index: 7, kind: output, shape index: {}]
  %s8 = sld [smem:[#allocation0]]
  $region66: #{tpu_custom_call.1} parent=0
    _
  %s10 = ssub.s32 1, %s8
  %s11 = scalar_select 0, %s10, %s8
  $region1: #{tpu_custom_call.1} parent=0
    #allocation2 [shape = 'u8[4096]{0}', space=vmem, size = 0x1000, scoped, tag = 'input window, operand 0, single buffered']
    #allocation3 [shape = 's32[1]{0}', space=sflag, size = 0x4, scoped, tag = 'scoped memory for tpu_custom_call.1']
    #allocation4 [shape = 's32[1]{0}', space=sflag, size = 0x4, scoped, tag = 'scoped memory for tpu_custom_call.1']
    #allocation5 [shape = 'u8[524288]{0}', space=vmem, size = 0x80000, scoped, tag = 'input window, operand 1, single buffered']
    #allocation6 [shape = 's32[1]{0}', space=sflag, size = 0x4, scoped, tag = 'scoped memory for tpu_custom_call.1']
    #allocation7 [shape = 'u8[8192]{0}', space=vmem, size = 0x2000, scoped, tag = 'input window, operand 2, single buffered']
    #allocation8 [shape = 'u8[2097152]{0}', space=vmem, size = 0x200000, scoped, tag = 'input window, operand 3, single buffered']
    #allocation9 [shape = 's32[1]{0}', space=sflag, size = 0x4, scoped, tag = 'scoped memory for tpu_custom_call.1']
    #allocation10 [shape = 'u8[4096]{0}', space=vmem, size = 0x1000, scoped, tag = 'input window, operand 4, single buffered']
    #allocation11 [shape = 'u8[2097152]{0}', space=vmem, size = 0x200000, scoped, tag = 'input window, operand 5, single buffered']
    #allocation12 [shape = 's32[1]{0}', space=sflag, size = 0x4, scoped, tag = 'scoped memory for tpu_custom_call.1']
    #allocation13 [shape = 'u8[4096]{0}', space=vmem, size = 0x1000, scoped, tag = 'input window, operand 6, single buffered']
    #allocation14 [shape = 'u8[32768]{0}', space=vmem, size = 0x8000, scoped, tag = 'output window, operand 0, single buffered']
    %12 = vsyncpa [#allocation3], 0
    %13 = vsyncpa [#allocation6], 0
    %14 = vsyncpa [#allocation9], 0
    %15 = vsyncpa [#allocation12], 0
    %16 = vsyncpa [#allocation4], 0
    // Predicated region
    $region2: #{tpu_custom_call.1} parent=1 // pred_check
      _
    $region3: #{tpu_custom_call.1} parent=1 // pred_check_branch
      %18 = sbr.rel (0) target = $region5
    $region4: #{tpu_custom_call.1} parent=1 // pred_region
      %s20 = ssub.s32 128, 128
      %21 = vsyncadd [#allocation3], %s20
      %s22 = sshll.u32 [#allocation2], 4
      %s23 = int_to_ptr.vmem [resolvable:$true] %s22
      %28 = dma.hbm_to_vmem [thread:$0]  %s0, 128, %s23, [#allocation3], 64, 64, 4
    $region5: #{tpu_custom_call.1} parent=1 // pred_fallthru
      _
    // Predicated region
    $region6: #{tpu_custom_call.1} parent=1 // pred_check
      _
    $region7: #{tpu_custom_call.1} parent=1 // pred_check_branch
      %30 = sbr.rel (0) target = $region9
    $region8: #{tpu_custom_call.1} parent=1 // pred_region
      %s32 = ssub.s32 16384, 16384
      %33 = vsyncadd [#allocation6], %s32
      %s34 = sshll.u32 [#allocation5], 4
      %s35 = int_to_ptr.vmem [resolvable:$true] %s34
      %40 = dma.hbm_to_vmem [thread:$0]  %s1, 16384, %s35, [#allocation6], 1024, 1024, 64
    $region9: #{tpu_custom_call.1} parent=1 // pred_fallthru
      _
    // Predicated region
    $region10: #{tpu_custom_call.1} parent=1 // pred_check
      _
    $region11: #{tpu_custom_call.1} parent=1 // pred_check_branch
      %42 = sbr.rel (0) target = $region13
    $region12: #{tpu_custom_call.1} parent=1 // pred_region
      %s44 = ssub.s32 256, 256
      %45 = vsyncadd [#allocation6], %s44
      %s47 = sshll.u32 [#allocation7], 4
      %s48 = int_to_ptr.vmem [resolvable:$true] %s47
      %50 = dma.hbm_to_vmem [thread:$0]  %s2, 256, %s48, [#allocation6]
    $region13: #{tpu_custom_call.1} parent=1 // pred_fallthru
      _
    // Predicated region
    $region14: #{tpu_custom_call.1} parent=1 // pred_check
      _
    $region15: #{tpu_custom_call.1} parent=1 // pred_check_branch
      %52 = sbr.rel (0) target = $region17
    $region16: #{tpu_custom_call.1} parent=1 // pred_region
      %s54 = ssub.s32 65536, 65536
      %55 = vsyncadd [#allocation9], %s54
      %s56 = sshll.u32 [#allocation8], 4
      %s57 = int_to_ptr.vmem [resolvable:$true] %s56
      %62 = dma.hbm_to_vmem [thread:$0]  %s3, 65536, %s57, [#allocation9], 512, 512, 32
    $region17: #{tpu_custom_call.1} parent=1 // pred_fallthru
      _
    // Predicated region
    $region18: #{tpu_custom_call.1} parent=1 // pred_check
      _
    $region19: #{tpu_custom_call.1} parent=1 // pred_check_branch
      %64 = sbr.rel (0) target = $region21
    $region20: #{tpu_custom_call.1} parent=1 // pred_region
      %s66 = ssub.s32 128, 128
      %67 = vsyncadd [#allocation9], %s66
      %s69 = sshll.u32 [#allocation10], 4
      %s70 = int_to_ptr.vmem [resolvable:$true] %s69
      %72 = dma.hbm_to_vmem [thread:$0]  %s4, 128, %s70, [#allocation9]
    $region21: #{tpu_custom_call.1} parent=1 // pred_fallthru
      _
    // Predicated region
    $region22: #{tpu_custom_call.1} parent=1 // pred_check
      _
    $region23: #{tpu_custom_call.1} parent=1 // pred_check_branch
      %74 = sbr.rel (0) target = $region25
    $region24: #{tpu_custom_call.1} parent=1 // pred_region
      %s76 = ssub.s32 65536, 65536
      %77 = vsyncadd [#allocation12], %s76
      %s78 = sshll.u32 [#allocation11], 4
      %s79 = int_to_ptr.vmem [resolvable:$true] %s78
      %84 = dma.hbm_to_vmem [thread:$0]  %s5, 65536, %s79, [#allocation12], 512, 512, 32
    $region25: #{tpu_custom_call.1} parent=1 // pred_fallthru
      _
    // Predicated region
    $region26: #{tpu_custom_call.1} parent=1 // pred_check
      _
    $region27: #{tpu_custom_call.1} parent=1 // pred_check_branch
      %86 = sbr.rel (0) target = $region29
    $region28: #{tpu_custom_call.1} parent=1 // pred_region
      %s88 = ssub.s32 128, 128
      %89 = vsyncadd [#allocation12], %s88
      %s91 = sshll.u32 [#allocation13], 4
      %s92 = int_to_ptr.vmem [resolvable:$true] %s91
      %94 = dma.hbm_to_vmem [thread:$0]  %s6, 128, %s92, [#allocation12]
    $region29: #{tpu_custom_call.1} parent=1 // pred_fallthru
      _
    // Predicated region
    $region30: #{tpu_custom_call.1} parent=1 // pred_check
      _
    $region31: #{tpu_custom_call.1} parent=1 // pred_check_branch
      %96 = sbr.rel (0) target = $region33
    $region32: #{tpu_custom_call.1} parent=1 // pred_region
      %97 = dma.done [#allocation3], 128
    $region33: #{tpu_custom_call.1} parent=1 // pred_fallthru
      _
    // Predicated region
    $region34: #{tpu_custom_call.1} parent=1 // pred_check
      _
    $region35: #{tpu_custom_call.1} parent=1 // pred_check_branch
      %99 = sbr.rel (0) target = $region37
    $region36: #{tpu_custom_call.1} parent=1 // pred_region
      %100 = dma.done [#allocation6], 16384
    $region37: #{tpu_custom_call.1} parent=1 // pred_fallthru
      _
    // Predicated region
    $region38: #{tpu_custom_call.1} parent=1 // pred_check
      _
    $region39: #{tpu_custom_call.1} parent=1 // pred_check_branch
      %102 = sbr.rel (0) target = $region41
    $region40: #{tpu_custom_call.1} parent=1 // pred_region
      %103 = dma.done [#allocation6], 256
    $region41: #{tpu_custom_call.1} parent=1 // pred_fallthru
      _
    // Predicated region
    $region42: #{tpu_custom_call.1} parent=1 // pred_check
      _
    $region43: #{tpu_custom_call.1} parent=1 // pred_check_branch
      %105 = sbr.rel (0) target = $region45
    $region44: #{tpu_custom_call.1} parent=1 // pred_region
      %106 = dma.done [#allocation9], 65536
    $region45: #{tpu_custom_call.1} parent=1 // pred_fallthru
      _
    // Predicated region
    $region46: #{tpu_custom_call.1} parent=1 // pred_check
      _
    $region47: #{tpu_custom_call.1} parent=1 // pred_check_branch
      %108 = sbr.rel (0) target = $region49
    $region48: #{tpu_custom_call.1} parent=1 // pred_region
      %109 = dma.done [#allocation9], 128
    $region49: #{tpu_custom_call.1} parent=1 // pred_fallthru
      _
    // Predicated region
    $region50: #{tpu_custom_call.1} parent=1 // pred_check
      _
    $region51: #{tpu_custom_call.1} parent=1 // pred_check_branch
      %111 = sbr.rel (0) target = $region53
    $region52: #{tpu_custom_call.1} parent=1 // pred_region
      %112 = dma.done [#allocation12], 65536
    $region53: #{tpu_custom_call.1} parent=1 // pred_fallthru
      _
    // Predicated region
    $region54: #{tpu_custom_call.1} parent=1 // pred_check
      _
    $region55: #{tpu_custom_call.1} parent=1 // pred_check_branch
      %114 = sbr.rel (0) target = $region57
    $region56: #{tpu_custom_call.1} parent=1 // pred_region
      %115 = dma.done [#allocation12], 128
    $region57: #{tpu_custom_call.1} parent=1 // pred_fallthru
      _
    %v117 = vld [vmem:[#allocation2] sm:$0xf]
    %v118 = vld [vmem:[#allocation2 + $0x4] sm:$0xf]
    %v119 = vld [vmem:[#allocation5] sm:$0xff]
    %v120 = vld [vmem:[#allocation5 + $0x8] sm:$0xff]
    %v121 = vld [vmem:[#allocation5 + $0x10] sm:$0xff]
    %v122 = vld [vmem:[#allocation5 + $0x18] sm:$0xff]
    %v123 = vld [vmem:[#allocation5 + $0x20] sm:$0xff]
    %v124 = vld [vmem:[#allocation5 + $0x28] sm:$0xff]
    %v125 = vld [vmem:[#allocation5 + $0x30] sm:$0xff]
    %v126 = vld [vmem:[#allocation5 + $0x38] sm:$0xff]
    %v127 = vld [vmem:[#allocation5 + $0x40] sm:$0xff]
    %v128 = vld [vmem:[#allocation5 + $0x48] sm:$0xff]
    %v129 = vld [vmem:[#allocation5 + $0x50] sm:$0xff]
    %v130 = vld [vmem:[#allocation5 + $0x58] sm:$0xff]
    %v131 = vld [vmem:[#allocation5 + $0x60] sm:$0xff]
    %v132 = vld [vmem:[#allocation5 + $0x68] sm:$0xff]
    %v133 = vld [vmem:[#allocation5 + $0x70] sm:$0xff]
    %v134 = vld [vmem:[#allocation5 + $0x78] sm:$0xff]
    %v135 = vld [vmem:[#allocation5 + $0x80] sm:$0xff]
    %v136 = vld [vmem:[#allocation5 + $0x88] sm:$0xff]
    %v137 = vld [vmem:[#allocation5 + $0x90] sm:$0xff]
    %v138 = vld [vmem:[#allocation5 + $0x98] sm:$0xff]
    %v139 = vld [vmem:[#allocation5 + $0xa0] sm:$0xff]
    %v140 = vld [vmem:[#allocation5 + $0xa8] sm:$0xff]
    %v141 = vld [vmem:[#allocation5 + $0xb0] sm:$0xff]
    %v142 = vld [vmem:[#allocation5 + $0xb8] sm:$0xff]
    %v143 = vld [vmem:[#allocation5 + $0xc0] sm:$0xff]
    %v144 = vld [vmem:[#allocation5 + $0xc8] sm:$0xff]
    %v145 = vld [vmem:[#allocation5 + $0xd0] sm:$0xff]
    %v146 = vld [vmem:[#allocation5 + $0xd8] sm:$0xff]
    %v147 = vld [vmem:[#allocation5 + $0xe0] sm:$0xff]
    %v148 = vld [vmem:[#allocation5 + $0xe8] sm:$0xff]
    %v149 = vld [vmem:[#allocation5 + $0xf0] sm:$0xff]
    %v150 = vld [vmem:[#allocation5 + $0xf8] sm:$0xff]
    %v151 = vld [vmem:[#allocation5 + $0x100] sm:$0xff]
    %v152 = vld [vmem:[#allocation5 + $0x108] sm:$0xff]
    %v153 = vld [vmem:[#allocation5 + $0x110] sm:$0xff]
    %v154 = vld [vmem:[#allocation5 + $0x118] sm:$0xff]
    %v155 = vld [vmem:[#allocation5 + $0x120] sm:$0xff]
    %v156 = vld [vmem:[#allocation5 + $0x128] sm:$0xff]
    %v157 = vld [vmem:[#allocation5 + $0x130] sm:$0xff]
    %v158 = vld [vmem:[#allocation5 + $0x138] sm:$0xff]
    %v159 = vld [vmem:[#allocation5 + $0x140] sm:$0xff]
    %v160 = vld [vmem:[#allocation5 + $0x148] sm:$0xff]
    %v161 = vld [vmem:[#allocation5 + $0x150] sm:$0xff]
    %v162 = vld [vmem:[#allocation5 + $0x158] sm:$0xff]
    %v163 = vld [vmem:[#allocation5 + $0x160] sm:$0xff]
    %v164 = vld [vmem:[#allocation5 + $0x168] sm:$0xff]
    %v165 = vld [vmem:[#allocation5 + $0x170] sm:$0xff]
    %v166 = vld [vmem:[#allocation5 + $0x178] sm:$0xff]
    %v167 = vld [vmem:[#allocation5 + $0x180] sm:$0xff]
    %v168 = vld [vmem:[#allocation5 + $0x188] sm:$0xff]
    %v169 = vld [vmem:[#allocation5 + $0x190] sm:$0xff]
    %v170 = vld [vmem:[#allocation5 + $0x198] sm:$0xff]
    %v171 = vld [vmem:[#allocation5 + $0x1a0] sm:$0xff]
    %v172 = vld [vmem:[#allocation5 + $0x1a8] sm:$0xff]
    %v173 = vld [vmem:[#allocation5 + $0x1b0] sm:$0xff]
    %v174 = vld [vmem:[#allocation5 + $0x1b8] sm:$0xff]
    %v175 = vld [vmem:[#allocation5 + $0x1c0] sm:$0xff]
    %v176 = vld [vmem:[#allocation5 + $0x1c8] sm:$0xff]
    %v177 = vld [vmem:[#allocation5 + $0x1d0] sm:$0xff]
    %v178 = vld [vmem:[#allocation5 + $0x1d8] sm:$0xff]
    %v179 = vld [vmem:[#allocation5 + $0x1e0] sm:$0xff]
    %v180 = vld [vmem:[#allocation5 + $0x1e8] sm:$0xff]
    %v181 = vld [vmem:[#allocation5 + $0x1f0] sm:$0xff]
    %v182 = vld [vmem:[#allocation5 + $0x1f8] sm:$0xff]
    %v183 = vld [vmem:[#allocation5 + $0x200] sm:$0xff]
    %v184 = vld [vmem:[#allocation5 + $0x208] sm:$0xff]
    %v185 = vld [vmem:[#allocation5 + $0x210] sm:$0xff]
    %v186 = vld [vmem:[#allocation5 + $0x218] sm:$0xff]
    %v187 = vld [vmem:[#allocation5 + $0x220] sm:$0xff]
    %v188 = vld [vmem:[#allocation5 + $0x228] sm:$0xff]
    %v189 = vld [vmem:[#allocation5 + $0x230] sm:$0xff]
    %v190 = vld [vmem:[#allocation5 + $0x238] sm:$0xff]
    %v191 = vld [vmem:[#allocation5 + $0x240] sm:$0xff]
    %v192 = vld [vmem:[#allocation5 + $0x248] sm:$0xff]
    %v193 = vld [vmem:[#allocation5 + $0x250] sm:$0xff]
    %v194 = vld [vmem:[#allocation5 + $0x258] sm:$0xff]
    %v195 = vld [vmem:[#allocation5 + $0x260] sm:$0xff]
    %v196 = vld [vmem:[#allocation5 + $0x268] sm:$0xff]
    %v197 = vld [vmem:[#allocation5 + $0x270] sm:$0xff]
    %v198 = vld [vmem:[#allocation5 + $0x278] sm:$0xff]
    %v199 = vld [vmem:[#allocation5 + $0x280] sm:$0xff]
    %v200 = vld [vmem:[#allocation5 + $0x288] sm:$0xff]
    %v201 = vld [vmem:[#allocation5 + $0x290] sm:$0xff]
    %v202 = vld [vmem:[#allocation5 + $0x298] sm:$0xff]
    %v203 = vld [vmem:[#allocation5 + $0x2a0] sm:$0xff]
    %v204 = vld [vmem:[#allocation5 + $0x2a8] sm:$0xff]
    %v205 = vld [vmem:[#allocation5 + $0x2b0] sm:$0xff]
    %v206 = vld [vmem:[#allocation5 + $0x2b8] sm:$0xff]
    %v207 = vld [vmem:[#allocation5 + $0x2c0] sm:$0xff]
    %v208 = vld [vmem:[#allocation5 + $0x2c8] sm:$0xff]
    %v209 = vld [vmem:[#allocation5 + $0x2d0] sm:$0xff]
    %v210 = vld [vmem:[#allocation5 + $0x2d8] sm:$0xff]
    %v211 = vld [vmem:[#allocation5 + $0x2e0] sm:$0xff]
    %v212 = vld [vmem:[#allocation5 + $0x2e8] sm:$0xff]
    %v213 = vld [vmem:[#allocation5 + $0x2f0] sm:$0xff]
    %v214 = vld [vmem:[#allocation5 + $0x2f8] sm:$0xff]
    %v215 = vld [vmem:[#allocation5 + $0x300] sm:$0xff]
    %v216 = vld [vmem:[#allocation5 + $0x308] sm:$0xff]
    %v217 = vld [vmem:[#allocation5 + $0x310] sm:$0xff]
    %v218 = vld [vmem:[#allocation5 + $0x318] sm:$0xff]
    %v219 = vld [vmem:[#allocation5 + $0x320] sm:$0xff]
    %v220 = vld [vmem:[#allocation5 + $0x328] sm:$0xff]
    %v221 = vld [vmem:[#allocation5 + $0x330] sm:$0xff]
    %v222 = vld [vmem:[#allocation5 + $0x338] sm:$0xff]
    %v223 = vld [vmem:[#allocation5 + $0x340] sm:$0xff]
    %v224 = vld [vmem:[#allocation5 + $0x348] sm:$0xff]
    %v225 = vld [vmem:[#allocation5 + $0x350] sm:$0xff]
    %v226 = vld [vmem:[#allocation5 + $0x358] sm:$0xff]
    %v227 = vld [vmem:[#allocation5 + $0x360] sm:$0xff]
    %v228 = vld [vmem:[#allocation5 + $0x368] sm:$0xff]
    %v229 = vld [vmem:[#allocation5 + $0x370] sm:$0xff]
    %v230 = vld [vmem:[#allocation5 + $0x378] sm:$0xff]
    %v231 = vld [vmem:[#allocation5 + $0x380] sm:$0xff]
    %v232 = vld [vmem:[#allocation5 + $0x388] sm:$0xff]
    %v233 = vld [vmem:[#allocation5 + $0x390] sm:$0xff]
    %v234 = vld [vmem:[#allocation5 + $0x398] sm:$0xff]
    %v235 = vld [vmem:[#allocation5 + $0x3a0] sm:$0xff]
    %v236 = vld [vmem:[#allocation5 + $0x3a8] sm:$0xff]
    %v237 = vld [vmem:[#allocation5 + $0x3b0] sm:$0xff]
    %v238 = vld [vmem:[#allocation5 + $0x3b8] sm:$0xff]
    %v239 = vld [vmem:[#allocation5 + $0x3c0] sm:$0xff]
    %v240 = vld [vmem:[#allocation5 + $0x3c8] sm:$0xff]
    %v241 = vld [vmem:[#allocation5 + $0x3d0] sm:$0xff]
    %v242 = vld [vmem:[#allocation5 + $0x3d8] sm:$0xff]
    %v243 = vld [vmem:[#allocation5 + $0x3e0] sm:$0xff]
    %v244 = vld [vmem:[#allocation5 + $0x3e8] sm:$0xff]
    %v245 = vld [vmem:[#allocation5 + $0x3f0] sm:$0xff]
    %v246 = vld [vmem:[#allocation5 + $0x3f8] sm:$0xff]
    %v247 = vld [vmem:[#allocation7] sm:$0xff]
    %v248 = vld [vmem:[#allocation7 + $0x8] sm:$0xff]
    %v251 = vlaneseq
    %v252 = vshrl.u32 %v251, 7
    %v253 = vsub.s32 0, %v252
    %v254 = vrot.slane %v247, %v253
    %v255 = vlaneseq
    %v256 = vshrl.u32 %v255, 7
    %v257 = vsub.s32 1, %v256
    %v258 = vrot.slane %v247, %v257
    %v259 = vlaneseq
    %v260 = vshrl.u32 %v259, 7
    %v261 = vsub.s32 2, %v260
    %v262 = vrot.slane %v247, %v261
    %v263 = vlaneseq
    %v264 = vshrl.u32 %v263, 7
    %v265 = vsub.s32 3, %v264
    %v266 = vrot.slane %v247, %v265
    %v267 = vlaneseq
    %v268 = vshrl.u32 %v267, 7
    %v269 = vsub.s32 4, %v268
    %v270 = vrot.slane %v247, %v269
    %v271 = vlaneseq
    %v272 = vshrl.u32 %v271, 7
    %v273 = vsub.s32 5, %v272
    %v274 = vrot.slane %v247, %v273
    %v275 = vlaneseq
    %v276 = vshrl.u32 %v275, 7
    %v277 = vsub.s32 6, %v276
    %v278 = vrot.slane %v247, %v277
    %v279 = vlaneseq
    %v280 = vshrl.u32 %v279, 7
    %v281 = vsub.s32 7, %v280
    %v282 = vrot.slane %v247, %v281
    %v283 = vlaneseq
    %v284 = vshrl.u32 %v283, 7
    %v285 = vsub.s32 0, %v284
    %v286 = vrot.slane %v248, %v285
    %v287 = vlaneseq
    %v288 = vshrl.u32 %v287, 7
    %v289 = vsub.s32 1, %v288
    %v290 = vrot.slane %v248, %v289
    %v291 = vlaneseq
    %v292 = vshrl.u32 %v291, 7
    %v293 = vsub.s32 2, %v292
    %v294 = vrot.slane %v248, %v293
    %v295 = vlaneseq
    %v296 = vshrl.u32 %v295, 7
    %v297 = vsub.s32 3, %v296
    %v298 = vrot.slane %v248, %v297
    %v299 = vlaneseq
    %v300 = vshrl.u32 %v299, 7
    %v301 = vsub.s32 4, %v300
    %v302 = vrot.slane %v248, %v301
    %v303 = vlaneseq
    %v304 = vshrl.u32 %v303, 7
    %v305 = vsub.s32 5, %v304
    %v306 = vrot.slane %v248, %v305
    %v307 = vlaneseq
    %v308 = vshrl.u32 %v307, 7
    %v309 = vsub.s32 6, %v308
    %v310 = vrot.slane %v248, %v309
    %v311 = vlaneseq
    %v312 = vshrl.u32 %v311, 7
    %v313 = vsub.s32 7, %v312
    %v314 = vrot.slane %v248, %v313
    %v333 = vunpack.c.l.b16 %v117
    %v334 = vunpack.c.l.b16 %v118
    %v335 = vpack.c.b16 %v334, %v333
    %v465 = vunpack.c.l.b16 %v119
    %v466 = vunpack.c.h.b16 %v119
    %v467 = vunpack.c.l.b16 %v120
    %v468 = vunpack.c.h.b16 %v120
    %v469 = vunpack.c.l.b16 %v121
    %v470 = vunpack.c.h.b16 %v121
    %v471 = vunpack.c.l.b16 %v122
    %v472 = vunpack.c.h.b16 %v122
    %v473 = vunpack.c.l.b16 %v123
    %v474 = vunpack.c.h.b16 %v123
    %v475 = vunpack.c.l.b16 %v124
    %v476 = vunpack.c.h.b16 %v124
    %v477 = vunpack.c.l.b16 %v125
    %v478 = vunpack.c.h.b16 %v125
    %v479 = vunpack.c.l.b16 %v126
    %v480 = vunpack.c.h.b16 %v126
    %v481 = vunpack.c.l.b16 %v127
    %v482 = vunpack.c.h.b16 %v127
    %v483 = vunpack.c.l.b16 %v128
    %v484 = vunpack.c.h.b16 %v128
    %v485 = vunpack.c.l.b16 %v129
    %v486 = vunpack.c.h.b16 %v129
    %v487 = vunpack.c.l.b16 %v130
    %v488 = vunpack.c.h.b16 %v130
    %v489 = vunpack.c.l.b16 %v131
    %v490 = vunpack.c.h.b16 %v131
    %v491 = vunpack.c.l.b16 %v132
    %v492 = vunpack.c.h.b16 %v132
    %v493 = vunpack.c.l.b16 %v133
    %v494 = vunpack.c.h.b16 %v133
    %v495 = vunpack.c.l.b16 %v134
    %v496 = vunpack.c.h.b16 %v134
    %v497 = vunpack.c.l.b16 %v135
    %v498 = vunpack.c.h.b16 %v135
    %v499 = vunpack.c.l.b16 %v136
    %v500 = vunpack.c.h.b16 %v136
    %v501 = vunpack.c.l.b16 %v137
    %v502 = vunpack.c.h.b16 %v137
    %v503 = vunpack.c.l.b16 %v138
    %v504 = vunpack.c.h.b16 %v138
    %v505 = vunpack.c.l.b16 %v139
    %v506 = vunpack.c.h.b16 %v139
    %v507 = vunpack.c.l.b16 %v140
    %v508 = vunpack.c.h.b16 %v140
    %v509 = vunpack.c.l.b16 %v141
    %v510 = vunpack.c.h.b16 %v141
    %v511 = vunpack.c.l.b16 %v142
    %v512 = vunpack.c.h.b16 %v142
    %v513 = vunpack.c.l.b16 %v143
    %v514 = vunpack.c.h.b16 %v143
    %v515 = vunpack.c.l.b16 %v144
    %v516 = vunpack.c.h.b16 %v144
    %v517 = vunpack.c.l.b16 %v145
    %v518 = vunpack.c.h.b16 %v145
    %v519 = vunpack.c.l.b16 %v146
    %v520 = vunpack.c.h.b16 %v146
    %v521 = vunpack.c.l.b16 %v147
    %v522 = vunpack.c.h.b16 %v147
    %v523 = vunpack.c.l.b16 %v148
    %v524 = vunpack.c.h.b16 %v148
    %v525 = vunpack.c.l.b16 %v149
    %v526 = vunpack.c.h.b16 %v149
    %v527 = vunpack.c.l.b16 %v150
    %v528 = vunpack.c.h.b16 %v150
    %v529 = vunpack.c.l.b16 %v151
    %v530 = vunpack.c.h.b16 %v151
    %v531 = vunpack.c.l.b16 %v152
    %v532 = vunpack.c.h.b16 %v152
    %v533 = vunpack.c.l.b16 %v153
    %v534 = vunpack.c.h.b16 %v153
    %v535 = vunpack.c.l.b16 %v154
    %v536 = vunpack.c.h.b16 %v154
    %v537 = vunpack.c.l.b16 %v155
    %v538 = vunpack.c.h.b16 %v155
    %v539 = vunpack.c.l.b16 %v156
    %v540 = vunpack.c.h.b16 %v156
    %v541 = vunpack.c.l.b16 %v157
    %v542 = vunpack.c.h.b16 %v157
    %v543 = vunpack.c.l.b16 %v158
    %v544 = vunpack.c.h.b16 %v158
    %v545 = vunpack.c.l.b16 %v159
    %v546 = vunpack.c.h.b16 %v159
    %v547 = vunpack.c.l.b16 %v160
    %v548 = vunpack.c.h.b16 %v160
    %v549 = vunpack.c.l.b16 %v161
    %v550 = vunpack.c.h.b16 %v161
    %v551 = vunpack.c.l.b16 %v162
    %v552 = vunpack.c.h.b16 %v162
    %v553 = vunpack.c.l.b16 %v163
    %v554 = vunpack.c.h.b16 %v163
    %v555 = vunpack.c.l.b16 %v164
    %v556 = vunpack.c.h.b16 %v164
    %v557 = vunpack.c.l.b16 %v165
    %v558 = vunpack.c.h.b16 %v165
    %v559 = vunpack.c.l.b16 %v166
    %v560 = vunpack.c.h.b16 %v166
    %v561 = vunpack.c.l.b16 %v167
    %v562 = vunpack.c.h.b16 %v167
    %v563 = vunpack.c.l.b16 %v168
    %v564 = vunpack.c.h.b16 %v168
    %v565 = vunpack.c.l.b16 %v169
    %v566 = vunpack.c.h.b16 %v169
    %v567 = vunpack.c.l.b16 %v170
    %v568 = vunpack.c.h.b16 %v170
    %v569 = vunpack.c.l.b16 %v171
    %v570 = vunpack.c.h.b16 %v171
    %v571 = vunpack.c.l.b16 %v172
    %v572 = vunpack.c.h.b16 %v172
    %v573 = vunpack.c.l.b16 %v173
    %v574 = vunpack.c.h.b16 %v173
    %v575 = vunpack.c.l.b16 %v174
    %v576 = vunpack.c.h.b16 %v174
    %v577 = vunpack.c.l.b16 %v175
    %v578 = vunpack.c.h.b16 %v175
    %v579 = vunpack.c.l.b16 %v176
    %v580 = vunpack.c.h.b16 %v176
    %v581 = vunpack.c.l.b16 %v177
    %v582 = vunpack.c.h.b16 %v177
    %v583 = vunpack.c.l.b16 %v178
    %v584 = vunpack.c.h.b16 %v178
    %v585 = vunpack.c.l.b16 %v179
    %v586 = vunpack.c.h.b16 %v179
    %v587 = vunpack.c.l.b16 %v180
    %v588 = vunpack.c.h.b16 %v180
    %v589 = vunpack.c.l.b16 %v181
    %v590 = vunpack.c.h.b16 %v181
    %v591 = vunpack.c.l.b16 %v182
    %v592 = vunpack.c.h.b16 %v182
    %v593 = vunpack.c.l.b16 %v183
    %v594 = vunpack.c.h.b16 %v183
    %v595 = vunpack.c.l.b16 %v184
    %v596 = vunpack.c.h.b16 %v184
    %v597 = vunpack.c.l.b16 %v185
    %v598 = vunpack.c.h.b16 %v185
    %v599 = vunpack.c.l.b16 %v186
    %v600 = vunpack.c.h.b16 %v186
    %v601 = vunpack.c.l.b16 %v187
    %v602 = vunpack.c.h.b16 %v187
    %v603 = vunpack.c.l.b16 %v188
    %v604 = vunpack.c.h.b16 %v188
    %v605 = vunpack.c.l.b16 %v189
    %v606 = vunpack.c.h.b16 %v189
    %v607 = vunpack.c.l.b16 %v190
    %v608 = vunpack.c.h.b16 %v190
    %v609 = vunpack.c.l.b16 %v191
    %v610 = vunpack.c.h.b16 %v191
    %v611 = vunpack.c.l.b16 %v192
    %v612 = vunpack.c.h.b16 %v192
    %v613 = vunpack.c.l.b16 %v193
    %v614 = vunpack.c.h.b16 %v193
    %v615 = vunpack.c.l.b16 %v194
    %v616 = vunpack.c.h.b16 %v194
    %v617 = vunpack.c.l.b16 %v195
    %v618 = vunpack.c.h.b16 %v195
    %v619 = vunpack.c.l.b16 %v196
    %v620 = vunpack.c.h.b16 %v196
    %v621 = vunpack.c.l.b16 %v197
    %v622 = vunpack.c.h.b16 %v197
    %v623 = vunpack.c.l.b16 %v198
    %v624 = vunpack.c.h.b16 %v198
    %v625 = vunpack.c.l.b16 %v199
    %v626 = vunpack.c.h.b16 %v199
    %v627 = vunpack.c.l.b16 %v200
    %v628 = vunpack.c.h.b16 %v200
    %v629 = vunpack.c.l.b16 %v201
    %v630 = vunpack.c.h.b16 %v201
    %v631 = vunpack.c.l.b16 %v202
    %v632 = vunpack.c.h.b16 %v202
    %v633 = vunpack.c.l.b16 %v203
    %v634 = vunpack.c.h.b16 %v203
    %v635 = vunpack.c.l.b16 %v204
    %v636 = vunpack.c.h.b16 %v204
    %v637 = vunpack.c.l.b16 %v205
    %v638 = vunpack.c.h.b16 %v205
    %v639 = vunpack.c.l.b16 %v206
    %v640 = vunpack.c.h.b16 %v206
    %v641 = vunpack.c.l.b16 %v207
    %v642 = vunpack.c.h.b16 %v207
    %v643 = vunpack.c.l.b16 %v208
    %v644 = vunpack.c.h.b16 %v208
    %v645 = vunpack.c.l.b16 %v209
    %v646 = vunpack.c.h.b16 %v209
    %v647 = vunpack.c.l.b16 %v210
    %v648 = vunpack.c.h.b16 %v210
    %v649 = vunpack.c.l.b16 %v211
    %v650 = vunpack.c.h.b16 %v211
    %v651 = vunpack.c.l.b16 %v212
    %v652 = vunpack.c.h.b16 %v212
    %v653 = vunpack.c.l.b16 %v213
    %v654 = vunpack.c.h.b16 %v213
    %v655 = vunpack.c.l.b16 %v214
    %v656 = vunpack.c.h.b16 %v214
    %v657 = vunpack.c.l.b16 %v215
    %v658 = vunpack.c.h.b16 %v215
    %v659 = vunpack.c.l.b16 %v216
    %v660 = vunpack.c.h.b16 %v216
    %v661 = vunpack.c.l.b16 %v217
    %v662 = vunpack.c.h.b16 %v217
    %v663 = vunpack.c.l.b16 %v218
    %v664 = vunpack.c.h.b16 %v218
    %v665 = vunpack.c.l.b16 %v219
    %v666 = vunpack.c.h.b16 %v219
    %v667 = vunpack.c.l.b16 %v220
    %v668 = vunpack.c.h.b16 %v220
    %v669 = vunpack.c.l.b16 %v221
    %v670 = vunpack.c.h.b16 %v221
    %v671 = vunpack.c.l.b16 %v222
    %v672 = vunpack.c.h.b16 %v222
    %v673 = vunpack.c.l.b16 %v223
    %v674 = vunpack.c.h.b16 %v223
    %v675 = vunpack.c.l.b16 %v224
    %v676 = vunpack.c.h.b16 %v224
    %v677 = vunpack.c.l.b16 %v225
    %v678 = vunpack.c.h.b16 %v225
    %v679 = vunpack.c.l.b16 %v226
    %v680 = vunpack.c.h.b16 %v226
    %v681 = vunpack.c.l.b16 %v227
    %v682 = vunpack.c.h.b16 %v227
    %v683 = vunpack.c.l.b16 %v228
    %v684 = vunpack.c.h.b16 %v228
    %v685 = vunpack.c.l.b16 %v229
    %v686 = vunpack.c.h.b16 %v229
    %v687 = vunpack.c.l.b16 %v230
    %v688 = vunpack.c.h.b16 %v230
    %v689 = vunpack.c.l.b16 %v231
    %v690 = vunpack.c.h.b16 %v231
    %v691 = vunpack.c.l.b16 %v232
    %v692 = vunpack.c.h.b16 %v232
    %v693 = vunpack.c.l.b16 %v233
    %v694 = vunpack.c.h.b16 %v233
    %v695 = vunpack.c.l.b16 %v234
    %v696 = vunpack.c.h.b16 %v234
    %v697 = vunpack.c.l.b16 %v235
    %v698 = vunpack.c.h.b16 %v235
    %v699 = vunpack.c.l.b16 %v236
    %v700 = vunpack.c.h.b16 %v236
    %v701 = vunpack.c.l.b16 %v237
    %v702 = vunpack.c.h.b16 %v237
    %v703 = vunpack.c.l.b16 %v238
    %v704 = vunpack.c.h.b16 %v238
    %v705 = vunpack.c.l.b16 %v239
    %v706 = vunpack.c.h.b16 %v239
    %v707 = vunpack.c.l.b16 %v240
    %v708 = vunpack.c.h.b16 %v240
    %v709 = vunpack.c.l.b16 %v241
    %v710 = vunpack.c.h.b16 %v241
    %v711 = vunpack.c.l.b16 %v242
    %v712 = vunpack.c.h.b16 %v242
    %v713 = vunpack.c.l.b16 %v243
    %v714 = vunpack.c.h.b16 %v243
    %v715 = vunpack.c.l.b16 %v244
    %v716 = vunpack.c.h.b16 %v244
    %v717 = vunpack.c.l.b16 %v245
    %v718 = vunpack.c.h.b16 %v245
    %v719 = vunpack.c.l.b16 %v246
    %v720 = vunpack.c.h.b16 %v246
    %v721 = vpack.c.b16 %v481, %v465
    %v722 = vpack.c.b16 %v482, %v466
    %v723 = vpack.c.b16 %v483, %v467
    %v724 = vpack.c.b16 %v484, %v468
    %v725 = vpack.c.b16 %v485, %v469
    %v726 = vpack.c.b16 %v486, %v470
    %v727 = vpack.c.b16 %v487, %v471
    %v728 = vpack.c.b16 %v488, %v472
    %v729 = vpack.c.b16 %v489, %v473
    %v730 = vpack.c.b16 %v490, %v474
    %v731 = vpack.c.b16 %v491, %v475
    %v732 = vpack.c.b16 %v492, %v476
    %v733 = vpack.c.b16 %v493, %v477
    %v734 = vpack.c.b16 %v494, %v478
    %v735 = vpack.c.b16 %v495, %v479
    %v736 = vpack.c.b16 %v496, %v480
    %v737 = vpack.c.b16 %v513, %v497
    %v738 = vpack.c.b16 %v514, %v498
    %v739 = vpack.c.b16 %v515, %v499
    %v740 = vpack.c.b16 %v516, %v500
    %v741 = vpack.c.b16 %v517, %v501
    %v742 = vpack.c.b16 %v518, %v502
    %v743 = vpack.c.b16 %v519, %v503
    %v744 = vpack.c.b16 %v520, %v504
    %v745 = vpack.c.b16 %v521, %v505
    %v746 = vpack.c.b16 %v522, %v506
    %v747 = vpack.c.b16 %v523, %v507
    %v748 = vpack.c.b16 %v524, %v508
    %v749 = vpack.c.b16 %v525, %v509
    %v750 = vpack.c.b16 %v526, %v510
    %v751 = vpack.c.b16 %v527, %v511
    %v752 = vpack.c.b16 %v528, %v512
    %v753 = vpack.c.b16 %v545, %v529
    %v754 = vpack.c.b16 %v546, %v530
    %v755 = vpack.c.b16 %v547, %v531
    %v756 = vpack.c.b16 %v548, %v532
    %v757 = vpack.c.b16 %v549, %v533
    %v758 = vpack.c.b16 %v550, %v534
    %v759 = vpack.c.b16 %v551, %v535
    %v760 = vpack.c.b16 %v552, %v536
    %v761 = vpack.c.b16 %v553, %v537
    %v762 = vpack.c.b16 %v554, %v538
    %v763 = vpack.c.b16 %v555, %v539
    %v764 = vpack.c.b16 %v556, %v540
    %v765 = vpack.c.b16 %v557, %v541
    %v766 = vpack.c.b16 %v558, %v542
    %v767 = vpack.c.b16 %v559, %v543
    %v768 = vpack.c.b16 %v560, %v544
    %v769 = vpack.c.b16 %v577, %v561
    %v770 = vpack.c.b16 %v578, %v562
    %v771 = vpack.c.b16 %v579, %v563
    %v772 = vpack.c.b16 %v580, %v564
    %v773 = vpack.c.b16 %v581, %v565
    %v774 = vpack.c.b16 %v582, %v566
    %v775 = vpack.c.b16 %v583, %v567
    %v776 = vpack.c.b16 %v584, %v568
    %v777 = vpack.c.b16 %v585, %v569
    %v778 = vpack.c.b16 %v586, %v570
    %v779 = vpack.c.b16 %v587, %v571
    %v780 = vpack.c.b16 %v588, %v572
    %v781 = vpack.c.b16 %v589, %v573
    %v782 = vpack.c.b16 %v590, %v574
    %v783 = vpack.c.b16 %v591, %v575
    %v784 = vpack.c.b16 %v592, %v576
    %v785 = vpack.c.b16 %v609, %v593
    %v786 = vpack.c.b16 %v610, %v594
    %v787 = vpack.c.b16 %v611, %v595
    %v788 = vpack.c.b16 %v612, %v596
    %v789 = vpack.c.b16 %v613, %v597
    %v790 = vpack.c.b16 %v614, %v598
    %v791 = vpack.c.b16 %v615, %v599
    %v792 = vpack.c.b16 %v616, %v600
    %v793 = vpack.c.b16 %v617, %v601
    %v794 = vpack.c.b16 %v618, %v602
    %v795 = vpack.c.b16 %v619, %v603
    %v796 = vpack.c.b16 %v620, %v604
    %v797 = vpack.c.b16 %v621, %v605
    %v798 = vpack.c.b16 %v622, %v606
    %v799 = vpack.c.b16 %v623, %v607
    %v800 = vpack.c.b16 %v624, %v608
    %v801 = vpack.c.b16 %v641, %v625
    %v802 = vpack.c.b16 %v642, %v626
    %v803 = vpack.c.b16 %v643, %v627
    %v804 = vpack.c.b16 %v644, %v628
    %v805 = vpack.c.b16 %v645, %v629
    %v806 = vpack.c.b16 %v646, %v630
    %v807 = vpack.c.b16 %v647, %v631
    %v808 = vpack.c.b16 %v648, %v632
    %v809 = vpack.c.b16 %v649, %v633
    %v810 = vpack.c.b16 %v650, %v634
    %v811 = vpack.c.b16 %v651, %v635
    %v812 = vpack.c.b16 %v652, %v636
    %v813 = vpack.c.b16 %v653, %v637
    %v814 = vpack.c.b16 %v654, %v638
    %v815 = vpack.c.b16 %v655, %v639
    %v816 = vpack.c.b16 %v656, %v640
    %v817 = vpack.c.b16 %v673, %v657
    %v818 = vpack.c.b16 %v674, %v658
    %v819 = vpack.c.b16 %v675, %v659
    %v820 = vpack.c.b16 %v676, %v660
    %v821 = vpack.c.b16 %v677, %v661
    %v822 = vpack.c.b16 %v678, %v662
    %v823 = vpack.c.b16 %v679, %v663
    %v824 = vpack.c.b16 %v680, %v664
    %v825 = vpack.c.b16 %v681, %v665
    %v826 = vpack.c.b16 %v682, %v666
    %v827 = vpack.c.b16 %v683, %v667
    %v828 = vpack.c.b16 %v684, %v668
    %v829 = vpack.c.b16 %v685, %v669
    %v830 = vpack.c.b16 %v686, %v670
    %v831 = vpack.c.b16 %v687, %v671
    %v832 = vpack.c.b16 %v688, %v672
    %v833 = vpack.c.b16 %v705, %v689
    %v834 = vpack.c.b16 %v706, %v690
    %v835 = vpack.c.b16 %v707, %v691
    %v836 = vpack.c.b16 %v708, %v692
    %v837 = vpack.c.b16 %v709, %v693
    %v838 = vpack.c.b16 %v710, %v694
    %v839 = vpack.c.b16 %v711, %v695
    %v840 = vpack.c.b16 %v712, %v696
    %v841 = vpack.c.b16 %v713, %v697
    %v842 = vpack.c.b16 %v714, %v698
    %v843 = vpack.c.b16 %v715, %v699
    %v844 = vpack.c.b16 %v716, %v700
    %v845 = vpack.c.b16 %v717, %v701
    %v846 = vpack.c.b16 %v718, %v702
    %v847 = vpack.c.b16 %v719, %v703
    %v848 = vpack.c.b16 %v720, %v704
    %977 = vmatprep.subr.bf16.mxu0 %v722
    %978 = vmatpush1.bf16.msra.mxu0 %v721
    %979 = vmatprep.subr.bf16.mxu0 %v738
    %980 = vmatpush1.bf16.msra.mxu0 %v737
    %981 = vmatprep.subr.bf16.mxu0 %v754
    %982 = vmatpush1.bf16.msra.mxu0 %v753
    %983 = vmatprep.subr.bf16.mxu0 %v770
    %984 = vmatpush1.bf16.msra.mxu0 %v769
    %985 = vmatprep.subr.bf16.mxu0 %v786
    %986 = vmatpush1.bf16.msra.mxu0 %v785
    %987 = vmatprep.subr.bf16.mxu0 %v802
    %988 = vmatpush1.bf16.msra.mxu0 %v801
    %989 = vmatprep.subr.bf16.mxu0 %v818
    %990 = vmatpush1.bf16.msra.mxu0 %v817
    %991 = vmatprep.subr.bf16.mxu0 %v834
    %992 = vmatpush1.bf16.msra.mxu0 %v833
    %993 = vmatprep.subr.bf16.mxu0 0
    %994 = vmatpush1.bf16.msra.mxu0 0
    %995 = vmatprep.subr.bf16.mxu0 0
    %996 = vmatpush1.bf16.msra.mxu0 0
    %997 = vmatprep.subr.bf16.mxu0 0
    %998 = vmatpush1.bf16.msra.mxu0 0
    %999 = vmatprep.subr.bf16.mxu0 0
    %1000 = vmatpush1.bf16.msra.mxu0 0
    %1001 = vmatprep.subr.bf16.mxu0 0
    %1002 = vmatpush1.bf16.msra.mxu0 0
    %1003 = vmatprep.subr.bf16.mxu0 0
    %1004 = vmatpush1.bf16.msra.mxu0 0
    %1005 = vmatprep.subr.bf16.mxu0 0
    %1006 = vmatpush1.bf16.msra.mxu0 0
    %1007 = vmatprep.subr.bf16.mxu0 0
    %1008 = vmatpush1.bf16.msra.mxu0 0
    %1009 = vmatprep.mubr.bf16.mxu0 0
    %1010 = vmatmul.mubr.bf16.gmra.mrb[0].mxu0 %v335
    %v1011 = vpop.f32.mrb[0].mxu0
    %v1012 = vadd.f32 %v254, %v1011
    %v1013 = vpop.f32.mrb[0].mxu0
    %v1014 = vadd.f32 %v258, %v1013
    %v1015 = vpop.f32.mrb[0].mxu0
    %v1016 = vadd.f32 %v254, %v1015
    %v1017 = vpop.f32.mrb[0].mxu0
    %v1018 = vadd.f32 %v258, %v1017
    %1019 = vdwg.mxu0
    %1020 = vmatprep.subr.bf16.mxu0 %v724
    %1021 = vmatpush1.bf16.msra.mxu0 %v723
    %1022 = vmatprep.subr.bf16.mxu0 %v740
    %1023 = vmatpush1.bf16.msra.mxu0 %v739
    %1024 = vmatprep.subr.bf16.mxu0 %v756
    %1025 = vmatpush1.bf16.msra.mxu0 %v755
    %1026 = vmatprep.subr.bf16.mxu0 %v772
    %1027 = vmatpush1.bf16.msra.mxu0 %v771
    %1028 = vmatprep.subr.bf16.mxu0 %v788
    %1029 = vmatpush1.bf16.msra.mxu0 %v787
    %1030 = vmatprep.subr.bf16.mxu0 %v804
    %1031 = vmatpush1.bf16.msra.mxu0 %v803
    %1032 = vmatprep.subr.bf16.mxu0 %v820
    %1033 = vmatpush1.bf16.msra.mxu0 %v819
    %1034 = vmatprep.subr.bf16.mxu0 %v836
    %1035 = vmatpush1.bf16.msra.mxu0 %v835
    %1036 = vmatprep.subr.bf16.mxu0 0
    %1037 = vmatpush1.bf16.msra.mxu0 0
    %1038 = vmatprep.subr.bf16.mxu0 0
    %1039 = vmatpush1.bf16.msra.mxu0 0
    %1040 = vmatprep.subr.bf16.mxu0 0
    %1041 = vmatpush1.bf16.msra.mxu0 0
    %1042 = vmatprep.subr.bf16.mxu0 0
    %1043 = vmatpush1.bf16.msra.mxu0 0
    %1044 = vmatprep.subr.bf16.mxu0 0
    %1045 = vmatpush1.bf16.msra.mxu0 0
    %1046 = vmatprep.subr.bf16.mxu0 0
    %1047 = vmatpush1.bf16.msra.mxu0 0
    %1048 = vmatprep.subr.bf16.mxu0 0
    %1049 = vmatpush1.bf16.msra.mxu0 0
    %1050 = vmatprep.subr.bf16.mxu0 0
    %1051 = vmatpush1.bf16.msra.mxu0 0
    %1052 = vmatprep.mubr.bf16.mxu0 0
    %1053 = vmatmul.mubr.bf16.gmra.mrb[0].mxu0 %v335
    %v1054 = vpop.f32.mrb[0].mxu0
    %v1055 = vadd.f32 %v262, %v1054
    %v1056 = vpop.f32.mrb[0].mxu0
    %v1057 = vadd.f32 %v266, %v1056
    %v1058 = vpop.f32.mrb[0].mxu0
    %v1059 = vadd.f32 %v262, %v1058
    %v1060 = vpop.f32.mrb[0].mxu0
    %v1061 = vadd.f32 %v266, %v1060
    %1062 = vdwg.mxu0
    %1063 = vmatprep.subr.bf16.mxu0 %v726
    %1064 = vmatpush1.bf16.msra.mxu0 %v725
    %1065 = vmatprep.subr.bf16.mxu0 %v742
    %1066 = vmatpush1.bf16.msra.mxu0 %v741
    %1067 = vmatprep.subr.bf16.mxu0 %v758
    %1068 = vmatpush1.bf16.msra.mxu0 %v757
    %1069 = vmatprep.subr.bf16.mxu0 %v774
    %1070 = vmatpush1.bf16.msra.mxu0 %v773
    %1071 = vmatprep.subr.bf16.mxu0 %v790
    %1072 = vmatpush1.bf16.msra.mxu0 %v789
    %1073 = vmatprep.subr.bf16.mxu0 %v806
    %1074 = vmatpush1.bf16.msra.mxu0 %v805
    %1075 = vmatprep.subr.bf16.mxu0 %v822
    %1076 = vmatpush1.bf16.msra.mxu0 %v821
    %1077 = vmatprep.subr.bf16.mxu0 %v838
    %1078 = vmatpush1.bf16.msra.mxu0 %v837
    %1079 = vmatprep.subr.bf16.mxu0 0
    %1080 = vmatpush1.bf16.msra.mxu0 0
    %1081 = vmatprep.subr.bf16.mxu0 0
    %1082 = vmatpush1.bf16.msra.mxu0 0
    %1083 = vmatprep.subr.bf16.mxu0 0
    %1084 = vmatpush1.bf16.msra.mxu0 0
    %1085 = vmatprep.subr.bf16.mxu0 0
    %1086 = vmatpush1.bf16.msra.mxu0 0
    %1087 = vmatprep.subr.bf16.mxu0 0
    %1088 = vmatpush1.bf16.msra.mxu0 0
    %1089 = vmatprep.subr.bf16.mxu0 0
    %1090 = vmatpush1.bf16.msra.mxu0 0
    %1091 = vmatprep.subr.bf16.mxu0 0
    %1092 = vmatpush1.bf16.msra.mxu0 0
    %1093 = vmatprep.subr.bf16.mxu0 0
    %1094 = vmatpush1.bf16.msra.mxu0 0
    %1095 = vmatprep.mubr.bf16.mxu0 0
    %1096 = vmatmul.mubr.bf16.gmra.mrb[0].mxu0 %v335
    %v1097 = vpop.f32.mrb[0].mxu0
    %v1098 = vadd.f32 %v270, %v1097
    %v1099 = vpop.f32.mrb[0].mxu0
    %v1100 = vadd.f32 %v274, %v1099
    %v1101 = vpop.f32.mrb[0].mxu0
    %v1102 = vadd.f32 %v270, %v1101
    %v1103 = vpop.f32.mrb[0].mxu0
    %v1104 = vadd.f32 %v274, %v1103
    %1105 = vdwg.mxu0
    %1106 = vmatprep.subr.bf16.mxu0 %v728
    %1107 = vmatpush1.bf16.msra.mxu0 %v727
    %1108 = vmatprep.subr.bf16.mxu0 %v744
    %1109 = vmatpush1.bf16.msra.mxu0 %v743
    %1110 = vmatprep.subr.bf16.mxu0 %v760
    %1111 = vmatpush1.bf16.msra.mxu0 %v759
    %1112 = vmatprep.subr.bf16.mxu0 %v776
    %1113 = vmatpush1.bf16.msra.mxu0 %v775
    %1114 = vmatprep.subr.bf16.mxu0 %v792
    %1115 = vmatpush1.bf16.msra.mxu0 %v791
    %1116 = vmatprep.subr.bf16.mxu0 %v808
    %1117 = vmatpush1.bf16.msra.mxu0 %v807
    %1118 = vmatprep.subr.bf16.mxu0 %v824
    %1119 = vmatpush1.bf16.msra.mxu0 %v823
    %1120 = vmatprep.subr.bf16.mxu0 %v840
    %1121 = vmatpush1.bf16.msra.mxu0 %v839
    %1122 = vmatprep.subr.bf16.mxu0 0
    %1123 = vmatpush1.bf16.msra.mxu0 0
    %1124 = vmatprep.subr.bf16.mxu0 0
    %1125 = vmatpush1.bf16.msra.mxu0 0
    %1126 = vmatprep.subr.bf16.mxu0 0
    %1127 = vmatpush1.bf16.msra.mxu0 0
    %1128 = vmatprep.subr.bf16.mxu0 0
    %1129 = vmatpush1.bf16.msra.mxu0 0
    %1130 = vmatprep.subr.bf16.mxu0 0
    %1131 = vmatpush1.bf16.msra.mxu0 0
    %1132 = vmatprep.subr.bf16.mxu0 0
    %1133 = vmatpush1.bf16.msra.mxu0 0
    %1134 = vmatprep.subr.bf16.mxu0 0
    %1135 = vmatpush1.bf16.msra.mxu0 0
    %1136 = vmatprep.subr.bf16.mxu0 0
    %1137 = vmatpush1.bf16.msra.mxu0 0
    %1138 = vmatprep.mubr.bf16.mxu0 0
    %1139 = vmatmul.mubr.bf16.gmra.mrb[0].mxu0 %v335
    %v1140 = vpop.f32.mrb[0].mxu0
    %v1141 = vadd.f32 %v278, %v1140
    %v1142 = vpop.f32.mrb[0].mxu0
    %v1143 = vadd.f32 %v282, %v1142
    %v1144 = vpop.f32.mrb[0].mxu0
    %v1145 = vadd.f32 %v278, %v1144
    %v1146 = vpop.f32.mrb[0].mxu0
    %v1147 = vadd.f32 %v282, %v1146
    %1148 = vdwg.mxu0
    %1149 = vmatprep.subr.bf16.mxu0 %v730
    %1150 = vmatpush1.bf16.msra.mxu0 %v729
    %1151 = vmatprep.subr.bf16.mxu0 %v746
    %1152 = vmatpush1.bf16.msra.mxu0 %v745
    %1153 = vmatprep.subr.bf16.mxu0 %v762
    %1154 = vmatpush1.bf16.msra.mxu0 %v761
    %1155 = vmatprep.subr.bf16.mxu0 %v778
    %1156 = vmatpush1.bf16.msra.mxu0 %v777
    %1157 = vmatprep.subr.bf16.mxu0 %v794
    %1158 = vmatpush1.bf16.msra.mxu0 %v793
    %1159 = vmatprep.subr.bf16.mxu0 %v810
    %1160 = vmatpush1.bf16.msra.mxu0 %v809
    %1161 = vmatprep.subr.bf16.mxu0 %v826
    %1162 = vmatpush1.bf16.msra.mxu0 %v825
    %1163 = vmatprep.subr.bf16.mxu0 %v842
    %1164 = vmatpush1.bf16.msra.mxu0 %v841
    %1165 = vmatprep.subr.bf16.mxu0 0
    %1166 = vmatpush1.bf16.msra.mxu0 0
    %1167 = vmatprep.subr.bf16.mxu0 0
    %1168 = vmatpush1.bf16.msra.mxu0 0
    %1169 = vmatprep.subr.bf16.mxu0 0
    %1170 = vmatpush1.bf16.msra.mxu0 0
    %1171 = vmatprep.subr.bf16.mxu0 0
    %1172 = vmatpush1.bf16.msra.mxu0 0
    %1173 = vmatprep.subr.bf16.mxu0 0
    %1174 = vmatpush1.bf16.msra.mxu0 0
    %1175 = vmatprep.subr.bf16.mxu0 0
    %1176 = vmatpush1.bf16.msra.mxu0 0
    %1177 = vmatprep.subr.bf16.mxu0 0
    %1178 = vmatpush1.bf16.msra.mxu0 0
    %1179 = vmatprep.subr.bf16.mxu0 0
    %1180 = vmatpush1.bf16.msra.mxu0 0
    %1181 = vmatprep.mubr.bf16.mxu0 0
    %1182 = vmatmul.mubr.bf16.gmra.mrb[0].mxu0 %v335
    %v1183 = vpop.f32.mrb[0].mxu0
    %v1184 = vadd.f32 %v286, %v1183
    %v1185 = vpop.f32.mrb[0].mxu0
    %v1186 = vadd.f32 %v290, %v1185
    %v1187 = vpop.f32.mrb[0].mxu0
    %v1188 = vadd.f32 %v286, %v1187
    %v1189 = vpop.f32.mrb[0].mxu0
    %v1190 = vadd.f32 %v290, %v1189
    %1191 = vdwg.mxu0
    %1192 = vmatprep.subr.bf16.mxu0 %v732
    %1193 = vmatpush1.bf16.msra.mxu0 %v731
    %1194 = vmatprep.subr.bf16.mxu0 %v748
    %1195 = vmatpush1.bf16.msra.mxu0 %v747
    %1196 = vmatprep.subr.bf16.mxu0 %v764
    %1197 = vmatpush1.bf16.msra.mxu0 %v763
    %1198 = vmatprep.subr.bf16.mxu0 %v780
    %1199 = vmatpush1.bf16.msra.mxu0 %v779
    %1200 = vmatprep.subr.bf16.mxu0 %v796
    %1201 = vmatpush1.bf16.msra.mxu0 %v795
    %1202 = vmatprep.subr.bf16.mxu0 %v812
    %1203 = vmatpush1.bf16.msra.mxu0 %v811
    %1204 = vmatprep.subr.bf16.mxu0 %v828
    %1205 = vmatpush1.bf16.msra.mxu0 %v827
    %1206 = vmatprep.subr.bf16.mxu0 %v844
    %1207 = vmatpush1.bf16.msra.mxu0 %v843
    %1208 = vmatprep.subr.bf16.mxu0 0
    %1209 = vmatpush1.bf16.msra.mxu0 0
    %1210 = vmatprep.subr.bf16.mxu0 0
    %1211 = vmatpush1.bf16.msra.mxu0 0
    %1212 = vmatprep.subr.bf16.mxu0 0
    %1213 = vmatpush1.bf16.msra.mxu0 0
    %1214 = vmatprep.subr.bf16.mxu0 0
    %1215 = vmatpush1.bf16.msra.mxu0 0
    %1216 = vmatprep.subr.bf16.mxu0 0
    %1217 = vmatpush1.bf16.msra.mxu0 0
    %1218 = vmatprep.subr.bf16.mxu0 0
    %1219 = vmatpush1.bf16.msra.mxu0 0
    %1220 = vmatprep.subr.bf16.mxu0 0
    %1221 = vmatpush1.bf16.msra.mxu0 0
    %1222 = vmatprep.subr.bf16.mxu0 0
    %1223 = vmatpush1.bf16.msra.mxu0 0
    %1224 = vmatprep.mubr.bf16.mxu0 0
    %1225 = vmatmul.mubr.bf16.gmra.mrb[0].mxu0 %v335
    %v1226 = vpop.f32.mrb[0].mxu0
    %v1227 = vadd.f32 %v294, %v1226
    %v1228 = vpop.f32.mrb[0].mxu0
    %v1229 = vadd.f32 %v298, %v1228
    %v1230 = vpop.f32.mrb[0].mxu0
    %v1231 = vadd.f32 %v294, %v1230
    %v1232 = vpop.f32.mrb[0].mxu0
    %v1233 = vadd.f32 %v298, %v1232
    %1234 = vdwg.mxu0
    %1235 = vmatprep.subr.bf16.mxu0 %v734
    %1236 = vmatpush1.bf16.msra.mxu0 %v733
    %1237 = vmatprep.subr.bf16.mxu0 %v750
    %1238 = vmatpush1.bf16.msra.mxu0 %v749
    %1239 = vmatprep.subr.bf16.mxu0 %v766
    %1240 = vmatpush1.bf16.msra.mxu0 %v765
    %1241 = vmatprep.subr.bf16.mxu0 %v782
    %1242 = vmatpush1.bf16.msra.mxu0 %v781
    %1243 = vmatprep.subr.bf16.mxu0 %v798
    %1244 = vmatpush1.bf16.msra.mxu0 %v797
    %1245 = vmatprep.subr.bf16.mxu0 %v814
    %1246 = vmatpush1.bf16.msra.mxu0 %v813
    %1247 = vmatprep.subr.bf16.mxu0 %v830
    %1248 = vmatpush1.bf16.msra.mxu0 %v829
    %1249 = vmatprep.subr.bf16.mxu0 %v846
    %1250 = vmatpush1.bf16.msra.mxu0 %v845
    %1251 = vmatprep.subr.bf16.mxu0 0
    %1252 = vmatpush1.bf16.msra.mxu0 0
    %1253 = vmatprep.subr.bf16.mxu0 0
    %1254 = vmatpush1.bf16.msra.mxu0 0
    %1255 = vmatprep.subr.bf16.mxu0 0
    %1256 = vmatpush1.bf16.msra.mxu0 0
    %1257 = vmatprep.subr.bf16.mxu0 0
    %1258 = vmatpush1.bf16.msra.mxu0 0
    %1259 = vmatprep.subr.bf16.mxu0 0
    %1260 = vmatpush1.bf16.msra.mxu0 0
    %1261 = vmatprep.subr.bf16.mxu0 0
    %1262 = vmatpush1.bf16.msra.mxu0 0
    %1263 = vmatprep.subr.bf16.mxu0 0
    %1264 = vmatpush1.bf16.msra.mxu0 0
    %1265 = vmatprep.subr.bf16.mxu0 0
    %1266 = vmatpush1.bf16.msra.mxu0 0
    %1267 = vmatprep.mubr.bf16.mxu0 0
    %1268 = vmatmul.mubr.bf16.gmra.mrb[0].mxu0 %v335
    %v1269 = vpop.f32.mrb[0].mxu0
    %v1270 = vadd.f32 %v302, %v1269
    %v1271 = vpop.f32.mrb[0].mxu0
    %v1272 = vadd.f32 %v306, %v1271
    %v1273 = vpop.f32.mrb[0].mxu0
    %v1274 = vadd.f32 %v302, %v1273
    %v1275 = vpop.f32.mrb[0].mxu0
    %v1276 = vadd.f32 %v306, %v1275
    %1277 = vdwg.mxu0
    %1278 = vmatprep.subr.bf16.mxu0 %v736
    %1279 = vmatpush1.bf16.msra.mxu0 %v735
    %1280 = vmatprep.subr.bf16.mxu0 %v752
    %1281 = vmatpush1.bf16.msra.mxu0 %v751
    %1282 = vmatprep.subr.bf16.mxu0 %v768
    %1283 = vmatpush1.bf16.msra.mxu0 %v767
    %1284 = vmatprep.subr.bf16.mxu0 %v784
    %1285 = vmatpush1.bf16.msra.mxu0 %v783
    %1286 = vmatprep.subr.bf16.mxu0 %v800
    %1287 = vmatpush1.bf16.msra.mxu0 %v799
    %1288 = vmatprep.subr.bf16.mxu0 %v816
    %1289 = vmatpush1.bf16.msra.mxu0 %v815
    %1290 = vmatprep.subr.bf16.mxu0 %v832
    %1291 = vmatpush1.bf16.msra.mxu0 %v831
    %1292 = vmatprep.subr.bf16.mxu0 %v848
    %1293 = vmatpush1.bf16.msra.mxu0 %v847
    %1294 = vmatprep.subr.bf16.mxu0 0
    %1295 = vmatpush1.bf16.msra.mxu0 0
    %1296 = vmatprep.subr.bf16.mxu0 0
    %1297 = vmatpush1.bf16.msra.mxu0 0
    %1298 = vmatprep.subr.bf16.mxu0 0
    %1299 = vmatpush1.bf16.msra.mxu0 0
    %1300 = vmatprep.subr.bf16.mxu0 0
    %1301 = vmatpush1.bf16.msra.mxu0 0
    %1302 = vmatprep.subr.bf16.mxu0 0
    %1303 = vmatpush1.bf16.msra.mxu0 0
    %1304 = vmatprep.subr.bf16.mxu0 0
    %1305 = vmatpush1.bf16.msra.mxu0 0
    %1306 = vmatprep.subr.bf16.mxu0 0
    %1307 = vmatpush1.bf16.msra.mxu0 0
    %1308 = vmatprep.subr.bf16.mxu0 0
    %1309 = vmatpush1.bf16.msra.mxu0 0
    %1310 = vmatprep.mubr.bf16.mxu0 0
    %1311 = vmatmul.mubr.bf16.gmra.mrb[0].mxu0 %v335
    %v1312 = vpop.f32.mrb[0].mxu0
    %v1313 = vadd.f32 %v310, %v1312
    %v1314 = vpop.f32.mrb[0].mxu0
    %v1315 = vadd.f32 %v314, %v1314
    %v1316 = vpop.f32.mrb[0].mxu0
    %v1317 = vadd.f32 %v310, %v1316
    %v1318 = vpop.f32.mrb[0].mxu0
    %v1319 = vadd.f32 %v314, %v1318
    %1320 = vdwg.mxu0
    %v1321 = vmul.f32 %v1012, 0.01
    %v1322 = vmul.f32 %v1014, 0.01
    %v1323 = vmul.f32 %v1055, 0.01
    %v1324 = vmul.f32 %v1057, 0.01
    %v1325 = vmul.f32 %v1098, 0.01
    %v1326 = vmul.f32 %v1100, 0.01
    %v1327 = vmul.f32 %v1141, 0.01
    %v1328 = vmul.f32 %v1143, 0.01
    %v1329 = vmul.f32 %v1184, 0.01
    %v1330 = vmul.f32 %v1186, 0.01
    %v1331 = vmul.f32 %v1227, 0.01
    %v1332 = vmul.f32 %v1229, 0.01
    %v1333 = vmul.f32 %v1270, 0.01
    %v1334 = vmul.f32 %v1272, 0.01
    %v1335 = vmul.f32 %v1313, 0.01
    %v1336 = vmul.f32 %v1315, 0.01
    %v1337 = vmul.f32 %v1016, 0.01
    %v1338 = vmul.f32 %v1018, 0.01
    %v1339 = vmul.f32 %v1059, 0.01
    %v1340 = vmul.f32 %v1061, 0.01
    %v1341 = vmul.f32 %v1102, 0.01
    %v1342 = vmul.f32 %v1104, 0.01
    %v1343 = vmul.f32 %v1145, 0.01
    %v1344 = vmul.f32 %v1147, 0.01
    %v1345 = vmul.f32 %v1188, 0.01
    %v1346 = vmul.f32 %v1190, 0.01
    %v1347 = vmul.f32 %v1231, 0.01
    %v1348 = vmul.f32 %v1233, 0.01
    %v1349 = vmul.f32 %v1274, 0.01
    %v1350 = vmul.f32 %v1276, 0.01
    %v1351 = vmul.f32 %v1317, 0.01
    %v1352 = vmul.f32 %v1319, 0.01
    %v1353 = vmax.f32 %v1012, %v1321
    %v1354 = vmax.f32 %v1014, %v1322
    %v1355 = vmax.f32 %v1055, %v1323
    %v1356 = vmax.f32 %v1057, %v1324
    %v1357 = vmax.f32 %v1098, %v1325
    %v1358 = vmax.f32 %v1100, %v1326
    %v1359 = vmax.f32 %v1141, %v1327
    %v1360 = vmax.f32 %v1143, %v1328
    %v1361 = vmax.f32 %v1184, %v1329
    %v1362 = vmax.f32 %v1186, %v1330
    %v1363 = vmax.f32 %v1227, %v1331
    %v1364 = vmax.f32 %v1229, %v1332
    %v1365 = vmax.f32 %v1270, %v1333
    %v1366 = vmax.f32 %v1272, %v1334
    %v1367 = vmax.f32 %v1313, %v1335
    %v1368 = vmax.f32 %v1315, %v1336
    %v1369 = vmax.f32 %v1016, %v1337
    %v1370 = vmax.f32 %v1018, %v1338
    %v1371 = vmax.f32 %v1059, %v1339
    %v1372 = vmax.f32 %v1061, %v1340
    %v1373 = vmax.f32 %v1102, %v1341
    %v1374 = vmax.f32 %v1104, %v1342
    %v1375 = vmax.f32 %v1145, %v1343
    %v1376 = vmax.f32 %v1147, %v1344
    %v1377 = vmax.f32 %v1188, %v1345
    %v1378 = vmax.f32 %v1190, %v1346
    %v1379 = vmax.f32 %v1231, %v1347
    %v1380 = vmax.f32 %v1233, %v1348
    %v1381 = vmax.f32 %v1274, %v1349
    %v1382 = vmax.f32 %v1276, %v1350
    %v1383 = vmax.f32 %v1317, %v1351
    %v1384 = vmax.f32 %v1319, %v1352
    %v1385 = vmax.f32 %v1353, %v1361
    %v1386 = vmax.f32 %v1354, %v1362
    %v1387 = vmax.f32 %v1355, %v1363
    %v1388 = vmax.f32 %v1356, %v1364
    %v1389 = vmax.f32 %v1357, %v1365
    %v1390 = vmax.f32 %v1358, %v1366
    %v1391 = vmax.f32 %v1359, %v1367
    %v1392 = vmax.f32 %v1360, %v1368
    %v1393 = vmax.f32 %v1369, %v1377
    %v1394 = vmax.f32 %v1370, %v1378
    %v1395 = vmax.f32 %v1371, %v1379
    %v1396 = vmax.f32 %v1372, %v1380
    %v1397 = vmax.f32 %v1373, %v1381
    %v1398 = vmax.f32 %v1374, %v1382
    %v1399 = vmax.f32 %v1375, %v1383
    %v1400 = vmax.f32 %v1376, %v1384
    %v1401 = vpack.c.bf16 %v1393, %v1385
    %v1402 = vpack.c.bf16 %v1394, %v1386
    %v1403 = vpack.c.bf16 %v1395, %v1387
    %v1404 = vpack.c.bf16 %v1396, %v1388
    %v1405 = vpack.c.bf16 %v1397, %v1389
    %v1406 = vpack.c.bf16 %v1398, %v1390
    %v1407 = vpack.c.bf16 %v1399, %v1391
    %v1408 = vpack.c.bf16 %v1400, %v1392
    %v1409 = vld [vmem:[#allocation8] sm:$0xff]
    %v1410 = vld [vmem:[#allocation8 + $0x8] sm:$0xff]
    %v1411 = vld [vmem:[#allocation8 + $0x10] sm:$0xff]
    %v1412 = vld [vmem:[#allocation8 + $0x18] sm:$0xff]
    %v1413 = vld [vmem:[#allocation8 + $0x20] sm:$0xff]
    %v1414 = vld [vmem:[#allocation8 + $0x28] sm:$0xff]
    %v1415 = vld [vmem:[#allocation8 + $0x30] sm:$0xff]
    %v1416 = vld [vmem:[#allocation8 + $0x38] sm:$0xff]
    %v1417 = vld [vmem:[#allocation8 + $0x40] sm:$0xff]
    %v1418 = vld [vmem:[#allocation8 + $0x48] sm:$0xff]
    %v1419 = vld [vmem:[#allocation8 + $0x50] sm:$0xff]
    %v1420 = vld [vmem:[#allocation8 + $0x58] sm:$0xff]
    %v1421 = vld [vmem:[#allocation8 + $0x60] sm:$0xff]
    %v1422 = vld [vmem:[#allocation8 + $0x68] sm:$0xff]
    %v1423 = vld [vmem:[#allocation8 + $0x70] sm:$0xff]
    %v1424 = vld [vmem:[#allocation8 + $0x78] sm:$0xff]
    %v1425 = vld [vmem:[#allocation8 + $0x80] sm:$0xff]
    %v1426 = vld [vmem:[#allocation8 + $0x88] sm:$0xff]
    %v1427 = vld [vmem:[#allocation8 + $0x90] sm:$0xff]
    %v1428 = vld [vmem:[#allocation8 + $0x98] sm:$0xff]
    %v1429 = vld [vmem:[#allocation8 + $0xa0] sm:$0xff]
    %v1430 = vld [vmem:[#allocation8 + $0xa8] sm:$0xff]
    %v1431 = vld [vmem:[#allocation8 + $0xb0] sm:$0xff]
    %v1432 = vld [vmem:[#allocation8 + $0xb8] sm:$0xff]
    %v1433 = vld [vmem:[#allocation8 + $0xc0] sm:$0xff]
    %v1434 = vld [vmem:[#allocation8 + $0xc8] sm:$0xff]
    %v1435 = vld [vmem:[#allocation8 + $0xd0] sm:$0xff]
    %v1436 = vld [vmem:[#allocation8 + $0xd8] sm:$0xff]
    %v1437 = vld [vmem:[#allocation8 + $0xe0] sm:$0xff]
    %v1438 = vld [vmem:[#allocation8 + $0xe8] sm:$0xff]
    %v1439 = vld [vmem:[#allocation8 + $0xf0] sm:$0xff]
    %v1440 = vld [vmem:[#allocation8 + $0xf8] sm:$0xff]
    %v1441 = vld [vmem:[#allocation8 + $0x100] sm:$0xff]
    %v1442 = vld [vmem:[#allocation8 + $0x108] sm:$0xff]
    %v1443 = vld [vmem:[#allocation8 + $0x110] sm:$0xff]
    %v1444 = vld [vmem:[#allocation8 + $0x118] sm:$0xff]
    %v1445 = vld [vmem:[#allocation8 + $0x120] sm:$0xff]
    %v1446 = vld [vmem:[#allocation8 + $0x128] sm:$0xff]
    %v1447 = vld [vmem:[#allocation8 + $0x130] sm:$0xff]
    %v1448 = vld [vmem:[#allocation8 + $0x138] sm:$0xff]
    %v1449 = vld [vmem:[#allocation8 + $0x140] sm:$0xff]
    %v1450 = vld [vmem:[#allocation8 + $0x148] sm:$0xff]
    %v1451 = vld [vmem:[#allocation8 + $0x150] sm:$0xff]
    %v1452 = vld [vmem:[#allocation8 + $0x158] sm:$0xff]
    %v1453 = vld [vmem:[#allocation8 + $0x160] sm:$0xff]
    %v1454 = vld [vmem:[#allocation8 + $0x168] sm:$0xff]
    %v1455 = vld [vmem:[#allocation8 + $0x170] sm:$0xff]
    %v1456 = vld [vmem:[#allocation8 + $0x178] sm:$0xff]
    %v1457 = vld [vmem:[#allocation8 + $0x180] sm:$0xff]
    %v1458 = vld [vmem:[#allocation8 + $0x188] sm:$0xff]
    %v1459 = vld [vmem:[#allocation8 + $0x190] sm:$0xff]
    %v1460 = vld [vmem:[#allocation8 + $0x198] sm:$0xff]
    %v1461 = vld [vmem:[#allocation8 + $0x1a0] sm:$0xff]
    %v1462 = vld [vmem:[#allocation8 + $0x1a8] sm:$0xff]
    %v1463 = vld [vmem:[#allocation8 + $0x1b0] sm:$0xff]
    %v1464 = vld [vmem:[#allocation8 + $0x1b8] sm:$0xff]
    %v1465 = vld [vmem:[#allocation8 + $0x1c0] sm:$0xff]
    %v1466 = vld [vmem:[#allocation8 + $0x1c8] sm:$0xff]
    %v1467 = vld [vmem:[#allocation8 + $0x1d0] sm:$0xff]
    %v1468 = vld [vmem:[#allocation8 + $0x1d8] sm:$0xff]
    %v1469 = vld [vmem:[#allocation8 + $0x1e0] sm:$0xff]
    %v1470 = vld [vmem:[#allocation8 + $0x1e8] sm:$0xff]
    %v1471 = vld [vmem:[#allocation8 + $0x1f0] sm:$0xff]
    %v1472 = vld [vmem:[#allocation8 + $0x1f8] sm:$0xff]
    %v1473 = vld [vmem:[#allocation8 + $0x200] sm:$0xff]
    %v1474 = vld [vmem:[#allocation8 + $0x208] sm:$0xff]
    %v1475 = vld [vmem:[#allocation8 + $0x210] sm:$0xff]
    %v1476 = vld [vmem:[#allocation8 + $0x218] sm:$0xff]
    %v1477 = vld [vmem:[#allocation8 + $0x220] sm:$0xff]
    %v1478 = vld [vmem:[#allocation8 + $0x228] sm:$0xff]
    %v1479 = vld [vmem:[#allocation8 + $0x230] sm:$0xff]
    %v1480 = vld [vmem:[#allocation8 + $0x238] sm:$0xff]
    %v1481 = vld [vmem:[#allocation8 + $0x240] sm:$0xff]
    %v1482 = vld [vmem:[#allocation8 + $0x248] sm:$0xff]
    %v1483 = vld [vmem:[#allocation8 + $0x250] sm:$0xff]
    %v1484 = vld [vmem:[#allocation8 + $0x258] sm:$0xff]
    %v1485 = vld [vmem:[#allocation8 + $0x260] sm:$0xff]
    %v1486 = vld [vmem:[#allocation8 + $0x268] sm:$0xff]
    %v1487 = vld [vmem:[#allocation8 + $0x270] sm:$0xff]
    %v1488 = vld [vmem:[#allocation8 + $0x278] sm:$0xff]
    %v1489 = vld [vmem:[#allocation8 + $0x280] sm:$0xff]
    %v1490 = vld [vmem:[#allocation8 + $0x288] sm:$0xff]
    %v1491 = vld [vmem:[#allocation8 + $0x290] sm:$0xff]
    %v1492 = vld [vmem:[#allocation8 + $0x298] sm:$0xff]
    %v1493 = vld [vmem:[#allocation8 + $0x2a0] sm:$0xff]
    %v1494 = vld [vmem:[#allocation8 + $0x2a8] sm:$0xff]
    %v1495 = vld [vmem:[#allocation8 + $0x2b0] sm:$0xff]
    %v1496 = vld [vmem:[#allocation8 + $0x2b8] sm:$0xff]
    %v1497 = vld [vmem:[#allocation8 + $0x2c0] sm:$0xff]
    %v1498 = vld [vmem:[#allocation8 + $0x2c8] sm:$0xff]
    %v1499 = vld [vmem:[#allocation8 + $0x2d0] sm:$0xff]
    %v1500 = vld [vmem:[#allocation8 + $0x2d8] sm:$0xff]
    %v1501 = vld [vmem:[#allocation8 + $0x2e0] sm:$0xff]
    %v1502 = vld [vmem:[#allocation8 + $0x2e8] sm:$0xff]
    %v1503 = vld [vmem:[#allocation8 + $0x2f0] sm:$0xff]
    %v1504 = vld [vmem:[#allocation8 + $0x2f8] sm:$0xff]
    %v1505 = vld [vmem:[#allocation8 + $0x300] sm:$0xff]
    %v1506 = vld [vmem:[#allocation8 + $0x308] sm:$0xff]
    %v1507 = vld [vmem:[#allocation8 + $0x310] sm:$0xff]
    %v1508 = vld [vmem:[#allocation8 + $0x318] sm:$0xff]
    %v1509 = vld [vmem:[#allocation8 + $0x320] sm:$0xff]
    %v1510 = vld [vmem:[#allocation8 + $0x328] sm:$0xff]
    %v1511 = vld [vmem:[#allocation8 + $0x330] sm:$0xff]
    %v1512 = vld [vmem:[#allocation8 + $0x338] sm:$0xff]
    %v1513 = vld [vmem:[#allocation8 + $0x340] sm:$0xff]
    %v1514 = vld [vmem:[#allocation8 + $0x348] sm:$0xff]
    %v1515 = vld [vmem:[#allocation8 + $0x350] sm:$0xff]
    %v1516 = vld [vmem:[#allocation8 + $0x358] sm:$0xff]
    %v1517 = vld [vmem:[#allocation8 + $0x360] sm:$0xff]
    %v1518 = vld [vmem:[#allocation8 + $0x368] sm:$0xff]
    %v1519 = vld [vmem:[#allocation8 + $0x370] sm:$0xff]
    %v1520 = vld [vmem:[#allocation8 + $0x378] sm:$0xff]
    %v1521 = vld [vmem:[#allocation8 + $0x380] sm:$0xff]
    %v1522 = vld [vmem:[#allocation8 + $0x388] sm:$0xff]
    %v1523 = vld [vmem:[#allocation8 + $0x390] sm:$0xff]
    %v1524 = vld [vmem:[#allocation8 + $0x398] sm:$0xff]
    %v1525 = vld [vmem:[#allocation8 + $0x3a0] sm:$0xff]
    %v1526 = vld [vmem:[#allocation8 + $0x3a8] sm:$0xff]
    %v1527 = vld [vmem:[#allocation8 + $0x3b0] sm:$0xff]
    %v1528 = vld [vmem:[#allocation8 + $0x3b8] sm:$0xff]
    %v1529 = vld [vmem:[#allocation8 + $0x3c0] sm:$0xff]
    %v1530 = vld [vmem:[#allocation8 + $0x3c8] sm:$0xff]
    %v1531 = vld [vmem:[#allocation8 + $0x3d0] sm:$0xff]
    %v1532 = vld [vmem:[#allocation8 + $0x3d8] sm:$0xff]
    %v1533 = vld [vmem:[#allocation8 + $0x3e0] sm:$0xff]
    %v1534 = vld [vmem:[#allocation8 + $0x3e8] sm:$0xff]
    %v1535 = vld [vmem:[#allocation8 + $0x3f0] sm:$0xff]
    %v1536 = vld [vmem:[#allocation8 + $0x3f8] sm:$0xff]
    %v1537 = vld [vmem:[#allocation8 + $0x400] sm:$0xff]
    %v1538 = vld [vmem:[#allocation8 + $0x408] sm:$0xff]
    %v1539 = vld [vmem:[#allocation8 + $0x410] sm:$0xff]
    %v1540 = vld [vmem:[#allocation8 + $0x418] sm:$0xff]
    %v1541 = vld [vmem:[#allocation8 + $0x420] sm:$0xff]
    %v1542 = vld [vmem:[#allocation8 + $0x428] sm:$0xff]
    %v1543 = vld [vmem:[#allocation8 + $0x430] sm:$0xff]
    %v1544 = vld [vmem:[#allocation8 + $0x438] sm:$0xff]
    %v1545 = vld [vmem:[#allocation8 + $0x440] sm:$0xff]
    %v1546 = vld [vmem:[#allocation8 + $0x448] sm:$0xff]
    %v1547 = vld [vmem:[#allocation8 + $0x450] sm:$0xff]
    %v1548 = vld [vmem:[#allocation8 + $0x458] sm:$0xff]
    %v1549 = vld [vmem:[#allocation8 + $0x460] sm:$0xff]
    %v1550 = vld [vmem:[#allocation8 + $0x468] sm:$0xff]
    %v1551 = vld [vmem:[#allocation8 + $0x470] sm:$0xff]
    %v1552 = vld [vmem:[#allocation8 + $0x478] sm:$0xff]
    %v1553 = vld [vmem:[#allocation8 + $0x480] sm:$0xff]
    %v1554 = vld [vmem:[#allocation8 + $0x488] sm:$0xff]
    %v1555 = vld [vmem:[#allocation8 + $0x490] sm:$0xff]
    %v1556 = vld [vmem:[#allocation8 + $0x498] sm:$0xff]
    %v1557 = vld [vmem:[#allocation8 + $0x4a0] sm:$0xff]
    %v1558 = vld [vmem:[#allocation8 + $0x4a8] sm:$0xff]
    %v1559 = vld [vmem:[#allocation8 + $0x4b0] sm:$0xff]
    %v1560 = vld [vmem:[#allocation8 + $0x4b8] sm:$0xff]
    %v1561 = vld [vmem:[#allocation8 + $0x4c0] sm:$0xff]
    %v1562 = vld [vmem:[#allocation8 + $0x4c8] sm:$0xff]
    %v1563 = vld [vmem:[#allocation8 + $0x4d0] sm:$0xff]
    %v1564 = vld [vmem:[#allocation8 + $0x4d8] sm:$0xff]
    %v1565 = vld [vmem:[#allocation8 + $0x4e0] sm:$0xff]
    %v1566 = vld [vmem:[#allocation8 + $0x4e8] sm:$0xff]
    %v1567 = vld [vmem:[#allocation8 + $0x4f0] sm:$0xff]
    %v1568 = vld [vmem:[#allocation8 + $0x4f8] sm:$0xff]
    %v1569 = vld [vmem:[#allocation8 + $0x500] sm:$0xff]
    %v1570 = vld [vmem:[#allocation8 + $0x508] sm:$0xff]
    %v1571 = vld [vmem:[#allocation8 + $0x510] sm:$0xff]
    %v1572 = vld [vmem:[#allocation8 + $0x518] sm:$0xff]
    %v1573 = vld [vmem:[#allocation8 + $0x520] sm:$0xff]
    %v1574 = vld [vmem:[#allocation8 + $0x528] sm:$0xff]
    %v1575 = vld [vmem:[#allocation8 + $0x530] sm:$0xff]
    %v1576 = vld [vmem:[#allocation8 + $0x538] sm:$0xff]
    %v1577 = vld [vmem:[#allocation8 + $0x540] sm:$0xff]
    %v1578 = vld [vmem:[#allocation8 + $0x548] sm:$0xff]
    %v1579 = vld [vmem:[#allocation8 + $0x550] sm:$0xff]
    %v1580 = vld [vmem:[#allocation8 + $0x558] sm:$0xff]
    %v1581 = vld [vmem:[#allocation8 + $0x560] sm:$0xff]
    %v1582 = vld [vmem:[#allocation8 + $0x568] sm:$0xff]
    %v1583 = vld [vmem:[#allocation8 + $0x570] sm:$0xff]
    %v1584 = vld [vmem:[#allocation8 + $0x578] sm:$0xff]
    %v1585 = vld [vmem:[#allocation8 + $0x580] sm:$0xff]
    %v1586 = vld [vmem:[#allocation8 + $0x588] sm:$0xff]
    %v1587 = vld [vmem:[#allocation8 + $0x590] sm:$0xff]
    %v1588 = vld [vmem:[#allocation8 + $0x598] sm:$0xff]
    %v1589 = vld [vmem:[#allocation8 + $0x5a0] sm:$0xff]
    %v1590 = vld [vmem:[#allocation8 + $0x5a8] sm:$0xff]
    %v1591 = vld [vmem:[#allocation8 + $0x5b0] sm:$0xff]
    %v1592 = vld [vmem:[#allocation8 + $0x5b8] sm:$0xff]
    %v1593 = vld [vmem:[#allocation8 + $0x5c0] sm:$0xff]
    %v1594 = vld [vmem:[#allocation8 + $0x5c8] sm:$0xff]
    %v1595 = vld [vmem:[#allocation8 + $0x5d0] sm:$0xff]
    %v1596 = vld [vmem:[#allocation8 + $0x5d8] sm:$0xff]
    %v1597 = vld [vmem:[#allocation8 + $0x5e0] sm:$0xff]
    %v1598 = vld [vmem:[#allocation8 + $0x5e8] sm:$0xff]
    %v1599 = vld [vmem:[#allocation8 + $0x5f0] sm:$0xff]
    %v1600 = vld [vmem:[#allocation8 + $0x5f8] sm:$0xff]
    %v1601 = vld [vmem:[#allocation8 + $0x600] sm:$0xff]
    %v1602 = vld [vmem:[#allocation8 + $0x608] sm:$0xff]
    %v1603 = vld [vmem:[#allocation8 + $0x610] sm:$0xff]
    %v1604 = vld [vmem:[#allocation8 + $0x618] sm:$0xff]
    %v1605 = vld [vmem:[#allocation8 + $0x620] sm:$0xff]
    %v1606 = vld [vmem:[#allocation8 + $0x628] sm:$0xff]
    %v1607 = vld [vmem:[#allocation8 + $0x630] sm:$0xff]
    %v1608 = vld [vmem:[#allocation8 + $0x638] sm:$0xff]
    %v1609 = vld [vmem:[#allocation8 + $0x640] sm:$0xff]
    %v1610 = vld [vmem:[#allocation8 + $0x648] sm:$0xff]
    %v1611 = vld [vmem:[#allocation8 + $0x650] sm:$0xff]
    %v1612 = vld [vmem:[#allocation8 + $0x658] sm:$0xff]
    %v1613 = vld [vmem:[#allocation8 + $0x660] sm:$0xff]
    %v1614 = vld [vmem:[#allocation8 + $0x668] sm:$0xff]
    %v1615 = vld [vmem:[#allocation8 + $0x670] sm:$0xff]
    %v1616 = vld [vmem:[#allocation8 + $0x678] sm:$0xff]
    %v1617 = vld [vmem:[#allocation8 + $0x680] sm:$0xff]
    %v1618 = vld [vmem:[#allocation8 + $0x688] sm:$0xff]
    %v1619 = vld [vmem:[#allocation8 + $0x690] sm:$0xff]
    %v1620 = vld [vmem:[#allocation8 + $0x698] sm:$0xff]
    %v1621 = vld [vmem:[#allocation8 + $0x6a0] sm:$0xff]
    %v1622 = vld [vmem:[#allocation8 + $0x6a8] sm:$0xff]
    %v1623 = vld [vmem:[#allocation8 + $0x6b0] sm:$0xff]
    %v1624 = vld [vmem:[#allocation8 + $0x6b8] sm:$0xff]
    %v1625 = vld [vmem:[#allocation8 + $0x6c0] sm:$0xff]
    %v1626 = vld [vmem:[#allocation8 + $0x6c8] sm:$0xff]
    %v1627 = vld [vmem:[#allocation8 + $0x6d0] sm:$0xff]
    %v1628 = vld [vmem:[#allocation8 + $0x6d8] sm:$0xff]
    %v1629 = vld [vmem:[#allocation8 + $0x6e0] sm:$0xff]
    %v1630 = vld [vmem:[#allocation8 + $0x6e8] sm:$0xff]
    %v1631 = vld [vmem:[#allocation8 + $0x6f0] sm:$0xff]
    %v1632 = vld [vmem:[#allocation8 + $0x6f8] sm:$0xff]
    %v1633 = vld [vmem:[#allocation8 + $0x700] sm:$0xff]
    %v1634 = vld [vmem:[#allocation8 + $0x708] sm:$0xff]
    %v1635 = vld [vmem:[#allocation8 + $0x710] sm:$0xff]
    %v1636 = vld [vmem:[#allocation8 + $0x718] sm:$0xff]
    %v1637 = vld [vmem:[#allocation8 + $0x720] sm:$0xff]
    %v1638 = vld [vmem:[#allocation8 + $0x728] sm:$0xff]
    %v1639 = vld [vmem:[#allocation8 + $0x730] sm:$0xff]
    %v1640 = vld [vmem:[#allocation8 + $0x738] sm:$0xff]
    %v1641 = vld [vmem:[#allocation8 + $0x740] sm:$0xff]
    %v1642 = vld [vmem:[#allocation8 + $0x748] sm:$0xff]
    %v1643 = vld [vmem:[#allocation8 + $0x750] sm:$0xff]
    %v1644 = vld [vmem:[#allocation8 + $0x758] sm:$0xff]
    %v1645 = vld [vmem:[#allocation8 + $0x760] sm:$0xff]
    %v1646 = vld [vmem:[#allocation8 + $0x768] sm:$0xff]
    %v1647 = vld [vmem:[#allocation8 + $0x770] sm:$0xff]
    %v1648 = vld [vmem:[#allocation8 + $0x778] sm:$0xff]
    %v1649 = vld [vmem:[#allocation8 + $0x780] sm:$0xff]
    %v1650 = vld [vmem:[#allocation8 + $0x788] sm:$0xff]
    %v1651 = vld [vmem:[#allocation8 + $0x790] sm:$0xff]
    %v1652 = vld [vmem:[#allocation8 + $0x798] sm:$0xff]
    %v1653 = vld [vmem:[#allocation8 + $0x7a0] sm:$0xff]
    %v1654 = vld [vmem:[#allocation8 + $0x7a8] sm:$0xff]
    %v1655 = vld [vmem:[#allocation8 + $0x7b0] sm:$0xff]
    %v1656 = vld [vmem:[#allocation8 + $0x7b8] sm:$0xff]
    %v1657 = vld [vmem:[#allocation8 + $0x7c0] sm:$0xff]
    %v1658 = vld [vmem:[#allocation8 + $0x7c8] sm:$0xff]
    %v1659 = vld [vmem:[#allocation8 + $0x7d0] sm:$0xff]
    %v1660 = vld [vmem:[#allocation8 + $0x7d8] sm:$0xff]
    %v1661 = vld [vmem:[#allocation8 + $0x7e0] sm:$0xff]
    %v1662 = vld [vmem:[#allocation8 + $0x7e8] sm:$0xff]
    %v1663 = vld [vmem:[#allocation8 + $0x7f0] sm:$0xff]
    %v1664 = vld [vmem:[#allocation8 + $0x7f8] sm:$0xff]
    %v1665 = vld [vmem:[#allocation8 + $0x800] sm:$0xff]
    %v1666 = vld [vmem:[#allocation8 + $0x808] sm:$0xff]
    %v1667 = vld [vmem:[#allocation8 + $0x810] sm:$0xff]
    %v1668 = vld [vmem:[#allocation8 + $0x818] sm:$0xff]
    %v1669 = vld [vmem:[#allocation8 + $0x820] sm:$0xff]
    %v1670 = vld [vmem:[#allocation8 + $0x828] sm:$0xff]
    %v1671 = vld [vmem:[#allocation8 + $0x830] sm:$0xff]
    %v1672 = vld [vmem:[#allocation8 + $0x838] sm:$0xff]
    %v1673 = vld [vmem:[#allocation8 + $0x840] sm:$0xff]
    %v1674 = vld [vmem:[#allocation8 + $0x848] sm:$0xff]
    %v1675 = vld [vmem:[#allocation8 + $0x850] sm:$0xff]
    %v1676 = vld [vmem:[#allocation8 + $0x858] sm:$0xff]
    %v1677 = vld [vmem:[#allocation8 + $0x860] sm:$0xff]
    %v1678 = vld [vmem:[#allocation8 + $0x868] sm:$0xff]
    %v1679 = vld [vmem:[#allocation8 + $0x870] sm:$0xff]
    %v1680 = vld [vmem:[#allocation8 + $0x878] sm:$0xff]
    %v1681 = vld [vmem:[#allocation8 + $0x880] sm:$0xff]
    %v1682 = vld [vmem:[#allocation8 + $0x888] sm:$0xff]
    %v1683 = vld [vmem:[#allocation8 + $0x890] sm:$0xff]
    %v1684 = vld [vmem:[#allocation8 + $0x898] sm:$0xff]
    %v1685 = vld [vmem:[#allocation8 + $0x8a0] sm:$0xff]
    %v1686 = vld [vmem:[#allocation8 + $0x8a8] sm:$0xff]
    %v1687 = vld [vmem:[#allocation8 + $0x8b0] sm:$0xff]
    %v1688 = vld [vmem:[#allocation8 + $0x8b8] sm:$0xff]
    %v1689 = vld [vmem:[#allocation8 + $0x8c0] sm:$0xff]
    %v1690 = vld [vmem:[#allocation8 + $0x8c8] sm:$0xff]
    %v1691 = vld [vmem:[#allocation8 + $0x8d0] sm:$0xff]
    %v1692 = vld [vmem:[#allocation8 + $0x8d8] sm:$0xff]
    %v1693 = vld [vmem:[#allocation8 + $0x8e0] sm:$0xff]
    %v1694 = vld [vmem:[#allocation8 + $0x8e8] sm:$0xff]
    %v1695 = vld [vmem:[#allocation8 + $0x8f0] sm:$0xff]
    %v1696 = vld [vmem:[#allocation8 + $0x8f8] sm:$0xff]
    %v1697 = vld [vmem:[#allocation8 + $0x900] sm:$0xff]
    %v1698 = vld [vmem:[#allocation8 + $0x908] sm:$0xff]
    %v1699 = vld [vmem:[#allocation8 + $0x910] sm:$0xff]
    %v1700 = vld [vmem:[#allocation8 + $0x918] sm:$0xff]
    %v1701 = vld [vmem:[#allocation8 + $0x920] sm:$0xff]
    %v1702 = vld [vmem:[#allocation8 + $0x928] sm:$0xff]
    %v1703 = vld [vmem:[#allocation8 + $0x930] sm:$0xff]
    %v1704 = vld [vmem:[#allocation8 + $0x938] sm:$0xff]
    %v1705 = vld [vmem:[#allocation8 + $0x940] sm:$0xff]
    %v1706 = vld [vmem:[#allocation8 + $0x948] sm:$0xff]
    %v1707 = vld [vmem:[#allocation8 + $0x950] sm:$0xff]
    %v1708 = vld [vmem:[#allocation8 + $0x958] sm:$0xff]
    %v1709 = vld [vmem:[#allocation8 + $0x960] sm:$0xff]
    %v1710 = vld [vmem:[#allocation8 + $0x968] sm:$0xff]
    %v1711 = vld [vmem:[#allocation8 + $0x970] sm:$0xff]
    %v1712 = vld [vmem:[#allocation8 + $0x978] sm:$0xff]
    %v1713 = vld [vmem:[#allocation8 + $0x980] sm:$0xff]
    %v1714 = vld [vmem:[#allocation8 + $0x988] sm:$0xff]
    %v1715 = vld [vmem:[#allocation8 + $0x990] sm:$0xff]
    %v1716 = vld [vmem:[#allocation8 + $0x998] sm:$0xff]
    %v1717 = vld [vmem:[#allocation8 + $0x9a0] sm:$0xff]
    %v1718 = vld [vmem:[#allocation8 + $0x9a8] sm:$0xff]
    %v1719 = vld [vmem:[#allocation8 + $0x9b0] sm:$0xff]
    %v1720 = vld [vmem:[#allocation8 + $0x9b8] sm:$0xff]
    %v1721 = vld [vmem:[#allocation8 + $0x9c0] sm:$0xff]
    %v1722 = vld [vmem:[#allocation8 + $0x9c8] sm:$0xff]
    %v1723 = vld [vmem:[#allocation8 + $0x9d0] sm:$0xff]
    %v1724 = vld [vmem:[#allocation8 + $0x9d8] sm:$0xff]
    %v1725 = vld [vmem:[#allocation8 + $0x9e0] sm:$0xff]
    %v1726 = vld [vmem:[#allocation8 + $0x9e8] sm:$0xff]
    %v1727 = vld [vmem:[#allocation8 + $0x9f0] sm:$0xff]
    %v1728 = vld [vmem:[#allocation8 + $0x9f8] sm:$0xff]
    %v1729 = vld [vmem:[#allocation8 + $0xa00] sm:$0xff]
    %v1730 = vld [vmem:[#allocation8 + $0xa08] sm:$0xff]
    %v1731 = vld [vmem:[#allocation8 + $0xa10] sm:$0xff]
    %v1732 = vld [vmem:[#allocation8 + $0xa18] sm:$0xff]
    %v1733 = vld [vmem:[#allocation8 + $0xa20] sm:$0xff]
    %v1734 = vld [vmem:[#allocation8 + $0xa28] sm:$0xff]
    %v1735 = vld [vmem:[#allocation8 + $0xa30] sm:$0xff]
    %v1736 = vld [vmem:[#allocation8 + $0xa38] sm:$0xff]
    %v1737 = vld [vmem:[#allocation8 + $0xa40] sm:$0xff]
    %v1738 = vld [vmem:[#allocation8 + $0xa48] sm:$0xff]
    %v1739 = vld [vmem:[#allocation8 + $0xa50] sm:$0xff]
    %v1740 = vld [vmem:[#allocation8 + $0xa58] sm:$0xff]
    %v1741 = vld [vmem:[#allocation8 + $0xa60] sm:$0xff]
    %v1742 = vld [vmem:[#allocation8 + $0xa68] sm:$0xff]
    %v1743 = vld [vmem:[#allocation8 + $0xa70] sm:$0xff]
    %v1744 = vld [vmem:[#allocation8 + $0xa78] sm:$0xff]
    %v1745 = vld [vmem:[#allocation8 + $0xa80] sm:$0xff]
    %v1746 = vld [vmem:[#allocation8 + $0xa88] sm:$0xff]
    %v1747 = vld [vmem:[#allocation8 + $0xa90] sm:$0xff]
    %v1748 = vld [vmem:[#allocation8 + $0xa98] sm:$0xff]
    %v1749 = vld [vmem:[#allocation8 + $0xaa0] sm:$0xff]
    %v1750 = vld [vmem:[#allocation8 + $0xaa8] sm:$0xff]
    %v1751 = vld [vmem:[#allocation8 + $0xab0] sm:$0xff]
    %v1752 = vld [vmem:[#allocation8 + $0xab8] sm:$0xff]
    %v1753 = vld [vmem:[#allocation8 + $0xac0] sm:$0xff]
    %v1754 = vld [vmem:[#allocation8 + $0xac8] sm:$0xff]
    %v1755 = vld [vmem:[#allocation8 + $0xad0] sm:$0xff]
    %v1756 = vld [vmem:[#allocation8 + $0xad8] sm:$0xff]
    %v1757 = vld [vmem:[#allocation8 + $0xae0] sm:$0xff]
    %v1758 = vld [vmem:[#allocation8 + $0xae8] sm:$0xff]
    %v1759 = vld [vmem:[#allocation8 + $0xaf0] sm:$0xff]
    %v1760 = vld [vmem:[#allocation8 + $0xaf8] sm:$0xff]
    %v1761 = vld [vmem:[#allocation8 + $0xb00] sm:$0xff]
    %v1762 = vld [vmem:[#allocation8 + $0xb08] sm:$0xff]
    %v1763 = vld [vmem:[#allocation8 + $0xb10] sm:$0xff]
    %v1764 = vld [vmem:[#allocation8 + $0xb18] sm:$0xff]
    %v1765 = vld [vmem:[#allocation8 + $0xb20] sm:$0xff]
    %v1766 = vld [vmem:[#allocation8 + $0xb28] sm:$0xff]
    %v1767 = vld [vmem:[#allocation8 + $0xb30] sm:$0xff]
    %v1768 = vld [vmem:[#allocation8 + $0xb38] sm:$0xff]
    %v1769 = vld [vmem:[#allocation8 + $0xb40] sm:$0xff]
    %v1770 = vld [vmem:[#allocation8 + $0xb48] sm:$0xff]
    %v1771 = vld [vmem:[#allocation8 + $0xb50] sm:$0xff]
    %v1772 = vld [vmem:[#allocation8 + $0xb58] sm:$0xff]
    %v1773 = vld [vmem:[#allocation8 + $0xb60] sm:$0xff]
    %v1774 = vld [vmem:[#allocation8 + $0xb68] sm:$0xff]
    %v1775 = vld [vmem:[#allocation8 + $0xb70] sm:$0xff]
    %v1776 = vld [vmem:[#allocation8 + $0xb78] sm:$0xff]
    %v1777 = vld [vmem:[#allocation8 + $0xb80] sm:$0xff]
    %v1778 = vld [vmem:[#allocation8 + $0xb88] sm:$0xff]
    %v1779 = vld [vmem:[#allocation8 + $0xb90] sm:$0xff]
    %v1780 = vld [vmem:[#allocation8 + $0xb98] sm:$0xff]
    %v1781 = vld [vmem:[#allocation8 + $0xba0] sm:$0xff]
    %v1782 = vld [vmem:[#allocation8 + $0xba8] sm:$0xff]
    %v1783 = vld [vmem:[#allocation8 + $0xbb0] sm:$0xff]
    %v1784 = vld [vmem:[#allocation8 + $0xbb8] sm:$0xff]
    %v1785 = vld [vmem:[#allocation8 + $0xbc0] sm:$0xff]
    %v1786 = vld [vmem:[#allocation8 + $0xbc8] sm:$0xff]
    %v1787 = vld [vmem:[#allocation8 + $0xbd0] sm:$0xff]
    %v1788 = vld [vmem:[#allocation8 + $0xbd8] sm:$0xff]
    %v1789 = vld [vmem:[#allocation8 + $0xbe0] sm:$0xff]
    %v1790 = vld [vmem:[#allocation8 + $0xbe8] sm:$0xff]
    %v1791 = vld [vmem:[#allocation8 + $0xbf0] sm:$0xff]
    %v1792 = vld [vmem:[#allocation8 + $0xbf8] sm:$0xff]
    %v1793 = vld [vmem:[#allocation8 + $0xc00] sm:$0xff]
    %v1794 = vld [vmem:[#allocation8 + $0xc08] sm:$0xff]
    %v1795 = vld [vmem:[#allocation8 + $0xc10] sm:$0xff]
    %v1796 = vld [vmem:[#allocation8 + $0xc18] sm:$0xff]
    %v1797 = vld [vmem:[#allocation8 + $0xc20] sm:$0xff]
    %v1798 = vld [vmem:[#allocation8 + $0xc28] sm:$0xff]
    %v1799 = vld [vmem:[#allocation8 + $0xc30] sm:$0xff]
    %v1800 = vld [vmem:[#allocation8 + $0xc38] sm:$0xff]
    %v1801 = vld [vmem:[#allocation8 + $0xc40] sm:$0xff]
    %v1802 = vld [vmem:[#allocation8 + $0xc48] sm:$0xff]
    %v1803 = vld [vmem:[#allocation8 + $0xc50] sm:$0xff]
    %v1804 = vld [vmem:[#allocation8 + $0xc58] sm:$0xff]
    %v1805 = vld [vmem:[#allocation8 + $0xc60] sm:$0xff]
    %v1806 = vld [vmem:[#allocation8 + $0xc68] sm:$0xff]
    %v1807 = vld [vmem:[#allocation8 + $0xc70] sm:$0xff]
    %v1808 = vld [vmem:[#allocation8 + $0xc78] sm:$0xff]
    %v1809 = vld [vmem:[#allocation8 + $0xc80] sm:$0xff]
    %v1810 = vld [vmem:[#allocation8 + $0xc88] sm:$0xff]
    %v1811 = vld [vmem:[#allocation8 + $0xc90] sm:$0xff]
    %v1812 = vld [vmem:[#allocation8 + $0xc98] sm:$0xff]
    %v1813 = vld [vmem:[#allocation8 + $0xca0] sm:$0xff]
    %v1814 = vld [vmem:[#allocation8 + $0xca8] sm:$0xff]
    %v1815 = vld [vmem:[#allocation8 + $0xcb0] sm:$0xff]
    %v1816 = vld [vmem:[#allocation8 + $0xcb8] sm:$0xff]
    %v1817 = vld [vmem:[#allocation8 + $0xcc0] sm:$0xff]
    %v1818 = vld [vmem:[#allocation8 + $0xcc8] sm:$0xff]
    %v1819 = vld [vmem:[#allocation8 + $0xcd0] sm:$0xff]
    %v1820 = vld [vmem:[#allocation8 + $0xcd8] sm:$0xff]
    %v1821 = vld [vmem:[#allocation8 + $0xce0] sm:$0xff]
    %v1822 = vld [vmem:[#allocation8 + $0xce8] sm:$0xff]
    %v1823 = vld [vmem:[#allocation8 + $0xcf0] sm:$0xff]
    %v1824 = vld [vmem:[#allocation8 + $0xcf8] sm:$0xff]
    %v1825 = vld [vmem:[#allocation8 + $0xd00] sm:$0xff]
    %v1826 = vld [vmem:[#allocation8 + $0xd08] sm:$0xff]
    %v1827 = vld [vmem:[#allocation8 + $0xd10] sm:$0xff]
    %v1828 = vld [vmem:[#allocation8 + $0xd18] sm:$0xff]
    %v1829 = vld [vmem:[#allocation8 + $0xd20] sm:$0xff]
    %v1830 = vld [vmem:[#allocation8 + $0xd28] sm:$0xff]
    %v1831 = vld [vmem:[#allocation8 + $0xd30] sm:$0xff]
    %v1832 = vld [vmem:[#allocation8 + $0xd38] sm:$0xff]
    %v1833 = vld [vmem:[#allocation8 + $0xd40] sm:$0xff]
    %v1834 = vld [vmem:[#allocation8 + $0xd48] sm:$0xff]
    %v1835 = vld [vmem:[#allocation8 + $0xd50] sm:$0xff]
    %v1836 = vld [vmem:[#allocation8 + $0xd58] sm:$0xff]
    %v1837 = vld [vmem:[#allocation8 + $0xd60] sm:$0xff]
    %v1838 = vld [vmem:[#allocation8 + $0xd68] sm:$0xff]
    %v1839 = vld [vmem:[#allocation8 + $0xd70] sm:$0xff]
    %v1840 = vld [vmem:[#allocation8 + $0xd78] sm:$0xff]
    %v1841 = vld [vmem:[#allocation8 + $0xd80] sm:$0xff]
    %v1842 = vld [vmem:[#allocation8 + $0xd88] sm:$0xff]
    %v1843 = vld [vmem:[#allocation8 + $0xd90] sm:$0xff]
    %v1844 = vld [vmem:[#allocation8 + $0xd98] sm:$0xff]
    %v1845 = vld [vmem:[#allocation8 + $0xda0] sm:$0xff]
    %v1846 = vld [vmem:[#allocation8 + $0xda8] sm:$0xff]
    %v1847 = vld [vmem:[#allocation8 + $0xdb0] sm:$0xff]
    %v1848 = vld [vmem:[#allocation8 + $0xdb8] sm:$0xff]
    %v1849 = vld [vmem:[#allocation8 + $0xdc0] sm:$0xff]
    %v1850 = vld [vmem:[#allocation8 + $0xdc8] sm:$0xff]
    %v1851 = vld [vmem:[#allocation8 + $0xdd0] sm:$0xff]
    %v1852 = vld [vmem:[#allocation8 + $0xdd8] sm:$0xff]
    %v1853 = vld [vmem:[#allocation8 + $0xde0] sm:$0xff]
    %v1854 = vld [vmem:[#allocation8 + $0xde8] sm:$0xff]
    %v1855 = vld [vmem:[#allocation8 + $0xdf0] sm:$0xff]
    %v1856 = vld [vmem:[#allocation8 + $0xdf8] sm:$0xff]
    %v1857 = vld [vmem:[#allocation8 + $0xe00] sm:$0xff]
    %v1858 = vld [vmem:[#allocation8 + $0xe08] sm:$0xff]
    %v1859 = vld [vmem:[#allocation8 + $0xe10] sm:$0xff]
    %v1860 = vld [vmem:[#allocation8 + $0xe18] sm:$0xff]
    %v1861 = vld [vmem:[#allocation8 + $0xe20] sm:$0xff]
    %v1862 = vld [vmem:[#allocation8 + $0xe28] sm:$0xff]
    %v1863 = vld [vmem:[#allocation8 + $0xe30] sm:$0xff]
    %v1864 = vld [vmem:[#allocation8 + $0xe38] sm:$0xff]
    %v1865 = vld [vmem:[#allocation8 + $0xe40] sm:$0xff]
    %v1866 = vld [vmem:[#allocation8 + $0xe48] sm:$0xff]
    %v1867 = vld [vmem:[#allocation8 + $0xe50] sm:$0xff]
    %v1868 = vld [vmem:[#allocation8 + $0xe58] sm:$0xff]
    %v1869 = vld [vmem:[#allocation8 + $0xe60] sm:$0xff]
    %v1870 = vld [vmem:[#allocation8 + $0xe68] sm:$0xff]
    %v1871 = vld [vmem:[#allocation8 + $0xe70] sm:$0xff]
    %v1872 = vld [vmem:[#allocation8 + $0xe78] sm:$0xff]
    %v1873 = vld [vmem:[#allocation8 + $0xe80] sm:$0xff]
    %v1874 = vld [vmem:[#allocation8 + $0xe88] sm:$0xff]
    %v1875 = vld [vmem:[#allocation8 + $0xe90] sm:$0xff]
    %v1876 = vld [vmem:[#allocation8 + $0xe98] sm:$0xff]
    %v1877 = vld [vmem:[#allocation8 + $0xea0] sm:$0xff]
    %v1878 = vld [vmem:[#allocation8 + $0xea8] sm:$0xff]
    %v1879 = vld [vmem:[#allocation8 + $0xeb0] sm:$0xff]
    %v1880 = vld [vmem:[#allocation8 + $0xeb8] sm:$0xff]
    %v1881 = vld [vmem:[#allocation8 + $0xec0] sm:$0xff]
    %v1882 = vld [vmem:[#allocation8 + $0xec8] sm:$0xff]
    %v1883 = vld [vmem:[#allocation8 + $0xed0] sm:$0xff]
    %v1884 = vld [vmem:[#allocation8 + $0xed8] sm:$0xff]
    %v1885 = vld [vmem:[#allocation8 + $0xee0] sm:$0xff]
    %v1886 = vld [vmem:[#allocation8 + $0xee8] sm:$0xff]
    %v1887 = vld [vmem:[#allocation8 + $0xef0] sm:$0xff]
    %v1888 = vld [vmem:[#allocation8 + $0xef8] sm:$0xff]
    %v1889 = vld [vmem:[#allocation8 + $0xf00] sm:$0xff]
    %v1890 = vld [vmem:[#allocation8 + $0xf08] sm:$0xff]
    %v1891 = vld [vmem:[#allocation8 + $0xf10] sm:$0xff]
    %v1892 = vld [vmem:[#allocation8 + $0xf18] sm:$0xff]
    %v1893 = vld [vmem:[#allocation8 + $0xf20] sm:$0xff]
    %v1894 = vld [vmem:[#allocation8 + $0xf28] sm:$0xff]
    %v1895 = vld [vmem:[#allocation8 + $0xf30] sm:$0xff]
    %v1896 = vld [vmem:[#allocation8 + $0xf38] sm:$0xff]
    %v1897 = vld [vmem:[#allocation8 + $0xf40] sm:$0xff]
    %v1898 = vld [vmem:[#allocation8 + $0xf48] sm:$0xff]
    %v1899 = vld [vmem:[#allocation8 + $0xf50] sm:$0xff]
    %v1900 = vld [vmem:[#allocation8 + $0xf58] sm:$0xff]
    %v1901 = vld [vmem:[#allocation8 + $0xf60] sm:$0xff]
    %v1902 = vld [vmem:[#allocation8 + $0xf68] sm:$0xff]
    %v1903 = vld [vmem:[#allocation8 + $0xf70] sm:$0xff]
    %v1904 = vld [vmem:[#allocation8 + $0xf78] sm:$0xff]
    %v1905 = vld [vmem:[#allocation8 + $0xf80] sm:$0xff]
    %v1906 = vld [vmem:[#allocation8 + $0xf88] sm:$0xff]
    %v1907 = vld [vmem:[#allocation8 + $0xf90] sm:$0xff]
    %v1908 = vld [vmem:[#allocation8 + $0xf98] sm:$0xff]
    %v1909 = vld [vmem:[#allocation8 + $0xfa0] sm:$0xff]
    %v1910 = vld [vmem:[#allocation8 + $0xfa8] sm:$0xff]
    %v1911 = vld [vmem:[#allocation8 + $0xfb0] sm:$0xff]
    %v1912 = vld [vmem:[#allocation8 + $0xfb8] sm:$0xff]
    %v1913 = vld [vmem:[#allocation8 + $0xfc0] sm:$0xff]
    %v1914 = vld [vmem:[#allocation8 + $0xfc8] sm:$0xff]
    %v1915 = vld [vmem:[#allocation8 + $0xfd0] sm:$0xff]
    %v1916 = vld [vmem:[#allocation8 + $0xfd8] sm:$0xff]
    %v1917 = vld [vmem:[#allocation8 + $0xfe0] sm:$0xff]
    %v1918 = vld [vmem:[#allocation8 + $0xfe8] sm:$0xff]
    %v1919 = vld [vmem:[#allocation8 + $0xff0] sm:$0xff]
    %v1920 = vld [vmem:[#allocation8 + $0xff8] sm:$0xff]
    %v1921 = vld [vmem:[#allocation10] sm:$0xff]
    %v1923 = vlaneseq
    %v1924 = vshrl.u32 %v1923, 7
    %v1925 = vsub.s32 0, %v1924
    %v1926 = vrot.slane %v1921, %v1925
    %v1927 = vlaneseq
    %v1928 = vshrl.u32 %v1927, 7
    %v1929 = vsub.s32 1, %v1928
    %v1930 = vrot.slane %v1921, %v1929
    %v1931 = vlaneseq
    %v1932 = vshrl.u32 %v1931, 7
    %v1933 = vsub.s32 2, %v1932
    %v1934 = vrot.slane %v1921, %v1933
    %v1935 = vlaneseq
    %v1936 = vshrl.u32 %v1935, 7
    %v1937 = vsub.s32 3, %v1936
    %v1938 = vrot.slane %v1921, %v1937
    %v1939 = vlaneseq
    %v1940 = vshrl.u32 %v1939, 7
    %v1941 = vsub.s32 4, %v1940
    %v1942 = vrot.slane %v1921, %v1941
    %v1943 = vlaneseq
    %v1944 = vshrl.u32 %v1943, 7
    %v1945 = vsub.s32 5, %v1944
    %v1946 = vrot.slane %v1921, %v1945
    %v1947 = vlaneseq
    %v1948 = vshrl.u32 %v1947, 7
    %v1949 = vsub.s32 6, %v1948
    %v1950 = vrot.slane %v1921, %v1949
    %v1951 = vlaneseq
    %v1952 = vshrl.u32 %v1951, 7
    %v1953 = vsub.s32 7, %v1952
    %v1954 = vrot.slane %v1921, %v1953
    %v2475 = vunpack.c.l.b16 %v1409
    %v2476 = vunpack.c.h.b16 %v1409
    %v2477 = vunpack.c.l.b16 %v1410
    %v2478 = vunpack.c.h.b16 %v1410
    %v2479 = vunpack.c.l.b16 %v1411
    %v2480 = vunpack.c.h.b16 %v1411
    %v2481 = vunpack.c.l.b16 %v1412
    %v2482 = vunpack.c.h.b16 %v1412
    %v2483 = vunpack.c.l.b16 %v1413
    %v2484 = vunpack.c.h.b16 %v1413
    %v2485 = vunpack.c.l.b16 %v1414
    %v2486 = vunpack.c.h.b16 %v1414
    %v2487 = vunpack.c.l.b16 %v1415
    %v2488 = vunpack.c.h.b16 %v1415
    %v2489 = vunpack.c.l.b16 %v1416
    %v2490 = vunpack.c.h.b16 %v1416
    %v2491 = vunpack.c.l.b16 %v1417
    %v2492 = vunpack.c.h.b16 %v1417
    %v2493 = vunpack.c.l.b16 %v1418
    %v2494 = vunpack.c.h.b16 %v1418
    %v2495 = vunpack.c.l.b16 %v1419
    %v2496 = vunpack.c.h.b16 %v1419
    %v2497 = vunpack.c.l.b16 %v1420
    %v2498 = vunpack.c.h.b16 %v1420
    %v2499 = vunpack.c.l.b16 %v1421
    %v2500 = vunpack.c.h.b16 %v1421
    %v2501 = vunpack.c.l.b16 %v1422
    %v2502 = vunpack.c.h.b16 %v1422
    %v2503 = vunpack.c.l.b16 %v1423
    %v2504 = vunpack.c.h.b16 %v1423
    %v2505 = vunpack.c.l.b16 %v1424
    %v2506 = vunpack.c.h.b16 %v1424
    %v2507 = vunpack.c.l.b16 %v1425
    %v2508 = vunpack.c.h.b16 %v1425
    %v2509 = vunpack.c.l.b16 %v1426
    %v2510 = vunpack.c.h.b16 %v1426
    %v2511 = vunpack.c.l.b16 %v1427
    %v2512 = vunpack.c.h.b16 %v1427
    %v2513 = vunpack.c.l.b16 %v1428
    %v2514 = vunpack.c.h.b16 %v1428
    %v2515 = vunpack.c.l.b16 %v1429
    %v2516 = vunpack.c.h.b16 %v1429
    %v2517 = vunpack.c.l.b16 %v1430
    %v2518 = vunpack.c.h.b16 %v1430
    %v2519 = vunpack.c.l.b16 %v1431
    %v2520 = vunpack.c.h.b16 %v1431
    %v2521 = vunpack.c.l.b16 %v1432
    %v2522 = vunpack.c.h.b16 %v1432
    %v2523 = vunpack.c.l.b16 %v1433
    %v2524 = vunpack.c.h.b16 %v1433
    %v2525 = vunpack.c.l.b16 %v1434
    %v2526 = vunpack.c.h.b16 %v1434
    %v2527 = vunpack.c.l.b16 %v1435
    %v2528 = vunpack.c.h.b16 %v1435
    %v2529 = vunpack.c.l.b16 %v1436
    %v2530 = vunpack.c.h.b16 %v1436
    %v2531 = vunpack.c.l.b16 %v1437
    %v2532 = vunpack.c.h.b16 %v1437
    %v2533 = vunpack.c.l.b16 %v1438
    %v2534 = vunpack.c.h.b16 %v1438
    %v2535 = vunpack.c.l.b16 %v1439
    %v2536 = vunpack.c.h.b16 %v1439
    %v2537 = vunpack.c.l.b16 %v1440
    %v2538 = vunpack.c.h.b16 %v1440
    %v2539 = vunpack.c.l.b16 %v1441
    %v2540 = vunpack.c.h.b16 %v1441
    %v2541 = vunpack.c.l.b16 %v1442
    %v2542 = vunpack.c.h.b16 %v1442
    %v2543 = vunpack.c.l.b16 %v1443
    %v2544 = vunpack.c.h.b16 %v1443
    %v2545 = vunpack.c.l.b16 %v1444
    %v2546 = vunpack.c.h.b16 %v1444
    %v2547 = vunpack.c.l.b16 %v1445
    %v2548 = vunpack.c.h.b16 %v1445
    %v2549 = vunpack.c.l.b16 %v1446
    %v2550 = vunpack.c.h.b16 %v1446
    %v2551 = vunpack.c.l.b16 %v1447
    %v2552 = vunpack.c.h.b16 %v1447
    %v2553 = vunpack.c.l.b16 %v1448
    %v2554 = vunpack.c.h.b16 %v1448
    %v2555 = vunpack.c.l.b16 %v1449
    %v2556 = vunpack.c.h.b16 %v1449
    %v2557 = vunpack.c.l.b16 %v1450
    %v2558 = vunpack.c.h.b16 %v1450
    %v2559 = vunpack.c.l.b16 %v1451
    %v2560 = vunpack.c.h.b16 %v1451
    %v2561 = vunpack.c.l.b16 %v1452
    %v2562 = vunpack.c.h.b16 %v1452
    %v2563 = vunpack.c.l.b16 %v1453
    %v2564 = vunpack.c.h.b16 %v1453
    %v2565 = vunpack.c.l.b16 %v1454
    %v2566 = vunpack.c.h.b16 %v1454
    %v2567 = vunpack.c.l.b16 %v1455
    %v2568 = vunpack.c.h.b16 %v1455
    %v2569 = vunpack.c.l.b16 %v1456
    %v2570 = vunpack.c.h.b16 %v1456
    %v2571 = vunpack.c.l.b16 %v1457
    %v2572 = vunpack.c.h.b16 %v1457
    %v2573 = vunpack.c.l.b16 %v1458
    %v2574 = vunpack.c.h.b16 %v1458
    %v2575 = vunpack.c.l.b16 %v1459
    %v2576 = vunpack.c.h.b16 %v1459
    %v2577 = vunpack.c.l.b16 %v1460
    %v2578 = vunpack.c.h.b16 %v1460
    %v2579 = vunpack.c.l.b16 %v1461
    %v2580 = vunpack.c.h.b16 %v1461
    %v2581 = vunpack.c.l.b16 %v1462
    %v2582 = vunpack.c.h.b16 %v1462
    %v2583 = vunpack.c.l.b16 %v1463
    %v2584 = vunpack.c.h.b16 %v1463
    %v2585 = vunpack.c.l.b16 %v1464
    %v2586 = vunpack.c.h.b16 %v1464
    %v2587 = vunpack.c.l.b16 %v1465
    %v2588 = vunpack.c.h.b16 %v1465
    %v2589 = vunpack.c.l.b16 %v1466
    %v2590 = vunpack.c.h.b16 %v1466
    %v2591 = vunpack.c.l.b16 %v1467
    %v2592 = vunpack.c.h.b16 %v1467
    %v2593 = vunpack.c.l.b16 %v1468
    %v2594 = vunpack.c.h.b16 %v1468
    %v2595 = vunpack.c.l.b16 %v1469
    %v2596 = vunpack.c.h.b16 %v1469
    %v2597 = vunpack.c.l.b16 %v1470
    %v2598 = vunpack.c.h.b16 %v1470
    %v2599 = vunpack.c.l.b16 %v1471
    %v2600 = vunpack.c.h.b16 %v1471
    %v2601 = vunpack.c.l.b16 %v1472
    %v2602 = vunpack.c.h.b16 %v1472
    %v2603 = vunpack.c.l.b16 %v1473
    %v2604 = vunpack.c.h.b16 %v1473
    %v2605 = vunpack.c.l.b16 %v1474
    %v2606 = vunpack.c.h.b16 %v1474
    %v2607 = vunpack.c.l.b16 %v1475
    %v2608 = vunpack.c.h.b16 %v1475
    %v2609 = vunpack.c.l.b16 %v1476
    %v2610 = vunpack.c.h.b16 %v1476
    %v2611 = vunpack.c.l.b16 %v1477
    %v2612 = vunpack.c.h.b16 %v1477
    %v2613 = vunpack.c.l.b16 %v1478
    %v2614 = vunpack.c.h.b16 %v1478
    %v2615 = vunpack.c.l.b16 %v1479
    %v2616 = vunpack.c.h.b16 %v1479
    %v2617 = vunpack.c.l.b16 %v1480
    %v2618 = vunpack.c.h.b16 %v1480
    %v2619 = vunpack.c.l.b16 %v1481
    %v2620 = vunpack.c.h.b16 %v1481
    %v2621 = vunpack.c.l.b16 %v1482
    %v2622 = vunpack.c.h.b16 %v1482
    %v2623 = vunpack.c.l.b16 %v1483
    %v2624 = vunpack.c.h.b16 %v1483
    %v2625 = vunpack.c.l.b16 %v1484
    %v2626 = vunpack.c.h.b16 %v1484
    %v2627 = vunpack.c.l.b16 %v1485
    %v2628 = vunpack.c.h.b16 %v1485
    %v2629 = vunpack.c.l.b16 %v1486
    %v2630 = vunpack.c.h.b16 %v1486
    %v2631 = vunpack.c.l.b16 %v1487
    %v2632 = vunpack.c.h.b16 %v1487
    %v2633 = vunpack.c.l.b16 %v1488
    %v2634 = vunpack.c.h.b16 %v1488
    %v2635 = vunpack.c.l.b16 %v1489
    %v2636 = vunpack.c.h.b16 %v1489
    %v2637 = vunpack.c.l.b16 %v1490
    %v2638 = vunpack.c.h.b16 %v1490
    %v2639 = vunpack.c.l.b16 %v1491
    %v2640 = vunpack.c.h.b16 %v1491
    %v2641 = vunpack.c.l.b16 %v1492
    %v2642 = vunpack.c.h.b16 %v1492
    %v2643 = vunpack.c.l.b16 %v1493
    %v2644 = vunpack.c.h.b16 %v1493
    %v2645 = vunpack.c.l.b16 %v1494
    %v2646 = vunpack.c.h.b16 %v1494
    %v2647 = vunpack.c.l.b16 %v1495
    %v2648 = vunpack.c.h.b16 %v1495
    %v2649 = vunpack.c.l.b16 %v1496
    %v2650 = vunpack.c.h.b16 %v1496
    %v2651 = vunpack.c.l.b16 %v1497
    %v2652 = vunpack.c.h.b16 %v1497
    %v2653 = vunpack.c.l.b16 %v1498
    %v2654 = vunpack.c.h.b16 %v1498
    %v2655 = vunpack.c.l.b16 %v1499
    %v2656 = vunpack.c.h.b16 %v1499
    %v2657 = vunpack.c.l.b16 %v1500
    %v2658 = vunpack.c.h.b16 %v1500
    %v2659 = vunpack.c.l.b16 %v1501
    %v2660 = vunpack.c.h.b16 %v1501
    %v2661 = vunpack.c.l.b16 %v1502
    %v2662 = vunpack.c.h.b16 %v1502
    %v2663 = vunpack.c.l.b16 %v1503
    %v2664 = vunpack.c.h.b16 %v1503
    %v2665 = vunpack.c.l.b16 %v1504
    %v2666 = vunpack.c.h.b16 %v1504
    %v2667 = vunpack.c.l.b16 %v1505
    %v2668 = vunpack.c.h.b16 %v1505
    %v2669 = vunpack.c.l.b16 %v1506
    %v2670 = vunpack.c.h.b16 %v1506
    %v2671 = vunpack.c.l.b16 %v1507
    %v2672 = vunpack.c.h.b16 %v1507
    %v2673 = vunpack.c.l.b16 %v1508
    %v2674 = vunpack.c.h.b16 %v1508
    %v2675 = vunpack.c.l.b16 %v1509
    %v2676 = vunpack.c.h.b16 %v1509
    %v2677 = vunpack.c.l.b16 %v1510
    %v2678 = vunpack.c.h.b16 %v1510
    %v2679 = vunpack.c.l.b16 %v1511
    %v2680 = vunpack.c.h.b16 %v1511
    %v2681 = vunpack.c.l.b16 %v1512
    %v2682 = vunpack.c.h.b16 %v1512
    %v2683 = vunpack.c.l.b16 %v1513
    %v2684 = vunpack.c.h.b16 %v1513
    %v2685 = vunpack.c.l.b16 %v1514
    %v2686 = vunpack.c.h.b16 %v1514
    %v2687 = vunpack.c.l.b16 %v1515
    %v2688 = vunpack.c.h.b16 %v1515
    %v2689 = vunpack.c.l.b16 %v1516
    %v2690 = vunpack.c.h.b16 %v1516
    %v2691 = vunpack.c.l.b16 %v1517
    %v2692 = vunpack.c.h.b16 %v1517
    %v2693 = vunpack.c.l.b16 %v1518
    %v2694 = vunpack.c.h.b16 %v1518
    %v2695 = vunpack.c.l.b16 %v1519
    %v2696 = vunpack.c.h.b16 %v1519
    %v2697 = vunpack.c.l.b16 %v1520
    %v2698 = vunpack.c.h.b16 %v1520
    %v2699 = vunpack.c.l.b16 %v1521
    %v2700 = vunpack.c.h.b16 %v1521
    %v2701 = vunpack.c.l.b16 %v1522
    %v2702 = vunpack.c.h.b16 %v1522
    %v2703 = vunpack.c.l.b16 %v1523
    %v2704 = vunpack.c.h.b16 %v1523
    %v2705 = vunpack.c.l.b16 %v1524
    %v2706 = vunpack.c.h.b16 %v1524
    %v2707 = vunpack.c.l.b16 %v1525
    %v2708 = vunpack.c.h.b16 %v1525
    %v2709 = vunpack.c.l.b16 %v1526
    %v2710 = vunpack.c.h.b16 %v1526
    %v2711 = vunpack.c.l.b16 %v1527
    %v2712 = vunpack.c.h.b16 %v1527
    %v2713 = vunpack.c.l.b16 %v1528
    %v2714 = vunpack.c.h.b16 %v1528
    %v2715 = vunpack.c.l.b16 %v1529
    %v2716 = vunpack.c.h.b16 %v1529
    %v2717 = vunpack.c.l.b16 %v1530
    %v2718 = vunpack.c.h.b16 %v1530
    %v2719 = vunpack.c.l.b16 %v1531
    %v2720 = vunpack.c.h.b16 %v1531
    %v2721 = vunpack.c.l.b16 %v1532
    %v2722 = vunpack.c.h.b16 %v1532
    %v2723 = vunpack.c.l.b16 %v1533
    %v2724 = vunpack.c.h.b16 %v1533
    %v2725 = vunpack.c.l.b16 %v1534
    %v2726 = vunpack.c.h.b16 %v1534
    %v2727 = vunpack.c.l.b16 %v1535
    %v2728 = vunpack.c.h.b16 %v1535
    %v2729 = vunpack.c.l.b16 %v1536
    %v2730 = vunpack.c.h.b16 %v1536
    %v2731 = vunpack.c.l.b16 %v1537
    %v2732 = vunpack.c.h.b16 %v1537
    %v2733 = vunpack.c.l.b16 %v1538
    %v2734 = vunpack.c.h.b16 %v1538
    %v2735 = vunpack.c.l.b16 %v1539
    %v2736 = vunpack.c.h.b16 %v1539
    %v2737 = vunpack.c.l.b16 %v1540
    %v2738 = vunpack.c.h.b16 %v1540
    %v2739 = vunpack.c.l.b16 %v1541
    %v2740 = vunpack.c.h.b16 %v1541
    %v2741 = vunpack.c.l.b16 %v1542
    %v2742 = vunpack.c.h.b16 %v1542
    %v2743 = vunpack.c.l.b16 %v1543
    %v2744 = vunpack.c.h.b16 %v1543
    %v2745 = vunpack.c.l.b16 %v1544
    %v2746 = vunpack.c.h.b16 %v1544
    %v2747 = vunpack.c.l.b16 %v1545
    %v2748 = vunpack.c.h.b16 %v1545
    %v2749 = vunpack.c.l.b16 %v1546
    %v2750 = vunpack.c.h.b16 %v1546
    %v2751 = vunpack.c.l.b16 %v1547
    %v2752 = vunpack.c.h.b16 %v1547
    %v2753 = vunpack.c.l.b16 %v1548
    %v2754 = vunpack.c.h.b16 %v1548
    %v2755 = vunpack.c.l.b16 %v1549
    %v2756 = vunpack.c.h.b16 %v1549
    %v2757 = vunpack.c.l.b16 %v1550
    %v2758 = vunpack.c.h.b16 %v1550
    %v2759 = vunpack.c.l.b16 %v1551
    %v2760 = vunpack.c.h.b16 %v1551
    %v2761 = vunpack.c.l.b16 %v1552
    %v2762 = vunpack.c.h.b16 %v1552
    %v2763 = vunpack.c.l.b16 %v1553
    %v2764 = vunpack.c.h.b16 %v1553
    %v2765 = vunpack.c.l.b16 %v1554
    %v2766 = vunpack.c.h.b16 %v1554
    %v2767 = vunpack.c.l.b16 %v1555
    %v2768 = vunpack.c.h.b16 %v1555
    %v2769 = vunpack.c.l.b16 %v1556
    %v2770 = vunpack.c.h.b16 %v1556
    %v2771 = vunpack.c.l.b16 %v1557
    %v2772 = vunpack.c.h.b16 %v1557
    %v2773 = vunpack.c.l.b16 %v1558
    %v2774 = vunpack.c.h.b16 %v1558
    %v2775 = vunpack.c.l.b16 %v1559
    %v2776 = vunpack.c.h.b16 %v1559
    %v2777 = vunpack.c.l.b16 %v1560
    %v2778 = vunpack.c.h.b16 %v1560
    %v2779 = vunpack.c.l.b16 %v1561
    %v2780 = vunpack.c.h.b16 %v1561
    %v2781 = vunpack.c.l.b16 %v1562
    %v2782 = vunpack.c.h.b16 %v1562
    %v2783 = vunpack.c.l.b16 %v1563
    %v2784 = vunpack.c.h.b16 %v1563
    %v2785 = vunpack.c.l.b16 %v1564
    %v2786 = vunpack.c.h.b16 %v1564
    %v2787 = vunpack.c.l.b16 %v1565
    %v2788 = vunpack.c.h.b16 %v1565
    %v2789 = vunpack.c.l.b16 %v1566
    %v2790 = vunpack.c.h.b16 %v1566
    %v2791 = vunpack.c.l.b16 %v1567
    %v2792 = vunpack.c.h.b16 %v1567
    %v2793 = vunpack.c.l.b16 %v1568
    %v2794 = vunpack.c.h.b16 %v1568
    %v2795 = vunpack.c.l.b16 %v1569
    %v2796 = vunpack.c.h.b16 %v1569
    %v2797 = vunpack.c.l.b16 %v1570
    %v2798 = vunpack.c.h.b16 %v1570
    %v2799 = vunpack.c.l.b16 %v1571
    %v2800 = vunpack.c.h.b16 %v1571
    %v2801 = vunpack.c.l.b16 %v1572
    %v2802 = vunpack.c.h.b16 %v1572
    %v2803 = vunpack.c.l.b16 %v1573
    %v2804 = vunpack.c.h.b16 %v1573
    %v2805 = vunpack.c.l.b16 %v1574
    %v2806 = vunpack.c.h.b16 %v1574
    %v2807 = vunpack.c.l.b16 %v1575
    %v2808 = vunpack.c.h.b16 %v1575
    %v2809 = vunpack.c.l.b16 %v1576
    %v2810 = vunpack.c.h.b16 %v1576
    %v2811 = vunpack.c.l.b16 %v1577
    %v2812 = vunpack.c.h.b16 %v1577
    %v2813 = vunpack.c.l.b16 %v1578
    %v2814 = vunpack.c.h.b16 %v1578
    %v2815 = vunpack.c.l.b16 %v1579
    %v2816 = vunpack.c.h.b16 %v1579
    %v2817 = vunpack.c.l.b16 %v1580
    %v2818 = vunpack.c.h.b16 %v1580
    %v2819 = vunpack.c.l.b16 %v1581
    %v2820 = vunpack.c.h.b16 %v1581
    %v2821 = vunpack.c.l.b16 %v1582
    %v2822 = vunpack.c.h.b16 %v1582
    %v2823 = vunpack.c.l.b16 %v1583
    %v2824 = vunpack.c.h.b16 %v1583
    %v2825 = vunpack.c.l.b16 %v1584
    %v2826 = vunpack.c.h.b16 %v1584
    %v2827 = vunpack.c.l.b16 %v1585
    %v2828 = vunpack.c.h.b16 %v1585
    %v2829 = vunpack.c.l.b16 %v1586
    %v2830 = vunpack.c.h.b16 %v1586
    %v2831 = vunpack.c.l.b16 %v1587
    %v2832 = vunpack.c.h.b16 %v1587
    %v2833 = vunpack.c.l.b16 %v1588
    %v2834 = vunpack.c.h.b16 %v1588
    %v2835 = vunpack.c.l.b16 %v1589
    %v2836 = vunpack.c.h.b16 %v1589
    %v2837 = vunpack.c.l.b16 %v1590
    %v2838 = vunpack.c.h.b16 %v1590
    %v2839 = vunpack.c.l.b16 %v1591
    %v2840 = vunpack.c.h.b16 %v1591
    %v2841 = vunpack.c.l.b16 %v1592
    %v2842 = vunpack.c.h.b16 %v1592
    %v2843 = vunpack.c.l.b16 %v1593
    %v2844 = vunpack.c.h.b16 %v1593
    %v2845 = vunpack.c.l.b16 %v1594
    %v2846 = vunpack.c.h.b16 %v1594
    %v2847 = vunpack.c.l.b16 %v1595
    %v2848 = vunpack.c.h.b16 %v1595
    %v2849 = vunpack.c.l.b16 %v1596
    %v2850 = vunpack.c.h.b16 %v1596
    %v2851 = vunpack.c.l.b16 %v1597
    %v2852 = vunpack.c.h.b16 %v1597
    %v2853 = vunpack.c.l.b16 %v1598
    %v2854 = vunpack.c.h.b16 %v1598
    %v2855 = vunpack.c.l.b16 %v1599
    %v2856 = vunpack.c.h.b16 %v1599
    %v2857 = vunpack.c.l.b16 %v1600
    %v2858 = vunpack.c.h.b16 %v1600
    %v2859 = vunpack.c.l.b16 %v1601
    %v2860 = vunpack.c.h.b16 %v1601
    %v2861 = vunpack.c.l.b16 %v1602
    %v2862 = vunpack.c.h.b16 %v1602
    %v2863 = vunpack.c.l.b16 %v1603
    %v2864 = vunpack.c.h.b16 %v1603
    %v2865 = vunpack.c.l.b16 %v1604
    %v2866 = vunpack.c.h.b16 %v1604
    %v2867 = vunpack.c.l.b16 %v1605
    %v2868 = vunpack.c.h.b16 %v1605
    %v2869 = vunpack.c.l.b16 %v1606
    %v2870 = vunpack.c.h.b16 %v1606
    %v2871 = vunpack.c.l.b16 %v1607
    %v2872 = vunpack.c.h.b16 %v1607
    %v2873 = vunpack.c.l.b16 %v1608
    %v2874 = vunpack.c.h.b16 %v1608
    %v2875 = vunpack.c.l.b16 %v1609
    %v2876 = vunpack.c.h.b16 %v1609
    %v2877 = vunpack.c.l.b16 %v1610
    %v2878 = vunpack.c.h.b16 %v1610
    %v2879 = vunpack.c.l.b16 %v1611
    %v2880 = vunpack.c.h.b16 %v1611
    %v2881 = vunpack.c.l.b16 %v1612
    %v2882 = vunpack.c.h.b16 %v1612
    %v2883 = vunpack.c.l.b16 %v1613
    %v2884 = vunpack.c.h.b16 %v1613
    %v2885 = vunpack.c.l.b16 %v1614
    %v2886 = vunpack.c.h.b16 %v1614
    %v2887 = vunpack.c.l.b16 %v1615
    %v2888 = vunpack.c.h.b16 %v1615
    %v2889 = vunpack.c.l.b16 %v1616
    %v2890 = vunpack.c.h.b16 %v1616
    %v2891 = vunpack.c.l.b16 %v1617
    %v2892 = vunpack.c.h.b16 %v1617
    %v2893 = vunpack.c.l.b16 %v1618
    %v2894 = vunpack.c.h.b16 %v1618
    %v2895 = vunpack.c.l.b16 %v1619
    %v2896 = vunpack.c.h.b16 %v1619
    %v2897 = vunpack.c.l.b16 %v1620
    %v2898 = vunpack.c.h.b16 %v1620
    %v2899 = vunpack.c.l.b16 %v1621
    %v2900 = vunpack.c.h.b16 %v1621
    %v2901 = vunpack.c.l.b16 %v1622
    %v2902 = vunpack.c.h.b16 %v1622
    %v2903 = vunpack.c.l.b16 %v1623
    %v2904 = vunpack.c.h.b16 %v1623
    %v2905 = vunpack.c.l.b16 %v1624
    %v2906 = vunpack.c.h.b16 %v1624
    %v2907 = vunpack.c.l.b16 %v1625
    %v2908 = vunpack.c.h.b16 %v1625
    %v2909 = vunpack.c.l.b16 %v1626
    %v2910 = vunpack.c.h.b16 %v1626
    %v2911 = vunpack.c.l.b16 %v1627
    %v2912 = vunpack.c.h.b16 %v1627
    %v2913 = vunpack.c.l.b16 %v1628
    %v2914 = vunpack.c.h.b16 %v1628
    %v2915 = vunpack.c.l.b16 %v1629
    %v2916 = vunpack.c.h.b16 %v1629
    %v2917 = vunpack.c.l.b16 %v1630
    %v2918 = vunpack.c.h.b16 %v1630
    %v2919 = vunpack.c.l.b16 %v1631
    %v2920 = vunpack.c.h.b16 %v1631
    %v2921 = vunpack.c.l.b16 %v1632
    %v2922 = vunpack.c.h.b16 %v1632
    %v2923 = vunpack.c.l.b16 %v1633
    %v2924 = vunpack.c.h.b16 %v1633
    %v2925 = vunpack.c.l.b16 %v1634
    %v2926 = vunpack.c.h.b16 %v1634
    %v2927 = vunpack.c.l.b16 %v1635
    %v2928 = vunpack.c.h.b16 %v1635
    %v2929 = vunpack.c.l.b16 %v1636
    %v2930 = vunpack.c.h.b16 %v1636
    %v2931 = vunpack.c.l.b16 %v1637
    %v2932 = vunpack.c.h.b16 %v1637
    %v2933 = vunpack.c.l.b16 %v1638
    %v2934 = vunpack.c.h.b16 %v1638
    %v2935 = vunpack.c.l.b16 %v1639
    %v2936 = vunpack.c.h.b16 %v1639
    %v2937 = vunpack.c.l.b16 %v1640
    %v2938 = vunpack.c.h.b16 %v1640
    %v2939 = vunpack.c.l.b16 %v1641
    %v2940 = vunpack.c.h.b16 %v1641
    %v2941 = vunpack.c.l.b16 %v1642
    %v2942 = vunpack.c.h.b16 %v1642
    %v2943 = vunpack.c.l.b16 %v1643
    %v2944 = vunpack.c.h.b16 %v1643
    %v2945 = vunpack.c.l.b16 %v1644
    %v2946 = vunpack.c.h.b16 %v1644
    %v2947 = vunpack.c.l.b16 %v1645
    %v2948 = vunpack.c.h.b16 %v1645
    %v2949 = vunpack.c.l.b16 %v1646
    %v2950 = vunpack.c.h.b16 %v1646
    %v2951 = vunpack.c.l.b16 %v1647
    %v2952 = vunpack.c.h.b16 %v1647
    %v2953 = vunpack.c.l.b16 %v1648
    %v2954 = vunpack.c.h.b16 %v1648
    %v2955 = vunpack.c.l.b16 %v1649
    %v2956 = vunpack.c.h.b16 %v1649
    %v2957 = vunpack.c.l.b16 %v1650
    %v2958 = vunpack.c.h.b16 %v1650
    %v2959 = vunpack.c.l.b16 %v1651
    %v2960 = vunpack.c.h.b16 %v1651
    %v2961 = vunpack.c.l.b16 %v1652
    %v2962 = vunpack.c.h.b16 %v1652
    %v2963 = vunpack.c.l.b16 %v1653
    %v2964 = vunpack.c.h.b16 %v1653
    %v2965 = vunpack.c.l.b16 %v1654
    %v2966 = vunpack.c.h.b16 %v1654
    %v2967 = vunpack.c.l.b16 %v1655
    %v2968 = vunpack.c.h.b16 %v1655
    %v2969 = vunpack.c.l.b16 %v1656
    %v2970 = vunpack.c.h.b16 %v1656
    %v2971 = vunpack.c.l.b16 %v1657
    %v2972 = vunpack.c.h.b16 %v1657
    %v2973 = vunpack.c.l.b16 %v1658
    %v2974 = vunpack.c.h.b16 %v1658
    %v2975 = vunpack.c.l.b16 %v1659
    %v2976 = vunpack.c.h.b16 %v1659
    %v2977 = vunpack.c.l.b16 %v1660
    %v2978 = vunpack.c.h.b16 %v1660
    %v2979 = vunpack.c.l.b16 %v1661
    %v2980 = vunpack.c.h.b16 %v1661
    %v2981 = vunpack.c.l.b16 %v1662
    %v2982 = vunpack.c.h.b16 %v1662
    %v2983 = vunpack.c.l.b16 %v1663
    %v2984 = vunpack.c.h.b16 %v1663
    %v2985 = vunpack.c.l.b16 %v1664
    %v2986 = vunpack.c.h.b16 %v1664
    %v2987 = vunpack.c.l.b16 %v1665
    %v2988 = vunpack.c.h.b16 %v1665
    %v2989 = vunpack.c.l.b16 %v1666
    %v2990 = vunpack.c.h.b16 %v1666
    %v2991 = vunpack.c.l.b16 %v1667
    %v2992 = vunpack.c.h.b16 %v1667
    %v2993 = vunpack.c.l.b16 %v1668
    %v2994 = vunpack.c.h.b16 %v1668
    %v2995 = vunpack.c.l.b16 %v1669
    %v2996 = vunpack.c.h.b16 %v1669
    %v2997 = vunpack.c.l.b16 %v1670
    %v2998 = vunpack.c.h.b16 %v1670
    %v2999 = vunpack.c.l.b16 %v1671
    %v3000 = vunpack.c.h.b16 %v1671
    %v3001 = vunpack.c.l.b16 %v1672
    %v3002 = vunpack.c.h.b16 %v1672
    %v3003 = vunpack.c.l.b16 %v1673
    %v3004 = vunpack.c.h.b16 %v1673
    %v3005 = vunpack.c.l.b16 %v1674
    %v3006 = vunpack.c.h.b16 %v1674
    %v3007 = vunpack.c.l.b16 %v1675
    %v3008 = vunpack.c.h.b16 %v1675
    %v3009 = vunpack.c.l.b16 %v1676
    %v3010 = vunpack.c.h.b16 %v1676
    %v3011 = vunpack.c.l.b16 %v1677
    %v3012 = vunpack.c.h.b16 %v1677
    %v3013 = vunpack.c.l.b16 %v1678
    %v3014 = vunpack.c.h.b16 %v1678
    %v3015 = vunpack.c.l.b16 %v1679
    %v3016 = vunpack.c.h.b16 %v1679
    %v3017 = vunpack.c.l.b16 %v1680
    %v3018 = vunpack.c.h.b16 %v1680
    %v3019 = vunpack.c.l.b16 %v1681
    %v3020 = vunpack.c.h.b16 %v1681
    %v3021 = vunpack.c.l.b16 %v1682
    %v3022 = vunpack.c.h.b16 %v1682
    %v3023 = vunpack.c.l.b16 %v1683
    %v3024 = vunpack.c.h.b16 %v1683
    %v3025 = vunpack.c.l.b16 %v1684
    %v3026 = vunpack.c.h.b16 %v1684
    %v3027 = vunpack.c.l.b16 %v1685
    %v3028 = vunpack.c.h.b16 %v1685
    %v3029 = vunpack.c.l.b16 %v1686
    %v3030 = vunpack.c.h.b16 %v1686
    %v3031 = vunpack.c.l.b16 %v1687
    %v3032 = vunpack.c.h.b16 %v1687
    %v3033 = vunpack.c.l.b16 %v1688
    %v3034 = vunpack.c.h.b16 %v1688
    %v3035 = vunpack.c.l.b16 %v1689
    %v3036 = vunpack.c.h.b16 %v1689
    %v3037 = vunpack.c.l.b16 %v1690
    %v3038 = vunpack.c.h.b16 %v1690
    %v3039 = vunpack.c.l.b16 %v1691
    %v3040 = vunpack.c.h.b16 %v1691
    %v3041 = vunpack.c.l.b16 %v1692
    %v3042 = vunpack.c.h.b16 %v1692
    %v3043 = vunpack.c.l.b16 %v1693
    %v3044 = vunpack.c.h.b16 %v1693
    %v3045 = vunpack.c.l.b16 %v1694
    %v3046 = vunpack.c.h.b16 %v1694
    %v3047 = vunpack.c.l.b16 %v1695
    %v3048 = vunpack.c.h.b16 %v1695
    %v3049 = vunpack.c.l.b16 %v1696
    %v3050 = vunpack.c.h.b16 %v1696
    %v3051 = vunpack.c.l.b16 %v1697
    %v3052 = vunpack.c.h.b16 %v1697
    %v3053 = vunpack.c.l.b16 %v1698
    %v3054 = vunpack.c.h.b16 %v1698
    %v3055 = vunpack.c.l.b16 %v1699
    %v3056 = vunpack.c.h.b16 %v1699
    %v3057 = vunpack.c.l.b16 %v1700
    %v3058 = vunpack.c.h.b16 %v1700
    %v3059 = vunpack.c.l.b16 %v1701
    %v3060 = vunpack.c.h.b16 %v1701
    %v3061 = vunpack.c.l.b16 %v1702
    %v3062 = vunpack.c.h.b16 %v1702
    %v3063 = vunpack.c.l.b16 %v1703
    %v3064 = vunpack.c.h.b16 %v1703
    %v3065 = vunpack.c.l.b16 %v1704
    %v3066 = vunpack.c.h.b16 %v1704
    %v3067 = vunpack.c.l.b16 %v1705
    %v3068 = vunpack.c.h.b16 %v1705
    %v3069 = vunpack.c.l.b16 %v1706
    %v3070 = vunpack.c.h.b16 %v1706
    %v3071 = vunpack.c.l.b16 %v1707
    %v3072 = vunpack.c.h.b16 %v1707
    %v3073 = vunpack.c.l.b16 %v1708
    %v3074 = vunpack.c.h.b16 %v1708
    %v3075 = vunpack.c.l.b16 %v1709
    %v3076 = vunpack.c.h.b16 %v1709
    %v3077 = vunpack.c.l.b16 %v1710
    %v3078 = vunpack.c.h.b16 %v1710
    %v3079 = vunpack.c.l.b16 %v1711
    %v3080 = vunpack.c.h.b16 %v1711
    %v3081 = vunpack.c.l.b16 %v1712
    %v3082 = vunpack.c.h.b16 %v1712
    %v3083 = vunpack.c.l.b16 %v1713
    %v3084 = vunpack.c.h.b16 %v1713
    %v3085 = vunpack.c.l.b16 %v1714
    %v3086 = vunpack.c.h.b16 %v1714
    %v3087 = vunpack.c.l.b16 %v1715
    %v3088 = vunpack.c.h.b16 %v1715
    %v3089 = vunpack.c.l.b16 %v1716
    %v3090 = vunpack.c.h.b16 %v1716
    %v3091 = vunpack.c.l.b16 %v1717
    %v3092 = vunpack.c.h.b16 %v1717
    %v3093 = vunpack.c.l.b16 %v1718
    %v3094 = vunpack.c.h.b16 %v1718
    %v3095 = vunpack.c.l.b16 %v1719
    %v3096 = vunpack.c.h.b16 %v1719
    %v3097 = vunpack.c.l.b16 %v1720
    %v3098 = vunpack.c.h.b16 %v1720
    %v3099 = vunpack.c.l.b16 %v1721
    %v3100 = vunpack.c.h.b16 %v1721
    %v3101 = vunpack.c.l.b16 %v1722
    %v3102 = vunpack.c.h.b16 %v1722
    %v3103 = vunpack.c.l.b16 %v1723
    %v3104 = vunpack.c.h.b16 %v1723
    %v3105 = vunpack.c.l.b16 %v1724
    %v3106 = vunpack.c.h.b16 %v1724
    %v3107 = vunpack.c.l.b16 %v1725
    %v3108 = vunpack.c.h.b16 %v1725
    %v3109 = vunpack.c.l.b16 %v1726
    %v3110 = vunpack.c.h.b16 %v1726
    %v3111 = vunpack.c.l.b16 %v1727
    %v3112 = vunpack.c.h.b16 %v1727
    %v3113 = vunpack.c.l.b16 %v1728
    %v3114 = vunpack.c.h.b16 %v1728
    %v3115 = vunpack.c.l.b16 %v1729
    %v3116 = vunpack.c.h.b16 %v1729
    %v3117 = vunpack.c.l.b16 %v1730
    %v3118 = vunpack.c.h.b16 %v1730
    %v3119 = vunpack.c.l.b16 %v1731
    %v3120 = vunpack.c.h.b16 %v1731
    %v3121 = vunpack.c.l.b16 %v1732
    %v3122 = vunpack.c.h.b16 %v1732
    %v3123 = vunpack.c.l.b16 %v1733
    %v3124 = vunpack.c.h.b16 %v1733
    %v3125 = vunpack.c.l.b16 %v1734
    %v3126 = vunpack.c.h.b16 %v1734
    %v3127 = vunpack.c.l.b16 %v1735
    %v3128 = vunpack.c.h.b16 %v1735
    %v3129 = vunpack.c.l.b16 %v1736
    %v3130 = vunpack.c.h.b16 %v1736
    %v3131 = vunpack.c.l.b16 %v1737
    %v3132 = vunpack.c.h.b16 %v1737
    %v3133 = vunpack.c.l.b16 %v1738
    %v3134 = vunpack.c.h.b16 %v1738
    %v3135 = vunpack.c.l.b16 %v1739
    %v3136 = vunpack.c.h.b16 %v1739
    %v3137 = vunpack.c.l.b16 %v1740
    %v3138 = vunpack.c.h.b16 %v1740
    %v3139 = vunpack.c.l.b16 %v1741
    %v3140 = vunpack.c.h.b16 %v1741
    %v3141 = vunpack.c.l.b16 %v1742
    %v3142 = vunpack.c.h.b16 %v1742
    %v3143 = vunpack.c.l.b16 %v1743
    %v3144 = vunpack.c.h.b16 %v1743
    %v3145 = vunpack.c.l.b16 %v1744
    %v3146 = vunpack.c.h.b16 %v1744
    %v3147 = vunpack.c.l.b16 %v1745
    %v3148 = vunpack.c.h.b16 %v1745
    %v3149 = vunpack.c.l.b16 %v1746
    %v3150 = vunpack.c.h.b16 %v1746
    %v3151 = vunpack.c.l.b16 %v1747
    %v3152 = vunpack.c.h.b16 %v1747
    %v3153 = vunpack.c.l.b16 %v1748
    %v3154 = vunpack.c.h.b16 %v1748
    %v3155 = vunpack.c.l.b16 %v1749
    %v3156 = vunpack.c.h.b16 %v1749
    %v3157 = vunpack.c.l.b16 %v1750
    %v3158 = vunpack.c.h.b16 %v1750
    %v3159 = vunpack.c.l.b16 %v1751
    %v3160 = vunpack.c.h.b16 %v1751
    %v3161 = vunpack.c.l.b16 %v1752
    %v3162 = vunpack.c.h.b16 %v1752
    %v3163 = vunpack.c.l.b16 %v1753
    %v3164 = vunpack.c.h.b16 %v1753
    %v3165 = vunpack.c.l.b16 %v1754
    %v3166 = vunpack.c.h.b16 %v1754
    %v3167 = vunpack.c.l.b16 %v1755
    %v3168 = vunpack.c.h.b16 %v1755
    %v3169 = vunpack.c.l.b16 %v1756
    %v3170 = vunpack.c.h.b16 %v1756
    %v3171 = vunpack.c.l.b16 %v1757
    %v3172 = vunpack.c.h.b16 %v1757
    %v3173 = vunpack.c.l.b16 %v1758
    %v3174 = vunpack.c.h.b16 %v1758
    %v3175 = vunpack.c.l.b16 %v1759
    %v3176 = vunpack.c.h.b16 %v1759
    %v3177 = vunpack.c.l.b16 %v1760
    %v3178 = vunpack.c.h.b16 %v1760
    %v3179 = vunpack.c.l.b16 %v1761
    %v3180 = vunpack.c.h.b16 %v1761
    %v3181 = vunpack.c.l.b16 %v1762
    %v3182 = vunpack.c.h.b16 %v1762
    %v3183 = vunpack.c.l.b16 %v1763
    %v3184 = vunpack.c.h.b16 %v1763
    %v3185 = vunpack.c.l.b16 %v1764
    %v3186 = vunpack.c.h.b16 %v1764
    %v3187 = vunpack.c.l.b16 %v1765
    %v3188 = vunpack.c.h.b16 %v1765
    %v3189 = vunpack.c.l.b16 %v1766
    %v3190 = vunpack.c.h.b16 %v1766
    %v3191 = vunpack.c.l.b16 %v1767
    %v3192 = vunpack.c.h.b16 %v1767
    %v3193 = vunpack.c.l.b16 %v1768
    %v3194 = vunpack.c.h.b16 %v1768
    %v3195 = vunpack.c.l.b16 %v1769
    %v3196 = vunpack.c.h.b16 %v1769
    %v3197 = vunpack.c.l.b16 %v1770
    %v3198 = vunpack.c.h.b16 %v1770
    %v3199 = vunpack.c.l.b16 %v1771
    %v3200 = vunpack.c.h.b16 %v1771
    %v3201 = vunpack.c.l.b16 %v1772
    %v3202 = vunpack.c.h.b16 %v1772
    %v3203 = vunpack.c.l.b16 %v1773
    %v3204 = vunpack.c.h.b16 %v1773
    %v3205 = vunpack.c.l.b16 %v1774
    %v3206 = vunpack.c.h.b16 %v1774
    %v3207 = vunpack.c.l.b16 %v1775
    %v3208 = vunpack.c.h.b16 %v1775
    %v3209 = vunpack.c.l.b16 %v1776
    %v3210 = vunpack.c.h.b16 %v1776
    %v3211 = vunpack.c.l.b16 %v1777
    %v3212 = vunpack.c.h.b16 %v1777
    %v3213 = vunpack.c.l.b16 %v1778
    %v3214 = vunpack.c.h.b16 %v1778
    %v3215 = vunpack.c.l.b16 %v1779
    %v3216 = vunpack.c.h.b16 %v1779
    %v3217 = vunpack.c.l.b16 %v1780
    %v3218 = vunpack.c.h.b16 %v1780
    %v3219 = vunpack.c.l.b16 %v1781
    %v3220 = vunpack.c.h.b16 %v1781
    %v3221 = vunpack.c.l.b16 %v1782
    %v3222 = vunpack.c.h.b16 %v1782
    %v3223 = vunpack.c.l.b16 %v1783
    %v3224 = vunpack.c.h.b16 %v1783
    %v3225 = vunpack.c.l.b16 %v1784
    %v3226 = vunpack.c.h.b16 %v1784
    %v3227 = vunpack.c.l.b16 %v1785
    %v3228 = vunpack.c.h.b16 %v1785
    %v3229 = vunpack.c.l.b16 %v1786
    %v3230 = vunpack.c.h.b16 %v1786
    %v3231 = vunpack.c.l.b16 %v1787
    %v3232 = vunpack.c.h.b16 %v1787
    %v3233 = vunpack.c.l.b16 %v1788
    %v3234 = vunpack.c.h.b16 %v1788
    %v3235 = vunpack.c.l.b16 %v1789
    %v3236 = vunpack.c.h.b16 %v1789
    %v3237 = vunpack.c.l.b16 %v1790
    %v3238 = vunpack.c.h.b16 %v1790
    %v3239 = vunpack.c.l.b16 %v1791
    %v3240 = vunpack.c.h.b16 %v1791
    %v3241 = vunpack.c.l.b16 %v1792
    %v3242 = vunpack.c.h.b16 %v1792
    %v3243 = vunpack.c.l.b16 %v1793
    %v3244 = vunpack.c.h.b16 %v1793
    %v3245 = vunpack.c.l.b16 %v1794
    %v3246 = vunpack.c.h.b16 %v1794
    %v3247 = vunpack.c.l.b16 %v1795
    %v3248 = vunpack.c.h.b16 %v1795
    %v3249 = vunpack.c.l.b16 %v1796
    %v3250 = vunpack.c.h.b16 %v1796
    %v3251 = vunpack.c.l.b16 %v1797
    %v3252 = vunpack.c.h.b16 %v1797
    %v3253 = vunpack.c.l.b16 %v1798
    %v3254 = vunpack.c.h.b16 %v1798
    %v3255 = vunpack.c.l.b16 %v1799
    %v3256 = vunpack.c.h.b16 %v1799
    %v3257 = vunpack.c.l.b16 %v1800
    %v3258 = vunpack.c.h.b16 %v1800
    %v3259 = vunpack.c.l.b16 %v1801
    %v3260 = vunpack.c.h.b16 %v1801
    %v3261 = vunpack.c.l.b16 %v1802
    %v3262 = vunpack.c.h.b16 %v1802
    %v3263 = vunpack.c.l.b16 %v1803
    %v3264 = vunpack.c.h.b16 %v1803
    %v3265 = vunpack.c.l.b16 %v1804
    %v3266 = vunpack.c.h.b16 %v1804
    %v3267 = vunpack.c.l.b16 %v1805
    %v3268 = vunpack.c.h.b16 %v1805
    %v3269 = vunpack.c.l.b16 %v1806
    %v3270 = vunpack.c.h.b16 %v1806
    %v3271 = vunpack.c.l.b16 %v1807
    %v3272 = vunpack.c.h.b16 %v1807
    %v3273 = vunpack.c.l.b16 %v1808
    %v3274 = vunpack.c.h.b16 %v1808
    %v3275 = vunpack.c.l.b16 %v1809
    %v3276 = vunpack.c.h.b16 %v1809
    %v3277 = vunpack.c.l.b16 %v1810
    %v3278 = vunpack.c.h.b16 %v1810
    %v3279 = vunpack.c.l.b16 %v1811
    %v3280 = vunpack.c.h.b16 %v1811
    %v3281 = vunpack.c.l.b16 %v1812
    %v3282 = vunpack.c.h.b16 %v1812
    %v3283 = vunpack.c.l.b16 %v1813
    %v3284 = vunpack.c.h.b16 %v1813
    %v3285 = vunpack.c.l.b16 %v1814
    %v3286 = vunpack.c.h.b16 %v1814
    %v3287 = vunpack.c.l.b16 %v1815
    %v3288 = vunpack.c.h.b16 %v1815
    %v3289 = vunpack.c.l.b16 %v1816
    %v3290 = vunpack.c.h.b16 %v1816
    %v3291 = vunpack.c.l.b16 %v1817
    %v3292 = vunpack.c.h.b16 %v1817
    %v3293 = vunpack.c.l.b16 %v1818
    %v3294 = vunpack.c.h.b16 %v1818
    %v3295 = vunpack.c.l.b16 %v1819
    %v3296 = vunpack.c.h.b16 %v1819
    %v3297 = vunpack.c.l.b16 %v1820
    %v3298 = vunpack.c.h.b16 %v1820
    %v3299 = vunpack.c.l.b16 %v1821
    %v3300 = vunpack.c.h.b16 %v1821
    %v3301 = vunpack.c.l.b16 %v1822
    %v3302 = vunpack.c.h.b16 %v1822
    %v3303 = vunpack.c.l.b16 %v1823
    %v3304 = vunpack.c.h.b16 %v1823
    %v3305 = vunpack.c.l.b16 %v1824
    %v3306 = vunpack.c.h.b16 %v1824
    %v3307 = vunpack.c.l.b16 %v1825
    %v3308 = vunpack.c.h.b16 %v1825
    %v3309 = vunpack.c.l.b16 %v1826
    %v3310 = vunpack.c.h.b16 %v1826
    %v3311 = vunpack.c.l.b16 %v1827
    %v3312 = vunpack.c.h.b16 %v1827
    %v3313 = vunpack.c.l.b16 %v1828
    %v3314 = vunpack.c.h.b16 %v1828
    %v3315 = vunpack.c.l.b16 %v1829
    %v3316 = vunpack.c.h.b16 %v1829
    %v3317 = vunpack.c.l.b16 %v1830
    %v3318 = vunpack.c.h.b16 %v1830
    %v3319 = vunpack.c.l.b16 %v1831
    %v3320 = vunpack.c.h.b16 %v1831
    %v3321 = vunpack.c.l.b16 %v1832
    %v3322 = vunpack.c.h.b16 %v1832
    %v3323 = vunpack.c.l.b16 %v1833
    %v3324 = vunpack.c.h.b16 %v1833
    %v3325 = vunpack.c.l.b16 %v1834
    %v3326 = vunpack.c.h.b16 %v1834
    %v3327 = vunpack.c.l.b16 %v1835
    %v3328 = vunpack.c.h.b16 %v1835
    %v3329 = vunpack.c.l.b16 %v1836
    %v3330 = vunpack.c.h.b16 %v1836
    %v3331 = vunpack.c.l.b16 %v1837
    %v3332 = vunpack.c.h.b16 %v1837
    %v3333 = vunpack.c.l.b16 %v1838
    %v3334 = vunpack.c.h.b16 %v1838
    %v3335 = vunpack.c.l.b16 %v1839
    %v3336 = vunpack.c.h.b16 %v1839
    %v3337 = vunpack.c.l.b16 %v1840
    %v3338 = vunpack.c.h.b16 %v1840
    %v3339 = vunpack.c.l.b16 %v1841
    %v3340 = vunpack.c.h.b16 %v1841
    %v3341 = vunpack.c.l.b16 %v1842
    %v3342 = vunpack.c.h.b16 %v1842
    %v3343 = vunpack.c.l.b16 %v1843
    %v3344 = vunpack.c.h.b16 %v1843
    %v3345 = vunpack.c.l.b16 %v1844
    %v3346 = vunpack.c.h.b16 %v1844
    %v3347 = vunpack.c.l.b16 %v1845
    %v3348 = vunpack.c.h.b16 %v1845
    %v3349 = vunpack.c.l.b16 %v1846
    %v3350 = vunpack.c.h.b16 %v1846
    %v3351 = vunpack.c.l.b16 %v1847
    %v3352 = vunpack.c.h.b16 %v1847
    %v3353 = vunpack.c.l.b16 %v1848
    %v3354 = vunpack.c.h.b16 %v1848
    %v3355 = vunpack.c.l.b16 %v1849
    %v3356 = vunpack.c.h.b16 %v1849
    %v3357 = vunpack.c.l.b16 %v1850
    %v3358 = vunpack.c.h.b16 %v1850
    %v3359 = vunpack.c.l.b16 %v1851
    %v3360 = vunpack.c.h.b16 %v1851
    %v3361 = vunpack.c.l.b16 %v1852
    %v3362 = vunpack.c.h.b16 %v1852
    %v3363 = vunpack.c.l.b16 %v1853
    %v3364 = vunpack.c.h.b16 %v1853
    %v3365 = vunpack.c.l.b16 %v1854
    %v3366 = vunpack.c.h.b16 %v1854
    %v3367 = vunpack.c.l.b16 %v1855
    %v3368 = vunpack.c.h.b16 %v1855
    %v3369 = vunpack.c.l.b16 %v1856
    %v3370 = vunpack.c.h.b16 %v1856
    %v3371 = vunpack.c.l.b16 %v1857
    %v3372 = vunpack.c.h.b16 %v1857
    %v3373 = vunpack.c.l.b16 %v1858
    %v3374 = vunpack.c.h.b16 %v1858
    %v3375 = vunpack.c.l.b16 %v1859
    %v3376 = vunpack.c.h.b16 %v1859
    %v3377 = vunpack.c.l.b16 %v1860
    %v3378 = vunpack.c.h.b16 %v1860
    %v3379 = vunpack.c.l.b16 %v1861
    %v3380 = vunpack.c.h.b16 %v1861
    %v3381 = vunpack.c.l.b16 %v1862
    %v3382 = vunpack.c.h.b16 %v1862
    %v3383 = vunpack.c.l.b16 %v1863
    %v3384 = vunpack.c.h.b16 %v1863
    %v3385 = vunpack.c.l.b16 %v1864
    %v3386 = vunpack.c.h.b16 %v1864
    %v3387 = vunpack.c.l.b16 %v1865
    %v3388 = vunpack.c.h.b16 %v1865
    %v3389 = vunpack.c.l.b16 %v1866
    %v3390 = vunpack.c.h.b16 %v1866
    %v3391 = vunpack.c.l.b16 %v1867
    %v3392 = vunpack.c.h.b16 %v1867
    %v3393 = vunpack.c.l.b16 %v1868
    %v3394 = vunpack.c.h.b16 %v1868
    %v3395 = vunpack.c.l.b16 %v1869
    %v3396 = vunpack.c.h.b16 %v1869
    %v3397 = vunpack.c.l.b16 %v1870
    %v3398 = vunpack.c.h.b16 %v1870
    %v3399 = vunpack.c.l.b16 %v1871
    %v3400 = vunpack.c.h.b16 %v1871
    %v3401 = vunpack.c.l.b16 %v1872
    %v3402 = vunpack.c.h.b16 %v1872
    %v3403 = vunpack.c.l.b16 %v1873
    %v3404 = vunpack.c.h.b16 %v1873
    %v3405 = vunpack.c.l.b16 %v1874
    %v3406 = vunpack.c.h.b16 %v1874
    %v3407 = vunpack.c.l.b16 %v1875
    %v3408 = vunpack.c.h.b16 %v1875
    %v3409 = vunpack.c.l.b16 %v1876
    %v3410 = vunpack.c.h.b16 %v1876
    %v3411 = vunpack.c.l.b16 %v1877
    %v3412 = vunpack.c.h.b16 %v1877
    %v3413 = vunpack.c.l.b16 %v1878
    %v3414 = vunpack.c.h.b16 %v1878
    %v3415 = vunpack.c.l.b16 %v1879
    %v3416 = vunpack.c.h.b16 %v1879
    %v3417 = vunpack.c.l.b16 %v1880
    %v3418 = vunpack.c.h.b16 %v1880
    %v3419 = vunpack.c.l.b16 %v1881
    %v3420 = vunpack.c.h.b16 %v1881
    %v3421 = vunpack.c.l.b16 %v1882
    %v3422 = vunpack.c.h.b16 %v1882
    %v3423 = vunpack.c.l.b16 %v1883
    %v3424 = vunpack.c.h.b16 %v1883
    %v3425 = vunpack.c.l.b16 %v1884
    %v3426 = vunpack.c.h.b16 %v1884
    %v3427 = vunpack.c.l.b16 %v1885
    %v3428 = vunpack.c.h.b16 %v1885
    %v3429 = vunpack.c.l.b16 %v1886
    %v3430 = vunpack.c.h.b16 %v1886
    %v3431 = vunpack.c.l.b16 %v1887
    %v3432 = vunpack.c.h.b16 %v1887
    %v3433 = vunpack.c.l.b16 %v1888
    %v3434 = vunpack.c.h.b16 %v1888
    %v3435 = vunpack.c.l.b16 %v1889
    %v3436 = vunpack.c.h.b16 %v1889
    %v3437 = vunpack.c.l.b16 %v1890
    %v3438 = vunpack.c.h.b16 %v1890
    %v3439 = vunpack.c.l.b16 %v1891
    %v3440 = vunpack.c.h.b16 %v1891
    %v3441 = vunpack.c.l.b16 %v1892
    %v3442 = vunpack.c.h.b16 %v1892
    %v3443 = vunpack.c.l.b16 %v1893
    %v3444 = vunpack.c.h.b16 %v1893
    %v3445 = vunpack.c.l.b16 %v1894
    %v3446 = vunpack.c.h.b16 %v1894
    %v3447 = vunpack.c.l.b16 %v1895
    %v3448 = vunpack.c.h.b16 %v1895
    %v3449 = vunpack.c.l.b16 %v1896
    %v3450 = vunpack.c.h.b16 %v1896
    %v3451 = vunpack.c.l.b16 %v1897
    %v3452 = vunpack.c.h.b16 %v1897
    %v3453 = vunpack.c.l.b16 %v1898
    %v3454 = vunpack.c.h.b16 %v1898
    %v3455 = vunpack.c.l.b16 %v1899
    %v3456 = vunpack.c.h.b16 %v1899
    %v3457 = vunpack.c.l.b16 %v1900
    %v3458 = vunpack.c.h.b16 %v1900
    %v3459 = vunpack.c.l.b16 %v1901
    %v3460 = vunpack.c.h.b16 %v1901
    %v3461 = vunpack.c.l.b16 %v1902
    %v3462 = vunpack.c.h.b16 %v1902
    %v3463 = vunpack.c.l.b16 %v1903
    %v3464 = vunpack.c.h.b16 %v1903
    %v3465 = vunpack.c.l.b16 %v1904
    %v3466 = vunpack.c.h.b16 %v1904
    %v3467 = vunpack.c.l.b16 %v1905
    %v3468 = vunpack.c.h.b16 %v1905
    %v3469 = vunpack.c.l.b16 %v1906
    %v3470 = vunpack.c.h.b16 %v1906
    %v3471 = vunpack.c.l.b16 %v1907
    %v3472 = vunpack.c.h.b16 %v1907
    %v3473 = vunpack.c.l.b16 %v1908
    %v3474 = vunpack.c.h.b16 %v1908
    %v3475 = vunpack.c.l.b16 %v1909
    %v3476 = vunpack.c.h.b16 %v1909
    %v3477 = vunpack.c.l.b16 %v1910
    %v3478 = vunpack.c.h.b16 %v1910
    %v3479 = vunpack.c.l.b16 %v1911
    %v3480 = vunpack.c.h.b16 %v1911
    %v3481 = vunpack.c.l.b16 %v1912
    %v3482 = vunpack.c.h.b16 %v1912
    %v3483 = vunpack.c.l.b16 %v1913
    %v3484 = vunpack.c.h.b16 %v1913
    %v3485 = vunpack.c.l.b16 %v1914
    %v3486 = vunpack.c.h.b16 %v1914
    %v3487 = vunpack.c.l.b16 %v1915
    %v3488 = vunpack.c.h.b16 %v1915
    %v3489 = vunpack.c.l.b16 %v1916
    %v3490 = vunpack.c.h.b16 %v1916
    %v3491 = vunpack.c.l.b16 %v1917
    %v3492 = vunpack.c.h.b16 %v1917
    %v3493 = vunpack.c.l.b16 %v1918
    %v3494 = vunpack.c.h.b16 %v1918
    %v3495 = vunpack.c.l.b16 %v1919
    %v3496 = vunpack.c.h.b16 %v1919
    %v3497 = vunpack.c.l.b16 %v1920
    %v3498 = vunpack.c.h.b16 %v1920
    %v3499 = vpack.c.b16 %v2483, %v2475
    %v3500 = vpack.c.b16 %v2484, %v2476
    %v3501 = vpack.c.b16 %v2485, %v2477
    %v3502 = vpack.c.b16 %v2486, %v2478
    %v3503 = vpack.c.b16 %v2487, %v2479
    %v3504 = vpack.c.b16 %v2488, %v2480
    %v3505 = vpack.c.b16 %v2489, %v2481
    %v3506 = vpack.c.b16 %v2490, %v2482
    %v3507 = vpack.c.b16 %v2499, %v2491
    %v3508 = vpack.c.b16 %v2500, %v2492
    %v3509 = vpack.c.b16 %v2501, %v2493
    %v3510 = vpack.c.b16 %v2502, %v2494
    %v3511 = vpack.c.b16 %v2503, %v2495
    %v3512 = vpack.c.b16 %v2504, %v2496
    %v3513 = vpack.c.b16 %v2505, %v2497
    %v3514 = vpack.c.b16 %v2506, %v2498
    %v3515 = vpack.c.b16 %v2515, %v2507
    %v3516 = vpack.c.b16 %v2516, %v2508
    %v3517 = vpack.c.b16 %v2517, %v2509
    %v3518 = vpack.c.b16 %v2518, %v2510
    %v3519 = vpack.c.b16 %v2519, %v2511
    %v3520 = vpack.c.b16 %v2520, %v2512
    %v3521 = vpack.c.b16 %v2521, %v2513
    %v3522 = vpack.c.b16 %v2522, %v2514
    %v3523 = vpack.c.b16 %v2531, %v2523
    %v3524 = vpack.c.b16 %v2532, %v2524
    %v3525 = vpack.c.b16 %v2533, %v2525
    %v3526 = vpack.c.b16 %v2534, %v2526
    %v3527 = vpack.c.b16 %v2535, %v2527
    %v3528 = vpack.c.b16 %v2536, %v2528
    %v3529 = vpack.c.b16 %v2537, %v2529
    %v3530 = vpack.c.b16 %v2538, %v2530
    %v3531 = vpack.c.b16 %v2547, %v2539
    %v3532 = vpack.c.b16 %v2548, %v2540
    %v3533 = vpack.c.b16 %v2549, %v2541
    %v3534 = vpack.c.b16 %v2550, %v2542
    %v3535 = vpack.c.b16 %v2551, %v2543
    %v3536 = vpack.c.b16 %v2552, %v2544
    %v3537 = vpack.c.b16 %v2553, %v2545
    %v3538 = vpack.c.b16 %v2554, %v2546
    %v3539 = vpack.c.b16 %v2563, %v2555
    %v3540 = vpack.c.b16 %v2564, %v2556
    %v3541 = vpack.c.b16 %v2565, %v2557
    %v3542 = vpack.c.b16 %v2566, %v2558
    %v3543 = vpack.c.b16 %v2567, %v2559
    %v3544 = vpack.c.b16 %v2568, %v2560
    %v3545 = vpack.c.b16 %v2569, %v2561
    %v3546 = vpack.c.b16 %v2570, %v2562
    %v3547 = vpack.c.b16 %v2579, %v2571
    %v3548 = vpack.c.b16 %v2580, %v2572
    %v3549 = vpack.c.b16 %v2581, %v2573
    %v3550 = vpack.c.b16 %v2582, %v2574
    %v3551 = vpack.c.b16 %v2583, %v2575
    %v3552 = vpack.c.b16 %v2584, %v2576
    %v3553 = vpack.c.b16 %v2585, %v2577
    %v3554 = vpack.c.b16 %v2586, %v2578
    %v3555 = vpack.c.b16 %v2595, %v2587
    %v3556 = vpack.c.b16 %v2596, %v2588
    %v3557 = vpack.c.b16 %v2597, %v2589
    %v3558 = vpack.c.b16 %v2598, %v2590
    %v3559 = vpack.c.b16 %v2599, %v2591
    %v3560 = vpack.c.b16 %v2600, %v2592
    %v3561 = vpack.c.b16 %v2601, %v2593
    %v3562 = vpack.c.b16 %v2602, %v2594
    %v3563 = vpack.c.b16 %v2611, %v2603
    %v3564 = vpack.c.b16 %v2612, %v2604
    %v3565 = vpack.c.b16 %v2613, %v2605
    %v3566 = vpack.c.b16 %v2614, %v2606
    %v3567 = vpack.c.b16 %v2615, %v2607
    %v3568 = vpack.c.b16 %v2616, %v2608
    %v3569 = vpack.c.b16 %v2617, %v2609
    %v3570 = vpack.c.b16 %v2618, %v2610
    %v3571 = vpack.c.b16 %v2627, %v2619
    %v3572 = vpack.c.b16 %v2628, %v2620
    %v3573 = vpack.c.b16 %v2629, %v2621
    %v3574 = vpack.c.b16 %v2630, %v2622
    %v3575 = vpack.c.b16 %v2631, %v2623
    %v3576 = vpack.c.b16 %v2632, %v2624
    %v3577 = vpack.c.b16 %v2633, %v2625
    %v3578 = vpack.c.b16 %v2634, %v2626
    %v3579 = vpack.c.b16 %v2643, %v2635
    %v3580 = vpack.c.b16 %v2644, %v2636
    %v3581 = vpack.c.b16 %v2645, %v2637
    %v3582 = vpack.c.b16 %v2646, %v2638
    %v3583 = vpack.c.b16 %v2647, %v2639
    %v3584 = vpack.c.b16 %v2648, %v2640
    %v3585 = vpack.c.b16 %v2649, %v2641
    %v3586 = vpack.c.b16 %v2650, %v2642
    %v3587 = vpack.c.b16 %v2659, %v2651
    %v3588 = vpack.c.b16 %v2660, %v2652
    %v3589 = vpack.c.b16 %v2661, %v2653
    %v3590 = vpack.c.b16 %v2662, %v2654
    %v3591 = vpack.c.b16 %v2663, %v2655
    %v3592 = vpack.c.b16 %v2664, %v2656
    %v3593 = vpack.c.b16 %v2665, %v2657
    %v3594 = vpack.c.b16 %v2666, %v2658
    %v3595 = vpack.c.b16 %v2675, %v2667
    %v3596 = vpack.c.b16 %v2676, %v2668
    %v3597 = vpack.c.b16 %v2677, %v2669
    %v3598 = vpack.c.b16 %v2678, %v2670
    %v3599 = vpack.c.b16 %v2679, %v2671
    %v3600 = vpack.c.b16 %v2680, %v2672
    %v3601 = vpack.c.b16 %v2681, %v2673
    %v3602 = vpack.c.b16 %v2682, %v2674
    %v3603 = vpack.c.b16 %v2691, %v2683
    %v3604 = vpack.c.b16 %v2692, %v2684
    %v3605 = vpack.c.b16 %v2693, %v2685
    %v3606 = vpack.c.b16 %v2694, %v2686
    %v3607 = vpack.c.b16 %v2695, %v2687
    %v3608 = vpack.c.b16 %v2696, %v2688
    %v3609 = vpack.c.b16 %v2697, %v2689
    %v3610 = vpack.c.b16 %v2698, %v2690
    %v3611 = vpack.c.b16 %v2707, %v2699
    %v3612 = vpack.c.b16 %v2708, %v2700
    %v3613 = vpack.c.b16 %v2709, %v2701
    %v3614 = vpack.c.b16 %v2710, %v2702
    %v3615 = vpack.c.b16 %v2711, %v2703
    %v3616 = vpack.c.b16 %v2712, %v2704
    %v3617 = vpack.c.b16 %v2713, %v2705
    %v3618 = vpack.c.b16 %v2714, %v2706
    %v3619 = vpack.c.b16 %v2723, %v2715
    %v3620 = vpack.c.b16 %v2724, %v2716
    %v3621 = vpack.c.b16 %v2725, %v2717
    %v3622 = vpack.c.b16 %v2726, %v2718
    %v3623 = vpack.c.b16 %v2727, %v2719
    %v3624 = vpack.c.b16 %v2728, %v2720
    %v3625 = vpack.c.b16 %v2729, %v2721
    %v3626 = vpack.c.b16 %v2730, %v2722
    %v3627 = vpack.c.b16 %v2739, %v2731
    %v3628 = vpack.c.b16 %v2740, %v2732
    %v3629 = vpack.c.b16 %v2741, %v2733
    %v3630 = vpack.c.b16 %v2742, %v2734
    %v3631 = vpack.c.b16 %v2743, %v2735
    %v3632 = vpack.c.b16 %v2744, %v2736
    %v3633 = vpack.c.b16 %v2745, %v2737
    %v3634 = vpack.c.b16 %v2746, %v2738
    %v3635 = vpack.c.b16 %v2755, %v2747
    %v3636 = vpack.c.b16 %v2756, %v2748
    %v3637 = vpack.c.b16 %v2757, %v2749
    %v3638 = vpack.c.b16 %v2758, %v2750
    %v3639 = vpack.c.b16 %v2759, %v2751
    %v3640 = vpack.c.b16 %v2760, %v2752
    %v3641 = vpack.c.b16 %v2761, %v2753
    %v3642 = vpack.c.b16 %v2762, %v2754
    %v3643 = vpack.c.b16 %v2771, %v2763
    %v3644 = vpack.c.b16 %v2772, %v2764
    %v3645 = vpack.c.b16 %v2773, %v2765
    %v3646 = vpack.c.b16 %v2774, %v2766
    %v3647 = vpack.c.b16 %v2775, %v2767
    %v3648 = vpack.c.b16 %v2776, %v2768
    %v3649 = vpack.c.b16 %v2777, %v2769
    %v3650 = vpack.c.b16 %v2778, %v2770
    %v3651 = vpack.c.b16 %v2787, %v2779
    %v3652 = vpack.c.b16 %v2788, %v2780
    %v3653 = vpack.c.b16 %v2789, %v2781
    %v3654 = vpack.c.b16 %v2790, %v2782
    %v3655 = vpack.c.b16 %v2791, %v2783
    %v3656 = vpack.c.b16 %v2792, %v2784
    %v3657 = vpack.c.b16 %v2793, %v2785
    %v3658 = vpack.c.b16 %v2794, %v2786
    %v3659 = vpack.c.b16 %v2803, %v2795
    %v3660 = vpack.c.b16 %v2804, %v2796
    %v3661 = vpack.c.b16 %v2805, %v2797
    %v3662 = vpack.c.b16 %v2806, %v2798
    %v3663 = vpack.c.b16 %v2807, %v2799
    %v3664 = vpack.c.b16 %v2808, %v2800
    %v3665 = vpack.c.b16 %v2809, %v2801
    %v3666 = vpack.c.b16 %v2810, %v2802
    %v3667 = vpack.c.b16 %v2819, %v2811
    %v3668 = vpack.c.b16 %v2820, %v2812
    %v3669 = vpack.c.b16 %v2821, %v2813
    %v3670 = vpack.c.b16 %v2822, %v2814
    %v3671 = vpack.c.b16 %v2823, %v2815
    %v3672 = vpack.c.b16 %v2824, %v2816
    %v3673 = vpack.c.b16 %v2825, %v2817
    %v3674 = vpack.c.b16 %v2826, %v2818
    %v3675 = vpack.c.b16 %v2835, %v2827
    %v3676 = vpack.c.b16 %v2836, %v2828
    %v3677 = vpack.c.b16 %v2837, %v2829
    %v3678 = vpack.c.b16 %v2838, %v2830
    %v3679 = vpack.c.b16 %v2839, %v2831
    %v3680 = vpack.c.b16 %v2840, %v2832
    %v3681 = vpack.c.b16 %v2841, %v2833
    %v3682 = vpack.c.b16 %v2842, %v2834
    %v3683 = vpack.c.b16 %v2851, %v2843
    %v3684 = vpack.c.b16 %v2852, %v2844
    %v3685 = vpack.c.b16 %v2853, %v2845
    %v3686 = vpack.c.b16 %v2854, %v2846
    %v3687 = vpack.c.b16 %v2855, %v2847
    %v3688 = vpack.c.b16 %v2856, %v2848
    %v3689 = vpack.c.b16 %v2857, %v2849
    %v3690 = vpack.c.b16 %v2858, %v2850
    %v3691 = vpack.c.b16 %v2867, %v2859
    %v3692 = vpack.c.b16 %v2868, %v2860
    %v3693 = vpack.c.b16 %v2869, %v2861
    %v3694 = vpack.c.b16 %v2870, %v2862
    %v3695 = vpack.c.b16 %v2871, %v2863
    %v3696 = vpack.c.b16 %v2872, %v2864
    %v3697 = vpack.c.b16 %v2873, %v2865
    %v3698 = vpack.c.b16 %v2874, %v2866
    %v3699 = vpack.c.b16 %v2883, %v2875
    %v3700 = vpack.c.b16 %v2884, %v2876
    %v3701 = vpack.c.b16 %v2885, %v2877
    %v3702 = vpack.c.b16 %v2886, %v2878
    %v3703 = vpack.c.b16 %v2887, %v2879
    %v3704 = vpack.c.b16 %v2888, %v2880
    %v3705 = vpack.c.b16 %v2889, %v2881
    %v3706 = vpack.c.b16 %v2890, %v2882
    %v3707 = vpack.c.b16 %v2899, %v2891
    %v3708 = vpack.c.b16 %v2900, %v2892
    %v3709 = vpack.c.b16 %v2901, %v2893
    %v3710 = vpack.c.b16 %v2902, %v2894
    %v3711 = vpack.c.b16 %v2903, %v2895
    %v3712 = vpack.c.b16 %v2904, %v2896
    %v3713 = vpack.c.b16 %v2905, %v2897
    %v3714 = vpack.c.b16 %v2906, %v2898
    %v3715 = vpack.c.b16 %v2915, %v2907
    %v3716 = vpack.c.b16 %v2916, %v2908
    %v3717 = vpack.c.b16 %v2917, %v2909
    %v3718 = vpack.c.b16 %v2918, %v2910
    %v3719 = vpack.c.b16 %v2919, %v2911
    %v3720 = vpack.c.b16 %v2920, %v2912
    %v3721 = vpack.c.b16 %v2921, %v2913
    %v3722 = vpack.c.b16 %v2922, %v2914
    %v3723 = vpack.c.b16 %v2931, %v2923
    %v3724 = vpack.c.b16 %v2932, %v2924
    %v3725 = vpack.c.b16 %v2933, %v2925
    %v3726 = vpack.c.b16 %v2934, %v2926
    %v3727 = vpack.c.b16 %v2935, %v2927
    %v3728 = vpack.c.b16 %v2936, %v2928
    %v3729 = vpack.c.b16 %v2937, %v2929
    %v3730 = vpack.c.b16 %v2938, %v2930
    %v3731 = vpack.c.b16 %v2947, %v2939
    %v3732 = vpack.c.b16 %v2948, %v2940
    %v3733 = vpack.c.b16 %v2949, %v2941
    %v3734 = vpack.c.b16 %v2950, %v2942
    %v3735 = vpack.c.b16 %v2951, %v2943
    %v3736 = vpack.c.b16 %v2952, %v2944
    %v3737 = vpack.c.b16 %v2953, %v2945
    %v3738 = vpack.c.b16 %v2954, %v2946
    %v3739 = vpack.c.b16 %v2963, %v2955
    %v3740 = vpack.c.b16 %v2964, %v2956
    %v3741 = vpack.c.b16 %v2965, %v2957
    %v3742 = vpack.c.b16 %v2966, %v2958
    %v3743 = vpack.c.b16 %v2967, %v2959
    %v3744 = vpack.c.b16 %v2968, %v2960
    %v3745 = vpack.c.b16 %v2969, %v2961
    %v3746 = vpack.c.b16 %v2970, %v2962
    %v3747 = vpack.c.b16 %v2979, %v2971
    %v3748 = vpack.c.b16 %v2980, %v2972
    %v3749 = vpack.c.b16 %v2981, %v2973
    %v3750 = vpack.c.b16 %v2982, %v2974
    %v3751 = vpack.c.b16 %v2983, %v2975
    %v3752 = vpack.c.b16 %v2984, %v2976
    %v3753 = vpack.c.b16 %v2985, %v2977
    %v3754 = vpack.c.b16 %v2986, %v2978
    %v3755 = vpack.c.b16 %v2995, %v2987
    %v3756 = vpack.c.b16 %v2996, %v2988
    %v3757 = vpack.c.b16 %v2997, %v2989
    %v3758 = vpack.c.b16 %v2998, %v2990
    %v3759 = vpack.c.b16 %v2999, %v2991
    %v3760 = vpack.c.b16 %v3000, %v2992
    %v3761 = vpack.c.b16 %v3001, %v2993
    %v3762 = vpack.c.b16 %v3002, %v2994
    %v3763 = vpack.c.b16 %v3011, %v3003
    %v3764 = vpack.c.b16 %v3012, %v3004
    %v3765 = vpack.c.b16 %v3013, %v3005
    %v3766 = vpack.c.b16 %v3014, %v3006
    %v3767 = vpack.c.b16 %v3015, %v3007
    %v3768 = vpack.c.b16 %v3016, %v3008
    %v3769 = vpack.c.b16 %v3017, %v3009
    %v3770 = vpack.c.b16 %v3018, %v3010
    %v3771 = vpack.c.b16 %v3027, %v3019
    %v3772 = vpack.c.b16 %v3028, %v3020
    %v3773 = vpack.c.b16 %v3029, %v3021
    %v3774 = vpack.c.b16 %v3030, %v3022
    %v3775 = vpack.c.b16 %v3031, %v3023
    %v3776 = vpack.c.b16 %v3032, %v3024
    %v3777 = vpack.c.b16 %v3033, %v3025
    %v3778 = vpack.c.b16 %v3034, %v3026
    %v3779 = vpack.c.b16 %v3043, %v3035
    %v3780 = vpack.c.b16 %v3044, %v3036
    %v3781 = vpack.c.b16 %v3045, %v3037
    %v3782 = vpack.c.b16 %v3046, %v3038
    %v3783 = vpack.c.b16 %v3047, %v3039
    %v3784 = vpack.c.b16 %v3048, %v3040
    %v3785 = vpack.c.b16 %v3049, %v3041
    %v3786 = vpack.c.b16 %v3050, %v3042
    %v3787 = vpack.c.b16 %v3059, %v3051
    %v3788 = vpack.c.b16 %v3060, %v3052
    %v3789 = vpack.c.b16 %v3061, %v3053
    %v3790 = vpack.c.b16 %v3062, %v3054
    %v3791 = vpack.c.b16 %v3063, %v3055
    %v3792 = vpack.c.b16 %v3064, %v3056
    %v3793 = vpack.c.b16 %v3065, %v3057
    %v3794 = vpack.c.b16 %v3066, %v3058
    %v3795 = vpack.c.b16 %v3075, %v3067
    %v3796 = vpack.c.b16 %v3076, %v3068
    %v3797 = vpack.c.b16 %v3077, %v3069
    %v3798 = vpack.c.b16 %v3078, %v3070
    %v3799 = vpack.c.b16 %v3079, %v3071
    %v3800 = vpack.c.b16 %v3080, %v3072
    %v3801 = vpack.c.b16 %v3081, %v3073
    %v3802 = vpack.c.b16 %v3082, %v3074
    %v3803 = vpack.c.b16 %v3091, %v3083
    %v3804 = vpack.c.b16 %v3092, %v3084
    %v3805 = vpack.c.b16 %v3093, %v3085
    %v3806 = vpack.c.b16 %v3094, %v3086
    %v3807 = vpack.c.b16 %v3095, %v3087
    %v3808 = vpack.c.b16 %v3096, %v3088
    %v3809 = vpack.c.b16 %v3097, %v3089
    %v3810 = vpack.c.b16 %v3098, %v3090
    %v3811 = vpack.c.b16 %v3107, %v3099
    %v3812 = vpack.c.b16 %v3108, %v3100
    %v3813 = vpack.c.b16 %v3109, %v3101
    %v3814 = vpack.c.b16 %v3110, %v3102
    %v3815 = vpack.c.b16 %v3111, %v3103
    %v3816 = vpack.c.b16 %v3112, %v3104
    %v3817 = vpack.c.b16 %v3113, %v3105
    %v3818 = vpack.c.b16 %v3114, %v3106
    %v3819 = vpack.c.b16 %v3123, %v3115
    %v3820 = vpack.c.b16 %v3124, %v3116
    %v3821 = vpack.c.b16 %v3125, %v3117
    %v3822 = vpack.c.b16 %v3126, %v3118
    %v3823 = vpack.c.b16 %v3127, %v3119
    %v3824 = vpack.c.b16 %v3128, %v3120
    %v3825 = vpack.c.b16 %v3129, %v3121
    %v3826 = vpack.c.b16 %v3130, %v3122
    %v3827 = vpack.c.b16 %v3139, %v3131
    %v3828 = vpack.c.b16 %v3140, %v3132
    %v3829 = vpack.c.b16 %v3141, %v3133
    %v3830 = vpack.c.b16 %v3142, %v3134
    %v3831 = vpack.c.b16 %v3143, %v3135
    %v3832 = vpack.c.b16 %v3144, %v3136
    %v3833 = vpack.c.b16 %v3145, %v3137
    %v3834 = vpack.c.b16 %v3146, %v3138
    %v3835 = vpack.c.b16 %v3155, %v3147
    %v3836 = vpack.c.b16 %v3156, %v3148
    %v3837 = vpack.c.b16 %v3157, %v3149
    %v3838 = vpack.c.b16 %v3158, %v3150
    %v3839 = vpack.c.b16 %v3159, %v3151
    %v3840 = vpack.c.b16 %v3160, %v3152
    %v3841 = vpack.c.b16 %v3161, %v3153
    %v3842 = vpack.c.b16 %v3162, %v3154
    %v3843 = vpack.c.b16 %v3171, %v3163
    %v3844 = vpack.c.b16 %v3172, %v3164
    %v3845 = vpack.c.b16 %v3173, %v3165
    %v3846 = vpack.c.b16 %v3174, %v3166
    %v3847 = vpack.c.b16 %v3175, %v3167
    %v3848 = vpack.c.b16 %v3176, %v3168
    %v3849 = vpack.c.b16 %v3177, %v3169
    %v3850 = vpack.c.b16 %v3178, %v3170
    %v3851 = vpack.c.b16 %v3187, %v3179
    %v3852 = vpack.c.b16 %v3188, %v3180
    %v3853 = vpack.c.b16 %v3189, %v3181
    %v3854 = vpack.c.b16 %v3190, %v3182
    %v3855 = vpack.c.b16 %v3191, %v3183
    %v3856 = vpack.c.b16 %v3192, %v3184
    %v3857 = vpack.c.b16 %v3193, %v3185
    %v3858 = vpack.c.b16 %v3194, %v3186
    %v3859 = vpack.c.b16 %v3203, %v3195
    %v3860 = vpack.c.b16 %v3204, %v3196
    %v3861 = vpack.c.b16 %v3205, %v3197
    %v3862 = vpack.c.b16 %v3206, %v3198
    %v3863 = vpack.c.b16 %v3207, %v3199
    %v3864 = vpack.c.b16 %v3208, %v3200
    %v3865 = vpack.c.b16 %v3209, %v3201
    %v3866 = vpack.c.b16 %v3210, %v3202
    %v3867 = vpack.c.b16 %v3219, %v3211
    %v3868 = vpack.c.b16 %v3220, %v3212
    %v3869 = vpack.c.b16 %v3221, %v3213
    %v3870 = vpack.c.b16 %v3222, %v3214
    %v3871 = vpack.c.b16 %v3223, %v3215
    %v3872 = vpack.c.b16 %v3224, %v3216
    %v3873 = vpack.c.b16 %v3225, %v3217
    %v3874 = vpack.c.b16 %v3226, %v3218
    %v3875 = vpack.c.b16 %v3235, %v3227
    %v3876 = vpack.c.b16 %v3236, %v3228
    %v3877 = vpack.c.b16 %v3237, %v3229
    %v3878 = vpack.c.b16 %v3238, %v3230
    %v3879 = vpack.c.b16 %v3239, %v3231
    %v3880 = vpack.c.b16 %v3240, %v3232
    %v3881 = vpack.c.b16 %v3241, %v3233
    %v3882 = vpack.c.b16 %v3242, %v3234
    %v3883 = vpack.c.b16 %v3251, %v3243
    %v3884 = vpack.c.b16 %v3252, %v3244
    %v3885 = vpack.c.b16 %v3253, %v3245
    %v3886 = vpack.c.b16 %v3254, %v3246
    %v3887 = vpack.c.b16 %v3255, %v3247
    %v3888 = vpack.c.b16 %v3256, %v3248
    %v3889 = vpack.c.b16 %v3257, %v3249
    %v3890 = vpack.c.b16 %v3258, %v3250
    %v3891 = vpack.c.b16 %v3267, %v3259
    %v3892 = vpack.c.b16 %v3268, %v3260
    %v3893 = vpack.c.b16 %v3269, %v3261
    %v3894 = vpack.c.b16 %v3270, %v3262
    %v3895 = vpack.c.b16 %v3271, %v3263
    %v3896 = vpack.c.b16 %v3272, %v3264
    %v3897 = vpack.c.b16 %v3273, %v3265
    %v3898 = vpack.c.b16 %v3274, %v3266
    %v3899 = vpack.c.b16 %v3283, %v3275
    %v3900 = vpack.c.b16 %v3284, %v3276
    %v3901 = vpack.c.b16 %v3285, %v3277
    %v3902 = vpack.c.b16 %v3286, %v3278
    %v3903 = vpack.c.b16 %v3287, %v3279
    %v3904 = vpack.c.b16 %v3288, %v3280
    %v3905 = vpack.c.b16 %v3289, %v3281
    %v3906 = vpack.c.b16 %v3290, %v3282
    %v3907 = vpack.c.b16 %v3299, %v3291
    %v3908 = vpack.c.b16 %v3300, %v3292
    %v3909 = vpack.c.b16 %v3301, %v3293
    %v3910 = vpack.c.b16 %v3302, %v3294
    %v3911 = vpack.c.b16 %v3303, %v3295
    %v3912 = vpack.c.b16 %v3304, %v3296
    %v3913 = vpack.c.b16 %v3305, %v3297
    %v3914 = vpack.c.b16 %v3306, %v3298
    %v3915 = vpack.c.b16 %v3315, %v3307
    %v3916 = vpack.c.b16 %v3316, %v3308
    %v3917 = vpack.c.b16 %v3317, %v3309
    %v3918 = vpack.c.b16 %v3318, %v3310
    %v3919 = vpack.c.b16 %v3319, %v3311
    %v3920 = vpack.c.b16 %v3320, %v3312
    %v3921 = vpack.c.b16 %v3321, %v3313
    %v3922 = vpack.c.b16 %v3322, %v3314
    %v3923 = vpack.c.b16 %v3331, %v3323
    %v3924 = vpack.c.b16 %v3332, %v3324
    %v3925 = vpack.c.b16 %v3333, %v3325
    %v3926 = vpack.c.b16 %v3334, %v3326
    %v3927 = vpack.c.b16 %v3335, %v3327
    %v3928 = vpack.c.b16 %v3336, %v3328
    %v3929 = vpack.c.b16 %v3337, %v3329
    %v3930 = vpack.c.b16 %v3338, %v3330
    %v3931 = vpack.c.b16 %v3347, %v3339
    %v3932 = vpack.c.b16 %v3348, %v3340
    %v3933 = vpack.c.b16 %v3349, %v3341
    %v3934 = vpack.c.b16 %v3350, %v3342
    %v3935 = vpack.c.b16 %v3351, %v3343
    %v3936 = vpack.c.b16 %v3352, %v3344
    %v3937 = vpack.c.b16 %v3353, %v3345
    %v3938 = vpack.c.b16 %v3354, %v3346
    %v3939 = vpack.c.b16 %v3363, %v3355
    %v3940 = vpack.c.b16 %v3364, %v3356
    %v3941 = vpack.c.b16 %v3365, %v3357
    %v3942 = vpack.c.b16 %v3366, %v3358
    %v3943 = vpack.c.b16 %v3367, %v3359
    %v3944 = vpack.c.b16 %v3368, %v3360
    %v3945 = vpack.c.b16 %v3369, %v3361
    %v3946 = vpack.c.b16 %v3370, %v3362
    %v3947 = vpack.c.b16 %v3379, %v3371
    %v3948 = vpack.c.b16 %v3380, %v3372
    %v3949 = vpack.c.b16 %v3381, %v3373
    %v3950 = vpack.c.b16 %v3382, %v3374
    %v3951 = vpack.c.b16 %v3383, %v3375
    %v3952 = vpack.c.b16 %v3384, %v3376
    %v3953 = vpack.c.b16 %v3385, %v3377
    %v3954 = vpack.c.b16 %v3386, %v3378
    %v3955 = vpack.c.b16 %v3395, %v3387
    %v3956 = vpack.c.b16 %v3396, %v3388
    %v3957 = vpack.c.b16 %v3397, %v3389
    %v3958 = vpack.c.b16 %v3398, %v3390
    %v3959 = vpack.c.b16 %v3399, %v3391
    %v3960 = vpack.c.b16 %v3400, %v3392
    %v3961 = vpack.c.b16 %v3401, %v3393
    %v3962 = vpack.c.b16 %v3402, %v3394
    %v3963 = vpack.c.b16 %v3411, %v3403
    %v3964 = vpack.c.b16 %v3412, %v3404
    %v3965 = vpack.c.b16 %v3413, %v3405
    %v3966 = vpack.c.b16 %v3414, %v3406
    %v3967 = vpack.c.b16 %v3415, %v3407
    %v3968 = vpack.c.b16 %v3416, %v3408
    %v3969 = vpack.c.b16 %v3417, %v3409
    %v3970 = vpack.c.b16 %v3418, %v3410
    %v3971 = vpack.c.b16 %v3427, %v3419
    %v3972 = vpack.c.b16 %v3428, %v3420
    %v3973 = vpack.c.b16 %v3429, %v3421
    %v3974 = vpack.c.b16 %v3430, %v3422
    %v3975 = vpack.c.b16 %v3431, %v3423
    %v3976 = vpack.c.b16 %v3432, %v3424
    %v3977 = vpack.c.b16 %v3433, %v3425
    %v3978 = vpack.c.b16 %v3434, %v3426
    %v3979 = vpack.c.b16 %v3443, %v3435
    %v3980 = vpack.c.b16 %v3444, %v3436
    %v3981 = vpack.c.b16 %v3445, %v3437
    %v3982 = vpack.c.b16 %v3446, %v3438
    %v3983 = vpack.c.b16 %v3447, %v3439
    %v3984 = vpack.c.b16 %v3448, %v3440
    %v3985 = vpack.c.b16 %v3449, %v3441
    %v3986 = vpack.c.b16 %v3450, %v3442
    %v3987 = vpack.c.b16 %v3459, %v3451
    %v3988 = vpack.c.b16 %v3460, %v3452
    %v3989 = vpack.c.b16 %v3461, %v3453
    %v3990 = vpack.c.b16 %v3462, %v3454
    %v3991 = vpack.c.b16 %v3463, %v3455
    %v3992 = vpack.c.b16 %v3464, %v3456
    %v3993 = vpack.c.b16 %v3465, %v3457
    %v3994 = vpack.c.b16 %v3466, %v3458
    %v3995 = vpack.c.b16 %v3475, %v3467
    %v3996 = vpack.c.b16 %v3476, %v3468
    %v3997 = vpack.c.b16 %v3477, %v3469
    %v3998 = vpack.c.b16 %v3478, %v3470
    %v3999 = vpack.c.b16 %v3479, %v3471
    %v4000 = vpack.c.b16 %v3480, %v3472
    %v4001 = vpack.c.b16 %v3481, %v3473
    %v4002 = vpack.c.b16 %v3482, %v3474
    %v4003 = vpack.c.b16 %v3491, %v3483
    %v4004 = vpack.c.b16 %v3492, %v3484
    %v4005 = vpack.c.b16 %v3493, %v3485
    %v4006 = vpack.c.b16 %v3494, %v3486
    %v4007 = vpack.c.b16 %v3495, %v3487
    %v4008 = vpack.c.b16 %v3496, %v3488
    %v4009 = vpack.c.b16 %v3497, %v3489
    %v4010 = vpack.c.b16 %v3498, %v3490
    %4523 = vmatprep.subr.bf16.mxu0 %v3500
    %4524 = vmatpush1.bf16.msra.mxu0 %v3499
    %4525 = vmatprep.subr.bf16.mxu0 %v3508
    %4526 = vmatpush1.bf16.msra.mxu0 %v3507
    %4527 = vmatprep.subr.bf16.mxu0 %v3516
    %4528 = vmatpush1.bf16.msra.mxu0 %v3515
    %4529 = vmatprep.subr.bf16.mxu0 %v3524
    %4530 = vmatpush1.bf16.msra.mxu0 %v3523
    %4531 = vmatprep.subr.bf16.mxu0 %v3532
    %4532 = vmatpush1.bf16.msra.mxu0 %v3531
    %4533 = vmatprep.subr.bf16.mxu0 %v3540
    %4534 = vmatpush1.bf16.msra.mxu0 %v3539
    %4535 = vmatprep.subr.bf16.mxu0 %v3548
    %4536 = vmatpush1.bf16.msra.mxu0 %v3547
    %4537 = vmatprep.subr.bf16.mxu0 %v3556
    %4538 = vmatpush1.bf16.msra.mxu0 %v3555
    %4539 = vmatprep.subr.bf16.mxu0 %v3564
    %4540 = vmatpush1.bf16.msra.mxu0 %v3563
    %4541 = vmatprep.subr.bf16.mxu0 %v3572
    %4542 = vmatpush1.bf16.msra.mxu0 %v3571
    %4543 = vmatprep.subr.bf16.mxu0 %v3580
    %4544 = vmatpush1.bf16.msra.mxu0 %v3579
    %4545 = vmatprep.subr.bf16.mxu0 %v3588
    %4546 = vmatpush1.bf16.msra.mxu0 %v3587
    %4547 = vmatprep.subr.bf16.mxu0 %v3596
    %4548 = vmatpush1.bf16.msra.mxu0 %v3595
    %4549 = vmatprep.subr.bf16.mxu0 %v3604
    %4550 = vmatpush1.bf16.msra.mxu0 %v3603
    %4551 = vmatprep.subr.bf16.mxu0 %v3612
    %4552 = vmatpush1.bf16.msra.mxu0 %v3611
    %4553 = vmatprep.subr.bf16.mxu0 %v3620
    %4554 = vmatpush1.bf16.msra.mxu0 %v3619
    %4555 = vmatprep.mubr.bf16.mxu0 %v1402
    %4556 = vmatmul.mubr.bf16.gmra.mrb[0].mxu0 %v1401
    %v4557 = vpop.f32.mrb[0].mxu0
    %v4558 = vadd.f32 %v1926, %v4557
    %v4559 = vpop.f32.mrb[0].mxu0
    %v4560 = vadd.f32 %v1930, %v4559
    %v4561 = vpop.f32.mrb[0].mxu0
    %v4562 = vadd.f32 %v1926, %v4561
    %v4563 = vpop.f32.mrb[0].mxu0
    %v4564 = vadd.f32 %v1930, %v4563
    %4565 = vdwg.mxu0
    %4566 = vmatprep.subr.bf16.mxu0 %v3628
    %4567 = vmatpush1.bf16.msra.mxu0 %v3627
    %4568 = vmatprep.subr.bf16.mxu0 %v3636
    %4569 = vmatpush1.bf16.msra.mxu0 %v3635
    %4570 = vmatprep.subr.bf16.mxu0 %v3644
    %4571 = vmatpush1.bf16.msra.mxu0 %v3643
    %4572 = vmatprep.subr.bf16.mxu0 %v3652
    %4573 = vmatpush1.bf16.msra.mxu0 %v3651
    %4574 = vmatprep.subr.bf16.mxu0 %v3660
    %4575 = vmatpush1.bf16.msra.mxu0 %v3659
    %4576 = vmatprep.subr.bf16.mxu0 %v3668
    %4577 = vmatpush1.bf16.msra.mxu0 %v3667
    %4578 = vmatprep.subr.bf16.mxu0 %v3676
    %4579 = vmatpush1.bf16.msra.mxu0 %v3675
    %4580 = vmatprep.subr.bf16.mxu0 %v3684
    %4581 = vmatpush1.bf16.msra.mxu0 %v3683
    %4582 = vmatprep.subr.bf16.mxu0 %v3692
    %4583 = vmatpush1.bf16.msra.mxu0 %v3691
    %4584 = vmatprep.subr.bf16.mxu0 %v3700
    %4585 = vmatpush1.bf16.msra.mxu0 %v3699
    %4586 = vmatprep.subr.bf16.mxu0 %v3708
    %4587 = vmatpush1.bf16.msra.mxu0 %v3707
    %4588 = vmatprep.subr.bf16.mxu0 %v3716
    %4589 = vmatpush1.bf16.msra.mxu0 %v3715
    %4590 = vmatprep.subr.bf16.mxu0 %v3724
    %4591 = vmatpush1.bf16.msra.mxu0 %v3723
    %4592 = vmatprep.subr.bf16.mxu0 %v3732
    %4593 = vmatpush1.bf16.msra.mxu0 %v3731
    %4594 = vmatprep.subr.bf16.mxu0 %v3740
    %4595 = vmatpush1.bf16.msra.mxu0 %v3739
    %4596 = vmatprep.subr.bf16.mxu0 %v3748
    %4597 = vmatpush1.bf16.msra.mxu0 %v3747
    %4598 = vmatprep.mubr.bf16.mxu0 %v1404
    %4599 = vmatmul.mubr.bf16.gmra.mrb[0].mxu0 %v1403
    %v4600 = vpop.f32.mrb[0].mxu0
    %v4601 = vadd.f32 %v4558, %v4600
    %v4602 = vpop.f32.mrb[0].mxu0
    %v4603 = vadd.f32 %v4560, %v4602
    %v4604 = vpop.f32.mrb[0].mxu0
    %v4605 = vadd.f32 %v4562, %v4604
    %v4606 = vpop.f32.mrb[0].mxu0
    %v4607 = vadd.f32 %v4564, %v4606
    %4608 = vdwg.mxu0
    %4609 = vmatprep.subr.bf16.mxu0 %v3756
    %4610 = vmatpush1.bf16.msra.mxu0 %v3755
    %4611 = vmatprep.subr.bf16.mxu0 %v3764
    %4612 = vmatpush1.bf16.msra.mxu0 %v3763
    %4613 = vmatprep.subr.bf16.mxu0 %v3772
    %4614 = vmatpush1.bf16.msra.mxu0 %v3771
    %4615 = vmatprep.subr.bf16.mxu0 %v3780
    %4616 = vmatpush1.bf16.msra.mxu0 %v3779
    %4617 = vmatprep.subr.bf16.mxu0 %v3788
    %4618 = vmatpush1.bf16.msra.mxu0 %v3787
    %4619 = vmatprep.subr.bf16.mxu0 %v3796
    %4620 = vmatpush1.bf16.msra.mxu0 %v3795
    %4621 = vmatprep.subr.bf16.mxu0 %v3804
    %4622 = vmatpush1.bf16.msra.mxu0 %v3803
    %4623 = vmatprep.subr.bf16.mxu0 %v3812
    %4624 = vmatpush1.bf16.msra.mxu0 %v3811
    %4625 = vmatprep.subr.bf16.mxu0 %v3820
    %4626 = vmatpush1.bf16.msra.mxu0 %v3819
    %4627 = vmatprep.subr.bf16.mxu0 %v3828
    %4628 = vmatpush1.bf16.msra.mxu0 %v3827
    %4629 = vmatprep.subr.bf16.mxu0 %v3836
    %4630 = vmatpush1.bf16.msra.mxu0 %v3835
    %4631 = vmatprep.subr.bf16.mxu0 %v3844
    %4632 = vmatpush1.bf16.msra.mxu0 %v3843
    %4633 = vmatprep.subr.bf16.mxu0 %v3852
    %4634 = vmatpush1.bf16.msra.mxu0 %v3851
    %4635 = vmatprep.subr.bf16.mxu0 %v3860
    %4636 = vmatpush1.bf16.msra.mxu0 %v3859
    %4637 = vmatprep.subr.bf16.mxu0 %v3868
    %4638 = vmatpush1.bf16.msra.mxu0 %v3867
    %4639 = vmatprep.subr.bf16.mxu0 %v3876
    %4640 = vmatpush1.bf16.msra.mxu0 %v3875
    %4641 = vmatprep.mubr.bf16.mxu0 %v1406
    %4642 = vmatmul.mubr.bf16.gmra.mrb[0].mxu0 %v1405
    %v4643 = vpop.f32.mrb[0].mxu0
    %v4644 = vadd.f32 %v4601, %v4643
    %v4645 = vpop.f32.mrb[0].mxu0
    %v4646 = vadd.f32 %v4603, %v4645
    %v4647 = vpop.f32.mrb[0].mxu0
    %v4648 = vadd.f32 %v4605, %v4647
    %v4649 = vpop.f32.mrb[0].mxu0
    %v4650 = vadd.f32 %v4607, %v4649
    %4651 = vdwg.mxu0
    %4652 = vmatprep.subr.bf16.mxu0 %v3884
    %4653 = vmatpush1.bf16.msra.mxu0 %v3883
    %4654 = vmatprep.subr.bf16.mxu0 %v3892
    %4655 = vmatpush1.bf16.msra.mxu0 %v3891
    %4656 = vmatprep.subr.bf16.mxu0 %v3900
    %4657 = vmatpush1.bf16.msra.mxu0 %v3899
    %4658 = vmatprep.subr.bf16.mxu0 %v3908
    %4659 = vmatpush1.bf16.msra.mxu0 %v3907
    %4660 = vmatprep.subr.bf16.mxu0 %v3916
    %4661 = vmatpush1.bf16.msra.mxu0 %v3915
    %4662 = vmatprep.subr.bf16.mxu0 %v3924
    %4663 = vmatpush1.bf16.msra.mxu0 %v3923
    %4664 = vmatprep.subr.bf16.mxu0 %v3932
    %4665 = vmatpush1.bf16.msra.mxu0 %v3931
    %4666 = vmatprep.subr.bf16.mxu0 %v3940
    %4667 = vmatpush1.bf16.msra.mxu0 %v3939
    %4668 = vmatprep.subr.bf16.mxu0 %v3948
    %4669 = vmatpush1.bf16.msra.mxu0 %v3947
    %4670 = vmatprep.subr.bf16.mxu0 %v3956
    %4671 = vmatpush1.bf16.msra.mxu0 %v3955
    %4672 = vmatprep.subr.bf16.mxu0 %v3964
    %4673 = vmatpush1.bf16.msra.mxu0 %v3963
    %4674 = vmatprep.subr.bf16.mxu0 %v3972
    %4675 = vmatpush1.bf16.msra.mxu0 %v3971
    %4676 = vmatprep.subr.bf16.mxu0 %v3980
    %4677 = vmatpush1.bf16.msra.mxu0 %v3979
    %4678 = vmatprep.subr.bf16.mxu0 %v3988
    %4679 = vmatpush1.bf16.msra.mxu0 %v3987
    %4680 = vmatprep.subr.bf16.mxu0 %v3996
    %4681 = vmatpush1.bf16.msra.mxu0 %v3995
    %4682 = vmatprep.subr.bf16.mxu0 %v4004
    %4683 = vmatpush1.bf16.msra.mxu0 %v4003
    %4684 = vmatprep.mubr.bf16.mxu0 %v1408
    %4685 = vmatmul.mubr.bf16.gmra.mrb[0].mxu0 %v1407
    %v4686 = vpop.f32.mrb[0].mxu0
    %v4687 = vadd.f32 %v4644, %v4686
    %v4688 = vpop.f32.mrb[0].mxu0
    %v4689 = vadd.f32 %v4646, %v4688
    %v4690 = vpop.f32.mrb[0].mxu0
    %v4691 = vadd.f32 %v4648, %v4690
    %v4692 = vpop.f32.mrb[0].mxu0
    %v4693 = vadd.f32 %v4650, %v4692
    %4694 = vdwg.mxu0
    %4695 = vmatprep.subr.bf16.mxu0 %v3502
    %4696 = vmatpush1.bf16.msra.mxu0 %v3501
    %4697 = vmatprep.subr.bf16.mxu0 %v3510
    %4698 = vmatpush1.bf16.msra.mxu0 %v3509
    %4699 = vmatprep.subr.bf16.mxu0 %v3518
    %4700 = vmatpush1.bf16.msra.mxu0 %v3517
    %4701 = vmatprep.subr.bf16.mxu0 %v3526
    %4702 = vmatpush1.bf16.msra.mxu0 %v3525
    %4703 = vmatprep.subr.bf16.mxu0 %v3534
    %4704 = vmatpush1.bf16.msra.mxu0 %v3533
    %4705 = vmatprep.subr.bf16.mxu0 %v3542
    %4706 = vmatpush1.bf16.msra.mxu0 %v3541
    %4707 = vmatprep.subr.bf16.mxu0 %v3550
    %4708 = vmatpush1.bf16.msra.mxu0 %v3549
    %4709 = vmatprep.subr.bf16.mxu0 %v3558
    %4710 = vmatpush1.bf16.msra.mxu0 %v3557
    %4711 = vmatprep.subr.bf16.mxu0 %v3566
    %4712 = vmatpush1.bf16.msra.mxu0 %v3565
    %4713 = vmatprep.subr.bf16.mxu0 %v3574
    %4714 = vmatpush1.bf16.msra.mxu0 %v3573
    %4715 = vmatprep.subr.bf16.mxu0 %v3582
    %4716 = vmatpush1.bf16.msra.mxu0 %v3581
    %4717 = vmatprep.subr.bf16.mxu0 %v3590
    %4718 = vmatpush1.bf16.msra.mxu0 %v3589
    %4719 = vmatprep.subr.bf16.mxu0 %v3598
    %4720 = vmatpush1.bf16.msra.mxu0 %v3597
    %4721 = vmatprep.subr.bf16.mxu0 %v3606
    %4722 = vmatpush1.bf16.msra.mxu0 %v3605
    %4723 = vmatprep.subr.bf16.mxu0 %v3614
    %4724 = vmatpush1.bf16.msra.mxu0 %v3613
    %4725 = vmatprep.subr.bf16.mxu0 %v3622
    %4726 = vmatpush1.bf16.msra.mxu0 %v3621
    %4727 = vmatprep.mubr.bf16.mxu0 %v1402
    %4728 = vmatmul.mubr.bf16.gmra.mrb[0].mxu0 %v1401
    %v4729 = vpop.f32.mrb[0].mxu0
    %v4730 = vadd.f32 %v1934, %v4729
    %v4731 = vpop.f32.mrb[0].mxu0
    %v4732 = vadd.f32 %v1938, %v4731
    %v4733 = vpop.f32.mrb[0].mxu0
    %v4734 = vadd.f32 %v1934, %v4733
    %v4735 = vpop.f32.mrb[0].mxu0
    %v4736 = vadd.f32 %v1938, %v4735
    %4737 = vdwg.mxu0
    %4738 = vmatprep.subr.bf16.mxu0 %v3630
    %4739 = vmatpush1.bf16.msra.mxu0 %v3629
    %4740 = vmatprep.subr.bf16.mxu0 %v3638
    %4741 = vmatpush1.bf16.msra.mxu0 %v3637
    %4742 = vmatprep.subr.bf16.mxu0 %v3646
    %4743 = vmatpush1.bf16.msra.mxu0 %v3645
    %4744 = vmatprep.subr.bf16.mxu0 %v3654
    %4745 = vmatpush1.bf16.msra.mxu0 %v3653
    %4746 = vmatprep.subr.bf16.mxu0 %v3662
    %4747 = vmatpush1.bf16.msra.mxu0 %v3661
    %4748 = vmatprep.subr.bf16.mxu0 %v3670
    %4749 = vmatpush1.bf16.msra.mxu0 %v3669
    %4750 = vmatprep.subr.bf16.mxu0 %v3678
    %4751 = vmatpush1.bf16.msra.mxu0 %v3677
    %4752 = vmatprep.subr.bf16.mxu0 %v3686
    %4753 = vmatpush1.bf16.msra.mxu0 %v3685
    %4754 = vmatprep.subr.bf16.mxu0 %v3694
    %4755 = vmatpush1.bf16.msra.mxu0 %v3693
    %4756 = vmatprep.subr.bf16.mxu0 %v3702
    %4757 = vmatpush1.bf16.msra.mxu0 %v3701
    %4758 = vmatprep.subr.bf16.mxu0 %v3710
    %4759 = vmatpush1.bf16.msra.mxu0 %v3709
    %4760 = vmatprep.subr.bf16.mxu0 %v3718
    %4761 = vmatpush1.bf16.msra.mxu0 %v3717
    %4762 = vmatprep.subr.bf16.mxu0 %v3726
    %4763 = vmatpush1.bf16.msra.mxu0 %v3725
    %4764 = vmatprep.subr.bf16.mxu0 %v3734
    %4765 = vmatpush1.bf16.msra.mxu0 %v3733
    %4766 = vmatprep.subr.bf16.mxu0 %v3742
    %4767 = vmatpush1.bf16.msra.mxu0 %v3741
    %4768 = vmatprep.subr.bf16.mxu0 %v3750
    %4769 = vmatpush1.bf16.msra.mxu0 %v3749
    %4770 = vmatprep.mubr.bf16.mxu0 %v1404
    %4771 = vmatmul.mubr.bf16.gmra.mrb[0].mxu0 %v1403
    %v4772 = vpop.f32.mrb[0].mxu0
    %v4773 = vadd.f32 %v4730, %v4772
    %v4774 = vpop.f32.mrb[0].mxu0
    %v4775 = vadd.f32 %v4732, %v4774
    %v4776 = vpop.f32.mrb[0].mxu0
    %v4777 = vadd.f32 %v4734, %v4776
    %v4778 = vpop.f32.mrb[0].mxu0
    %v4779 = vadd.f32 %v4736, %v4778
    %4780 = vdwg.mxu0
    %4781 = vmatprep.subr.bf16.mxu0 %v3758
    %4782 = vmatpush1.bf16.msra.mxu0 %v3757
    %4783 = vmatprep.subr.bf16.mxu0 %v3766
    %4784 = vmatpush1.bf16.msra.mxu0 %v3765
    %4785 = vmatprep.subr.bf16.mxu0 %v3774
    %4786 = vmatpush1.bf16.msra.mxu0 %v3773
    %4787 = vmatprep.subr.bf16.mxu0 %v3782
    %4788 = vmatpush1.bf16.msra.mxu0 %v3781
    %4789 = vmatprep.subr.bf16.mxu0 %v3790
    %4790 = vmatpush1.bf16.msra.mxu0 %v3789
    %4791 = vmatprep.subr.bf16.mxu0 %v3798
    %4792 = vmatpush1.bf16.msra.mxu0 %v3797
    %4793 = vmatprep.subr.bf16.mxu0 %v3806
    %4794 = vmatpush1.bf16.msra.mxu0 %v3805
    %4795 = vmatprep.subr.bf16.mxu0 %v3814
    %4796 = vmatpush1.bf16.msra.mxu0 %v3813
    %4797 = vmatprep.subr.bf16.mxu0 %v3822
    %4798 = vmatpush1.bf16.msra.mxu0 %v3821
    %4799 = vmatprep.subr.bf16.mxu0 %v3830
    %4800 = vmatpush1.bf16.msra.mxu0 %v3829
    %4801 = vmatprep.subr.bf16.mxu0 %v3838
    %4802 = vmatpush1.bf16.msra.mxu0 %v3837
    %4803 = vmatprep.subr.bf16.mxu0 %v3846
    %4804 = vmatpush1.bf16.msra.mxu0 %v3845
    %4805 = vmatprep.subr.bf16.mxu0 %v3854
    %4806 = vmatpush1.bf16.msra.mxu0 %v3853
    %4807 = vmatprep.subr.bf16.mxu0 %v3862
    %4808 = vmatpush1.bf16.msra.mxu0 %v3861
    %4809 = vmatprep.subr.bf16.mxu0 %v3870
    %4810 = vmatpush1.bf16.msra.mxu0 %v3869
    %4811 = vmatprep.subr.bf16.mxu0 %v3878
    %4812 = vmatpush1.bf16.msra.mxu0 %v3877
    %4813 = vmatprep.mubr.bf16.mxu0 %v1406
    %4814 = vmatmul.mubr.bf16.gmra.mrb[0].mxu0 %v1405
    %v4815 = vpop.f32.mrb[0].mxu0
    %v4816 = vadd.f32 %v4773, %v4815
    %v4817 = vpop.f32.mrb[0].mxu0
    %v4818 = vadd.f32 %v4775, %v4817
    %v4819 = vpop.f32.mrb[0].mxu0
    %v4820 = vadd.f32 %v4777, %v4819
    %v4821 = vpop.f32.mrb[0].mxu0
    %v4822 = vadd.f32 %v4779, %v4821
    %4823 = vdwg.mxu0
    %4824 = vmatprep.subr.bf16.mxu0 %v3886
    %4825 = vmatpush1.bf16.msra.mxu0 %v3885
    %4826 = vmatprep.subr.bf16.mxu0 %v3894
    %4827 = vmatpush1.bf16.msra.mxu0 %v3893
    %4828 = vmatprep.subr.bf16.mxu0 %v3902
    %4829 = vmatpush1.bf16.msra.mxu0 %v3901
    %4830 = vmatprep.subr.bf16.mxu0 %v3910
    %4831 = vmatpush1.bf16.msra.mxu0 %v3909
    %4832 = vmatprep.subr.bf16.mxu0 %v3918
    %4833 = vmatpush1.bf16.msra.mxu0 %v3917
    %4834 = vmatprep.subr.bf16.mxu0 %v3926
    %4835 = vmatpush1.bf16.msra.mxu0 %v3925
    %4836 = vmatprep.subr.bf16.mxu0 %v3934
    %4837 = vmatpush1.bf16.msra.mxu0 %v3933
    %4838 = vmatprep.subr.bf16.mxu0 %v3942
    %4839 = vmatpush1.bf16.msra.mxu0 %v3941
    %4840 = vmatprep.subr.bf16.mxu0 %v3950
    %4841 = vmatpush1.bf16.msra.mxu0 %v3949
    %4842 = vmatprep.subr.bf16.mxu0 %v3958
    %4843 = vmatpush1.bf16.msra.mxu0 %v3957
    %4844 = vmatprep.subr.bf16.mxu0 %v3966
    %4845 = vmatpush1.bf16.msra.mxu0 %v3965
    %4846 = vmatprep.subr.bf16.mxu0 %v3974
    %4847 = vmatpush1.bf16.msra.mxu0 %v3973
    %4848 = vmatprep.subr.bf16.mxu0 %v3982
    %4849 = vmatpush1.bf16.msra.mxu0 %v3981
    %4850 = vmatprep.subr.bf16.mxu0 %v3990
    %4851 = vmatpush1.bf16.msra.mxu0 %v3989
    %4852 = vmatprep.subr.bf16.mxu0 %v3998
    %4853 = vmatpush1.bf16.msra.mxu0 %v3997
    %4854 = vmatprep.subr.bf16.mxu0 %v4006
    %4855 = vmatpush1.bf16.msra.mxu0 %v4005
    %4856 = vmatprep.mubr.bf16.mxu0 %v1408
    %4857 = vmatmul.mubr.bf16.gmra.mrb[0].mxu0 %v1407
    %v4858 = vpop.f32.mrb[0].mxu0
    %v4859 = vadd.f32 %v4816, %v4858
    %v4860 = vpop.f32.mrb[0].mxu0
    %v4861 = vadd.f32 %v4818, %v4860
    %v4862 = vpop.f32.mrb[0].mxu0
    %v4863 = vadd.f32 %v4820, %v4862
    %v4864 = vpop.f32.mrb[0].mxu0
    %v4865 = vadd.f32 %v4822, %v4864
    %4866 = vdwg.mxu0
    %4867 = vmatprep.subr.bf16.mxu0 %v3504
    %4868 = vmatpush1.bf16.msra.mxu0 %v3503
    %4869 = vmatprep.subr.bf16.mxu0 %v3512
    %4870 = vmatpush1.bf16.msra.mxu0 %v3511
    %4871 = vmatprep.subr.bf16.mxu0 %v3520
    %4872 = vmatpush1.bf16.msra.mxu0 %v3519
    %4873 = vmatprep.subr.bf16.mxu0 %v3528
    %4874 = vmatpush1.bf16.msra.mxu0 %v3527
    %4875 = vmatprep.subr.bf16.mxu0 %v3536
    %4876 = vmatpush1.bf16.msra.mxu0 %v3535
    %4877 = vmatprep.subr.bf16.mxu0 %v3544
    %4878 = vmatpush1.bf16.msra.mxu0 %v3543
    %4879 = vmatprep.subr.bf16.mxu0 %v3552
    %4880 = vmatpush1.bf16.msra.mxu0 %v3551
    %4881 = vmatprep.subr.bf16.mxu0 %v3560
    %4882 = vmatpush1.bf16.msra.mxu0 %v3559
    %4883 = vmatprep.subr.bf16.mxu0 %v3568
    %4884 = vmatpush1.bf16.msra.mxu0 %v3567
    %4885 = vmatprep.subr.bf16.mxu0 %v3576
    %4886 = vmatpush1.bf16.msra.mxu0 %v3575
    %4887 = vmatprep.subr.bf16.mxu0 %v3584
    %4888 = vmatpush1.bf16.msra.mxu0 %v3583
    %4889 = vmatprep.subr.bf16.mxu0 %v3592
    %4890 = vmatpush1.bf16.msra.mxu0 %v3591
    %4891 = vmatprep.subr.bf16.mxu0 %v3600
    %4892 = vmatpush1.bf16.msra.mxu0 %v3599
    %4893 = vmatprep.subr.bf16.mxu0 %v3608
    %4894 = vmatpush1.bf16.msra.mxu0 %v3607
    %4895 = vmatprep.subr.bf16.mxu0 %v3616
    %4896 = vmatpush1.bf16.msra.mxu0 %v3615
    %4897 = vmatprep.subr.bf16.mxu0 %v3624
    %4898 = vmatpush1.bf16.msra.mxu0 %v3623
    %4899 = vmatprep.mubr.bf16.mxu0 %v1402
    %4900 = vmatmul.mubr.bf16.gmra.mrb[0].mxu0 %v1401
    %v4901 = vpop.f32.mrb[0].mxu0
    %v4902 = vadd.f32 %v1942, %v4901
    %v4903 = vpop.f32.mrb[0].mxu0
    %v4904 = vadd.f32 %v1946, %v4903
    %v4905 = vpop.f32.mrb[0].mxu0
    %v4906 = vadd.f32 %v1942, %v4905
    %v4907 = vpop.f32.mrb[0].mxu0
    %v4908 = vadd.f32 %v1946, %v4907
    %4909 = vdwg.mxu0
    %4910 = vmatprep.subr.bf16.mxu0 %v3632
    %4911 = vmatpush1.bf16.msra.mxu0 %v3631
    %4912 = vmatprep.subr.bf16.mxu0 %v3640
    %4913 = vmatpush1.bf16.msra.mxu0 %v3639
    %4914 = vmatprep.subr.bf16.mxu0 %v3648
    %4915 = vmatpush1.bf16.msra.mxu0 %v3647
    %4916 = vmatprep.subr.bf16.mxu0 %v3656
    %4917 = vmatpush1.bf16.msra.mxu0 %v3655
    %4918 = vmatprep.subr.bf16.mxu0 %v3664
    %4919 = vmatpush1.bf16.msra.mxu0 %v3663
    %4920 = vmatprep.subr.bf16.mxu0 %v3672
    %4921 = vmatpush1.bf16.msra.mxu0 %v3671
    %4922 = vmatprep.subr.bf16.mxu0 %v3680
    %4923 = vmatpush1.bf16.msra.mxu0 %v3679
    %4924 = vmatprep.subr.bf16.mxu0 %v3688
    %4925 = vmatpush1.bf16.msra.mxu0 %v3687
    %4926 = vmatprep.subr.bf16.mxu0 %v3696
    %4927 = vmatpush1.bf16.msra.mxu0 %v3695
    %4928 = vmatprep.subr.bf16.mxu0 %v3704
    %4929 = vmatpush1.bf16.msra.mxu0 %v3703
    %4930 = vmatprep.subr.bf16.mxu0 %v3712
    %4931 = vmatpush1.bf16.msra.mxu0 %v3711
    %4932 = vmatprep.subr.bf16.mxu0 %v3720
    %4933 = vmatpush1.bf16.msra.mxu0 %v3719
    %4934 = vmatprep.subr.bf16.mxu0 %v3728
    %4935 = vmatpush1.bf16.msra.mxu0 %v3727
    %4936 = vmatprep.subr.bf16.mxu0 %v3736
    %4937 = vmatpush1.bf16.msra.mxu0 %v3735
    %4938 = vmatprep.subr.bf16.mxu0 %v3744
    %4939 = vmatpush1.bf16.msra.mxu0 %v3743
    %4940 = vmatprep.subr.bf16.mxu0 %v3752
    %4941 = vmatpush1.bf16.msra.mxu0 %v3751
    %4942 = vmatprep.mubr.bf16.mxu0 %v1404
    %4943 = vmatmul.mubr.bf16.gmra.mrb[0].mxu0 %v1403
    %v4944 = vpop.f32.mrb[0].mxu0
    %v4945 = vadd.f32 %v4902, %v4944
    %v4946 = vpop.f32.mrb[0].mxu0
    %v4947 = vadd.f32 %v4904, %v4946
    %v4948 = vpop.f32.mrb[0].mxu0
    %v4949 = vadd.f32 %v4906, %v4948
    %v4950 = vpop.f32.mrb[0].mxu0
    %v4951 = vadd.f32 %v4908, %v4950
    %4952 = vdwg.mxu0
    %4953 = vmatprep.subr.bf16.mxu0 %v3760
    %4954 = vmatpush1.bf16.msra.mxu0 %v3759
    %4955 = vmatprep.subr.bf16.mxu0 %v3768
    %4956 = vmatpush1.bf16.msra.mxu0 %v3767
    %4957 = vmatprep.subr.bf16.mxu0 %v3776
    %4958 = vmatpush1.bf16.msra.mxu0 %v3775
    %4959 = vmatprep.subr.bf16.mxu0 %v3784
    %4960 = vmatpush1.bf16.msra.mxu0 %v3783
    %4961 = vmatprep.subr.bf16.mxu0 %v3792
    %4962 = vmatpush1.bf16.msra.mxu0 %v3791
    %4963 = vmatprep.subr.bf16.mxu0 %v3800
    %4964 = vmatpush1.bf16.msra.mxu0 %v3799
    %4965 = vmatprep.subr.bf16.mxu0 %v3808
    %4966 = vmatpush1.bf16.msra.mxu0 %v3807
    %4967 = vmatprep.subr.bf16.mxu0 %v3816
    %4968 = vmatpush1.bf16.msra.mxu0 %v3815
    %4969 = vmatprep.subr.bf16.mxu0 %v3824
    %4970 = vmatpush1.bf16.msra.mxu0 %v3823
    %4971 = vmatprep.subr.bf16.mxu0 %v3832
    %4972 = vmatpush1.bf16.msra.mxu0 %v3831
    %4973 = vmatprep.subr.bf16.mxu0 %v3840
    %4974 = vmatpush1.bf16.msra.mxu0 %v3839
    %4975 = vmatprep.subr.bf16.mxu0 %v3848
    %4976 = vmatpush1.bf16.msra.mxu0 %v3847
    %4977 = vmatprep.subr.bf16.mxu0 %v3856
    %4978 = vmatpush1.bf16.msra.mxu0 %v3855
    %4979 = vmatprep.subr.bf16.mxu0 %v3864
    %4980 = vmatpush1.bf16.msra.mxu0 %v3863
    %4981 = vmatprep.subr.bf16.mxu0 %v3872
    %4982 = vmatpush1.bf16.msra.mxu0 %v3871
    %4983 = vmatprep.subr.bf16.mxu0 %v3880
    %4984 = vmatpush1.bf16.msra.mxu0 %v3879
    %4985 = vmatprep.mubr.bf16.mxu0 %v1406
    %4986 = vmatmul.mubr.bf16.gmra.mrb[0].mxu0 %v1405
    %v4987 = vpop.f32.mrb[0].mxu0
    %v4988 = vadd.f32 %v4945, %v4987
    %v4989 = vpop.f32.mrb[0].mxu0
    %v4990 = vadd.f32 %v4947, %v4989
    %v4991 = vpop.f32.mrb[0].mxu0
    %v4992 = vadd.f32 %v4949, %v4991
    %v4993 = vpop.f32.mrb[0].mxu0
    %v4994 = vadd.f32 %v4951, %v4993
    %4995 = vdwg.mxu0
    %4996 = vmatprep.subr.bf16.mxu0 %v3888
    %4997 = vmatpush1.bf16.msra.mxu0 %v3887
    %4998 = vmatprep.subr.bf16.mxu0 %v3896
    %4999 = vmatpush1.bf16.msra.mxu0 %v3895
    %5000 = vmatprep.subr.bf16.mxu0 %v3904
    %5001 = vmatpush1.bf16.msra.mxu0 %v3903
    %5002 = vmatprep.subr.bf16.mxu0 %v3912
    %5003 = vmatpush1.bf16.msra.mxu0 %v3911
    %5004 = vmatprep.subr.bf16.mxu0 %v3920
    %5005 = vmatpush1.bf16.msra.mxu0 %v3919
    %5006 = vmatprep.subr.bf16.mxu0 %v3928
    %5007 = vmatpush1.bf16.msra.mxu0 %v3927
    %5008 = vmatprep.subr.bf16.mxu0 %v3936
    %5009 = vmatpush1.bf16.msra.mxu0 %v3935
    %5010 = vmatprep.subr.bf16.mxu0 %v3944
    %5011 = vmatpush1.bf16.msra.mxu0 %v3943
    %5012 = vmatprep.subr.bf16.mxu0 %v3952
    %5013 = vmatpush1.bf16.msra.mxu0 %v3951
    %5014 = vmatprep.subr.bf16.mxu0 %v3960
    %5015 = vmatpush1.bf16.msra.mxu0 %v3959
    %5016 = vmatprep.subr.bf16.mxu0 %v3968
    %5017 = vmatpush1.bf16.msra.mxu0 %v3967
    %5018 = vmatprep.subr.bf16.mxu0 %v3976
    %5019 = vmatpush1.bf16.msra.mxu0 %v3975
    %5020 = vmatprep.subr.bf16.mxu0 %v3984
    %5021 = vmatpush1.bf16.msra.mxu0 %v3983
    %5022 = vmatprep.subr.bf16.mxu0 %v3992
    %5023 = vmatpush1.bf16.msra.mxu0 %v3991
    %5024 = vmatprep.subr.bf16.mxu0 %v4000
    %5025 = vmatpush1.bf16.msra.mxu0 %v3999
    %5026 = vmatprep.subr.bf16.mxu0 %v4008
    %5027 = vmatpush1.bf16.msra.mxu0 %v4007
    %5028 = vmatprep.mubr.bf16.mxu0 %v1408
    %5029 = vmatmul.mubr.bf16.gmra.mrb[0].mxu0 %v1407
    %v5030 = vpop.f32.mrb[0].mxu0
    %v5031 = vadd.f32 %v4988, %v5030
    %v5032 = vpop.f32.mrb[0].mxu0
    %v5033 = vadd.f32 %v4990, %v5032
    %v5034 = vpop.f32.mrb[0].mxu0
    %v5035 = vadd.f32 %v4992, %v5034
    %v5036 = vpop.f32.mrb[0].mxu0
    %v5037 = vadd.f32 %v4994, %v5036
    %5038 = vdwg.mxu0
    %5039 = vmatprep.subr.bf16.mxu0 %v3506
    %5040 = vmatpush1.bf16.msra.mxu0 %v3505
    %5041 = vmatprep.subr.bf16.mxu0 %v3514
    %5042 = vmatpush1.bf16.msra.mxu0 %v3513
    %5043 = vmatprep.subr.bf16.mxu0 %v3522
    %5044 = vmatpush1.bf16.msra.mxu0 %v3521
    %5045 = vmatprep.subr.bf16.mxu0 %v3530
    %5046 = vmatpush1.bf16.msra.mxu0 %v3529
    %5047 = vmatprep.subr.bf16.mxu0 %v3538
    %5048 = vmatpush1.bf16.msra.mxu0 %v3537
    %5049 = vmatprep.subr.bf16.mxu0 %v3546
    %5050 = vmatpush1.bf16.msra.mxu0 %v3545
    %5051 = vmatprep.subr.bf16.mxu0 %v3554
    %5052 = vmatpush1.bf16.msra.mxu0 %v3553
    %5053 = vmatprep.subr.bf16.mxu0 %v3562
    %5054 = vmatpush1.bf16.msra.mxu0 %v3561
    %5055 = vmatprep.subr.bf16.mxu0 %v3570
    %5056 = vmatpush1.bf16.msra.mxu0 %v3569
    %5057 = vmatprep.subr.bf16.mxu0 %v3578
    %5058 = vmatpush1.bf16.msra.mxu0 %v3577
    %5059 = vmatprep.subr.bf16.mxu0 %v3586
    %5060 = vmatpush1.bf16.msra.mxu0 %v3585
    %5061 = vmatprep.subr.bf16.mxu0 %v3594
    %5062 = vmatpush1.bf16.msra.mxu0 %v3593
    %5063 = vmatprep.subr.bf16.mxu0 %v3602
    %5064 = vmatpush1.bf16.msra.mxu0 %v3601
    %5065 = vmatprep.subr.bf16.mxu0 %v3610
    %5066 = vmatpush1.bf16.msra.mxu0 %v3609
    %5067 = vmatprep.subr.bf16.mxu0 %v3618
    %5068 = vmatpush1.bf16.msra.mxu0 %v3617
    %5069 = vmatprep.subr.bf16.mxu0 %v3626
    %5070 = vmatpush1.bf16.msra.mxu0 %v3625
    %5071 = vmatprep.mubr.bf16.mxu0 %v1402
    %5072 = vmatmul.mubr.bf16.gmra.mrb[0].mxu0 %v1401
    %v5073 = vpop.f32.mrb[0].mxu0
    %v5074 = vadd.f32 %v1950, %v5073
    %v5075 = vpop.f32.mrb[0].mxu0
    %v5076 = vadd.f32 %v1954, %v5075
    %v5077 = vpop.f32.mrb[0].mxu0
    %v5078 = vadd.f32 %v1950, %v5077
    %v5079 = vpop.f32.mrb[0].mxu0
    %v5080 = vadd.f32 %v1954, %v5079
    %5081 = vdwg.mxu0
    %5082 = vmatprep.subr.bf16.mxu0 %v3634
    %5083 = vmatpush1.bf16.msra.mxu0 %v3633
    %5084 = vmatprep.subr.bf16.mxu0 %v3642
    %5085 = vmatpush1.bf16.msra.mxu0 %v3641
    %5086 = vmatprep.subr.bf16.mxu0 %v3650
    %5087 = vmatpush1.bf16.msra.mxu0 %v3649
    %5088 = vmatprep.subr.bf16.mxu0 %v3658
    %5089 = vmatpush1.bf16.msra.mxu0 %v3657
    %5090 = vmatprep.subr.bf16.mxu0 %v3666
    %5091 = vmatpush1.bf16.msra.mxu0 %v3665
    %5092 = vmatprep.subr.bf16.mxu0 %v3674
    %5093 = vmatpush1.bf16.msra.mxu0 %v3673
    %5094 = vmatprep.subr.bf16.mxu0 %v3682
    %5095 = vmatpush1.bf16.msra.mxu0 %v3681
    %5096 = vmatprep.subr.bf16.mxu0 %v3690
    %5097 = vmatpush1.bf16.msra.mxu0 %v3689
    %5098 = vmatprep.subr.bf16.mxu0 %v3698
    %5099 = vmatpush1.bf16.msra.mxu0 %v3697
    %5100 = vmatprep.subr.bf16.mxu0 %v3706
    %5101 = vmatpush1.bf16.msra.mxu0 %v3705
    %5102 = vmatprep.subr.bf16.mxu0 %v3714
    %5103 = vmatpush1.bf16.msra.mxu0 %v3713
    %5104 = vmatprep.subr.bf16.mxu0 %v3722
    %5105 = vmatpush1.bf16.msra.mxu0 %v3721
    %5106 = vmatprep.subr.bf16.mxu0 %v3730
    %5107 = vmatpush1.bf16.msra.mxu0 %v3729
    %5108 = vmatprep.subr.bf16.mxu0 %v3738
    %5109 = vmatpush1.bf16.msra.mxu0 %v3737
    %5110 = vmatprep.subr.bf16.mxu0 %v3746
    %5111 = vmatpush1.bf16.msra.mxu0 %v3745
    %5112 = vmatprep.subr.bf16.mxu0 %v3754
    %5113 = vmatpush1.bf16.msra.mxu0 %v3753
    %5114 = vmatprep.mubr.bf16.mxu0 %v1404
    %5115 = vmatmul.mubr.bf16.gmra.mrb[0].mxu0 %v1403
    %v5116 = vpop.f32.mrb[0].mxu0
    %v5117 = vadd.f32 %v5074, %v5116
    %v5118 = vpop.f32.mrb[0].mxu0
    %v5119 = vadd.f32 %v5076, %v5118
    %v5120 = vpop.f32.mrb[0].mxu0
    %v5121 = vadd.f32 %v5078, %v5120
    %v5122 = vpop.f32.mrb[0].mxu0
    %v5123 = vadd.f32 %v5080, %v5122
    %5124 = vdwg.mxu0
    %5125 = vmatprep.subr.bf16.mxu0 %v3762
    %5126 = vmatpush1.bf16.msra.mxu0 %v3761
    %5127 = vmatprep.subr.bf16.mxu0 %v3770
    %5128 = vmatpush1.bf16.msra.mxu0 %v3769
    %5129 = vmatprep.subr.bf16.mxu0 %v3778
    %5130 = vmatpush1.bf16.msra.mxu0 %v3777
    %5131 = vmatprep.subr.bf16.mxu0 %v3786
    %5132 = vmatpush1.bf16.msra.mxu0 %v3785
    %5133 = vmatprep.subr.bf16.mxu0 %v3794
    %5134 = vmatpush1.bf16.msra.mxu0 %v3793
    %5135 = vmatprep.subr.bf16.mxu0 %v3802
    %5136 = vmatpush1.bf16.msra.mxu0 %v3801
    %5137 = vmatprep.subr.bf16.mxu0 %v3810
    %5138 = vmatpush1.bf16.msra.mxu0 %v3809
    %5139 = vmatprep.subr.bf16.mxu0 %v3818
    %5140 = vmatpush1.bf16.msra.mxu0 %v3817
    %5141 = vmatprep.subr.bf16.mxu0 %v3826
    %5142 = vmatpush1.bf16.msra.mxu0 %v3825
    %5143 = vmatprep.subr.bf16.mxu0 %v3834
    %5144 = vmatpush1.bf16.msra.mxu0 %v3833
    %5145 = vmatprep.subr.bf16.mxu0 %v3842
    %5146 = vmatpush1.bf16.msra.mxu0 %v3841
    %5147 = vmatprep.subr.bf16.mxu0 %v3850
    %5148 = vmatpush1.bf16.msra.mxu0 %v3849
    %5149 = vmatprep.subr.bf16.mxu0 %v3858
    %5150 = vmatpush1.bf16.msra.mxu0 %v3857
    %5151 = vmatprep.subr.bf16.mxu0 %v3866
    %5152 = vmatpush1.bf16.msra.mxu0 %v3865
    %5153 = vmatprep.subr.bf16.mxu0 %v3874
    %5154 = vmatpush1.bf16.msra.mxu0 %v3873
    %5155 = vmatprep.subr.bf16.mxu0 %v3882
    %5156 = vmatpush1.bf16.msra.mxu0 %v3881
    %5157 = vmatprep.mubr.bf16.mxu0 %v1406
    %5158 = vmatmul.mubr.bf16.gmra.mrb[0].mxu0 %v1405
    %v5159 = vpop.f32.mrb[0].mxu0
    %v5160 = vadd.f32 %v5117, %v5159
    %v5161 = vpop.f32.mrb[0].mxu0
    %v5162 = vadd.f32 %v5119, %v5161
    %v5163 = vpop.f32.mrb[0].mxu0
    %v5164 = vadd.f32 %v5121, %v5163
    %v5165 = vpop.f32.mrb[0].mxu0
    %v5166 = vadd.f32 %v5123, %v5165
    %5167 = vdwg.mxu0
    %5168 = vmatprep.subr.bf16.mxu0 %v3890
    %5169 = vmatpush1.bf16.msra.mxu0 %v3889
    %5170 = vmatprep.subr.bf16.mxu0 %v3898
    %5171 = vmatpush1.bf16.msra.mxu0 %v3897
    %5172 = vmatprep.subr.bf16.mxu0 %v3906
    %5173 = vmatpush1.bf16.msra.mxu0 %v3905
    %5174 = vmatprep.subr.bf16.mxu0 %v3914
    %5175 = vmatpush1.bf16.msra.mxu0 %v3913
    %5176 = vmatprep.subr.bf16.mxu0 %v3922
    %5177 = vmatpush1.bf16.msra.mxu0 %v3921
    %5178 = vmatprep.subr.bf16.mxu0 %v3930
    %5179 = vmatpush1.bf16.msra.mxu0 %v3929
    %5180 = vmatprep.subr.bf16.mxu0 %v3938
    %5181 = vmatpush1.bf16.msra.mxu0 %v3937
    %5182 = vmatprep.subr.bf16.mxu0 %v3946
    %5183 = vmatpush1.bf16.msra.mxu0 %v3945
    %5184 = vmatprep.subr.bf16.mxu0 %v3954
    %5185 = vmatpush1.bf16.msra.mxu0 %v3953
    %5186 = vmatprep.subr.bf16.mxu0 %v3962
    %5187 = vmatpush1.bf16.msra.mxu0 %v3961
    %5188 = vmatprep.subr.bf16.mxu0 %v3970
    %5189 = vmatpush1.bf16.msra.mxu0 %v3969
    %5190 = vmatprep.subr.bf16.mxu0 %v3978
    %5191 = vmatpush1.bf16.msra.mxu0 %v3977
    %5192 = vmatprep.subr.bf16.mxu0 %v3986
    %5193 = vmatpush1.bf16.msra.mxu0 %v3985
    %5194 = vmatprep.subr.bf16.mxu0 %v3994
    %5195 = vmatpush1.bf16.msra.mxu0 %v3993
    %5196 = vmatprep.subr.bf16.mxu0 %v4002
    %5197 = vmatpush1.bf16.msra.mxu0 %v4001
    %5198 = vmatprep.subr.bf16.mxu0 %v4010
    %5199 = vmatpush1.bf16.msra.mxu0 %v4009
    %5200 = vmatprep.mubr.bf16.mxu0 %v1408
    %5201 = vmatmul.mubr.bf16.gmra.mrb[0].mxu0 %v1407
    %v5202 = vpop.f32.mrb[0].mxu0
    %v5203 = vadd.f32 %v5160, %v5202
    %v5204 = vpop.f32.mrb[0].mxu0
    %v5205 = vadd.f32 %v5162, %v5204
    %v5206 = vpop.f32.mrb[0].mxu0
    %v5207 = vadd.f32 %v5164, %v5206
    %v5208 = vpop.f32.mrb[0].mxu0
    %v5209 = vadd.f32 %v5166, %v5208
    %5210 = vdwg.mxu0
    %v5211 = vmul.f32 %v4687, 0.01
    %v5212 = vmul.f32 %v4689, 0.01
    %v5213 = vmul.f32 %v4859, 0.01
    %v5214 = vmul.f32 %v4861, 0.01
    %v5215 = vmul.f32 %v5031, 0.01
    %v5216 = vmul.f32 %v5033, 0.01
    %v5217 = vmul.f32 %v5203, 0.01
    %v5218 = vmul.f32 %v5205, 0.01
    %v5219 = vmul.f32 %v4691, 0.01
    %v5220 = vmul.f32 %v4693, 0.01
    %v5221 = vmul.f32 %v4863, 0.01
    %v5222 = vmul.f32 %v4865, 0.01
    %v5223 = vmul.f32 %v5035, 0.01
    %v5224 = vmul.f32 %v5037, 0.01
    %v5225 = vmul.f32 %v5207, 0.01
    %v5226 = vmul.f32 %v5209, 0.01
    %v5227 = vmax.f32 %v4687, %v5211
    %v5228 = vmax.f32 %v4689, %v5212
    %v5229 = vmax.f32 %v4859, %v5213
    %v5230 = vmax.f32 %v4861, %v5214
    %v5231 = vmax.f32 %v5031, %v5215
    %v5232 = vmax.f32 %v5033, %v5216
    %v5233 = vmax.f32 %v5203, %v5217
    %v5234 = vmax.f32 %v5205, %v5218
    %v5235 = vmax.f32 %v4691, %v5219
    %v5236 = vmax.f32 %v4693, %v5220
    %v5237 = vmax.f32 %v4863, %v5221
    %v5238 = vmax.f32 %v4865, %v5222
    %v5239 = vmax.f32 %v5035, %v5223
    %v5240 = vmax.f32 %v5037, %v5224
    %v5241 = vmax.f32 %v5207, %v5225
    %v5242 = vmax.f32 %v5209, %v5226
    %v5243 = vpack.c.bf16 %v5235, %v5227
    %v5244 = vpack.c.bf16 %v5236, %v5228
    %v5245 = vpack.c.bf16 %v5237, %v5229
    %v5246 = vpack.c.bf16 %v5238, %v5230
    %v5247 = vpack.c.bf16 %v5239, %v5231
    %v5248 = vpack.c.bf16 %v5240, %v5232
    %v5249 = vpack.c.bf16 %v5241, %v5233
    %v5250 = vpack.c.bf16 %v5242, %v5234
    %v5251 = vld [vmem:[#allocation11] sm:$0xff]
    %v5252 = vld [vmem:[#allocation11 + $0x8] sm:$0xff]
    %v5253 = vld [vmem:[#allocation11 + $0x10] sm:$0xff]
    %v5254 = vld [vmem:[#allocation11 + $0x18] sm:$0xff]
    %v5255 = vld [vmem:[#allocation11 + $0x20] sm:$0xff]
    %v5256 = vld [vmem:[#allocation11 + $0x28] sm:$0xff]
    %v5257 = vld [vmem:[#allocation11 + $0x30] sm:$0xff]
    %v5258 = vld [vmem:[#allocation11 + $0x38] sm:$0xff]
    %v5259 = vld [vmem:[#allocation11 + $0x40] sm:$0xff]
    %v5260 = vld [vmem:[#allocation11 + $0x48] sm:$0xff]
    %v5261 = vld [vmem:[#allocation11 + $0x50] sm:$0xff]
    %v5262 = vld [vmem:[#allocation11 + $0x58] sm:$0xff]
    %v5263 = vld [vmem:[#allocation11 + $0x60] sm:$0xff]
    %v5264 = vld [vmem:[#allocation11 + $0x68] sm:$0xff]
    %v5265 = vld [vmem:[#allocation11 + $0x70] sm:$0xff]
    %v5266 = vld [vmem:[#allocation11 + $0x78] sm:$0xff]
    %v5267 = vld [vmem:[#allocation11 + $0x80] sm:$0xff]
    %v5268 = vld [vmem:[#allocation11 + $0x88] sm:$0xff]
    %v5269 = vld [vmem:[#allocation11 + $0x90] sm:$0xff]
    %v5270 = vld [vmem:[#allocation11 + $0x98] sm:$0xff]
    %v5271 = vld [vmem:[#allocation11 + $0xa0] sm:$0xff]
    %v5272 = vld [vmem:[#allocation11 + $0xa8] sm:$0xff]
    %v5273 = vld [vmem:[#allocation11 + $0xb0] sm:$0xff]
    %v5274 = vld [vmem:[#allocation11 + $0xb8] sm:$0xff]
    %v5275 = vld [vmem:[#allocation11 + $0xc0] sm:$0xff]
    %v5276 = vld [vmem:[#allocation11 + $0xc8] sm:$0xff]
    %v5277 = vld [vmem:[#allocation11 + $0xd0] sm:$0xff]
    %v5278 = vld [vmem:[#allocation11 + $0xd8] sm:$0xff]
    %v5279 = vld [vmem:[#allocation11 + $0xe0] sm:$0xff]
    %v5280 = vld [vmem:[#allocation11 + $0xe8] sm:$0xff]
    %v5281 = vld [vmem:[#allocation11 + $0xf0] sm:$0xff]
    %v5282 = vld [vmem:[#allocation11 + $0xf8] sm:$0xff]
    %v5283 = vld [vmem:[#allocation11 + $0x100] sm:$0xff]
    %v5284 = vld [vmem:[#allocation11 + $0x108] sm:$0xff]
    %v5285 = vld [vmem:[#allocation11 + $0x110] sm:$0xff]
    %v5286 = vld [vmem:[#allocation11 + $0x118] sm:$0xff]
    %v5287 = vld [vmem:[#allocation11 + $0x120] sm:$0xff]
    %v5288 = vld [vmem:[#allocation11 + $0x128] sm:$0xff]
    %v5289 = vld [vmem:[#allocation11 + $0x130] sm:$0xff]
    %v5290 = vld [vmem:[#allocation11 + $0x138] sm:$0xff]
    %v5291 = vld [vmem:[#allocation11 + $0x140] sm:$0xff]
    %v5292 = vld [vmem:[#allocation11 + $0x148] sm:$0xff]
    %v5293 = vld [vmem:[#allocation11 + $0x150] sm:$0xff]
    %v5294 = vld [vmem:[#allocation11 + $0x158] sm:$0xff]
    %v5295 = vld [vmem:[#allocation11 + $0x160] sm:$0xff]
    %v5296 = vld [vmem:[#allocation11 + $0x168] sm:$0xff]
    %v5297 = vld [vmem:[#allocation11 + $0x170] sm:$0xff]
    %v5298 = vld [vmem:[#allocation11 + $0x178] sm:$0xff]
    %v5299 = vld [vmem:[#allocation11 + $0x180] sm:$0xff]
    %v5300 = vld [vmem:[#allocation11 + $0x188] sm:$0xff]
    %v5301 = vld [vmem:[#allocation11 + $0x190] sm:$0xff]
    %v5302 = vld [vmem:[#allocation11 + $0x198] sm:$0xff]
    %v5303 = vld [vmem:[#allocation11 + $0x1a0] sm:$0xff]
    %v5304 = vld [vmem:[#allocation11 + $0x1a8] sm:$0xff]
    %v5305 = vld [vmem:[#allocation11 + $0x1b0] sm:$0xff]
    %v5306 = vld [vmem:[#allocation11 + $0x1b8] sm:$0xff]
    %v5307 = vld [vmem:[#allocation11 + $0x1c0] sm:$0xff]
    %v5308 = vld [vmem:[#allocation11 + $0x1c8] sm:$0xff]
    %v5309 = vld [vmem:[#allocation11 + $0x1d0] sm:$0xff]
    %v5310 = vld [vmem:[#allocation11 + $0x1d8] sm:$0xff]
    %v5311 = vld [vmem:[#allocation11 + $0x1e0] sm:$0xff]
    %v5312 = vld [vmem:[#allocation11 + $0x1e8] sm:$0xff]
    %v5313 = vld [vmem:[#allocation11 + $0x1f0] sm:$0xff]
    %v5314 = vld [vmem:[#allocation11 + $0x1f8] sm:$0xff]
    %v5315 = vld [vmem:[#allocation11 + $0x200] sm:$0xff]
    %v5316 = vld [vmem:[#allocation11 + $0x208] sm:$0xff]
    %v5317 = vld [vmem:[#allocation11 + $0x210] sm:$0xff]
    %v5318 = vld [vmem:[#allocation11 + $0x218] sm:$0xff]
    %v5319 = vld [vmem:[#allocation11 + $0x220] sm:$0xff]
    %v5320 = vld [vmem:[#allocation11 + $0x228] sm:$0xff]
    %v5321 = vld [vmem:[#allocation11 + $0x230] sm:$0xff]
    %v5322 = vld [vmem:[#allocation11 + $0x238] sm:$0xff]
    %v5323 = vld [vmem:[#allocation11 + $0x240] sm:$0xff]
    %v5324 = vld [vmem:[#allocation11 + $0x248] sm:$0xff]
    %v5325 = vld [vmem:[#allocation11 + $0x250] sm:$0xff]
    %v5326 = vld [vmem:[#allocation11 + $0x258] sm:$0xff]
    %v5327 = vld [vmem:[#allocation11 + $0x260] sm:$0xff]
    %v5328 = vld [vmem:[#allocation11 + $0x268] sm:$0xff]
    %v5329 = vld [vmem:[#allocation11 + $0x270] sm:$0xff]
    %v5330 = vld [vmem:[#allocation11 + $0x278] sm:$0xff]
    %v5331 = vld [vmem:[#allocation11 + $0x280] sm:$0xff]
    %v5332 = vld [vmem:[#allocation11 + $0x288] sm:$0xff]
    %v5333 = vld [vmem:[#allocation11 + $0x290] sm:$0xff]
    %v5334 = vld [vmem:[#allocation11 + $0x298] sm:$0xff]
    %v5335 = vld [vmem:[#allocation11 + $0x2a0] sm:$0xff]
    %v5336 = vld [vmem:[#allocation11 + $0x2a8] sm:$0xff]
    %v5337 = vld [vmem:[#allocation11 + $0x2b0] sm:$0xff]
    %v5338 = vld [vmem:[#allocation11 + $0x2b8] sm:$0xff]
    %v5339 = vld [vmem:[#allocation11 + $0x2c0] sm:$0xff]
    %v5340 = vld [vmem:[#allocation11 + $0x2c8] sm:$0xff]
    %v5341 = vld [vmem:[#allocation11 + $0x2d0] sm:$0xff]
    %v5342 = vld [vmem:[#allocation11 + $0x2d8] sm:$0xff]
    %v5343 = vld [vmem:[#allocation11 + $0x2e0] sm:$0xff]
    %v5344 = vld [vmem:[#allocation11 + $0x2e8] sm:$0xff]
    %v5345 = vld [vmem:[#allocation11 + $0x2f0] sm:$0xff]
    %v5346 = vld [vmem:[#allocation11 + $0x2f8] sm:$0xff]
    %v5347 = vld [vmem:[#allocation11 + $0x300] sm:$0xff]
    %v5348 = vld [vmem:[#allocation11 + $0x308] sm:$0xff]
    %v5349 = vld [vmem:[#allocation11 + $0x310] sm:$0xff]
    %v5350 = vld [vmem:[#allocation11 + $0x318] sm:$0xff]
    %v5351 = vld [vmem:[#allocation11 + $0x320] sm:$0xff]
    %v5352 = vld [vmem:[#allocation11 + $0x328] sm:$0xff]
    %v5353 = vld [vmem:[#allocation11 + $0x330] sm:$0xff]
    %v5354 = vld [vmem:[#allocation11 + $0x338] sm:$0xff]
    %v5355 = vld [vmem:[#allocation11 + $0x340] sm:$0xff]
    %v5356 = vld [vmem:[#allocation11 + $0x348] sm:$0xff]
    %v5357 = vld [vmem:[#allocation11 + $0x350] sm:$0xff]
    %v5358 = vld [vmem:[#allocation11 + $0x358] sm:$0xff]
    %v5359 = vld [vmem:[#allocation11 + $0x360] sm:$0xff]
    %v5360 = vld [vmem:[#allocation11 + $0x368] sm:$0xff]
    %v5361 = vld [vmem:[#allocation11 + $0x370] sm:$0xff]
    %v5362 = vld [vmem:[#allocation11 + $0x378] sm:$0xff]
    %v5363 = vld [vmem:[#allocation11 + $0x380] sm:$0xff]
    %v5364 = vld [vmem:[#allocation11 + $0x388] sm:$0xff]
    %v5365 = vld [vmem:[#allocation11 + $0x390] sm:$0xff]
    %v5366 = vld [vmem:[#allocation11 + $0x398] sm:$0xff]
    %v5367 = vld [vmem:[#allocation11 + $0x3a0] sm:$0xff]
    %v5368 = vld [vmem:[#allocation11 + $0x3a8] sm:$0xff]
    %v5369 = vld [vmem:[#allocation11 + $0x3b0] sm:$0xff]
    %v5370 = vld [vmem:[#allocation11 + $0x3b8] sm:$0xff]
    %v5371 = vld [vmem:[#allocation11 + $0x3c0] sm:$0xff]
    %v5372 = vld [vmem:[#allocation11 + $0x3c8] sm:$0xff]
    %v5373 = vld [vmem:[#allocation11 + $0x3d0] sm:$0xff]
    %v5374 = vld [vmem:[#allocation11 + $0x3d8] sm:$0xff]
    %v5375 = vld [vmem:[#allocation11 + $0x3e0] sm:$0xff]
    %v5376 = vld [vmem:[#allocation11 + $0x3e8] sm:$0xff]
    %v5377 = vld [vmem:[#allocation11 + $0x3f0] sm:$0xff]
    %v5378 = vld [vmem:[#allocation11 + $0x3f8] sm:$0xff]
    %v5379 = vld [vmem:[#allocation11 + $0x400] sm:$0xff]
    %v5380 = vld [vmem:[#allocation11 + $0x408] sm:$0xff]
    %v5381 = vld [vmem:[#allocation11 + $0x410] sm:$0xff]
    %v5382 = vld [vmem:[#allocation11 + $0x418] sm:$0xff]
    %v5383 = vld [vmem:[#allocation11 + $0x420] sm:$0xff]
    %v5384 = vld [vmem:[#allocation11 + $0x428] sm:$0xff]
    %v5385 = vld [vmem:[#allocation11 + $0x430] sm:$0xff]
    %v5386 = vld [vmem:[#allocation11 + $0x438] sm:$0xff]
    %v5387 = vld [vmem:[#allocation11 + $0x440] sm:$0xff]
    %v5388 = vld [vmem:[#allocation11 + $0x448] sm:$0xff]
    %v5389 = vld [vmem:[#allocation11 + $0x450] sm:$0xff]
    %v5390 = vld [vmem:[#allocation11 + $0x458] sm:$0xff]
    %v5391 = vld [vmem:[#allocation11 + $0x460] sm:$0xff]
    %v5392 = vld [vmem:[#allocation11 + $0x468] sm:$0xff]
    %v5393 = vld [vmem:[#allocation11 + $0x470] sm:$0xff]
    %v5394 = vld [vmem:[#allocation11 + $0x478] sm:$0xff]
    %v5395 = vld [vmem:[#allocation11 + $0x480] sm:$0xff]
    %v5396 = vld [vmem:[#allocation11 + $0x488] sm:$0xff]
    %v5397 = vld [vmem:[#allocation11 + $0x490] sm:$0xff]
    %v5398 = vld [vmem:[#allocation11 + $0x498] sm:$0xff]
    %v5399 = vld [vmem:[#allocation11 + $0x4a0] sm:$0xff]
    %v5400 = vld [vmem:[#allocation11 + $0x4a8] sm:$0xff]
    %v5401 = vld [vmem:[#allocation11 + $0x4b0] sm:$0xff]
    %v5402 = vld [vmem:[#allocation11 + $0x4b8] sm:$0xff]
    %v5403 = vld [vmem:[#allocation11 + $0x4c0] sm:$0xff]
    %v5404 = vld [vmem:[#allocation11 + $0x4c8] sm:$0xff]
    %v5405 = vld [vmem:[#allocation11 + $0x4d0] sm:$0xff]
    %v5406 = vld [vmem:[#allocation11 + $0x4d8] sm:$0xff]
    %v5407 = vld [vmem:[#allocation11 + $0x4e0] sm:$0xff]
    %v5408 = vld [vmem:[#allocation11 + $0x4e8] sm:$0xff]
    %v5409 = vld [vmem:[#allocation11 + $0x4f0] sm:$0xff]
    %v5410 = vld [vmem:[#allocation11 + $0x4f8] sm:$0xff]
    %v5411 = vld [vmem:[#allocation11 + $0x500] sm:$0xff]
    %v5412 = vld [vmem:[#allocation11 + $0x508] sm:$0xff]
    %v5413 = vld [vmem:[#allocation11 + $0x510] sm:$0xff]
    %v5414 = vld [vmem:[#allocation11 + $0x518] sm:$0xff]
    %v5415 = vld [vmem:[#allocation11 + $0x520] sm:$0xff]
    %v5416 = vld [vmem:[#allocation11 + $0x528] sm:$0xff]
    %v5417 = vld [vmem:[#allocation11 + $0x530] sm:$0xff]
    %v5418 = vld [vmem:[#allocation11 + $0x538] sm:$0xff]
    %v5419 = vld [vmem:[#allocation11 + $0x540] sm:$0xff]
    %v5420 = vld [vmem:[#allocation11 + $0x548] sm:$0xff]
    %v5421 = vld [vmem:[#allocation11 + $0x550] sm:$0xff]
    %v5422 = vld [vmem:[#allocation11 + $0x558] sm:$0xff]
    %v5423 = vld [vmem:[#allocation11 + $0x560] sm:$0xff]
    %v5424 = vld [vmem:[#allocation11 + $0x568] sm:$0xff]
    %v5425 = vld [vmem:[#allocation11 + $0x570] sm:$0xff]
    %v5426 = vld [vmem:[#allocation11 + $0x578] sm:$0xff]
    %v5427 = vld [vmem:[#allocation11 + $0x580] sm:$0xff]
    %v5428 = vld [vmem:[#allocation11 + $0x588] sm:$0xff]
    %v5429 = vld [vmem:[#allocation11 + $0x590] sm:$0xff]
    %v5430 = vld [vmem:[#allocation11 + $0x598] sm:$0xff]
    %v5431 = vld [vmem:[#allocation11 + $0x5a0] sm:$0xff]
    %v5432 = vld [vmem:[#allocation11 + $0x5a8] sm:$0xff]
    %v5433 = vld [vmem:[#allocation11 + $0x5b0] sm:$0xff]
    %v5434 = vld [vmem:[#allocation11 + $0x5b8] sm:$0xff]
    %v5435 = vld [vmem:[#allocation11 + $0x5c0] sm:$0xff]
    %v5436 = vld [vmem:[#allocation11 + $0x5c8] sm:$0xff]
    %v5437 = vld [vmem:[#allocation11 + $0x5d0] sm:$0xff]
    %v5438 = vld [vmem:[#allocation11 + $0x5d8] sm:$0xff]
    %v5439 = vld [vmem:[#allocation11 + $0x5e0] sm:$0xff]
    %v5440 = vld [vmem:[#allocation11 + $0x5e8] sm:$0xff]
    %v5441 = vld [vmem:[#allocation11 + $0x5f0] sm:$0xff]
    %v5442 = vld [vmem:[#allocation11 + $0x5f8] sm:$0xff]
    %v5443 = vld [vmem:[#allocation11 + $0x600] sm:$0xff]
    %v5444 = vld [vmem:[#allocation11 + $0x608] sm:$0xff]
    %v5445 = vld [vmem:[#allocation11 + $0x610] sm:$0xff]
    %v5446 = vld [vmem:[#allocation11 + $0x618] sm:$0xff]
    %v5447 = vld [vmem:[#allocation11 + $0x620] sm:$0xff]
    %v5448 = vld [vmem:[#allocation11 + $0x628] sm:$0xff]
    %v5449 = vld [vmem:[#allocation11 + $0x630] sm:$0xff]
    %v5450 = vld [vmem:[#allocation11 + $0x638] sm:$0xff]
    %v5451 = vld [vmem:[#allocation11 + $0x640] sm:$0xff]
    %v5452 = vld [vmem:[#allocation11 + $0x648] sm:$0xff]
    %v5453 = vld [vmem:[#allocation11 + $0x650] sm:$0xff]
    %v5454 = vld [vmem:[#allocation11 + $0x658] sm:$0xff]
    %v5455 = vld [vmem:[#allocation11 + $0x660] sm:$0xff]
    %v5456 = vld [vmem:[#allocation11 + $0x668] sm:$0xff]
    %v5457 = vld [vmem:[#allocation11 + $0x670] sm:$0xff]
    %v5458 = vld [vmem:[#allocation11 + $0x678] sm:$0xff]
    %v5459 = vld [vmem:[#allocation11 + $0x680] sm:$0xff]
    %v5460 = vld [vmem:[#allocation11 + $0x688] sm:$0xff]
    %v5461 = vld [vmem:[#allocation11 + $0x690] sm:$0xff]
    %v5462 = vld [vmem:[#allocation11 + $0x698] sm:$0xff]
    %v5463 = vld [vmem:[#allocation11 + $0x6a0] sm:$0xff]
    %v5464 = vld [vmem:[#allocation11 + $0x6a8] sm:$0xff]
    %v5465 = vld [vmem:[#allocation11 + $0x6b0] sm:$0xff]
    %v5466 = vld [vmem:[#allocation11 + $0x6b8] sm:$0xff]
    %v5467 = vld [vmem:[#allocation11 + $0x6c0] sm:$0xff]
    %v5468 = vld [vmem:[#allocation11 + $0x6c8] sm:$0xff]
    %v5469 = vld [vmem:[#allocation11 + $0x6d0] sm:$0xff]
    %v5470 = vld [vmem:[#allocation11 + $0x6d8] sm:$0xff]
    %v5471 = vld [vmem:[#allocation11 + $0x6e0] sm:$0xff]
    %v5472 = vld [vmem:[#allocation11 + $0x6e8] sm:$0xff]
    %v5473 = vld [vmem:[#allocation11 + $0x6f0] sm:$0xff]
    %v5474 = vld [vmem:[#allocation11 + $0x6f8] sm:$0xff]
    %v5475 = vld [vmem:[#allocation11 + $0x700] sm:$0xff]
    %v5476 = vld [vmem:[#allocation11 + $0x708] sm:$0xff]
    %v5477 = vld [vmem:[#allocation11 + $0x710] sm:$0xff]
    %v5478 = vld [vmem:[#allocation11 + $0x718] sm:$0xff]
    %v5479 = vld [vmem:[#allocation11 + $0x720] sm:$0xff]
    %v5480 = vld [vmem:[#allocation11 + $0x728] sm:$0xff]
    %v5481 = vld [vmem:[#allocation11 + $0x730] sm:$0xff]
    %v5482 = vld [vmem:[#allocation11 + $0x738] sm:$0xff]
    %v5483 = vld [vmem:[#allocation11 + $0x740] sm:$0xff]
    %v5484 = vld [vmem:[#allocation11 + $0x748] sm:$0xff]
    %v5485 = vld [vmem:[#allocation11 + $0x750] sm:$0xff]
    %v5486 = vld [vmem:[#allocation11 + $0x758] sm:$0xff]
    %v5487 = vld [vmem:[#allocation11 + $0x760] sm:$0xff]
    %v5488 = vld [vmem:[#allocation11 + $0x768] sm:$0xff]
    %v5489 = vld [vmem:[#allocation11 + $0x770] sm:$0xff]
    %v5490 = vld [vmem:[#allocation11 + $0x778] sm:$0xff]
    %v5491 = vld [vmem:[#allocation11 + $0x780] sm:$0xff]
    %v5492 = vld [vmem:[#allocation11 + $0x788] sm:$0xff]
    %v5493 = vld [vmem:[#allocation11 + $0x790] sm:$0xff]
    %v5494 = vld [vmem:[#allocation11 + $0x798] sm:$0xff]
    %v5495 = vld [vmem:[#allocation11 + $0x7a0] sm:$0xff]
    %v5496 = vld [vmem:[#allocation11 + $0x7a8] sm:$0xff]
    %v5497 = vld [vmem:[#allocation11 + $0x7b0] sm:$0xff]
    %v5498 = vld [vmem:[#allocation11 + $0x7b8] sm:$0xff]
    %v5499 = vld [vmem:[#allocation11 + $0x7c0] sm:$0xff]
    %v5500 = vld [vmem:[#allocation11 + $0x7c8] sm:$0xff]
    %v5501 = vld [vmem:[#allocation11 + $0x7d0] sm:$0xff]
    %v5502 = vld [vmem:[#allocation11 + $0x7d8] sm:$0xff]
    %v5503 = vld [vmem:[#allocation11 + $0x7e0] sm:$0xff]
    %v5504 = vld [vmem:[#allocation11 + $0x7e8] sm:$0xff]
    %v5505 = vld [vmem:[#allocation11 + $0x7f0] sm:$0xff]
    %v5506 = vld [vmem:[#allocation11 + $0x7f8] sm:$0xff]
    %v5507 = vld [vmem:[#allocation11 + $0x800] sm:$0xff]
    %v5508 = vld [vmem:[#allocation11 + $0x808] sm:$0xff]
    %v5509 = vld [vmem:[#allocation11 + $0x810] sm:$0xff]
    %v5510 = vld [vmem:[#allocation11 + $0x818] sm:$0xff]
    %v5511 = vld [vmem:[#allocation11 + $0x820] sm:$0xff]
    %v5512 = vld [vmem:[#allocation11 + $0x828] sm:$0xff]
    %v5513 = vld [vmem:[#allocation11 + $0x830] sm:$0xff]
    %v5514 = vld [vmem:[#allocation11 + $0x838] sm:$0xff]
    %v5515 = vld [vmem:[#allocation11 + $0x840] sm:$0xff]
    %v5516 = vld [vmem:[#allocation11 + $0x848] sm:$0xff]
    %v5517 = vld [vmem:[#allocation11 + $0x850] sm:$0xff]
    %v5518 = vld [vmem:[#allocation11 + $0x858] sm:$0xff]
    %v5519 = vld [vmem:[#allocation11 + $0x860] sm:$0xff]
    %v5520 = vld [vmem:[#allocation11 + $0x868] sm:$0xff]
    %v5521 = vld [vmem:[#allocation11 + $0x870] sm:$0xff]
    %v5522 = vld [vmem:[#allocation11 + $0x878] sm:$0xff]
    %v5523 = vld [vmem:[#allocation11 + $0x880] sm:$0xff]
    %v5524 = vld [vmem:[#allocation11 + $0x888] sm:$0xff]
    %v5525 = vld [vmem:[#allocation11 + $0x890] sm:$0xff]
    %v5526 = vld [vmem:[#allocation11 + $0x898] sm:$0xff]
    %v5527 = vld [vmem:[#allocation11 + $0x8a0] sm:$0xff]
    %v5528 = vld [vmem:[#allocation11 + $0x8a8] sm:$0xff]
    %v5529 = vld [vmem:[#allocation11 + $0x8b0] sm:$0xff]
    %v5530 = vld [vmem:[#allocation11 + $0x8b8] sm:$0xff]
    %v5531 = vld [vmem:[#allocation11 + $0x8c0] sm:$0xff]
    %v5532 = vld [vmem:[#allocation11 + $0x8c8] sm:$0xff]
    %v5533 = vld [vmem:[#allocation11 + $0x8d0] sm:$0xff]
    %v5534 = vld [vmem:[#allocation11 + $0x8d8] sm:$0xff]
    %v5535 = vld [vmem:[#allocation11 + $0x8e0] sm:$0xff]
    %v5536 = vld [vmem:[#allocation11 + $0x8e8] sm:$0xff]
    %v5537 = vld [vmem:[#allocation11 + $0x8f0] sm:$0xff]
    %v5538 = vld [vmem:[#allocation11 + $0x8f8] sm:$0xff]
    %v5539 = vld [vmem:[#allocation11 + $0x900] sm:$0xff]
    %v5540 = vld [vmem:[#allocation11 + $0x908] sm:$0xff]
    %v5541 = vld [vmem:[#allocation11 + $0x910] sm:$0xff]
    %v5542 = vld [vmem:[#allocation11 + $0x918] sm:$0xff]
    %v5543 = vld [vmem:[#allocation11 + $0x920] sm:$0xff]
    %v5544 = vld [vmem:[#allocation11 + $0x928] sm:$0xff]
    %v5545 = vld [vmem:[#allocation11 + $0x930] sm:$0xff]
    %v5546 = vld [vmem:[#allocation11 + $0x938] sm:$0xff]
    %v5547 = vld [vmem:[#allocation11 + $0x940] sm:$0xff]
    %v5548 = vld [vmem:[#allocation11 + $0x948] sm:$0xff]
    %v5549 = vld [vmem:[#allocation11 + $0x950] sm:$0xff]
    %v5550 = vld [vmem:[#allocation11 + $0x958] sm:$0xff]
    %v5551 = vld [vmem:[#allocation11 + $0x960] sm:$0xff]
    %v5552 = vld [vmem:[#allocation11 + $0x968] sm:$0xff]
    %v5553 = vld [vmem:[#allocation11 + $0x970] sm:$0xff]
    %v5554 = vld [vmem:[#allocation11 + $0x978] sm:$0xff]
    %v5555 = vld [vmem:[#allocation11 + $0x980] sm:$0xff]
    %v5556 = vld [vmem:[#allocation11 + $0x988] sm:$0xff]
    %v5557 = vld [vmem:[#allocation11 + $0x990] sm:$0xff]
    %v5558 = vld [vmem:[#allocation11 + $0x998] sm:$0xff]
    %v5559 = vld [vmem:[#allocation11 + $0x9a0] sm:$0xff]
    %v5560 = vld [vmem:[#allocation11 + $0x9a8] sm:$0xff]
    %v5561 = vld [vmem:[#allocation11 + $0x9b0] sm:$0xff]
    %v5562 = vld [vmem:[#allocation11 + $0x9b8] sm:$0xff]
    %v5563 = vld [vmem:[#allocation11 + $0x9c0] sm:$0xff]
    %v5564 = vld [vmem:[#allocation11 + $0x9c8] sm:$0xff]
    %v5565 = vld [vmem:[#allocation11 + $0x9d0] sm:$0xff]
    %v5566 = vld [vmem:[#allocation11 + $0x9d8] sm:$0xff]
    %v5567 = vld [vmem:[#allocation11 + $0x9e0] sm:$0xff]
    %v5568 = vld [vmem:[#allocation11 + $0x9e8] sm:$0xff]
    %v5569 = vld [vmem:[#allocation11 + $0x9f0] sm:$0xff]
    %v5570 = vld [vmem:[#allocation11 + $0x9f8] sm:$0xff]
    %v5571 = vld [vmem:[#allocation11 + $0xa00] sm:$0xff]
    %v5572 = vld [vmem:[#allocation11 + $0xa08] sm:$0xff]
    %v5573 = vld [vmem:[#allocation11 + $0xa10] sm:$0xff]
    %v5574 = vld [vmem:[#allocation11 + $0xa18] sm:$0xff]
    %v5575 = vld [vmem:[#allocation11 + $0xa20] sm:$0xff]
    %v5576 = vld [vmem:[#allocation11 + $0xa28] sm:$0xff]
    %v5577 = vld [vmem:[#allocation11 + $0xa30] sm:$0xff]
    %v5578 = vld [vmem:[#allocation11 + $0xa38] sm:$0xff]
    %v5579 = vld [vmem:[#allocation11 + $0xa40] sm:$0xff]
    %v5580 = vld [vmem:[#allocation11 + $0xa48] sm:$0xff]
    %v5581 = vld [vmem:[#allocation11 + $0xa50] sm:$0xff]
    %v5582 = vld [vmem:[#allocation11 + $0xa58] sm:$0xff]
    %v5583 = vld [vmem:[#allocation11 + $0xa60] sm:$0xff]
    %v5584 = vld [vmem:[#allocation11 + $0xa68] sm:$0xff]
    %v5585 = vld [vmem:[#allocation11 + $0xa70] sm:$0xff]
    %v5586 = vld [vmem:[#allocation11 + $0xa78] sm:$0xff]
    %v5587 = vld [vmem:[#allocation11 + $0xa80] sm:$0xff]
    %v5588 = vld [vmem:[#allocation11 + $0xa88] sm:$0xff]
    %v5589 = vld [vmem:[#allocation11 + $0xa90] sm:$0xff]
    %v5590 = vld [vmem:[#allocation11 + $0xa98] sm:$0xff]
    %v5591 = vld [vmem:[#allocation11 + $0xaa0] sm:$0xff]
    %v5592 = vld [vmem:[#allocation11 + $0xaa8] sm:$0xff]
    %v5593 = vld [vmem:[#allocation11 + $0xab0] sm:$0xff]
    %v5594 = vld [vmem:[#allocation11 + $0xab8] sm:$0xff]
    %v5595 = vld [vmem:[#allocation11 + $0xac0] sm:$0xff]
    %v5596 = vld [vmem:[#allocation11 + $0xac8] sm:$0xff]
    %v5597 = vld [vmem:[#allocation11 + $0xad0] sm:$0xff]
    %v5598 = vld [vmem:[#allocation11 + $0xad8] sm:$0xff]
    %v5599 = vld [vmem:[#allocation11 + $0xae0] sm:$0xff]
    %v5600 = vld [vmem:[#allocation11 + $0xae8] sm:$0xff]
    %v5601 = vld [vmem:[#allocation11 + $0xaf0] sm:$0xff]
    %v5602 = vld [vmem:[#allocation11 + $0xaf8] sm:$0xff]
    %v5603 = vld [vmem:[#allocation11 + $0xb00] sm:$0xff]
    %v5604 = vld [vmem:[#allocation11 + $0xb08] sm:$0xff]
    %v5605 = vld [vmem:[#allocation11 + $0xb10] sm:$0xff]
    %v5606 = vld [vmem:[#allocation11 + $0xb18] sm:$0xff]
    %v5607 = vld [vmem:[#allocation11 + $0xb20] sm:$0xff]
    %v5608 = vld [vmem:[#allocation11 + $0xb28] sm:$0xff]
    %v5609 = vld [vmem:[#allocation11 + $0xb30] sm:$0xff]
    %v5610 = vld [vmem:[#allocation11 + $0xb38] sm:$0xff]
    %v5611 = vld [vmem:[#allocation11 + $0xb40] sm:$0xff]
    %v5612 = vld [vmem:[#allocation11 + $0xb48] sm:$0xff]
    %v5613 = vld [vmem:[#allocation11 + $0xb50] sm:$0xff]
    %v5614 = vld [vmem:[#allocation11 + $0xb58] sm:$0xff]
    %v5615 = vld [vmem:[#allocation11 + $0xb60] sm:$0xff]
    %v5616 = vld [vmem:[#allocation11 + $0xb68] sm:$0xff]
    %v5617 = vld [vmem:[#allocation11 + $0xb70] sm:$0xff]
    %v5618 = vld [vmem:[#allocation11 + $0xb78] sm:$0xff]
    %v5619 = vld [vmem:[#allocation11 + $0xb80] sm:$0xff]
    %v5620 = vld [vmem:[#allocation11 + $0xb88] sm:$0xff]
    %v5621 = vld [vmem:[#allocation11 + $0xb90] sm:$0xff]
    %v5622 = vld [vmem:[#allocation11 + $0xb98] sm:$0xff]
    %v5623 = vld [vmem:[#allocation11 + $0xba0] sm:$0xff]
    %v5624 = vld [vmem:[#allocation11 + $0xba8] sm:$0xff]
    %v5625 = vld [vmem:[#allocation11 + $0xbb0] sm:$0xff]
    %v5626 = vld [vmem:[#allocation11 + $0xbb8] sm:$0xff]
    %v5627 = vld [vmem:[#allocation11 + $0xbc0] sm:$0xff]
    %v5628 = vld [vmem:[#allocation11 + $0xbc8] sm:$0xff]
    %v5629 = vld [vmem:[#allocation11 + $0xbd0] sm:$0xff]
    %v5630 = vld [vmem:[#allocation11 + $0xbd8] sm:$0xff]
    %v5631 = vld [vmem:[#allocation11 + $0xbe0] sm:$0xff]
    %v5632 = vld [vmem:[#allocation11 + $0xbe8] sm:$0xff]
    %v5633 = vld [vmem:[#allocation11 + $0xbf0] sm:$0xff]
    %v5634 = vld [vmem:[#allocation11 + $0xbf8] sm:$0xff]
    %v5635 = vld [vmem:[#allocation11 + $0xc00] sm:$0xff]
    %v5636 = vld [vmem:[#allocation11 + $0xc08] sm:$0xff]
    %v5637 = vld [vmem:[#allocation11 + $0xc10] sm:$0xff]
    %v5638 = vld [vmem:[#allocation11 + $0xc18] sm:$0xff]
    %v5639 = vld [vmem:[#allocation11 + $0xc20] sm:$0xff]
    %v5640 = vld [vmem:[#allocation11 + $0xc28] sm:$0xff]
    %v5641 = vld [vmem:[#allocation11 + $0xc30] sm:$0xff]
    %v5642 = vld [vmem:[#allocation11 + $0xc38] sm:$0xff]
    %v5643 = vld [vmem:[#allocation11 + $0xc40] sm:$0xff]
    %v5644 = vld [vmem:[#allocation11 + $0xc48] sm:$0xff]
    %v5645 = vld [vmem:[#allocation11 + $0xc50] sm:$0xff]
    %v5646 = vld [vmem:[#allocation11 + $0xc58] sm:$0xff]
    %v5647 = vld [vmem:[#allocation11 + $0xc60] sm:$0xff]
    %v5648 = vld [vmem:[#allocation11 + $0xc68] sm:$0xff]
    %v5649 = vld [vmem:[#allocation11 + $0xc70] sm:$0xff]
    %v5650 = vld [vmem:[#allocation11 + $0xc78] sm:$0xff]
    %v5651 = vld [vmem:[#allocation11 + $0xc80] sm:$0xff]
    %v5652 = vld [vmem:[#allocation11 + $0xc88] sm:$0xff]
    %v5653 = vld [vmem:[#allocation11 + $0xc90] sm:$0xff]
    %v5654 = vld [vmem:[#allocation11 + $0xc98] sm:$0xff]
    %v5655 = vld [vmem:[#allocation11 + $0xca0] sm:$0xff]
    %v5656 = vld [vmem:[#allocation11 + $0xca8] sm:$0xff]
    %v5657 = vld [vmem:[#allocation11 + $0xcb0] sm:$0xff]
    %v5658 = vld [vmem:[#allocation11 + $0xcb8] sm:$0xff]
    %v5659 = vld [vmem:[#allocation11 + $0xcc0] sm:$0xff]
    %v5660 = vld [vmem:[#allocation11 + $0xcc8] sm:$0xff]
    %v5661 = vld [vmem:[#allocation11 + $0xcd0] sm:$0xff]
    %v5662 = vld [vmem:[#allocation11 + $0xcd8] sm:$0xff]
    %v5663 = vld [vmem:[#allocation11 + $0xce0] sm:$0xff]
    %v5664 = vld [vmem:[#allocation11 + $0xce8] sm:$0xff]
    %v5665 = vld [vmem:[#allocation11 + $0xcf0] sm:$0xff]
    %v5666 = vld [vmem:[#allocation11 + $0xcf8] sm:$0xff]
    %v5667 = vld [vmem:[#allocation11 + $0xd00] sm:$0xff]
    %v5668 = vld [vmem:[#allocation11 + $0xd08] sm:$0xff]
    %v5669 = vld [vmem:[#allocation11 + $0xd10] sm:$0xff]
    %v5670 = vld [vmem:[#allocation11 + $0xd18] sm:$0xff]
    %v5671 = vld [vmem:[#allocation11 + $0xd20] sm:$0xff]
    %v5672 = vld [vmem:[#allocation11 + $0xd28] sm:$0xff]
    %v5673 = vld [vmem:[#allocation11 + $0xd30] sm:$0xff]
    %v5674 = vld [vmem:[#allocation11 + $0xd38] sm:$0xff]
    %v5675 = vld [vmem:[#allocation11 + $0xd40] sm:$0xff]
    %v5676 = vld [vmem:[#allocation11 + $0xd48] sm:$0xff]
    %v5677 = vld [vmem:[#allocation11 + $0xd50] sm:$0xff]
    %v5678 = vld [vmem:[#allocation11 + $0xd58] sm:$0xff]
    %v5679 = vld [vmem:[#allocation11 + $0xd60] sm:$0xff]
    %v5680 = vld [vmem:[#allocation11 + $0xd68] sm:$0xff]
    %v5681 = vld [vmem:[#allocation11 + $0xd70] sm:$0xff]
    %v5682 = vld [vmem:[#allocation11 + $0xd78] sm:$0xff]
    %v5683 = vld [vmem:[#allocation11 + $0xd80] sm:$0xff]
    %v5684 = vld [vmem:[#allocation11 + $0xd88] sm:$0xff]
    %v5685 = vld [vmem:[#allocation11 + $0xd90] sm:$0xff]
    %v5686 = vld [vmem:[#allocation11 + $0xd98] sm:$0xff]
    %v5687 = vld [vmem:[#allocation11 + $0xda0] sm:$0xff]
    %v5688 = vld [vmem:[#allocation11 + $0xda8] sm:$0xff]
    %v5689 = vld [vmem:[#allocation11 + $0xdb0] sm:$0xff]
    %v5690 = vld [vmem:[#allocation11 + $0xdb8] sm:$0xff]
    %v5691 = vld [vmem:[#allocation11 + $0xdc0] sm:$0xff]
    %v5692 = vld [vmem:[#allocation11 + $0xdc8] sm:$0xff]
    %v5693 = vld [vmem:[#allocation11 + $0xdd0] sm:$0xff]
    %v5694 = vld [vmem:[#allocation11 + $0xdd8] sm:$0xff]
    %v5695 = vld [vmem:[#allocation11 + $0xde0] sm:$0xff]
    %v5696 = vld [vmem:[#allocation11 + $0xde8] sm:$0xff]
    %v5697 = vld [vmem:[#allocation11 + $0xdf0] sm:$0xff]
    %v5698 = vld [vmem:[#allocation11 + $0xdf8] sm:$0xff]
    %v5699 = vld [vmem:[#allocation11 + $0xe00] sm:$0xff]
    %v5700 = vld [vmem:[#allocation11 + $0xe08] sm:$0xff]
    %v5701 = vld [vmem:[#allocation11 + $0xe10] sm:$0xff]
    %v5702 = vld [vmem:[#allocation11 + $0xe18] sm:$0xff]
    %v5703 = vld [vmem:[#allocation11 + $0xe20] sm:$0xff]
    %v5704 = vld [vmem:[#allocation11 + $0xe28] sm:$0xff]
    %v5705 = vld [vmem:[#allocation11 + $0xe30] sm:$0xff]
    %v5706 = vld [vmem:[#allocation11 + $0xe38] sm:$0xff]
    %v5707 = vld [vmem:[#allocation11 + $0xe40] sm:$0xff]
    %v5708 = vld [vmem:[#allocation11 + $0xe48] sm:$0xff]
    %v5709 = vld [vmem:[#allocation11 + $0xe50] sm:$0xff]
    %v5710 = vld [vmem:[#allocation11 + $0xe58] sm:$0xff]
    %v5711 = vld [vmem:[#allocation11 + $0xe60] sm:$0xff]
    %v5712 = vld [vmem:[#allocation11 + $0xe68] sm:$0xff]
    %v5713 = vld [vmem:[#allocation11 + $0xe70] sm:$0xff]
    %v5714 = vld [vmem:[#allocation11 + $0xe78] sm:$0xff]
    %v5715 = vld [vmem:[#allocation11 + $0xe80] sm:$0xff]
    %v5716 = vld [vmem:[#allocation11 + $0xe88] sm:$0xff]
    %v5717 = vld [vmem:[#allocation11 + $0xe90] sm:$0xff]
    %v5718 = vld [vmem:[#allocation11 + $0xe98] sm:$0xff]
    %v5719 = vld [vmem:[#allocation11 + $0xea0] sm:$0xff]
    %v5720 = vld [vmem:[#allocation11 + $0xea8] sm:$0xff]
    %v5721 = vld [vmem:[#allocation11 + $0xeb0] sm:$0xff]
    %v5722 = vld [vmem:[#allocation11 + $0xeb8] sm:$0xff]
    %v5723 = vld [vmem:[#allocation11 + $0xec0] sm:$0xff]
    %v5724 = vld [vmem:[#allocation11 + $0xec8] sm:$0xff]
    %v5725 = vld [vmem:[#allocation11 + $0xed0] sm:$0xff]
    %v5726 = vld [vmem:[#allocation11 + $0xed8] sm:$0xff]
    %v5727 = vld [vmem:[#allocation11 + $0xee0] sm:$0xff]
    %v5728 = vld [vmem:[#allocation11 + $0xee8] sm:$0xff]
    %v5729 = vld [vmem:[#allocation11 + $0xef0] sm:$0xff]
    %v5730 = vld [vmem:[#allocation11 + $0xef8] sm:$0xff]
    %v5731 = vld [vmem:[#allocation11 + $0xf00] sm:$0xff]
    %v5732 = vld [vmem:[#allocation11 + $0xf08] sm:$0xff]
    %v5733 = vld [vmem:[#allocation11 + $0xf10] sm:$0xff]
    %v5734 = vld [vmem:[#allocation11 + $0xf18] sm:$0xff]
    %v5735 = vld [vmem:[#allocation11 + $0xf20] sm:$0xff]
    %v5736 = vld [vmem:[#allocation11 + $0xf28] sm:$0xff]
    %v5737 = vld [vmem:[#allocation11 + $0xf30] sm:$0xff]
    %v5738 = vld [vmem:[#allocation11 + $0xf38] sm:$0xff]
    %v5739 = vld [vmem:[#allocation11 + $0xf40] sm:$0xff]
    %v5740 = vld [vmem:[#allocation11 + $0xf48] sm:$0xff]
    %v5741 = vld [vmem:[#allocation11 + $0xf50] sm:$0xff]
    %v5742 = vld [vmem:[#allocation11 + $0xf58] sm:$0xff]
    %v5743 = vld [vmem:[#allocation11 + $0xf60] sm:$0xff]
    %v5744 = vld [vmem:[#allocation11 + $0xf68] sm:$0xff]
    %v5745 = vld [vmem:[#allocation11 + $0xf70] sm:$0xff]
    %v5746 = vld [vmem:[#allocation11 + $0xf78] sm:$0xff]
    %v5747 = vld [vmem:[#allocation11 + $0xf80] sm:$0xff]
    %v5748 = vld [vmem:[#allocation11 + $0xf88] sm:$0xff]
    %v5749 = vld [vmem:[#allocation11 + $0xf90] sm:$0xff]
    %v5750 = vld [vmem:[#allocation11 + $0xf98] sm:$0xff]
    %v5751 = vld [vmem:[#allocation11 + $0xfa0] sm:$0xff]
    %v5752 = vld [vmem:[#allocation11 + $0xfa8] sm:$0xff]
    %v5753 = vld [vmem:[#allocation11 + $0xfb0] sm:$0xff]
    %v5754 = vld [vmem:[#allocation11 + $0xfb8] sm:$0xff]
    %v5755 = vld [vmem:[#allocation11 + $0xfc0] sm:$0xff]
    %v5756 = vld [vmem:[#allocation11 + $0xfc8] sm:$0xff]
    %v5757 = vld [vmem:[#allocation11 + $0xfd0] sm:$0xff]
    %v5758 = vld [vmem:[#allocation11 + $0xfd8] sm:$0xff]
    %v5759 = vld [vmem:[#allocation11 + $0xfe0] sm:$0xff]
    %v5760 = vld [vmem:[#allocation11 + $0xfe8] sm:$0xff]
    %v5761 = vld [vmem:[#allocation11 + $0xff0] sm:$0xff]
    %v5762 = vld [vmem:[#allocation11 + $0xff8] sm:$0xff]
    %v5763 = vld [vmem:[#allocation13] sm:$0xff]
    %v5765 = vlaneseq
    %v5766 = vshrl.u32 %v5765, 7
    %v5767 = vsub.s32 0, %v5766
    %v5768 = vrot.slane %v5763, %v5767
    %v5769 = vlaneseq
    %v5770 = vshrl.u32 %v5769, 7
    %v5771 = vsub.s32 1, %v5770
    %v5772 = vrot.slane %v5763, %v5771
    %v5773 = vlaneseq
    %v5774 = vshrl.u32 %v5773, 7
    %v5775 = vsub.s32 2, %v5774
    %v5776 = vrot.slane %v5763, %v5775
    %v5777 = vlaneseq
    %v5778 = vshrl.u32 %v5777, 7
    %v5779 = vsub.s32 3, %v5778
    %v5780 = vrot.slane %v5763, %v5779
    %v5781 = vlaneseq
    %v5782 = vshrl.u32 %v5781, 7
    %v5783 = vsub.s32 4, %v5782
    %v5784 = vrot.slane %v5763, %v5783
    %v5785 = vlaneseq
    %v5786 = vshrl.u32 %v5785, 7
    %v5787 = vsub.s32 5, %v5786
    %v5788 = vrot.slane %v5763, %v5787
    %v5789 = vlaneseq
    %v5790 = vshrl.u32 %v5789, 7
    %v5791 = vsub.s32 6, %v5790
    %v5792 = vrot.slane %v5763, %v5791
    %v5793 = vlaneseq
    %v5794 = vshrl.u32 %v5793, 7
    %v5795 = vsub.s32 7, %v5794
    %v5796 = vrot.slane %v5763, %v5795
    %v6317 = vunpack.c.l.b16 %v5251
    %v6318 = vunpack.c.h.b16 %v5251
    %v6319 = vunpack.c.l.b16 %v5252
    %v6320 = vunpack.c.h.b16 %v5252
    %v6321 = vunpack.c.l.b16 %v5253
    %v6322 = vunpack.c.h.b16 %v5253
    %v6323 = vunpack.c.l.b16 %v5254
    %v6324 = vunpack.c.h.b16 %v5254
    %v6325 = vunpack.c.l.b16 %v5255
    %v6326 = vunpack.c.h.b16 %v5255
    %v6327 = vunpack.c.l.b16 %v5256
    %v6328 = vunpack.c.h.b16 %v5256
    %v6329 = vunpack.c.l.b16 %v5257
    %v6330 = vunpack.c.h.b16 %v5257
    %v6331 = vunpack.c.l.b16 %v5258
    %v6332 = vunpack.c.h.b16 %v5258
    %v6333 = vunpack.c.l.b16 %v5259
    %v6334 = vunpack.c.h.b16 %v5259
    %v6335 = vunpack.c.l.b16 %v5260
    %v6336 = vunpack.c.h.b16 %v5260
    %v6337 = vunpack.c.l.b16 %v5261
    %v6338 = vunpack.c.h.b16 %v5261
    %v6339 = vunpack.c.l.b16 %v5262
    %v6340 = vunpack.c.h.b16 %v5262
    %v6341 = vunpack.c.l.b16 %v5263
    %v6342 = vunpack.c.h.b16 %v5263
    %v6343 = vunpack.c.l.b16 %v5264
    %v6344 = vunpack.c.h.b16 %v5264
    %v6345 = vunpack.c.l.b16 %v5265
    %v6346 = vunpack.c.h.b16 %v5265
    %v6347 = vunpack.c.l.b16 %v5266
    %v6348 = vunpack.c.h.b16 %v5266
    %v6349 = vunpack.c.l.b16 %v5267
    %v6350 = vunpack.c.h.b16 %v5267
    %v6351 = vunpack.c.l.b16 %v5268
    %v6352 = vunpack.c.h.b16 %v5268
    %v6353 = vunpack.c.l.b16 %v5269
    %v6354 = vunpack.c.h.b16 %v5269
    %v6355 = vunpack.c.l.b16 %v5270
    %v6356 = vunpack.c.h.b16 %v5270
    %v6357 = vunpack.c.l.b16 %v5271
    %v6358 = vunpack.c.h.b16 %v5271
    %v6359 = vunpack.c.l.b16 %v5272
    %v6360 = vunpack.c.h.b16 %v5272
    %v6361 = vunpack.c.l.b16 %v5273
    %v6362 = vunpack.c.h.b16 %v5273
    %v6363 = vunpack.c.l.b16 %v5274
    %v6364 = vunpack.c.h.b16 %v5274
    %v6365 = vunpack.c.l.b16 %v5275
    %v6366 = vunpack.c.h.b16 %v5275
    %v6367 = vunpack.c.l.b16 %v5276
    %v6368 = vunpack.c.h.b16 %v5276
    %v6369 = vunpack.c.l.b16 %v5277
    %v6370 = vunpack.c.h.b16 %v5277
    %v6371 = vunpack.c.l.b16 %v5278
    %v6372 = vunpack.c.h.b16 %v5278
    %v6373 = vunpack.c.l.b16 %v5279
    %v6374 = vunpack.c.h.b16 %v5279
    %v6375 = vunpack.c.l.b16 %v5280
    %v6376 = vunpack.c.h.b16 %v5280
    %v6377 = vunpack.c.l.b16 %v5281
    %v6378 = vunpack.c.h.b16 %v5281
    %v6379 = vunpack.c.l.b16 %v5282
    %v6380 = vunpack.c.h.b16 %v5282
    %v6381 = vunpack.c.l.b16 %v5283
    %v6382 = vunpack.c.h.b16 %v5283
    %v6383 = vunpack.c.l.b16 %v5284
    %v6384 = vunpack.c.h.b16 %v5284
    %v6385 = vunpack.c.l.b16 %v5285
    %v6386 = vunpack.c.h.b16 %v5285
    %v6387 = vunpack.c.l.b16 %v5286
    %v6388 = vunpack.c.h.b16 %v5286
    %v6389 = vunpack.c.l.b16 %v5287
    %v6390 = vunpack.c.h.b16 %v5287
    %v6391 = vunpack.c.l.b16 %v5288
    %v6392 = vunpack.c.h.b16 %v5288
    %v6393 = vunpack.c.l.b16 %v5289
    %v6394 = vunpack.c.h.b16 %v5289
    %v6395 = vunpack.c.l.b16 %v5290
    %v6396 = vunpack.c.h.b16 %v5290
    %v6397 = vunpack.c.l.b16 %v5291
    %v6398 = vunpack.c.h.b16 %v5291
    %v6399 = vunpack.c.l.b16 %v5292
    %v6400 = vunpack.c.h.b16 %v5292
    %v6401 = vunpack.c.l.b16 %v5293
    %v6402 = vunpack.c.h.b16 %v5293
    %v6403 = vunpack.c.l.b16 %v5294
    %v6404 = vunpack.c.h.b16 %v5294
    %v6405 = vunpack.c.l.b16 %v5295
    %v6406 = vunpack.c.h.b16 %v5295
    %v6407 = vunpack.c.l.b16 %v5296
    %v6408 = vunpack.c.h.b16 %v5296
    %v6409 = vunpack.c.l.b16 %v5297
    %v6410 = vunpack.c.h.b16 %v5297
    %v6411 = vunpack.c.l.b16 %v5298
    %v6412 = vunpack.c.h.b16 %v5298
    %v6413 = vunpack.c.l.b16 %v5299
    %v6414 = vunpack.c.h.b16 %v5299
    %v6415 = vunpack.c.l.b16 %v5300
    %v6416 = vunpack.c.h.b16 %v5300
    %v6417 = vunpack.c.l.b16 %v5301
    %v6418 = vunpack.c.h.b16 %v5301
    %v6419 = vunpack.c.l.b16 %v5302
    %v6420 = vunpack.c.h.b16 %v5302
    %v6421 = vunpack.c.l.b16 %v5303
    %v6422 = vunpack.c.h.b16 %v5303
    %v6423 = vunpack.c.l.b16 %v5304
    %v6424 = vunpack.c.h.b16 %v5304
    %v6425 = vunpack.c.l.b16 %v5305
    %v6426 = vunpack.c.h.b16 %v5305
    %v6427 = vunpack.c.l.b16 %v5306
    %v6428 = vunpack.c.h.b16 %v5306
    %v6429 = vunpack.c.l.b16 %v5307
    %v6430 = vunpack.c.h.b16 %v5307
    %v6431 = vunpack.c.l.b16 %v5308
    %v6432 = vunpack.c.h.b16 %v5308
    %v6433 = vunpack.c.l.b16 %v5309
    %v6434 = vunpack.c.h.b16 %v5309
    %v6435 = vunpack.c.l.b16 %v5310
    %v6436 = vunpack.c.h.b16 %v5310
    %v6437 = vunpack.c.l.b16 %v5311
    %v6438 = vunpack.c.h.b16 %v5311
    %v6439 = vunpack.c.l.b16 %v5312
    %v6440 = vunpack.c.h.b16 %v5312
    %v6441 = vunpack.c.l.b16 %v5313
    %v6442 = vunpack.c.h.b16 %v5313
    %v6443 = vunpack.c.l.b16 %v5314
    %v6444 = vunpack.c.h.b16 %v5314
    %v6445 = vunpack.c.l.b16 %v5315
    %v6446 = vunpack.c.h.b16 %v5315
    %v6447 = vunpack.c.l.b16 %v5316
    %v6448 = vunpack.c.h.b16 %v5316
    %v6449 = vunpack.c.l.b16 %v5317
    %v6450 = vunpack.c.h.b16 %v5317
    %v6451 = vunpack.c.l.b16 %v5318
    %v6452 = vunpack.c.h.b16 %v5318
    %v6453 = vunpack.c.l.b16 %v5319
    %v6454 = vunpack.c.h.b16 %v5319
    %v6455 = vunpack.c.l.b16 %v5320
    %v6456 = vunpack.c.h.b16 %v5320
    %v6457 = vunpack.c.l.b16 %v5321
    %v6458 = vunpack.c.h.b16 %v5321
    %v6459 = vunpack.c.l.b16 %v5322
    %v6460 = vunpack.c.h.b16 %v5322
    %v6461 = vunpack.c.l.b16 %v5323
    %v6462 = vunpack.c.h.b16 %v5323
    %v6463 = vunpack.c.l.b16 %v5324
    %v6464 = vunpack.c.h.b16 %v5324
    %v6465 = vunpack.c.l.b16 %v5325
    %v6466 = vunpack.c.h.b16 %v5325
    %v6467 = vunpack.c.l.b16 %v5326
    %v6468 = vunpack.c.h.b16 %v5326
    %v6469 = vunpack.c.l.b16 %v5327
    %v6470 = vunpack.c.h.b16 %v5327
    %v6471 = vunpack.c.l.b16 %v5328
    %v6472 = vunpack.c.h.b16 %v5328
    %v6473 = vunpack.c.l.b16 %v5329
    %v6474 = vunpack.c.h.b16 %v5329
    %v6475 = vunpack.c.l.b16 %v5330
    %v6476 = vunpack.c.h.b16 %v5330
    %v6477 = vunpack.c.l.b16 %v5331
    %v6478 = vunpack.c.h.b16 %v5331
    %v6479 = vunpack.c.l.b16 %v5332
    %v6480 = vunpack.c.h.b16 %v5332
    %v6481 = vunpack.c.l.b16 %v5333
    %v6482 = vunpack.c.h.b16 %v5333
    %v6483 = vunpack.c.l.b16 %v5334
    %v6484 = vunpack.c.h.b16 %v5334
    %v6485 = vunpack.c.l.b16 %v5335
    %v6486 = vunpack.c.h.b16 %v5335
    %v6487 = vunpack.c.l.b16 %v5336
    %v6488 = vunpack.c.h.b16 %v5336
    %v6489 = vunpack.c.l.b16 %v5337
    %v6490 = vunpack.c.h.b16 %v5337
    %v6491 = vunpack.c.l.b16 %v5338
    %v6492 = vunpack.c.h.b16 %v5338
    %v6493 = vunpack.c.l.b16 %v5339
    %v6494 = vunpack.c.h.b16 %v5339
    %v6495 = vunpack.c.l.b16 %v5340
    %v6496 = vunpack.c.h.b16 %v5340
    %v6497 = vunpack.c.l.b16 %v5341
    %v6498 = vunpack.c.h.b16 %v5341
    %v6499 = vunpack.c.l.b16 %v5342
    %v6500 = vunpack.c.h.b16 %v5342
    %v6501 = vunpack.c.l.b16 %v5343
    %v6502 = vunpack.c.h.b16 %v5343
    %v6503 = vunpack.c.l.b16 %v5344
    %v6504 = vunpack.c.h.b16 %v5344
    %v6505 = vunpack.c.l.b16 %v5345
    %v6506 = vunpack.c.h.b16 %v5345
    %v6507 = vunpack.c.l.b16 %v5346
    %v6508 = vunpack.c.h.b16 %v5346
    %v6509 = vunpack.c.l.b16 %v5347
    %v6510 = vunpack.c.h.b16 %v5347
    %v6511 = vunpack.c.l.b16 %v5348
    %v6512 = vunpack.c.h.b16 %v5348
    %v6513 = vunpack.c.l.b16 %v5349
    %v6514 = vunpack.c.h.b16 %v5349
    %v6515 = vunpack.c.l.b16 %v5350
    %v6516 = vunpack.c.h.b16 %v5350
    %v6517 = vunpack.c.l.b16 %v5351
    %v6518 = vunpack.c.h.b16 %v5351
    %v6519 = vunpack.c.l.b16 %v5352
    %v6520 = vunpack.c.h.b16 %v5352
    %v6521 = vunpack.c.l.b16 %v5353
    %v6522 = vunpack.c.h.b16 %v5353
    %v6523 = vunpack.c.l.b16 %v5354
    %v6524 = vunpack.c.h.b16 %v5354
    %v6525 = vunpack.c.l.b16 %v5355
    %v6526 = vunpack.c.h.b16 %v5355
    %v6527 = vunpack.c.l.b16 %v5356
    %v6528 = vunpack.c.h.b16 %v5356
    %v6529 = vunpack.c.l.b16 %v5357
    %v6530 = vunpack.c.h.b16 %v5357
    %v6531 = vunpack.c.l.b16 %v5358
    %v6532 = vunpack.c.h.b16 %v5358
    %v6533 = vunpack.c.l.b16 %v5359
    %v6534 = vunpack.c.h.b16 %v5359
    %v6535 = vunpack.c.l.b16 %v5360
    %v6536 = vunpack.c.h.b16 %v5360
    %v6537 = vunpack.c.l.b16 %v5361
    %v6538 = vunpack.c.h.b16 %v5361
    %v6539 = vunpack.c.l.b16 %v5362
    %v6540 = vunpack.c.h.b16 %v5362
    %v6541 = vunpack.c.l.b16 %v5363
    %v6542 = vunpack.c.h.b16 %v5363
    %v6543 = vunpack.c.l.b16 %v5364
    %v6544 = vunpack.c.h.b16 %v5364
    %v6545 = vunpack.c.l.b16 %v5365
    %v6546 = vunpack.c.h.b16 %v5365
    %v6547 = vunpack.c.l.b16 %v5366
    %v6548 = vunpack.c.h.b16 %v5366
    %v6549 = vunpack.c.l.b16 %v5367
    %v6550 = vunpack.c.h.b16 %v5367
    %v6551 = vunpack.c.l.b16 %v5368
    %v6552 = vunpack.c.h.b16 %v5368
    %v6553 = vunpack.c.l.b16 %v5369
    %v6554 = vunpack.c.h.b16 %v5369
    %v6555 = vunpack.c.l.b16 %v5370
    %v6556 = vunpack.c.h.b16 %v5370
    %v6557 = vunpack.c.l.b16 %v5371
    %v6558 = vunpack.c.h.b16 %v5371
    %v6559 = vunpack.c.l.b16 %v5372
    %v6560 = vunpack.c.h.b16 %v5372
    %v6561 = vunpack.c.l.b16 %v5373
    %v6562 = vunpack.c.h.b16 %v5373
    %v6563 = vunpack.c.l.b16 %v5374
    %v6564 = vunpack.c.h.b16 %v5374
    %v6565 = vunpack.c.l.b16 %v5375
    %v6566 = vunpack.c.h.b16 %v5375
    %v6567 = vunpack.c.l.b16 %v5376
    %v6568 = vunpack.c.h.b16 %v5376
    %v6569 = vunpack.c.l.b16 %v5377
    %v6570 = vunpack.c.h.b16 %v5377
    %v6571 = vunpack.c.l.b16 %v5378
    %v6572 = vunpack.c.h.b16 %v5378
    %v6573 = vunpack.c.l.b16 %v5379
    %v6574 = vunpack.c.h.b16 %v5379
    %v6575 = vunpack.c.l.b16 %v5380
    %v6576 = vunpack.c.h.b16 %v5380
    %v6577 = vunpack.c.l.b16 %v5381
    %v6578 = vunpack.c.h.b16 %v5381
    %v6579 = vunpack.c.l.b16 %v5382
    %v6580 = vunpack.c.h.b16 %v5382
    %v6581 = vunpack.c.l.b16 %v5383
    %v6582 = vunpack.c.h.b16 %v5383
    %v6583 = vunpack.c.l.b16 %v5384
    %v6584 = vunpack.c.h.b16 %v5384
    %v6585 = vunpack.c.l.b16 %v5385
    %v6586 = vunpack.c.h.b16 %v5385
    %v6587 = vunpack.c.l.b16 %v5386
    %v6588 = vunpack.c.h.b16 %v5386
    %v6589 = vunpack.c.l.b16 %v5387
    %v6590 = vunpack.c.h.b16 %v5387
    %v6591 = vunpack.c.l.b16 %v5388
    %v6592 = vunpack.c.h.b16 %v5388
    %v6593 = vunpack.c.l.b16 %v5389
    %v6594 = vunpack.c.h.b16 %v5389
    %v6595 = vunpack.c.l.b16 %v5390
    %v6596 = vunpack.c.h.b16 %v5390
    %v6597 = vunpack.c.l.b16 %v5391
    %v6598 = vunpack.c.h.b16 %v5391
    %v6599 = vunpack.c.l.b16 %v5392
    %v6600 = vunpack.c.h.b16 %v5392
    %v6601 = vunpack.c.l.b16 %v5393
    %v6602 = vunpack.c.h.b16 %v5393
    %v6603 = vunpack.c.l.b16 %v5394
    %v6604 = vunpack.c.h.b16 %v5394
    %v6605 = vunpack.c.l.b16 %v5395
    %v6606 = vunpack.c.h.b16 %v5395
    %v6607 = vunpack.c.l.b16 %v5396
    %v6608 = vunpack.c.h.b16 %v5396
    %v6609 = vunpack.c.l.b16 %v5397
    %v6610 = vunpack.c.h.b16 %v5397
    %v6611 = vunpack.c.l.b16 %v5398
    %v6612 = vunpack.c.h.b16 %v5398
    %v6613 = vunpack.c.l.b16 %v5399
    %v6614 = vunpack.c.h.b16 %v5399
    %v6615 = vunpack.c.l.b16 %v5400
    %v6616 = vunpack.c.h.b16 %v5400
    %v6617 = vunpack.c.l.b16 %v5401
    %v6618 = vunpack.c.h.b16 %v5401
    %v6619 = vunpack.c.l.b16 %v5402
    %v6620 = vunpack.c.h.b16 %v5402
    %v6621 = vunpack.c.l.b16 %v5403
    %v6622 = vunpack.c.h.b16 %v5403
    %v6623 = vunpack.c.l.b16 %v5404
    %v6624 = vunpack.c.h.b16 %v5404
    %v6625 = vunpack.c.l.b16 %v5405
    %v6626 = vunpack.c.h.b16 %v5405
    %v6627 = vunpack.c.l.b16 %v5406
    %v6628 = vunpack.c.h.b16 %v5406
    %v6629 = vunpack.c.l.b16 %v5407
    %v6630 = vunpack.c.h.b16 %v5407
    %v6631 = vunpack.c.l.b16 %v5408
    %v6632 = vunpack.c.h.b16 %v5408
    %v6633 = vunpack.c.l.b16 %v5409
    %v6634 = vunpack.c.h.b16 %v5409
    %v6635 = vunpack.c.l.b16 %v5410
    %v6636 = vunpack.c.h.b16 %v5410
    %v6637 = vunpack.c.l.b16 %v5411
    %v6638 = vunpack.c.h.b16 %v5411
    %v6639 = vunpack.c.l.b16 %v5412
    %v6640 = vunpack.c.h.b16 %v5412
    %v6641 = vunpack.c.l.b16 %v5413
    %v6642 = vunpack.c.h.b16 %v5413
    %v6643 = vunpack.c.l.b16 %v5414
    %v6644 = vunpack.c.h.b16 %v5414
    %v6645 = vunpack.c.l.b16 %v5415
    %v6646 = vunpack.c.h.b16 %v5415
    %v6647 = vunpack.c.l.b16 %v5416
    %v6648 = vunpack.c.h.b16 %v5416
    %v6649 = vunpack.c.l.b16 %v5417
    %v6650 = vunpack.c.h.b16 %v5417
    %v6651 = vunpack.c.l.b16 %v5418
    %v6652 = vunpack.c.h.b16 %v5418
    %v6653 = vunpack.c.l.b16 %v5419
    %v6654 = vunpack.c.h.b16 %v5419
    %v6655 = vunpack.c.l.b16 %v5420
    %v6656 = vunpack.c.h.b16 %v5420
    %v6657 = vunpack.c.l.b16 %v5421
    %v6658 = vunpack.c.h.b16 %v5421
    %v6659 = vunpack.c.l.b16 %v5422
    %v6660 = vunpack.c.h.b16 %v5422
    %v6661 = vunpack.c.l.b16 %v5423
    %v6662 = vunpack.c.h.b16 %v5423
    %v6663 = vunpack.c.l.b16 %v5424
    %v6664 = vunpack.c.h.b16 %v5424
    %v6665 = vunpack.c.l.b16 %v5425
    %v6666 = vunpack.c.h.b16 %v5425
    %v6667 = vunpack.c.l.b16 %v5426
    %v6668 = vunpack.c.h.b16 %v5426
    %v6669 = vunpack.c.l.b16 %v5427
    %v6670 = vunpack.c.h.b16 %v5427
    %v6671 = vunpack.c.l.b16 %v5428
    %v6672 = vunpack.c.h.b16 %v5428
    %v6673 = vunpack.c.l.b16 %v5429
    %v6674 = vunpack.c.h.b16 %v5429
    %v6675 = vunpack.c.l.b16 %v5430
    %v6676 = vunpack.c.h.b16 %v5430
    %v6677 = vunpack.c.l.b16 %v5431
    %v6678 = vunpack.c.h.b16 %v5431
    %v6679 = vunpack.c.l.b16 %v5432
    %v6680 = vunpack.c.h.b16 %v5432
    %v6681 = vunpack.c.l.b16 %v5433
    %v6682 = vunpack.c.h.b16 %v5433
    %v6683 = vunpack.c.l.b16 %v5434
    %v6684 = vunpack.c.h.b16 %v5434
    %v6685 = vunpack.c.l.b16 %v5435
    %v6686 = vunpack.c.h.b16 %v5435
    %v6687 = vunpack.c.l.b16 %v5436
    %v6688 = vunpack.c.h.b16 %v5436
    %v6689 = vunpack.c.l.b16 %v5437
    %v6690 = vunpack.c.h.b16 %v5437
    %v6691 = vunpack.c.l.b16 %v5438
    %v6692 = vunpack.c.h.b16 %v5438
    %v6693 = vunpack.c.l.b16 %v5439
    %v6694 = vunpack.c.h.b16 %v5439
    %v6695 = vunpack.c.l.b16 %v5440
    %v6696 = vunpack.c.h.b16 %v5440
    %v6697 = vunpack.c.l.b16 %v5441
    %v6698 = vunpack.c.h.b16 %v5441
    %v6699 = vunpack.c.l.b16 %v5442
    %v6700 = vunpack.c.h.b16 %v5442
    %v6701 = vunpack.c.l.b16 %v5443
    %v6702 = vunpack.c.h.b16 %v5443
    %v6703 = vunpack.c.l.b16 %v5444
    %v6704 = vunpack.c.h.b16 %v5444
    %v6705 = vunpack.c.l.b16 %v5445
    %v6706 = vunpack.c.h.b16 %v5445
    %v6707 = vunpack.c.l.b16 %v5446
    %v6708 = vunpack.c.h.b16 %v5446
    %v6709 = vunpack.c.l.b16 %v5447
    %v6710 = vunpack.c.h.b16 %v5447
    %v6711 = vunpack.c.l.b16 %v5448
    %v6712 = vunpack.c.h.b16 %v5448
    %v6713 = vunpack.c.l.b16 %v5449
    %v6714 = vunpack.c.h.b16 %v5449
    %v6715 = vunpack.c.l.b16 %v5450
    %v6716 = vunpack.c.h.b16 %v5450
    %v6717 = vunpack.c.l.b16 %v5451
    %v6718 = vunpack.c.h.b16 %v5451
    %v6719 = vunpack.c.l.b16 %v5452
    %v6720 = vunpack.c.h.b16 %v5452
    %v6721 = vunpack.c.l.b16 %v5453
    %v6722 = vunpack.c.h.b16 %v5453
    %v6723 = vunpack.c.l.b16 %v5454
    %v6724 = vunpack.c.h.b16 %v5454
    %v6725 = vunpack.c.l.b16 %v5455
    %v6726 = vunpack.c.h.b16 %v5455
    %v6727 = vunpack.c.l.b16 %v5456
    %v6728 = vunpack.c.h.b16 %v5456
    %v6729 = vunpack.c.l.b16 %v5457
    %v6730 = vunpack.c.h.b16 %v5457
    %v6731 = vunpack.c.l.b16 %v5458
    %v6732 = vunpack.c.h.b16 %v5458
    %v6733 = vunpack.c.l.b16 %v5459
    %v6734 = vunpack.c.h.b16 %v5459
    %v6735 = vunpack.c.l.b16 %v5460
    %v6736 = vunpack.c.h.b16 %v5460
    %v6737 = vunpack.c.l.b16 %v5461
    %v6738 = vunpack.c.h.b16 %v5461
    %v6739 = vunpack.c.l.b16 %v5462
    %v6740 = vunpack.c.h.b16 %v5462
    %v6741 = vunpack.c.l.b16 %v5463
    %v6742 = vunpack.c.h.b16 %v5463
    %v6743 = vunpack.c.l.b16 %v5464
    %v6744 = vunpack.c.h.b16 %v5464
    %v6745 = vunpack.c.l.b16 %v5465
    %v6746 = vunpack.c.h.b16 %v5465
    %v6747 = vunpack.c.l.b16 %v5466
    %v6748 = vunpack.c.h.b16 %v5466
    %v6749 = vunpack.c.l.b16 %v5467
    %v6750 = vunpack.c.h.b16 %v5467
    %v6751 = vunpack.c.l.b16 %v5468
    %v6752 = vunpack.c.h.b16 %v5468
    %v6753 = vunpack.c.l.b16 %v5469
    %v6754 = vunpack.c.h.b16 %v5469
    %v6755 = vunpack.c.l.b16 %v5470
    %v6756 = vunpack.c.h.b16 %v5470
    %v6757 = vunpack.c.l.b16 %v5471
    %v6758 = vunpack.c.h.b16 %v5471
    %v6759 = vunpack.c.l.b16 %v5472
    %v6760 = vunpack.c.h.b16 %v5472
    %v6761 = vunpack.c.l.b16 %v5473
    %v6762 = vunpack.c.h.b16 %v5473
    %v6763 = vunpack.c.l.b16 %v5474
    %v6764 = vunpack.c.h.b16 %v5474
    %v6765 = vunpack.c.l.b16 %v5475
    %v6766 = vunpack.c.h.b16 %v5475
    %v6767 = vunpack.c.l.b16 %v5476
    %v6768 = vunpack.c.h.b16 %v5476
    %v6769 = vunpack.c.l.b16 %v5477
    %v6770 = vunpack.c.h.b16 %v5477
    %v6771 = vunpack.c.l.b16 %v5478
    %v6772 = vunpack.c.h.b16 %v5478
    %v6773 = vunpack.c.l.b16 %v5479
    %v6774 = vunpack.c.h.b16 %v5479
    %v6775 = vunpack.c.l.b16 %v5480
    %v6776 = vunpack.c.h.b16 %v5480
    %v6777 = vunpack.c.l.b16 %v5481
    %v6778 = vunpack.c.h.b16 %v5481
    %v6779 = vunpack.c.l.b16 %v5482
    %v6780 = vunpack.c.h.b16 %v5482
    %v6781 = vunpack.c.l.b16 %v5483
    %v6782 = vunpack.c.h.b16 %v5483
    %v6783 = vunpack.c.l.b16 %v5484
    %v6784 = vunpack.c.h.b16 %v5484
    %v6785 = vunpack.c.l.b16 %v5485
    %v6786 = vunpack.c.h.b16 %v5485
    %v6787 = vunpack.c.l.b16 %v5486
    %v6788 = vunpack.c.h.b16 %v5486
    %v6789 = vunpack.c.l.b16 %v5487
    %v6790 = vunpack.c.h.b16 %v5487
    %v6791 = vunpack.c.l.b16 %v5488
    %v6792 = vunpack.c.h.b16 %v5488
    %v6793 = vunpack.c.l.b16 %v5489
    %v6794 = vunpack.c.h.b16 %v5489
    %v6795 = vunpack.c.l.b16 %v5490
    %v6796 = vunpack.c.h.b16 %v5490
    %v6797 = vunpack.c.l.b16 %v5491
    %v6798 = vunpack.c.h.b16 %v5491
    %v6799 = vunpack.c.l.b16 %v5492
    %v6800 = vunpack.c.h.b16 %v5492
    %v6801 = vunpack.c.l.b16 %v5493
    %v6802 = vunpack.c.h.b16 %v5493
    %v6803 = vunpack.c.l.b16 %v5494
    %v6804 = vunpack.c.h.b16 %v5494
    %v6805 = vunpack.c.l.b16 %v5495
    %v6806 = vunpack.c.h.b16 %v5495
    %v6807 = vunpack.c.l.b16 %v5496
    %v6808 = vunpack.c.h.b16 %v5496
    %v6809 = vunpack.c.l.b16 %v5497
    %v6810 = vunpack.c.h.b16 %v5497
    %v6811 = vunpack.c.l.b16 %v5498
    %v6812 = vunpack.c.h.b16 %v5498
    %v6813 = vunpack.c.l.b16 %v5499
    %v6814 = vunpack.c.h.b16 %v5499
    %v6815 = vunpack.c.l.b16 %v5500
    %v6816 = vunpack.c.h.b16 %v5500
    %v6817 = vunpack.c.l.b16 %v5501
    %v6818 = vunpack.c.h.b16 %v5501
    %v6819 = vunpack.c.l.b16 %v5502
    %v6820 = vunpack.c.h.b16 %v5502
    %v6821 = vunpack.c.l.b16 %v5503
    %v6822 = vunpack.c.h.b16 %v5503
    %v6823 = vunpack.c.l.b16 %v5504
    %v6824 = vunpack.c.h.b16 %v5504
    %v6825 = vunpack.c.l.b16 %v5505
    %v6826 = vunpack.c.h.b16 %v5505
    %v6827 = vunpack.c.l.b16 %v5506
    %v6828 = vunpack.c.h.b16 %v5506
    %v6829 = vunpack.c.l.b16 %v5507
    %v6830 = vunpack.c.h.b16 %v5507
    %v6831 = vunpack.c.l.b16 %v5508
    %v6832 = vunpack.c.h.b16 %v5508
    %v6833 = vunpack.c.l.b16 %v5509
    %v6834 = vunpack.c.h.b16 %v5509
    %v6835 = vunpack.c.l.b16 %v5510
    %v6836 = vunpack.c.h.b16 %v5510
    %v6837 = vunpack.c.l.b16 %v5511
    %v6838 = vunpack.c.h.b16 %v5511
    %v6839 = vunpack.c.l.b16 %v5512
    %v6840 = vunpack.c.h.b16 %v5512
    %v6841 = vunpack.c.l.b16 %v5513
    %v6842 = vunpack.c.h.b16 %v5513
    %v6843 = vunpack.c.l.b16 %v5514
    %v6844 = vunpack.c.h.b16 %v5514
    %v6845 = vunpack.c.l.b16 %v5515
    %v6846 = vunpack.c.h.b16 %v5515
    %v6847 = vunpack.c.l.b16 %v5516
    %v6848 = vunpack.c.h.b16 %v5516
    %v6849 = vunpack.c.l.b16 %v5517
    %v6850 = vunpack.c.h.b16 %v5517
    %v6851 = vunpack.c.l.b16 %v5518
    %v6852 = vunpack.c.h.b16 %v5518
    %v6853 = vunpack.c.l.b16 %v5519
    %v6854 = vunpack.c.h.b16 %v5519
    %v6855 = vunpack.c.l.b16 %v5520
    %v6856 = vunpack.c.h.b16 %v5520
    %v6857 = vunpack.c.l.b16 %v5521
    %v6858 = vunpack.c.h.b16 %v5521
    %v6859 = vunpack.c.l.b16 %v5522
    %v6860 = vunpack.c.h.b16 %v5522
    %v6861 = vunpack.c.l.b16 %v5523
    %v6862 = vunpack.c.h.b16 %v5523
    %v6863 = vunpack.c.l.b16 %v5524
    %v6864 = vunpack.c.h.b16 %v5524
    %v6865 = vunpack.c.l.b16 %v5525
    %v6866 = vunpack.c.h.b16 %v5525
    %v6867 = vunpack.c.l.b16 %v5526
    %v6868 = vunpack.c.h.b16 %v5526
    %v6869 = vunpack.c.l.b16 %v5527
    %v6870 = vunpack.c.h.b16 %v5527
    %v6871 = vunpack.c.l.b16 %v5528
    %v6872 = vunpack.c.h.b16 %v5528
    %v6873 = vunpack.c.l.b16 %v5529
    %v6874 = vunpack.c.h.b16 %v5529
    %v6875 = vunpack.c.l.b16 %v5530
    %v6876 = vunpack.c.h.b16 %v5530
    %v6877 = vunpack.c.l.b16 %v5531
    %v6878 = vunpack.c.h.b16 %v5531
    %v6879 = vunpack.c.l.b16 %v5532
    %v6880 = vunpack.c.h.b16 %v5532
    %v6881 = vunpack.c.l.b16 %v5533
    %v6882 = vunpack.c.h.b16 %v5533
    %v6883 = vunpack.c.l.b16 %v5534
    %v6884 = vunpack.c.h.b16 %v5534
    %v6885 = vunpack.c.l.b16 %v5535
    %v6886 = vunpack.c.h.b16 %v5535
    %v6887 = vunpack.c.l.b16 %v5536
    %v6888 = vunpack.c.h.b16 %v5536
    %v6889 = vunpack.c.l.b16 %v5537
    %v6890 = vunpack.c.h.b16 %v5537
    %v6891 = vunpack.c.l.b16 %v5538
    %v6892 = vunpack.c.h.b16 %v5538
    %v6893 = vunpack.c.l.b16 %v5539
    %v6894 = vunpack.c.h.b16 %v5539
    %v6895 = vunpack.c.l.b16 %v5540
    %v6896 = vunpack.c.h.b16 %v5540
    %v6897 = vunpack.c.l.b16 %v5541
    %v6898 = vunpack.c.h.b16 %v5541
    %v6899 = vunpack.c.l.b16 %v5542
    %v6900 = vunpack.c.h.b16 %v5542
    %v6901 = vunpack.c.l.b16 %v5543
    %v6902 = vunpack.c.h.b16 %v5543
    %v6903 = vunpack.c.l.b16 %v5544
    %v6904 = vunpack.c.h.b16 %v5544
    %v6905 = vunpack.c.l.b16 %v5545
    %v6906 = vunpack.c.h.b16 %v5545
    %v6907 = vunpack.c.l.b16 %v5546
    %v6908 = vunpack.c.h.b16 %v5546
    %v6909 = vunpack.c.l.b16 %v5547
    %v6910 = vunpack.c.h.b16 %v5547
    %v6911 = vunpack.c.l.b16 %v5548
    %v6912 = vunpack.c.h.b16 %v5548
    %v6913 = vunpack.c.l.b16 %v5549
    %v6914 = vunpack.c.h.b16 %v5549
    %v6915 = vunpack.c.l.b16 %v5550
    %v6916 = vunpack.c.h.b16 %v5550
    %v6917 = vunpack.c.l.b16 %v5551
    %v6918 = vunpack.c.h.b16 %v5551
    %v6919 = vunpack.c.l.b16 %v5552
    %v6920 = vunpack.c.h.b16 %v5552
    %v6921 = vunpack.c.l.b16 %v5553
    %v6922 = vunpack.c.h.b16 %v5553
    %v6923 = vunpack.c.l.b16 %v5554
    %v6924 = vunpack.c.h.b16 %v5554
    %v6925 = vunpack.c.l.b16 %v5555
    %v6926 = vunpack.c.h.b16 %v5555
    %v6927 = vunpack.c.l.b16 %v5556
    %v6928 = vunpack.c.h.b16 %v5556
    %v6929 = vunpack.c.l.b16 %v5557
    %v6930 = vunpack.c.h.b16 %v5557
    %v6931 = vunpack.c.l.b16 %v5558
    %v6932 = vunpack.c.h.b16 %v5558
    %v6933 = vunpack.c.l.b16 %v5559
    %v6934 = vunpack.c.h.b16 %v5559
    %v6935 = vunpack.c.l.b16 %v5560
    %v6936 = vunpack.c.h.b16 %v5560
    %v6937 = vunpack.c.l.b16 %v5561
    %v6938 = vunpack.c.h.b16 %v5561
    %v6939 = vunpack.c.l.b16 %v5562
    %v6940 = vunpack.c.h.b16 %v5562
    %v6941 = vunpack.c.l.b16 %v5563
    %v6942 = vunpack.c.h.b16 %v5563
    %v6943 = vunpack.c.l.b16 %v5564
    %v6944 = vunpack.c.h.b16 %v5564
    %v6945 = vunpack.c.l.b16 %v5565
    %v6946 = vunpack.c.h.b16 %v5565
    %v6947 = vunpack.c.l.b16 %v5566
    %v6948 = vunpack.c.h.b16 %v5566
    %v6949 = vunpack.c.l.b16 %v5567
    %v6950 = vunpack.c.h.b16 %v5567
    %v6951 = vunpack.c.l.b16 %v5568
    %v6952 = vunpack.c.h.b16 %v5568
    %v6953 = vunpack.c.l.b16 %v5569
    %v6954 = vunpack.c.h.b16 %v5569
    %v6955 = vunpack.c.l.b16 %v5570
    %v6956 = vunpack.c.h.b16 %v5570
    %v6957 = vunpack.c.l.b16 %v5571
    %v6958 = vunpack.c.h.b16 %v5571
    %v6959 = vunpack.c.l.b16 %v5572
    %v6960 = vunpack.c.h.b16 %v5572
    %v6961 = vunpack.c.l.b16 %v5573
    %v6962 = vunpack.c.h.b16 %v5573
    %v6963 = vunpack.c.l.b16 %v5574
    %v6964 = vunpack.c.h.b16 %v5574
    %v6965 = vunpack.c.l.b16 %v5575
    %v6966 = vunpack.c.h.b16 %v5575
    %v6967 = vunpack.c.l.b16 %v5576
    %v6968 = vunpack.c.h.b16 %v5576
    %v6969 = vunpack.c.l.b16 %v5577
    %v6970 = vunpack.c.h.b16 %v5577
    %v6971 = vunpack.c.l.b16 %v5578
    %v6972 = vunpack.c.h.b16 %v5578
    %v6973 = vunpack.c.l.b16 %v5579
    %v6974 = vunpack.c.h.b16 %v5579
    %v6975 = vunpack.c.l.b16 %v5580
    %v6976 = vunpack.c.h.b16 %v5580
    %v6977 = vunpack.c.l.b16 %v5581
    %v6978 = vunpack.c.h.b16 %v5581
    %v6979 = vunpack.c.l.b16 %v5582
    %v6980 = vunpack.c.h.b16 %v5582
    %v6981 = vunpack.c.l.b16 %v5583
    %v6982 = vunpack.c.h.b16 %v5583
    %v6983 = vunpack.c.l.b16 %v5584
    %v6984 = vunpack.c.h.b16 %v5584
    %v6985 = vunpack.c.l.b16 %v5585
    %v6986 = vunpack.c.h.b16 %v5585
    %v6987 = vunpack.c.l.b16 %v5586
    %v6988 = vunpack.c.h.b16 %v5586
    %v6989 = vunpack.c.l.b16 %v5587
    %v6990 = vunpack.c.h.b16 %v5587
    %v6991 = vunpack.c.l.b16 %v5588
    %v6992 = vunpack.c.h.b16 %v5588
    %v6993 = vunpack.c.l.b16 %v5589
    %v6994 = vunpack.c.h.b16 %v5589
    %v6995 = vunpack.c.l.b16 %v5590
    %v6996 = vunpack.c.h.b16 %v5590
    %v6997 = vunpack.c.l.b16 %v5591
    %v6998 = vunpack.c.h.b16 %v5591
    %v6999 = vunpack.c.l.b16 %v5592
    %v7000 = vunpack.c.h.b16 %v5592
    %v7001 = vunpack.c.l.b16 %v5593
    %v7002 = vunpack.c.h.b16 %v5593
    %v7003 = vunpack.c.l.b16 %v5594
    %v7004 = vunpack.c.h.b16 %v5594
    %v7005 = vunpack.c.l.b16 %v5595
    %v7006 = vunpack.c.h.b16 %v5595
    %v7007 = vunpack.c.l.b16 %v5596
    %v7008 = vunpack.c.h.b16 %v5596
    %v7009 = vunpack.c.l.b16 %v5597
    %v7010 = vunpack.c.h.b16 %v5597
    %v7011 = vunpack.c.l.b16 %v5598
    %v7012 = vunpack.c.h.b16 %v5598
    %v7013 = vunpack.c.l.b16 %v5599
    %v7014 = vunpack.c.h.b16 %v5599
    %v7015 = vunpack.c.l.b16 %v5600
    %v7016 = vunpack.c.h.b16 %v5600
    %v7017 = vunpack.c.l.b16 %v5601
    %v7018 = vunpack.c.h.b16 %v5601
    %v7019 = vunpack.c.l.b16 %v5602
    %v7020 = vunpack.c.h.b16 %v5602
    %v7021 = vunpack.c.l.b16 %v5603
    %v7022 = vunpack.c.h.b16 %v5603
    %v7023 = vunpack.c.l.b16 %v5604
    %v7024 = vunpack.c.h.b16 %v5604
    %v7025 = vunpack.c.l.b16 %v5605
    %v7026 = vunpack.c.h.b16 %v5605
    %v7027 = vunpack.c.l.b16 %v5606
    %v7028 = vunpack.c.h.b16 %v5606
    %v7029 = vunpack.c.l.b16 %v5607
    %v7030 = vunpack.c.h.b16 %v5607
    %v7031 = vunpack.c.l.b16 %v5608
    %v7032 = vunpack.c.h.b16 %v5608
    %v7033 = vunpack.c.l.b16 %v5609
    %v7034 = vunpack.c.h.b16 %v5609
    %v7035 = vunpack.c.l.b16 %v5610
    %v7036 = vunpack.c.h.b16 %v5610
    %v7037 = vunpack.c.l.b16 %v5611
    %v7038 = vunpack.c.h.b16 %v5611
    %v7039 = vunpack.c.l.b16 %v5612
    %v7040 = vunpack.c.h.b16 %v5612
    %v7041 = vunpack.c.l.b16 %v5613
    %v7042 = vunpack.c.h.b16 %v5613
    %v7043 = vunpack.c.l.b16 %v5614
    %v7044 = vunpack.c.h.b16 %v5614
    %v7045 = vunpack.c.l.b16 %v5615
    %v7046 = vunpack.c.h.b16 %v5615
    %v7047 = vunpack.c.l.b16 %v5616
    %v7048 = vunpack.c.h.b16 %v5616
    %v7049 = vunpack.c.l.b16 %v5617
    %v7050 = vunpack.c.h.b16 %v5617
    %v7051 = vunpack.c.l.b16 %v5618
    %v7052 = vunpack.c.h.b16 %v5618
    %v7053 = vunpack.c.l.b16 %v5619
    %v7054 = vunpack.c.h.b16 %v5619
    %v7055 = vunpack.c.l.b16 %v5620
    %v7056 = vunpack.c.h.b16 %v5620
    %v7057 = vunpack.c.l.b16 %v5621
    %v7058 = vunpack.c.h.b16 %v5621
    %v7059 = vunpack.c.l.b16 %v5622
    %v7060 = vunpack.c.h.b16 %v5622
    %v7061 = vunpack.c.l.b16 %v5623
    %v7062 = vunpack.c.h.b16 %v5623
    %v7063 = vunpack.c.l.b16 %v5624
    %v7064 = vunpack.c.h.b16 %v5624
    %v7065 = vunpack.c.l.b16 %v5625
    %v7066 = vunpack.c.h.b16 %v5625
    %v7067 = vunpack.c.l.b16 %v5626
    %v7068 = vunpack.c.h.b16 %v5626
    %v7069 = vunpack.c.l.b16 %v5627
    %v7070 = vunpack.c.h.b16 %v5627
    %v7071 = vunpack.c.l.b16 %v5628
    %v7072 = vunpack.c.h.b16 %v5628
    %v7073 = vunpack.c.l.b16 %v5629
    %v7074 = vunpack.c.h.b16 %v5629
    %v7075 = vunpack.c.l.b16 %v5630
    %v7076 = vunpack.c.h.b16 %v5630
    %v7077 = vunpack.c.l.b16 %v5631
    %v7078 = vunpack.c.h.b16 %v5631
    %v7079 = vunpack.c.l.b16 %v5632
    %v7080 = vunpack.c.h.b16 %v5632
    %v7081 = vunpack.c.l.b16 %v5633
    %v7082 = vunpack.c.h.b16 %v5633
    %v7083 = vunpack.c.l.b16 %v5634
    %v7084 = vunpack.c.h.b16 %v5634
    %v7085 = vunpack.c.l.b16 %v5635
    %v7086 = vunpack.c.h.b16 %v5635
    %v7087 = vunpack.c.l.b16 %v5636
    %v7088 = vunpack.c.h.b16 %v5636
    %v7089 = vunpack.c.l.b16 %v5637
    %v7090 = vunpack.c.h.b16 %v5637
    %v7091 = vunpack.c.l.b16 %v5638
    %v7092 = vunpack.c.h.b16 %v5638
    %v7093 = vunpack.c.l.b16 %v5639
    %v7094 = vunpack.c.h.b16 %v5639
    %v7095 = vunpack.c.l.b16 %v5640
    %v7096 = vunpack.c.h.b16 %v5640
    %v7097 = vunpack.c.l.b16 %v5641
    %v7098 = vunpack.c.h.b16 %v5641
    %v7099 = vunpack.c.l.b16 %v5642
    %v7100 = vunpack.c.h.b16 %v5642
    %v7101 = vunpack.c.l.b16 %v5643
    %v7102 = vunpack.c.h.b16 %v5643
    %v7103 = vunpack.c.l.b16 %v5644
    %v7104 = vunpack.c.h.b16 %v5644
    %v7105 = vunpack.c.l.b16 %v5645
    %v7106 = vunpack.c.h.b16 %v5645
    %v7107 = vunpack.c.l.b16 %v5646
    %v7108 = vunpack.c.h.b16 %v5646
    %v7109 = vunpack.c.l.b16 %v5647
    %v7110 = vunpack.c.h.b16 %v5647
    %v7111 = vunpack.c.l.b16 %v5648
    %v7112 = vunpack.c.h.b16 %v5648
    %v7113 = vunpack.c.l.b16 %v5649
    %v7114 = vunpack.c.h.b16 %v5649
    %v7115 = vunpack.c.l.b16 %v5650
    %v7116 = vunpack.c.h.b16 %v5650
    %v7117 = vunpack.c.l.b16 %v5651
    %v7118 = vunpack.c.h.b16 %v5651
    %v7119 = vunpack.c.l.b16 %v5652
    %v7120 = vunpack.c.h.b16 %v5652
    %v7121 = vunpack.c.l.b16 %v5653
    %v7122 = vunpack.c.h.b16 %v5653
    %v7123 = vunpack.c.l.b16 %v5654
    %v7124 = vunpack.c.h.b16 %v5654
    %v7125 = vunpack.c.l.b16 %v5655
    %v7126 = vunpack.c.h.b16 %v5655
    %v7127 = vunpack.c.l.b16 %v5656
    %v7128 = vunpack.c.h.b16 %v5656
    %v7129 = vunpack.c.l.b16 %v5657
    %v7130 = vunpack.c.h.b16 %v5657
    %v7131 = vunpack.c.l.b16 %v5658
    %v7132 = vunpack.c.h.b16 %v5658
    %v7133 = vunpack.c.l.b16 %v5659
    %v7134 = vunpack.c.h.b16 %v5659
    %v7135 = vunpack.c.l.b16 %v5660
    %v7136 = vunpack.c.h.b16 %v5660
    %v7137 = vunpack.c.l.b16 %v5661
    %v7138 = vunpack.c.h.b16 %v5661
    %v7139 = vunpack.c.l.b16 %v5662
    %v7140 = vunpack.c.h.b16 %v5662
    %v7141 = vunpack.c.l.b16 %v5663
    %v7142 = vunpack.c.h.b16 %v5663
    %v7143 = vunpack.c.l.b16 %v5664
    %v7144 = vunpack.c.h.b16 %v5664
    %v7145 = vunpack.c.l.b16 %v5665
    %v7146 = vunpack.c.h.b16 %v5665
    %v7147 = vunpack.c.l.b16 %v5666
    %v7148 = vunpack.c.h.b16 %v5666
    %v7149 = vunpack.c.l.b16 %v5667
    %v7150 = vunpack.c.h.b16 %v5667
    %v7151 = vunpack.c.l.b16 %v5668
    %v7152 = vunpack.c.h.b16 %v5668
    %v7153 = vunpack.c.l.b16 %v5669
    %v7154 = vunpack.c.h.b16 %v5669
    %v7155 = vunpack.c.l.b16 %v5670
    %v7156 = vunpack.c.h.b16 %v5670
    %v7157 = vunpack.c.l.b16 %v5671
    %v7158 = vunpack.c.h.b16 %v5671
    %v7159 = vunpack.c.l.b16 %v5672
    %v7160 = vunpack.c.h.b16 %v5672
    %v7161 = vunpack.c.l.b16 %v5673
    %v7162 = vunpack.c.h.b16 %v5673
    %v7163 = vunpack.c.l.b16 %v5674
    %v7164 = vunpack.c.h.b16 %v5674
    %v7165 = vunpack.c.l.b16 %v5675
    %v7166 = vunpack.c.h.b16 %v5675
    %v7167 = vunpack.c.l.b16 %v5676
    %v7168 = vunpack.c.h.b16 %v5676
    %v7169 = vunpack.c.l.b16 %v5677
    %v7170 = vunpack.c.h.b16 %v5677
    %v7171 = vunpack.c.l.b16 %v5678
    %v7172 = vunpack.c.h.b16 %v5678
    %v7173 = vunpack.c.l.b16 %v5679
    %v7174 = vunpack.c.h.b16 %v5679
    %v7175 = vunpack.c.l.b16 %v5680
    %v7176 = vunpack.c.h.b16 %v5680
    %v7177 = vunpack.c.l.b16 %v5681
    %v7178 = vunpack.c.h.b16 %v5681
    %v7179 = vunpack.c.l.b16 %v5682
    %v7180 = vunpack.c.h.b16 %v5682
    %v7181 = vunpack.c.l.b16 %v5683
    %v7182 = vunpack.c.h.b16 %v5683
    %v7183 = vunpack.c.l.b16 %v5684
    %v7184 = vunpack.c.h.b16 %v5684
    %v7185 = vunpack.c.l.b16 %v5685
    %v7186 = vunpack.c.h.b16 %v5685
    %v7187 = vunpack.c.l.b16 %v5686
    %v7188 = vunpack.c.h.b16 %v5686
    %v7189 = vunpack.c.l.b16 %v5687
    %v7190 = vunpack.c.h.b16 %v5687
    %v7191 = vunpack.c.l.b16 %v5688
    %v7192 = vunpack.c.h.b16 %v5688
    %v7193 = vunpack.c.l.b16 %v5689
    %v7194 = vunpack.c.h.b16 %v5689
    %v7195 = vunpack.c.l.b16 %v5690
    %v7196 = vunpack.c.h.b16 %v5690
    %v7197 = vunpack.c.l.b16 %v5691
    %v7198 = vunpack.c.h.b16 %v5691
    %v7199 = vunpack.c.l.b16 %v5692
    %v7200 = vunpack.c.h.b16 %v5692
    %v7201 = vunpack.c.l.b16 %v5693
    %v7202 = vunpack.c.h.b16 %v5693
    %v7203 = vunpack.c.l.b16 %v5694
    %v7204 = vunpack.c.h.b16 %v5694
    %v7205 = vunpack.c.l.b16 %v5695
    %v7206 = vunpack.c.h.b16 %v5695
    %v7207 = vunpack.c.l.b16 %v5696
    %v7208 = vunpack.c.h.b16 %v5696
    %v7209 = vunpack.c.l.b16 %v5697
    %v7210 = vunpack.c.h.b16 %v5697
    %v7211 = vunpack.c.l.b16 %v5698
    %v7212 = vunpack.c.h.b16 %v5698
    %v7213 = vunpack.c.l.b16 %v5699
    %v7214 = vunpack.c.h.b16 %v5699
    %v7215 = vunpack.c.l.b16 %v5700
    %v7216 = vunpack.c.h.b16 %v5700
    %v7217 = vunpack.c.l.b16 %v5701
    %v7218 = vunpack.c.h.b16 %v5701
    %v7219 = vunpack.c.l.b16 %v5702
    %v7220 = vunpack.c.h.b16 %v5702
    %v7221 = vunpack.c.l.b16 %v5703
    %v7222 = vunpack.c.h.b16 %v5703
    %v7223 = vunpack.c.l.b16 %v5704
    %v7224 = vunpack.c.h.b16 %v5704
    %v7225 = vunpack.c.l.b16 %v5705
    %v7226 = vunpack.c.h.b16 %v5705
    %v7227 = vunpack.c.l.b16 %v5706
    %v7228 = vunpack.c.h.b16 %v5706
    %v7229 = vunpack.c.l.b16 %v5707
    %v7230 = vunpack.c.h.b16 %v5707
    %v7231 = vunpack.c.l.b16 %v5708
    %v7232 = vunpack.c.h.b16 %v5708
    %v7233 = vunpack.c.l.b16 %v5709
    %v7234 = vunpack.c.h.b16 %v5709
    %v7235 = vunpack.c.l.b16 %v5710
    %v7236 = vunpack.c.h.b16 %v5710
    %v7237 = vunpack.c.l.b16 %v5711
    %v7238 = vunpack.c.h.b16 %v5711
    %v7239 = vunpack.c.l.b16 %v5712
    %v7240 = vunpack.c.h.b16 %v5712
    %v7241 = vunpack.c.l.b16 %v5713
    %v7242 = vunpack.c.h.b16 %v5713
    %v7243 = vunpack.c.l.b16 %v5714
    %v7244 = vunpack.c.h.b16 %v5714
    %v7245 = vunpack.c.l.b16 %v5715
    %v7246 = vunpack.c.h.b16 %v5715
    %v7247 = vunpack.c.l.b16 %v5716
    %v7248 = vunpack.c.h.b16 %v5716
    %v7249 = vunpack.c.l.b16 %v5717
    %v7250 = vunpack.c.h.b16 %v5717
    %v7251 = vunpack.c.l.b16 %v5718
    %v7252 = vunpack.c.h.b16 %v5718
    %v7253 = vunpack.c.l.b16 %v5719
    %v7254 = vunpack.c.h.b16 %v5719
    %v7255 = vunpack.c.l.b16 %v5720
    %v7256 = vunpack.c.h.b16 %v5720
    %v7257 = vunpack.c.l.b16 %v5721
    %v7258 = vunpack.c.h.b16 %v5721
    %v7259 = vunpack.c.l.b16 %v5722
    %v7260 = vunpack.c.h.b16 %v5722
    %v7261 = vunpack.c.l.b16 %v5723
    %v7262 = vunpack.c.h.b16 %v5723
    %v7263 = vunpack.c.l.b16 %v5724
    %v7264 = vunpack.c.h.b16 %v5724
    %v7265 = vunpack.c.l.b16 %v5725
    %v7266 = vunpack.c.h.b16 %v5725
    %v7267 = vunpack.c.l.b16 %v5726
    %v7268 = vunpack.c.h.b16 %v5726
    %v7269 = vunpack.c.l.b16 %v5727
    %v7270 = vunpack.c.h.b16 %v5727
    %v7271 = vunpack.c.l.b16 %v5728
    %v7272 = vunpack.c.h.b16 %v5728
    %v7273 = vunpack.c.l.b16 %v5729
    %v7274 = vunpack.c.h.b16 %v5729
    %v7275 = vunpack.c.l.b16 %v5730
    %v7276 = vunpack.c.h.b16 %v5730
    %v7277 = vunpack.c.l.b16 %v5731
    %v7278 = vunpack.c.h.b16 %v5731
    %v7279 = vunpack.c.l.b16 %v5732
    %v7280 = vunpack.c.h.b16 %v5732
    %v7281 = vunpack.c.l.b16 %v5733
    %v7282 = vunpack.c.h.b16 %v5733
    %v7283 = vunpack.c.l.b16 %v5734
    %v7284 = vunpack.c.h.b16 %v5734
    %v7285 = vunpack.c.l.b16 %v5735
    %v7286 = vunpack.c.h.b16 %v5735
    %v7287 = vunpack.c.l.b16 %v5736
    %v7288 = vunpack.c.h.b16 %v5736
    %v7289 = vunpack.c.l.b16 %v5737
    %v7290 = vunpack.c.h.b16 %v5737
    %v7291 = vunpack.c.l.b16 %v5738
    %v7292 = vunpack.c.h.b16 %v5738
    %v7293 = vunpack.c.l.b16 %v5739
    %v7294 = vunpack.c.h.b16 %v5739
    %v7295 = vunpack.c.l.b16 %v5740
    %v7296 = vunpack.c.h.b16 %v5740
    %v7297 = vunpack.c.l.b16 %v5741
    %v7298 = vunpack.c.h.b16 %v5741
    %v7299 = vunpack.c.l.b16 %v5742
    %v7300 = vunpack.c.h.b16 %v5742
    %v7301 = vunpack.c.l.b16 %v5743
    %v7302 = vunpack.c.h.b16 %v5743
    %v7303 = vunpack.c.l.b16 %v5744
    %v7304 = vunpack.c.h.b16 %v5744
    %v7305 = vunpack.c.l.b16 %v5745
    %v7306 = vunpack.c.h.b16 %v5745
    %v7307 = vunpack.c.l.b16 %v5746
    %v7308 = vunpack.c.h.b16 %v5746
    %v7309 = vunpack.c.l.b16 %v5747
    %v7310 = vunpack.c.h.b16 %v5747
    %v7311 = vunpack.c.l.b16 %v5748
    %v7312 = vunpack.c.h.b16 %v5748
    %v7313 = vunpack.c.l.b16 %v5749
    %v7314 = vunpack.c.h.b16 %v5749
    %v7315 = vunpack.c.l.b16 %v5750
    %v7316 = vunpack.c.h.b16 %v5750
    %v7317 = vunpack.c.l.b16 %v5751
    %v7318 = vunpack.c.h.b16 %v5751
    %v7319 = vunpack.c.l.b16 %v5752
    %v7320 = vunpack.c.h.b16 %v5752
    %v7321 = vunpack.c.l.b16 %v5753
    %v7322 = vunpack.c.h.b16 %v5753
    %v7323 = vunpack.c.l.b16 %v5754
    %v7324 = vunpack.c.h.b16 %v5754
    %v7325 = vunpack.c.l.b16 %v5755
    %v7326 = vunpack.c.h.b16 %v5755
    %v7327 = vunpack.c.l.b16 %v5756
    %v7328 = vunpack.c.h.b16 %v5756
    %v7329 = vunpack.c.l.b16 %v5757
    %v7330 = vunpack.c.h.b16 %v5757
    %v7331 = vunpack.c.l.b16 %v5758
    %v7332 = vunpack.c.h.b16 %v5758
    %v7333 = vunpack.c.l.b16 %v5759
    %v7334 = vunpack.c.h.b16 %v5759
    %v7335 = vunpack.c.l.b16 %v5760
    %v7336 = vunpack.c.h.b16 %v5760
    %v7337 = vunpack.c.l.b16 %v5761
    %v7338 = vunpack.c.h.b16 %v5761
    %v7339 = vunpack.c.l.b16 %v5762
    %v7340 = vunpack.c.h.b16 %v5762
    %v7341 = vpack.c.b16 %v6325, %v6317
    %v7342 = vpack.c.b16 %v6326, %v6318
    %v7343 = vpack.c.b16 %v6327, %v6319
    %v7344 = vpack.c.b16 %v6328, %v6320
    %v7345 = vpack.c.b16 %v6329, %v6321
    %v7346 = vpack.c.b16 %v6330, %v6322
    %v7347 = vpack.c.b16 %v6331, %v6323
    %v7348 = vpack.c.b16 %v6332, %v6324
    %v7349 = vpack.c.b16 %v6341, %v6333
    %v7350 = vpack.c.b16 %v6342, %v6334
    %v7351 = vpack.c.b16 %v6343, %v6335
    %v7352 = vpack.c.b16 %v6344, %v6336
    %v7353 = vpack.c.b16 %v6345, %v6337
    %v7354 = vpack.c.b16 %v6346, %v6338
    %v7355 = vpack.c.b16 %v6347, %v6339
    %v7356 = vpack.c.b16 %v6348, %v6340
    %v7357 = vpack.c.b16 %v6357, %v6349
    %v7358 = vpack.c.b16 %v6358, %v6350
    %v7359 = vpack.c.b16 %v6359, %v6351
    %v7360 = vpack.c.b16 %v6360, %v6352
    %v7361 = vpack.c.b16 %v6361, %v6353
    %v7362 = vpack.c.b16 %v6362, %v6354
    %v7363 = vpack.c.b16 %v6363, %v6355
    %v7364 = vpack.c.b16 %v6364, %v6356
    %v7365 = vpack.c.b16 %v6373, %v6365
    %v7366 = vpack.c.b16 %v6374, %v6366
    %v7367 = vpack.c.b16 %v6375, %v6367
    %v7368 = vpack.c.b16 %v6376, %v6368
    %v7369 = vpack.c.b16 %v6377, %v6369
    %v7370 = vpack.c.b16 %v6378, %v6370
    %v7371 = vpack.c.b16 %v6379, %v6371
    %v7372 = vpack.c.b16 %v6380, %v6372
    %v7373 = vpack.c.b16 %v6389, %v6381
    %v7374 = vpack.c.b16 %v6390, %v6382
    %v7375 = vpack.c.b16 %v6391, %v6383
    %v7376 = vpack.c.b16 %v6392, %v6384
    %v7377 = vpack.c.b16 %v6393, %v6385
    %v7378 = vpack.c.b16 %v6394, %v6386
    %v7379 = vpack.c.b16 %v6395, %v6387
    %v7380 = vpack.c.b16 %v6396, %v6388
    %v7381 = vpack.c.b16 %v6405, %v6397
    %v7382 = vpack.c.b16 %v6406, %v6398
    %v7383 = vpack.c.b16 %v6407, %v6399
    %v7384 = vpack.c.b16 %v6408, %v6400
    %v7385 = vpack.c.b16 %v6409, %v6401
    %v7386 = vpack.c.b16 %v6410, %v6402
    %v7387 = vpack.c.b16 %v6411, %v6403
    %v7388 = vpack.c.b16 %v6412, %v6404
    %v7389 = vpack.c.b16 %v6421, %v6413
    %v7390 = vpack.c.b16 %v6422, %v6414
    %v7391 = vpack.c.b16 %v6423, %v6415
    %v7392 = vpack.c.b16 %v6424, %v6416
    %v7393 = vpack.c.b16 %v6425, %v6417
    %v7394 = vpack.c.b16 %v6426, %v6418
    %v7395 = vpack.c.b16 %v6427, %v6419
    %v7396 = vpack.c.b16 %v6428, %v6420
    %v7397 = vpack.c.b16 %v6437, %v6429
    %v7398 = vpack.c.b16 %v6438, %v6430
    %v7399 = vpack.c.b16 %v6439, %v6431
    %v7400 = vpack.c.b16 %v6440, %v6432
    %v7401 = vpack.c.b16 %v6441, %v6433
    %v7402 = vpack.c.b16 %v6442, %v6434
    %v7403 = vpack.c.b16 %v6443, %v6435
    %v7404 = vpack.c.b16 %v6444, %v6436
    %v7405 = vpack.c.b16 %v6453, %v6445
    %v7406 = vpack.c.b16 %v6454, %v6446
    %v7407 = vpack.c.b16 %v6455, %v6447
    %v7408 = vpack.c.b16 %v6456, %v6448
    %v7409 = vpack.c.b16 %v6457, %v6449
    %v7410 = vpack.c.b16 %v6458, %v6450
    %v7411 = vpack.c.b16 %v6459, %v6451
    %v7412 = vpack.c.b16 %v6460, %v6452
    %v7413 = vpack.c.b16 %v6469, %v6461
    %v7414 = vpack.c.b16 %v6470, %v6462
    %v7415 = vpack.c.b16 %v6471, %v6463
    %v7416 = vpack.c.b16 %v6472, %v6464
    %v7417 = vpack.c.b16 %v6473, %v6465
    %v7418 = vpack.c.b16 %v6474, %v6466
    %v7419 = vpack.c.b16 %v6475, %v6467
    %v7420 = vpack.c.b16 %v6476, %v6468
    %v7421 = vpack.c.b16 %v6485, %v6477
    %v7422 = vpack.c.b16 %v6486, %v6478
    %v7423 = vpack.c.b16 %v6487, %v6479
    %v7424 = vpack.c.b16 %v6488, %v6480
    %v7425 = vpack.c.b16 %v6489, %v6481
    %v7426 = vpack.c.b16 %v6490, %v6482
    %v7427 = vpack.c.b16 %v6491, %v6483
    %v7428 = vpack.c.b16 %v6492, %v6484
    %v7429 = vpack.c.b16 %v6501, %v6493
    %v7430 = vpack.c.b16 %v6502, %v6494
    %v7431 = vpack.c.b16 %v6503, %v6495
    %v7432 = vpack.c.b16 %v6504, %v6496
    %v7433 = vpack.c.b16 %v6505, %v6497
    %v7434 = vpack.c.b16 %v6506, %v6498
    %v7435 = vpack.c.b16 %v6507, %v6499
    %v7436 = vpack.c.b16 %v6508, %v6500
    %v7437 = vpack.c.b16 %v6517, %v6509
    %v7438 = vpack.c.b16 %v6518, %v6510
    %v7439 = vpack.c.b16 %v6519, %v6511
    %v7440 = vpack.c.b16 %v6520, %v6512
    %v7441 = vpack.c.b16 %v6521, %v6513
    %v7442 = vpack.c.b16 %v6522, %v6514
    %v7443 = vpack.c.b16 %v6523, %v6515
    %v7444 = vpack.c.b16 %v6524, %v6516
    %v7445 = vpack.c.b16 %v6533, %v6525
    %v7446 = vpack.c.b16 %v6534, %v6526
    %v7447 = vpack.c.b16 %v6535, %v6527
    %v7448 = vpack.c.b16 %v6536, %v6528
    %v7449 = vpack.c.b16 %v6537, %v6529
    %v7450 = vpack.c.b16 %v6538, %v6530
    %v7451 = vpack.c.b16 %v6539, %v6531
    %v7452 = vpack.c.b16 %v6540, %v6532
    %v7453 = vpack.c.b16 %v6549, %v6541
    %v7454 = vpack.c.b16 %v6550, %v6542
    %v7455 = vpack.c.b16 %v6551, %v6543
    %v7456 = vpack.c.b16 %v6552, %v6544
    %v7457 = vpack.c.b16 %v6553, %v6545
    %v7458 = vpack.c.b16 %v6554, %v6546
    %v7459 = vpack.c.b16 %v6555, %v6547
    %v7460 = vpack.c.b16 %v6556, %v6548
    %v7461 = vpack.c.b16 %v6565, %v6557
    %v7462 = vpack.c.b16 %v6566, %v6558
    %v7463 = vpack.c.b16 %v6567, %v6559
    %v7464 = vpack.c.b16 %v6568, %v6560
    %v7465 = vpack.c.b16 %v6569, %v6561
    %v7466 = vpack.c.b16 %v6570, %v6562
    %v7467 = vpack.c.b16 %v6571, %v6563
    %v7468 = vpack.c.b16 %v6572, %v6564
    %v7469 = vpack.c.b16 %v6581, %v6573
    %v7470 = vpack.c.b16 %v6582, %v6574
    %v7471 = vpack.c.b16 %v6583, %v6575
    %v7472 = vpack.c.b16 %v6584, %v6576
    %v7473 = vpack.c.b16 %v6585, %v6577
    %v7474 = vpack.c.b16 %v6586, %v6578
    %v7475 = vpack.c.b16 %v6587, %v6579
    %v7476 = vpack.c.b16 %v6588, %v6580
    %v7477 = vpack.c.b16 %v6597, %v6589
    %v7478 = vpack.c.b16 %v6598, %v6590
    %v7479 = vpack.c.b16 %v6599, %v6591
    %v7480 = vpack.c.b16 %v6600, %v6592
    %v7481 = vpack.c.b16 %v6601, %v6593
    %v7482 = vpack.c.b16 %v6602, %v6594
    %v7483 = vpack.c.b16 %v6603, %v6595
    %v7484 = vpack.c.b16 %v6604, %v6596
    %v7485 = vpack.c.b16 %v6613, %v6605
    %v7486 = vpack.c.b16 %v6614, %v6606
    %v7487 = vpack.c.b16 %v6615, %v6607
    %v7488 = vpack.c.b16 %v6616, %v6608
    %v7489 = vpack.c.b16 %v6617, %v6609
    %v7490 = vpack.c.b16 %v6618, %v6610
    %v7491 = vpack.c.b16 %v6619, %v6611
    %v7492 = vpack.c.b16 %v6620, %v6612
    %v7493 = vpack.c.b16 %v6629, %v6621
    %v7494 = vpack.c.b16 %v6630, %v6622
    %v7495 = vpack.c.b16 %v6631, %v6623
    %v7496 = vpack.c.b16 %v6632, %v6624
    %v7497 = vpack.c.b16 %v6633, %v6625
    %v7498 = vpack.c.b16 %v6634, %v6626
    %v7499 = vpack.c.b16 %v6635, %v6627
    %v7500 = vpack.c.b16 %v6636, %v6628
    %v7501 = vpack.c.b16 %v6645, %v6637
    %v7502 = vpack.c.b16 %v6646, %v6638
    %v7503 = vpack.c.b16 %v6647, %v6639
    %v7504 = vpack.c.b16 %v6648, %v6640
    %v7505 = vpack.c.b16 %v6649, %v6641
    %v7506 = vpack.c.b16 %v6650, %v6642
    %v7507 = vpack.c.b16 %v6651, %v6643
    %v7508 = vpack.c.b16 %v6652, %v6644
    %v7509 = vpack.c.b16 %v6661, %v6653
    %v7510 = vpack.c.b16 %v6662, %v6654
    %v7511 = vpack.c.b16 %v6663, %v6655
    %v7512 = vpack.c.b16 %v6664, %v6656
    %v7513 = vpack.c.b16 %v6665, %v6657
    %v7514 = vpack.c.b16 %v6666, %v6658
    %v7515 = vpack.c.b16 %v6667, %v6659
    %v7516 = vpack.c.b16 %v6668, %v6660
    %v7517 = vpack.c.b16 %v6677, %v6669
    %v7518 = vpack.c.b16 %v6678, %v6670
    %v7519 = vpack.c.b16 %v6679, %v6671
    %v7520 = vpack.c.b16 %v6680, %v6672
    %v7521 = vpack.c.b16 %v6681, %v6673
    %v7522 = vpack.c.b16 %v6682, %v6674
    %v7523 = vpack.c.b16 %v6683, %v6675
    %v7524 = vpack.c.b16 %v6684, %v6676
    %v7525 = vpack.c.b16 %v6693, %v6685
    %v7526 = vpack.c.b16 %v6694, %v6686
    %v7527 = vpack.c.b16 %v6695, %v6687
    %v7528 = vpack.c.b16 %v6696, %v6688
    %v7529 = vpack.c.b16 %v6697, %v6689
    %v7530 = vpack.c.b16 %v6698, %v6690
    %v7531 = vpack.c.b16 %v6699, %v6691
    %v7532 = vpack.c.b16 %v6700, %v6692
    %v7533 = vpack.c.b16 %v6709, %v6701
    %v7534 = vpack.c.b16 %v6710, %v6702
    %v7535 = vpack.c.b16 %v6711, %v6703
    %v7536 = vpack.c.b16 %v6712, %v6704
    %v7537 = vpack.c.b16 %v6713, %v6705
    %v7538 = vpack.c.b16 %v6714, %v6706
    %v7539 = vpack.c.b16 %v6715, %v6707
    %v7540 = vpack.c.b16 %v6716, %v6708
    %v7541 = vpack.c.b16 %v6725, %v6717
    %v7542 = vpack.c.b16 %v6726, %v6718
    %v7543 = vpack.c.b16 %v6727, %v6719
    %v7544 = vpack.c.b16 %v6728, %v6720
    %v7545 = vpack.c.b16 %v6729, %v6721
    %v7546 = vpack.c.b16 %v6730, %v6722
    %v7547 = vpack.c.b16 %v6731, %v6723
    %v7548 = vpack.c.b16 %v6732, %v6724
    %v7549 = vpack.c.b16 %v6741, %v6733
    %v7550 = vpack.c.b16 %v6742, %v6734
    %v7551 = vpack.c.b16 %v6743, %v6735
    %v7552 = vpack.c.b16 %v6744, %v6736
    %v7553 = vpack.c.b16 %v6745, %v6737
    %v7554 = vpack.c.b16 %v6746, %v6738
    %v7555 = vpack.c.b16 %v6747, %v6739
    %v7556 = vpack.c.b16 %v6748, %v6740
    %v7557 = vpack.c.b16 %v6757, %v6749
    %v7558 = vpack.c.b16 %v6758, %v6750
    %v7559 = vpack.c.b16 %v6759, %v6751
    %v7560 = vpack.c.b16 %v6760, %v6752
    %v7561 = vpack.c.b16 %v6761, %v6753
    %v7562 = vpack.c.b16 %v6762, %v6754
    %v7563 = vpack.c.b16 %v6763, %v6755
    %v7564 = vpack.c.b16 %v6764, %v6756
    %v7565 = vpack.c.b16 %v6773, %v6765
    %v7566 = vpack.c.b16 %v6774, %v6766
    %v7567 = vpack.c.b16 %v6775, %v6767
    %v7568 = vpack.c.b16 %v6776, %v6768
    %v7569 = vpack.c.b16 %v6777, %v6769
    %v7570 = vpack.c.b16 %v6778, %v6770
    %v7571 = vpack.c.b16 %v6779, %v6771
    %v7572 = vpack.c.b16 %v6780, %v6772
    %v7573 = vpack.c.b16 %v6789, %v6781
    %v7574 = vpack.c.b16 %v6790, %v6782
    %v7575 = vpack.c.b16 %v6791, %v6783
    %v7576 = vpack.c.b16 %v6792, %v6784
    %v7577 = vpack.c.b16 %v6793, %v6785
    %v7578 = vpack.c.b16 %v6794, %v6786
    %v7579 = vpack.c.b16 %v6795, %v6787
    %v7580 = vpack.c.b16 %v6796, %v6788
    %v7581 = vpack.c.b16 %v6805, %v6797
    %v7582 = vpack.c.b16 %v6806, %v6798
    %v7583 = vpack.c.b16 %v6807, %v6799
    %v7584 = vpack.c.b16 %v6808, %v6800
    %v7585 = vpack.c.b16 %v6809, %v6801
    %v7586 = vpack.c.b16 %v6810, %v6802
    %v7587 = vpack.c.b16 %v6811, %v6803
    %v7588 = vpack.c.b16 %v6812, %v6804
    %v7589 = vpack.c.b16 %v6821, %v6813
    %v7590 = vpack.c.b16 %v6822, %v6814
    %v7591 = vpack.c.b16 %v6823, %v6815
    %v7592 = vpack.c.b16 %v6824, %v6816
    %v7593 = vpack.c.b16 %v6825, %v6817
    %v7594 = vpack.c.b16 %v6826, %v6818
    %v7595 = vpack.c.b16 %v6827, %v6819
    %v7596 = vpack.c.b16 %v6828, %v6820
    %v7597 = vpack.c.b16 %v6837, %v6829
    %v7598 = vpack.c.b16 %v6838, %v6830
    %v7599 = vpack.c.b16 %v6839, %v6831
    %v7600 = vpack.c.b16 %v6840, %v6832
    %v7601 = vpack.c.b16 %v6841, %v6833
    %v7602 = vpack.c.b16 %v6842, %v6834
    %v7603 = vpack.c.b16 %v6843, %v6835
    %v7604 = vpack.c.b16 %v6844, %v6836
    %v7605 = vpack.c.b16 %v6853, %v6845
    %v7606 = vpack.c.b16 %v6854, %v6846
    %v7607 = vpack.c.b16 %v6855, %v6847
    %v7608 = vpack.c.b16 %v6856, %v6848
    %v7609 = vpack.c.b16 %v6857, %v6849
    %v7610 = vpack.c.b16 %v6858, %v6850
    %v7611 = vpack.c.b16 %v6859, %v6851
    %v7612 = vpack.c.b16 %v6860, %v6852
    %v7613 = vpack.c.b16 %v6869, %v6861
    %v7614 = vpack.c.b16 %v6870, %v6862
    %v7615 = vpack.c.b16 %v6871, %v6863
    %v7616 = vpack.c.b16 %v6872, %v6864
    %v7617 = vpack.c.b16 %v6873, %v6865
    %v7618 = vpack.c.b16 %v6874, %v6866
    %v7619 = vpack.c.b16 %v6875, %v6867
    %v7620 = vpack.c.b16 %v6876, %v6868
    %v7621 = vpack.c.b16 %v6885, %v6877
    %v7622 = vpack.c.b16 %v6886, %v6878
    %v7623 = vpack.c.b16 %v6887, %v6879
    %v7624 = vpack.c.b16 %v6888, %v6880
    %v7625 = vpack.c.b16 %v6889, %v6881
    %v7626 = vpack.c.b16 %v6890, %v6882
    %v7627 = vpack.c.b16 %v6891, %v6883
    %v7628 = vpack.c.b16 %v6892, %v6884
    %v7629 = vpack.c.b16 %v6901, %v6893
    %v7630 = vpack.c.b16 %v6902, %v6894
    %v7631 = vpack.c.b16 %v6903, %v6895
    %v7632 = vpack.c.b16 %v6904, %v6896
    %v7633 = vpack.c.b16 %v6905, %v6897
    %v7634 = vpack.c.b16 %v6906, %v6898
    %v7635 = vpack.c.b16 %v6907, %v6899
    %v7636 = vpack.c.b16 %v6908, %v6900
    %v7637 = vpack.c.b16 %v6917, %v6909
    %v7638 = vpack.c.b16 %v6918, %v6910
    %v7639 = vpack.c.b16 %v6919, %v6911
    %v7640 = vpack.c.b16 %v6920, %v6912
    %v7641 = vpack.c.b16 %v6921, %v6913
    %v7642 = vpack.c.b16 %v6922, %v6914
    %v7643 = vpack.c.b16 %v6923, %v6915
    %v7644 = vpack.c.b16 %v6924, %v6916
    %v7645 = vpack.c.b16 %v6933, %v6925
    %v7646 = vpack.c.b16 %v6934, %v6926
    %v7647 = vpack.c.b16 %v6935, %v6927
    %v7648 = vpack.c.b16 %v6936, %v6928
    %v7649 = vpack.c.b16 %v6937, %v6929
    %v7650 = vpack.c.b16 %v6938, %v6930
    %v7651 = vpack.c.b16 %v6939, %v6931
    %v7652 = vpack.c.b16 %v6940, %v6932
    %v7653 = vpack.c.b16 %v6949, %v6941
    %v7654 = vpack.c.b16 %v6950, %v6942
    %v7655 = vpack.c.b16 %v6951, %v6943
    %v7656 = vpack.c.b16 %v6952, %v6944
    %v7657 = vpack.c.b16 %v6953, %v6945
    %v7658 = vpack.c.b16 %v6954, %v6946
    %v7659 = vpack.c.b16 %v6955, %v6947
    %v7660 = vpack.c.b16 %v6956, %v6948
    %v7661 = vpack.c.b16 %v6965, %v6957
    %v7662 = vpack.c.b16 %v6966, %v6958
    %v7663 = vpack.c.b16 %v6967, %v6959
    %v7664 = vpack.c.b16 %v6968, %v6960
    %v7665 = vpack.c.b16 %v6969, %v6961
    %v7666 = vpack.c.b16 %v6970, %v6962
    %v7667 = vpack.c.b16 %v6971, %v6963
    %v7668 = vpack.c.b16 %v6972, %v6964
    %v7669 = vpack.c.b16 %v6981, %v6973
    %v7670 = vpack.c.b16 %v6982, %v6974
    %v7671 = vpack.c.b16 %v6983, %v6975
    %v7672 = vpack.c.b16 %v6984, %v6976
    %v7673 = vpack.c.b16 %v6985, %v6977
    %v7674 = vpack.c.b16 %v6986, %v6978
    %v7675 = vpack.c.b16 %v6987, %v6979
    %v7676 = vpack.c.b16 %v6988, %v6980
    %v7677 = vpack.c.b16 %v6997, %v6989
    %v7678 = vpack.c.b16 %v6998, %v6990
    %v7679 = vpack.c.b16 %v6999, %v6991
    %v7680 = vpack.c.b16 %v7000, %v6992
    %v7681 = vpack.c.b16 %v7001, %v6993
    %v7682 = vpack.c.b16 %v7002, %v6994
    %v7683 = vpack.c.b16 %v7003, %v6995
    %v7684 = vpack.c.b16 %v7004, %v6996
    %v7685 = vpack.c.b16 %v7013, %v7005
    %v7686 = vpack.c.b16 %v7014, %v7006
    %v7687 = vpack.c.b16 %v7015, %v7007
    %v7688 = vpack.c.b16 %v7016, %v7008
    %v7689 = vpack.c.b16 %v7017, %v7009
    %v7690 = vpack.c.b16 %v7018, %v7010
    %v7691 = vpack.c.b16 %v7019, %v7011
    %v7692 = vpack.c.b16 %v7020, %v7012
    %v7693 = vpack.c.b16 %v7029, %v7021
    %v7694 = vpack.c.b16 %v7030, %v7022
    %v7695 = vpack.c.b16 %v7031, %v7023
    %v7696 = vpack.c.b16 %v7032, %v7024
    %v7697 = vpack.c.b16 %v7033, %v7025
    %v7698 = vpack.c.b16 %v7034, %v7026
    %v7699 = vpack.c.b16 %v7035, %v7027
    %v7700 = vpack.c.b16 %v7036, %v7028
    %v7701 = vpack.c.b16 %v7045, %v7037
    %v7702 = vpack.c.b16 %v7046, %v7038
    %v7703 = vpack.c.b16 %v7047, %v7039
    %v7704 = vpack.c.b16 %v7048, %v7040
    %v7705 = vpack.c.b16 %v7049, %v7041
    %v7706 = vpack.c.b16 %v7050, %v7042
    %v7707 = vpack.c.b16 %v7051, %v7043
    %v7708 = vpack.c.b16 %v7052, %v7044
    %v7709 = vpack.c.b16 %v7061, %v7053
    %v7710 = vpack.c.b16 %v7062, %v7054
    %v7711 = vpack.c.b16 %v7063, %v7055
    %v7712 = vpack.c.b16 %v7064, %v7056
    %v7713 = vpack.c.b16 %v7065, %v7057
    %v7714 = vpack.c.b16 %v7066, %v7058
    %v7715 = vpack.c.b16 %v7067, %v7059
    %v7716 = vpack.c.b16 %v7068, %v7060
    %v7717 = vpack.c.b16 %v7077, %v7069
    %v7718 = vpack.c.b16 %v7078, %v7070
    %v7719 = vpack.c.b16 %v7079, %v7071
    %v7720 = vpack.c.b16 %v7080, %v7072
    %v7721 = vpack.c.b16 %v7081, %v7073
    %v7722 = vpack.c.b16 %v7082, %v7074
    %v7723 = vpack.c.b16 %v7083, %v7075
    %v7724 = vpack.c.b16 %v7084, %v7076
    %v7725 = vpack.c.b16 %v7093, %v7085
    %v7726 = vpack.c.b16 %v7094, %v7086
    %v7727 = vpack.c.b16 %v7095, %v7087
    %v7728 = vpack.c.b16 %v7096, %v7088
    %v7729 = vpack.c.b16 %v7097, %v7089
    %v7730 = vpack.c.b16 %v7098, %v7090
    %v7731 = vpack.c.b16 %v7099, %v7091
    %v7732 = vpack.c.b16 %v7100, %v7092
    %v7733 = vpack.c.b16 %v7109, %v7101
    %v7734 = vpack.c.b16 %v7110, %v7102
    %v7735 = vpack.c.b16 %v7111, %v7103
    %v7736 = vpack.c.b16 %v7112, %v7104
    %v7737 = vpack.c.b16 %v7113, %v7105
    %v7738 = vpack.c.b16 %v7114, %v7106
    %v7739 = vpack.c.b16 %v7115, %v7107
    %v7740 = vpack.c.b16 %v7116, %v7108
    %v7741 = vpack.c.b16 %v7125, %v7117
    %v7742 = vpack.c.b16 %v7126, %v7118
    %v7743 = vpack.c.b16 %v7127, %v7119
    %v7744 = vpack.c.b16 %v7128, %v7120
    %v7745 = vpack.c.b16 %v7129, %v7121
    %v7746 = vpack.c.b16 %v7130, %v7122
    %v7747 = vpack.c.b16 %v7131, %v7123
    %v7748 = vpack.c.b16 %v7132, %v7124
    %v7749 = vpack.c.b16 %v7141, %v7133
    %v7750 = vpack.c.b16 %v7142, %v7134
    %v7751 = vpack.c.b16 %v7143, %v7135
    %v7752 = vpack.c.b16 %v7144, %v7136
    %v7753 = vpack.c.b16 %v7145, %v7137
    %v7754 = vpack.c.b16 %v7146, %v7138
    %v7755 = vpack.c.b16 %v7147, %v7139
    %v7756 = vpack.c.b16 %v7148, %v7140
    %v7757 = vpack.c.b16 %v7157, %v7149
    %v7758 = vpack.c.b16 %v7158, %v7150
    %v7759 = vpack.c.b16 %v7159, %v7151
    %v7760 = vpack.c.b16 %v7160, %v7152
    %v7761 = vpack.c.b16 %v7161, %v7153
    %v7762 = vpack.c.b16 %v7162, %v7154
    %v7763 = vpack.c.b16 %v7163, %v7155
    %v7764 = vpack.c.b16 %v7164, %v7156
    %v7765 = vpack.c.b16 %v7173, %v7165
    %v7766 = vpack.c.b16 %v7174, %v7166
    %v7767 = vpack.c.b16 %v7175, %v7167
    %v7768 = vpack.c.b16 %v7176, %v7168
    %v7769 = vpack.c.b16 %v7177, %v7169
    %v7770 = vpack.c.b16 %v7178, %v7170
    %v7771 = vpack.c.b16 %v7179, %v7171
    %v7772 = vpack.c.b16 %v7180, %v7172
    %v7773 = vpack.c.b16 %v7189, %v7181
    %v7774 = vpack.c.b16 %v7190, %v7182
    %v7775 = vpack.c.b16 %v7191, %v7183
    %v7776 = vpack.c.b16 %v7192, %v7184
    %v7777 = vpack.c.b16 %v7193, %v7185
    %v7778 = vpack.c.b16 %v7194, %v7186
    %v7779 = vpack.c.b16 %v7195, %v7187
    %v7780 = vpack.c.b16 %v7196, %v7188
    %v7781 = vpack.c.b16 %v7205, %v7197
    %v7782 = vpack.c.b16 %v7206, %v7198
    %v7783 = vpack.c.b16 %v7207, %v7199
    %v7784 = vpack.c.b16 %v7208, %v7200
    %v7785 = vpack.c.b16 %v7209, %v7201
    %v7786 = vpack.c.b16 %v7210, %v7202
    %v7787 = vpack.c.b16 %v7211, %v7203
    %v7788 = vpack.c.b16 %v7212, %v7204
    %v7789 = vpack.c.b16 %v7221, %v7213
    %v7790 = vpack.c.b16 %v7222, %v7214
    %v7791 = vpack.c.b16 %v7223, %v7215
    %v7792 = vpack.c.b16 %v7224, %v7216
    %v7793 = vpack.c.b16 %v7225, %v7217
    %v7794 = vpack.c.b16 %v7226, %v7218
    %v7795 = vpack.c.b16 %v7227, %v7219
    %v7796 = vpack.c.b16 %v7228, %v7220
    %v7797 = vpack.c.b16 %v7237, %v7229
    %v7798 = vpack.c.b16 %v7238, %v7230
    %v7799 = vpack.c.b16 %v7239, %v7231
    %v7800 = vpack.c.b16 %v7240, %v7232
    %v7801 = vpack.c.b16 %v7241, %v7233
    %v7802 = vpack.c.b16 %v7242, %v7234
    %v7803 = vpack.c.b16 %v7243, %v7235
    %v7804 = vpack.c.b16 %v7244, %v7236
    %v7805 = vpack.c.b16 %v7253, %v7245
    %v7806 = vpack.c.b16 %v7254, %v7246
    %v7807 = vpack.c.b16 %v7255, %v7247
    %v7808 = vpack.c.b16 %v7256, %v7248
    %v7809 = vpack.c.b16 %v7257, %v7249
    %v7810 = vpack.c.b16 %v7258, %v7250
    %v7811 = vpack.c.b16 %v7259, %v7251
    %v7812 = vpack.c.b16 %v7260, %v7252
    %v7813 = vpack.c.b16 %v7269, %v7261
    %v7814 = vpack.c.b16 %v7270, %v7262
    %v7815 = vpack.c.b16 %v7271, %v7263
    %v7816 = vpack.c.b16 %v7272, %v7264
    %v7817 = vpack.c.b16 %v7273, %v7265
    %v7818 = vpack.c.b16 %v7274, %v7266
    %v7819 = vpack.c.b16 %v7275, %v7267
    %v7820 = vpack.c.b16 %v7276, %v7268
    %v7821 = vpack.c.b16 %v7285, %v7277
    %v7822 = vpack.c.b16 %v7286, %v7278
    %v7823 = vpack.c.b16 %v7287, %v7279
    %v7824 = vpack.c.b16 %v7288, %v7280
    %v7825 = vpack.c.b16 %v7289, %v7281
    %v7826 = vpack.c.b16 %v7290, %v7282
    %v7827 = vpack.c.b16 %v7291, %v7283
    %v7828 = vpack.c.b16 %v7292, %v7284
    %v7829 = vpack.c.b16 %v7301, %v7293
    %v7830 = vpack.c.b16 %v7302, %v7294
    %v7831 = vpack.c.b16 %v7303, %v7295
    %v7832 = vpack.c.b16 %v7304, %v7296
    %v7833 = vpack.c.b16 %v7305, %v7297
    %v7834 = vpack.c.b16 %v7306, %v7298
    %v7835 = vpack.c.b16 %v7307, %v7299
    %v7836 = vpack.c.b16 %v7308, %v7300
    %v7837 = vpack.c.b16 %v7317, %v7309
    %v7838 = vpack.c.b16 %v7318, %v7310
    %v7839 = vpack.c.b16 %v7319, %v7311
    %v7840 = vpack.c.b16 %v7320, %v7312
    %v7841 = vpack.c.b16 %v7321, %v7313
    %v7842 = vpack.c.b16 %v7322, %v7314
    %v7843 = vpack.c.b16 %v7323, %v7315
    %v7844 = vpack.c.b16 %v7324, %v7316
    %v7845 = vpack.c.b16 %v7333, %v7325
    %v7846 = vpack.c.b16 %v7334, %v7326
    %v7847 = vpack.c.b16 %v7335, %v7327
    %v7848 = vpack.c.b16 %v7336, %v7328
    %v7849 = vpack.c.b16 %v7337, %v7329
    %v7850 = vpack.c.b16 %v7338, %v7330
    %v7851 = vpack.c.b16 %v7339, %v7331
    %v7852 = vpack.c.b16 %v7340, %v7332
    %8365 = vmatprep.subr.bf16.mxu0 %v7342
    %8366 = vmatpush1.bf16.msra.mxu0 %v7341
    %8367 = vmatprep.subr.bf16.mxu0 %v7350
    %8368 = vmatpush1.bf16.msra.mxu0 %v7349
    %8369 = vmatprep.subr.bf16.mxu0 %v7358
    %8370 = vmatpush1.bf16.msra.mxu0 %v7357
    %8371 = vmatprep.subr.bf16.mxu0 %v7366
    %8372 = vmatpush1.bf16.msra.mxu0 %v7365
    %8373 = vmatprep.subr.bf16.mxu0 %v7374
    %8374 = vmatpush1.bf16.msra.mxu0 %v7373
    %8375 = vmatprep.subr.bf16.mxu0 %v7382
    %8376 = vmatpush1.bf16.msra.mxu0 %v7381
    %8377 = vmatprep.subr.bf16.mxu0 %v7390
    %8378 = vmatpush1.bf16.msra.mxu0 %v7389
    %8379 = vmatprep.subr.bf16.mxu0 %v7398
    %8380 = vmatpush1.bf16.msra.mxu0 %v7397
    %8381 = vmatprep.subr.bf16.mxu0 %v7406
    %8382 = vmatpush1.bf16.msra.mxu0 %v7405
    %8383 = vmatprep.subr.bf16.mxu0 %v7414
    %8384 = vmatpush1.bf16.msra.mxu0 %v7413
    %8385 = vmatprep.subr.bf16.mxu0 %v7422
    %8386 = vmatpush1.bf16.msra.mxu0 %v7421
    %8387 = vmatprep.subr.bf16.mxu0 %v7430
    %8388 = vmatpush1.bf16.msra.mxu0 %v7429
    %8389 = vmatprep.subr.bf16.mxu0 %v7438
    %8390 = vmatpush1.bf16.msra.mxu0 %v7437
    %8391 = vmatprep.subr.bf16.mxu0 %v7446
    %8392 = vmatpush1.bf16.msra.mxu0 %v7445
    %8393 = vmatprep.subr.bf16.mxu0 %v7454
    %8394 = vmatpush1.bf16.msra.mxu0 %v7453
    %8395 = vmatprep.subr.bf16.mxu0 %v7462
    %8396 = vmatpush1.bf16.msra.mxu0 %v7461
    %8397 = vmatprep.mubr.bf16.mxu0 %v5244
    %8398 = vmatmul.mubr.bf16.gmra.mrb[0].mxu0 %v5243
    %v8399 = vpop.f32.mrb[0].mxu0
    %v8400 = vadd.f32 %v5768, %v8399
    %v8401 = vpop.f32.mrb[0].mxu0
    %v8402 = vadd.f32 %v5772, %v8401
    %v8403 = vpop.f32.mrb[0].mxu0
    %v8404 = vadd.f32 %v5768, %v8403
    %v8405 = vpop.f32.mrb[0].mxu0
    %v8406 = vadd.f32 %v5772, %v8405
    %8407 = vdwg.mxu0
    %8408 = vmatprep.subr.bf16.mxu0 %v7470
    %8409 = vmatpush1.bf16.msra.mxu0 %v7469
    %8410 = vmatprep.subr.bf16.mxu0 %v7478
    %8411 = vmatpush1.bf16.msra.mxu0 %v7477
    %8412 = vmatprep.subr.bf16.mxu0 %v7486
    %8413 = vmatpush1.bf16.msra.mxu0 %v7485
    %8414 = vmatprep.subr.bf16.mxu0 %v7494
    %8415 = vmatpush1.bf16.msra.mxu0 %v7493
    %8416 = vmatprep.subr.bf16.mxu0 %v7502
    %8417 = vmatpush1.bf16.msra.mxu0 %v7501
    %8418 = vmatprep.subr.bf16.mxu0 %v7510
    %8419 = vmatpush1.bf16.msra.mxu0 %v7509
    %8420 = vmatprep.subr.bf16.mxu0 %v7518
    %8421 = vmatpush1.bf16.msra.mxu0 %v7517
    %8422 = vmatprep.subr.bf16.mxu0 %v7526
    %8423 = vmatpush1.bf16.msra.mxu0 %v7525
    %8424 = vmatprep.subr.bf16.mxu0 %v7534
    %8425 = vmatpush1.bf16.msra.mxu0 %v7533
    %8426 = vmatprep.subr.bf16.mxu0 %v7542
    %8427 = vmatpush1.bf16.msra.mxu0 %v7541
    %8428 = vmatprep.subr.bf16.mxu0 %v7550
    %8429 = vmatpush1.bf16.msra.mxu0 %v7549
    %8430 = vmatprep.subr.bf16.mxu0 %v7558
    %8431 = vmatpush1.bf16.msra.mxu0 %v7557
    %8432 = vmatprep.subr.bf16.mxu0 %v7566
    %8433 = vmatpush1.bf16.msra.mxu0 %v7565
    %8434 = vmatprep.subr.bf16.mxu0 %v7574
    %8435 = vmatpush1.bf16.msra.mxu0 %v7573
    %8436 = vmatprep.subr.bf16.mxu0 %v7582
    %8437 = vmatpush1.bf16.msra.mxu0 %v7581
    %8438 = vmatprep.subr.bf16.mxu0 %v7590
    %8439 = vmatpush1.bf16.msra.mxu0 %v7589
    %8440 = vmatprep.mubr.bf16.mxu0 %v5246
    %8441 = vmatmul.mubr.bf16.gmra.mrb[0].mxu0 %v5245
    %v8442 = vpop.f32.mrb[0].mxu0
    %v8443 = vadd.f32 %v8400, %v8442
    %v8444 = vpop.f32.mrb[0].mxu0
    %v8445 = vadd.f32 %v8402, %v8444
    %v8446 = vpop.f32.mrb[0].mxu0
    %v8447 = vadd.f32 %v8404, %v8446
    %v8448 = vpop.f32.mrb[0].mxu0
    %v8449 = vadd.f32 %v8406, %v8448
    %8450 = vdwg.mxu0
    %8451 = vmatprep.subr.bf16.mxu0 %v7598
    %8452 = vmatpush1.bf16.msra.mxu0 %v7597
    %8453 = vmatprep.subr.bf16.mxu0 %v7606
    %8454 = vmatpush1.bf16.msra.mxu0 %v7605
    %8455 = vmatprep.subr.bf16.mxu0 %v7614
    %8456 = vmatpush1.bf16.msra.mxu0 %v7613
    %8457 = vmatprep.subr.bf16.mxu0 %v7622
    %8458 = vmatpush1.bf16.msra.mxu0 %v7621
    %8459 = vmatprep.subr.bf16.mxu0 %v7630
    %8460 = vmatpush1.bf16.msra.mxu0 %v7629
    %8461 = vmatprep.subr.bf16.mxu0 %v7638
    %8462 = vmatpush1.bf16.msra.mxu0 %v7637
    %8463 = vmatprep.subr.bf16.mxu0 %v7646
    %8464 = vmatpush1.bf16.msra.mxu0 %v7645
    %8465 = vmatprep.subr.bf16.mxu0 %v7654
    %8466 = vmatpush1.bf16.msra.mxu0 %v7653
    %8467 = vmatprep.subr.bf16.mxu0 %v7662
    %8468 = vmatpush1.bf16.msra.mxu0 %v7661
    %8469 = vmatprep.subr.bf16.mxu0 %v7670
    %8470 = vmatpush1.bf16.msra.mxu0 %v7669
    %8471 = vmatprep.subr.bf16.mxu0 %v7678
    %8472 = vmatpush1.bf16.msra.mxu0 %v7677
    %8473 = vmatprep.subr.bf16.mxu0 %v7686
    %8474 = vmatpush1.bf16.msra.mxu0 %v7685
    %8475 = vmatprep.subr.bf16.mxu0 %v7694
    %8476 = vmatpush1.bf16.msra.mxu0 %v7693
    %8477 = vmatprep.subr.bf16.mxu0 %v7702
    %8478 = vmatpush1.bf16.msra.mxu0 %v7701
    %8479 = vmatprep.subr.bf16.mxu0 %v7710
    %8480 = vmatpush1.bf16.msra.mxu0 %v7709
    %8481 = vmatprep.subr.bf16.mxu0 %v7718
    %8482 = vmatpush1.bf16.msra.mxu0 %v7717
    %8483 = vmatprep.mubr.bf16.mxu0 %v5248
    %8484 = vmatmul.mubr.bf16.gmra.mrb[0].mxu0 %v5247
    %v8485 = vpop.f32.mrb[0].mxu0
    %v8486 = vadd.f32 %v8443, %v8485
    %v8487 = vpop.f32.mrb[0].mxu0
    %v8488 = vadd.f32 %v8445, %v8487
    %v8489 = vpop.f32.mrb[0].mxu0
    %v8490 = vadd.f32 %v8447, %v8489
    %v8491 = vpop.f32.mrb[0].mxu0
    %v8492 = vadd.f32 %v8449, %v8491
    %8493 = vdwg.mxu0
    %8494 = vmatprep.subr.bf16.mxu0 %v7726
    %8495 = vmatpush1.bf16.msra.mxu0 %v7725
    %8496 = vmatprep.subr.bf16.mxu0 %v7734
    %8497 = vmatpush1.bf16.msra.mxu0 %v7733
    %8498 = vmatprep.subr.bf16.mxu0 %v7742
    %8499 = vmatpush1.bf16.msra.mxu0 %v7741
    %8500 = vmatprep.subr.bf16.mxu0 %v7750
    %8501 = vmatpush1.bf16.msra.mxu0 %v7749
    %8502 = vmatprep.subr.bf16.mxu0 %v7758
    %8503 = vmatpush1.bf16.msra.mxu0 %v7757
    %8504 = vmatprep.subr.bf16.mxu0 %v7766
    %8505 = vmatpush1.bf16.msra.mxu0 %v7765
    %8506 = vmatprep.subr.bf16.mxu0 %v7774
    %8507 = vmatpush1.bf16.msra.mxu0 %v7773
    %8508 = vmatprep.subr.bf16.mxu0 %v7782
    %8509 = vmatpush1.bf16.msra.mxu0 %v7781
    %8510 = vmatprep.subr.bf16.mxu0 %v7790
    %8511 = vmatpush1.bf16.msra.mxu0 %v7789
    %8512 = vmatprep.subr.bf16.mxu0 %v7798
    %8513 = vmatpush1.bf16.msra.mxu0 %v7797
    %8514 = vmatprep.subr.bf16.mxu0 %v7806
    %8515 = vmatpush1.bf16.msra.mxu0 %v7805
    %8516 = vmatprep.subr.bf16.mxu0 %v7814
    %8517 = vmatpush1.bf16.msra.mxu0 %v7813
    %8518 = vmatprep.subr.bf16.mxu0 %v7822
    %8519 = vmatpush1.bf16.msra.mxu0 %v7821
    %8520 = vmatprep.subr.bf16.mxu0 %v7830
    %8521 = vmatpush1.bf16.msra.mxu0 %v7829
    %8522 = vmatprep.subr.bf16.mxu0 %v7838
    %8523 = vmatpush1.bf16.msra.mxu0 %v7837
    %8524 = vmatprep.subr.bf16.mxu0 %v7846
    %8525 = vmatpush1.bf16.msra.mxu0 %v7845
    %8526 = vmatprep.mubr.bf16.mxu0 %v5250
    %8527 = vmatmul.mubr.bf16.gmra.mrb[0].mxu0 %v5249
    %v8528 = vpop.f32.mrb[0].mxu0
    %v8529 = vadd.f32 %v8486, %v8528
    %v8530 = vpop.f32.mrb[0].mxu0
    %v8531 = vadd.f32 %v8488, %v8530
    %v8532 = vpop.f32.mrb[0].mxu0
    %v8533 = vadd.f32 %v8490, %v8532
    %v8534 = vpop.f32.mrb[0].mxu0
    %v8535 = vadd.f32 %v8492, %v8534
    %8536 = vdwg.mxu0
    %8537 = vmatprep.subr.bf16.mxu0 %v7344
    %8538 = vmatpush1.bf16.msra.mxu0 %v7343
    %8539 = vmatprep.subr.bf16.mxu0 %v7352
    %8540 = vmatpush1.bf16.msra.mxu0 %v7351
    %8541 = vmatprep.subr.bf16.mxu0 %v7360
    %8542 = vmatpush1.bf16.msra.mxu0 %v7359
    %8543 = vmatprep.subr.bf16.mxu0 %v7368
    %8544 = vmatpush1.bf16.msra.mxu0 %v7367
    %8545 = vmatprep.subr.bf16.mxu0 %v7376
    %8546 = vmatpush1.bf16.msra.mxu0 %v7375
    %8547 = vmatprep.subr.bf16.mxu0 %v7384
    %8548 = vmatpush1.bf16.msra.mxu0 %v7383
    %8549 = vmatprep.subr.bf16.mxu0 %v7392
    %8550 = vmatpush1.bf16.msra.mxu0 %v7391
    %8551 = vmatprep.subr.bf16.mxu0 %v7400
    %8552 = vmatpush1.bf16.msra.mxu0 %v7399
    %8553 = vmatprep.subr.bf16.mxu0 %v7408
    %8554 = vmatpush1.bf16.msra.mxu0 %v7407
    %8555 = vmatprep.subr.bf16.mxu0 %v7416
    %8556 = vmatpush1.bf16.msra.mxu0 %v7415
    %8557 = vmatprep.subr.bf16.mxu0 %v7424
    %8558 = vmatpush1.bf16.msra.mxu0 %v7423
    %8559 = vmatprep.subr.bf16.mxu0 %v7432
    %8560 = vmatpush1.bf16.msra.mxu0 %v7431
    %8561 = vmatprep.subr.bf16.mxu0 %v7440
    %8562 = vmatpush1.bf16.msra.mxu0 %v7439
    %8563 = vmatprep.subr.bf16.mxu0 %v7448
    %8564 = vmatpush1.bf16.msra.mxu0 %v7447
    %8565 = vmatprep.subr.bf16.mxu0 %v7456
    %8566 = vmatpush1.bf16.msra.mxu0 %v7455
    %8567 = vmatprep.subr.bf16.mxu0 %v7464
    %8568 = vmatpush1.bf16.msra.mxu0 %v7463
    %8569 = vmatprep.mubr.bf16.mxu0 %v5244
    %8570 = vmatmul.mubr.bf16.gmra.mrb[0].mxu0 %v5243
    %v8571 = vpop.f32.mrb[0].mxu0
    %v8572 = vadd.f32 %v5776, %v8571
    %v8573 = vpop.f32.mrb[0].mxu0
    %v8574 = vadd.f32 %v5780, %v8573
    %v8575 = vpop.f32.mrb[0].mxu0
    %v8576 = vadd.f32 %v5776, %v8575
    %v8577 = vpop.f32.mrb[0].mxu0
    %v8578 = vadd.f32 %v5780, %v8577
    %8579 = vdwg.mxu0
    %8580 = vmatprep.subr.bf16.mxu0 %v7472
    %8581 = vmatpush1.bf16.msra.mxu0 %v7471
    %8582 = vmatprep.subr.bf16.mxu0 %v7480
    %8583 = vmatpush1.bf16.msra.mxu0 %v7479
    %8584 = vmatprep.subr.bf16.mxu0 %v7488
    %8585 = vmatpush1.bf16.msra.mxu0 %v7487
    %8586 = vmatprep.subr.bf16.mxu0 %v7496
    %8587 = vmatpush1.bf16.msra.mxu0 %v7495
    %8588 = vmatprep.subr.bf16.mxu0 %v7504
    %8589 = vmatpush1.bf16.msra.mxu0 %v7503
    %8590 = vmatprep.subr.bf16.mxu0 %v7512
    %8591 = vmatpush1.bf16.msra.mxu0 %v7511
    %8592 = vmatprep.subr.bf16.mxu0 %v7520
    %8593 = vmatpush1.bf16.msra.mxu0 %v7519
    %8594 = vmatprep.subr.bf16.mxu0 %v7528
    %8595 = vmatpush1.bf16.msra.mxu0 %v7527
    %8596 = vmatprep.subr.bf16.mxu0 %v7536
    %8597 = vmatpush1.bf16.msra.mxu0 %v7535
    %8598 = vmatprep.subr.bf16.mxu0 %v7544
    %8599 = vmatpush1.bf16.msra.mxu0 %v7543
    %8600 = vmatprep.subr.bf16.mxu0 %v7552
    %8601 = vmatpush1.bf16.msra.mxu0 %v7551
    %8602 = vmatprep.subr.bf16.mxu0 %v7560
    %8603 = vmatpush1.bf16.msra.mxu0 %v7559
    %8604 = vmatprep.subr.bf16.mxu0 %v7568
    %8605 = vmatpush1.bf16.msra.mxu0 %v7567
    %8606 = vmatprep.subr.bf16.mxu0 %v7576
    %8607 = vmatpush1.bf16.msra.mxu0 %v7575
    %8608 = vmatprep.subr.bf16.mxu0 %v7584
    %8609 = vmatpush1.bf16.msra.mxu0 %v7583
    %8610 = vmatprep.subr.bf16.mxu0 %v7592
    %8611 = vmatpush1.bf16.msra.mxu0 %v7591
    %8612 = vmatprep.mubr.bf16.mxu0 %v5246
    %8613 = vmatmul.mubr.bf16.gmra.mrb[0].mxu0 %v5245
    %v8614 = vpop.f32.mrb[0].mxu0
    %v8615 = vadd.f32 %v8572, %v8614
    %v8616 = vpop.f32.mrb[0].mxu0
    %v8617 = vadd.f32 %v8574, %v8616
    %v8618 = vpop.f32.mrb[0].mxu0
    %v8619 = vadd.f32 %v8576, %v8618
    %v8620 = vpop.f32.mrb[0].mxu0
    %v8621 = vadd.f32 %v8578, %v8620
    %8622 = vdwg.mxu0
    %8623 = vmatprep.subr.bf16.mxu0 %v7600
    %8624 = vmatpush1.bf16.msra.mxu0 %v7599
    %8625 = vmatprep.subr.bf16.mxu0 %v7608
    %8626 = vmatpush1.bf16.msra.mxu0 %v7607
    %8627 = vmatprep.subr.bf16.mxu0 %v7616
    %8628 = vmatpush1.bf16.msra.mxu0 %v7615
    %8629 = vmatprep.subr.bf16.mxu0 %v7624
    %8630 = vmatpush1.bf16.msra.mxu0 %v7623
    %8631 = vmatprep.subr.bf16.mxu0 %v7632
    %8632 = vmatpush1.bf16.msra.mxu0 %v7631
    %8633 = vmatprep.subr.bf16.mxu0 %v7640
    %8634 = vmatpush1.bf16.msra.mxu0 %v7639
    %8635 = vmatprep.subr.bf16.mxu0 %v7648
    %8636 = vmatpush1.bf16.msra.mxu0 %v7647
    %8637 = vmatprep.subr.bf16.mxu0 %v7656
    %8638 = vmatpush1.bf16.msra.mxu0 %v7655
    %8639 = vmatprep.subr.bf16.mxu0 %v7664
    %8640 = vmatpush1.bf16.msra.mxu0 %v7663
    %8641 = vmatprep.subr.bf16.mxu0 %v7672
    %8642 = vmatpush1.bf16.msra.mxu0 %v7671
    %8643 = vmatprep.subr.bf16.mxu0 %v7680
    %8644 = vmatpush1.bf16.msra.mxu0 %v7679
    %8645 = vmatprep.subr.bf16.mxu0 %v7688
    %8646 = vmatpush1.bf16.msra.mxu0 %v7687
    %8647 = vmatprep.subr.bf16.mxu0 %v7696
    %8648 = vmatpush1.bf16.msra.mxu0 %v7695
    %8649 = vmatprep.subr.bf16.mxu0 %v7704
    %8650 = vmatpush1.bf16.msra.mxu0 %v7703
    %8651 = vmatprep.subr.bf16.mxu0 %v7712
    %8652 = vmatpush1.bf16.msra.mxu0 %v7711
    %8653 = vmatprep.subr.bf16.mxu0 %v7720
    %8654 = vmatpush1.bf16.msra.mxu0 %v7719
    %8655 = vmatprep.mubr.bf16.mxu0 %v5248
    %8656 = vmatmul.mubr.bf16.gmra.mrb[0].mxu0 %v5247
    %v8657 = vpop.f32.mrb[0].mxu0
    %v8658 = vadd.f32 %v8615, %v8657
    %v8659 = vpop.f32.mrb[0].mxu0
    %v8660 = vadd.f32 %v8617, %v8659
    %v8661 = vpop.f32.mrb[0].mxu0
    %v8662 = vadd.f32 %v8619, %v8661
    %v8663 = vpop.f32.mrb[0].mxu0
    %v8664 = vadd.f32 %v8621, %v8663
    %8665 = vdwg.mxu0
    %8666 = vmatprep.subr.bf16.mxu0 %v7728
    %8667 = vmatpush1.bf16.msra.mxu0 %v7727
    %8668 = vmatprep.subr.bf16.mxu0 %v7736
    %8669 = vmatpush1.bf16.msra.mxu0 %v7735
    %8670 = vmatprep.subr.bf16.mxu0 %v7744
    %8671 = vmatpush1.bf16.msra.mxu0 %v7743
    %8672 = vmatprep.subr.bf16.mxu0 %v7752
    %8673 = vmatpush1.bf16.msra.mxu0 %v7751
    %8674 = vmatprep.subr.bf16.mxu0 %v7760
    %8675 = vmatpush1.bf16.msra.mxu0 %v7759
    %8676 = vmatprep.subr.bf16.mxu0 %v7768
    %8677 = vmatpush1.bf16.msra.mxu0 %v7767
    %8678 = vmatprep.subr.bf16.mxu0 %v7776
    %8679 = vmatpush1.bf16.msra.mxu0 %v7775
    %8680 = vmatprep.subr.bf16.mxu0 %v7784
    %8681 = vmatpush1.bf16.msra.mxu0 %v7783
    %8682 = vmatprep.subr.bf16.mxu0 %v7792
    %8683 = vmatpush1.bf16.msra.mxu0 %v7791
    %8684 = vmatprep.subr.bf16.mxu0 %v7800
    %8685 = vmatpush1.bf16.msra.mxu0 %v7799
    %8686 = vmatprep.subr.bf16.mxu0 %v7808
    %8687 = vmatpush1.bf16.msra.mxu0 %v7807
    %8688 = vmatprep.subr.bf16.mxu0 %v7816
    %8689 = vmatpush1.bf16.msra.mxu0 %v7815
    %8690 = vmatprep.subr.bf16.mxu0 %v7824
    %8691 = vmatpush1.bf16.msra.mxu0 %v7823
    %8692 = vmatprep.subr.bf16.mxu0 %v7832
    %8693 = vmatpush1.bf16.msra.mxu0 %v7831
    %8694 = vmatprep.subr.bf16.mxu0 %v7840
    %8695 = vmatpush1.bf16.msra.mxu0 %v7839
    %8696 = vmatprep.subr.bf16.mxu0 %v7848
    %8697 = vmatpush1.bf16.msra.mxu0 %v7847
    %8698 = vmatprep.mubr.bf16.mxu0 %v5250
    %8699 = vmatmul.mubr.bf16.gmra.mrb[0].mxu0 %v5249
    %v8700 = vpop.f32.mrb[0].mxu0
    %v8701 = vadd.f32 %v8658, %v8700
    %v8702 = vpop.f32.mrb[0].mxu0
    %v8703 = vadd.f32 %v8660, %v8702
    %v8704 = vpop.f32.mrb[0].mxu0
    %v8705 = vadd.f32 %v8662, %v8704
    %v8706 = vpop.f32.mrb[0].mxu0
    %v8707 = vadd.f32 %v8664, %v8706
    %8708 = vdwg.mxu0
    %8709 = vmatprep.subr.bf16.mxu0 %v7346
    %8710 = vmatpush1.bf16.msra.mxu0 %v7345
    %8711 = vmatprep.subr.bf16.mxu0 %v7354
    %8712 = vmatpush1.bf16.msra.mxu0 %v7353
    %8713 = vmatprep.subr.bf16.mxu0 %v7362
    %8714 = vmatpush1.bf16.msra.mxu0 %v7361
    %8715 = vmatprep.subr.bf16.mxu0 %v7370
    %8716 = vmatpush1.bf16.msra.mxu0 %v7369
    %8717 = vmatprep.subr.bf16.mxu0 %v7378
    %8718 = vmatpush1.bf16.msra.mxu0 %v7377
    %8719 = vmatprep.subr.bf16.mxu0 %v7386
    %8720 = vmatpush1.bf16.msra.mxu0 %v7385
    %8721 = vmatprep.subr.bf16.mxu0 %v7394
    %8722 = vmatpush1.bf16.msra.mxu0 %v7393
    %8723 = vmatprep.subr.bf16.mxu0 %v7402
    %8724 = vmatpush1.bf16.msra.mxu0 %v7401
    %8725 = vmatprep.subr.bf16.mxu0 %v7410
    %8726 = vmatpush1.bf16.msra.mxu0 %v7409
    %8727 = vmatprep.subr.bf16.mxu0 %v7418
    %8728 = vmatpush1.bf16.msra.mxu0 %v7417
    %8729 = vmatprep.subr.bf16.mxu0 %v7426
    %8730 = vmatpush1.bf16.msra.mxu0 %v7425
    %8731 = vmatprep.subr.bf16.mxu0 %v7434
    %8732 = vmatpush1.bf16.msra.mxu0 %v7433
    %8733 = vmatprep.subr.bf16.mxu0 %v7442
    %8734 = vmatpush1.bf16.msra.mxu0 %v7441
    %8735 = vmatprep.subr.bf16.mxu0 %v7450
    %8736 = vmatpush1.bf16.msra.mxu0 %v7449
    %8737 = vmatprep.subr.bf16.mxu0 %v7458
    %8738 = vmatpush1.bf16.msra.mxu0 %v7457
    %8739 = vmatprep.subr.bf16.mxu0 %v7466
    %8740 = vmatpush1.bf16.msra.mxu0 %v7465
    %8741 = vmatprep.mubr.bf16.mxu0 %v5244
    %8742 = vmatmul.mubr.bf16.gmra.mrb[0].mxu0 %v5243
    %v8743 = vpop.f32.mrb[0].mxu0
    %v8744 = vadd.f32 %v5784, %v8743
    %v8745 = vpop.f32.mrb[0].mxu0
    %v8746 = vadd.f32 %v5788, %v8745
    %v8747 = vpop.f32.mrb[0].mxu0
    %v8748 = vadd.f32 %v5784, %v8747
    %v8749 = vpop.f32.mrb[0].mxu0
    %v8750 = vadd.f32 %v5788, %v8749
    %8751 = vdwg.mxu0
    %8752 = vmatprep.subr.bf16.mxu0 %v7474
    %8753 = vmatpush1.bf16.msra.mxu0 %v7473
    %8754 = vmatprep.subr.bf16.mxu0 %v7482
    %8755 = vmatpush1.bf16.msra.mxu0 %v7481
    %8756 = vmatprep.subr.bf16.mxu0 %v7490
    %8757 = vmatpush1.bf16.msra.mxu0 %v7489
    %8758 = vmatprep.subr.bf16.mxu0 %v7498
    %8759 = vmatpush1.bf16.msra.mxu0 %v7497
    %8760 = vmatprep.subr.bf16.mxu0 %v7506
    %8761 = vmatpush1.bf16.msra.mxu0 %v7505
    %8762 = vmatprep.subr.bf16.mxu0 %v7514
    %8763 = vmatpush1.bf16.msra.mxu0 %v7513
    %8764 = vmatprep.subr.bf16.mxu0 %v7522
    %8765 = vmatpush1.bf16.msra.mxu0 %v7521
    %8766 = vmatprep.subr.bf16.mxu0 %v7530
    %8767 = vmatpush1.bf16.msra.mxu0 %v7529
    %8768 = vmatprep.subr.bf16.mxu0 %v7538
    %8769 = vmatpush1.bf16.msra.mxu0 %v7537
    %8770 = vmatprep.subr.bf16.mxu0 %v7546
    %8771 = vmatpush1.bf16.msra.mxu0 %v7545
    %8772 = vmatprep.subr.bf16.mxu0 %v7554
    %8773 = vmatpush1.bf16.msra.mxu0 %v7553
    %8774 = vmatprep.subr.bf16.mxu0 %v7562
    %8775 = vmatpush1.bf16.msra.mxu0 %v7561
    %8776 = vmatprep.subr.bf16.mxu0 %v7570
    %8777 = vmatpush1.bf16.msra.mxu0 %v7569
    %8778 = vmatprep.subr.bf16.mxu0 %v7578
    %8779 = vmatpush1.bf16.msra.mxu0 %v7577
    %8780 = vmatprep.subr.bf16.mxu0 %v7586
    %8781 = vmatpush1.bf16.msra.mxu0 %v7585
    %8782 = vmatprep.subr.bf16.mxu0 %v7594
    %8783 = vmatpush1.bf16.msra.mxu0 %v7593
    %8784 = vmatprep.mubr.bf16.mxu0 %v5246
    %8785 = vmatmul.mubr.bf16.gmra.mrb[0].mxu0 %v5245
    %v8786 = vpop.f32.mrb[0].mxu0
    %v8787 = vadd.f32 %v8744, %v8786
    %v8788 = vpop.f32.mrb[0].mxu0
    %v8789 = vadd.f32 %v8746, %v8788
    %v8790 = vpop.f32.mrb[0].mxu0
    %v8791 = vadd.f32 %v8748, %v8790
    %v8792 = vpop.f32.mrb[0].mxu0
    %v8793 = vadd.f32 %v8750, %v8792
    %8794 = vdwg.mxu0
    %8795 = vmatprep.subr.bf16.mxu0 %v7602
    %8796 = vmatpush1.bf16.msra.mxu0 %v7601
    %8797 = vmatprep.subr.bf16.mxu0 %v7610
    %8798 = vmatpush1.bf16.msra.mxu0 %v7609
    %8799 = vmatprep.subr.bf16.mxu0 %v7618
    %8800 = vmatpush1.bf16.msra.mxu0 %v7617
    %8801 = vmatprep.subr.bf16.mxu0 %v7626
    %8802 = vmatpush1.bf16.msra.mxu0 %v7625
    %8803 = vmatprep.subr.bf16.mxu0 %v7634
    %8804 = vmatpush1.bf16.msra.mxu0 %v7633
    %8805 = vmatprep.subr.bf16.mxu0 %v7642
    %8806 = vmatpush1.bf16.msra.mxu0 %v7641
    %8807 = vmatprep.subr.bf16.mxu0 %v7650
    %8808 = vmatpush1.bf16.msra.mxu0 %v7649
    %8809 = vmatprep.subr.bf16.mxu0 %v7658
    %8810 = vmatpush1.bf16.msra.mxu0 %v7657
    %8811 = vmatprep.subr.bf16.mxu0 %v7666
    %8812 = vmatpush1.bf16.msra.mxu0 %v7665
    %8813 = vmatprep.subr.bf16.mxu0 %v7674
    %8814 = vmatpush1.bf16.msra.mxu0 %v7673
    %8815 = vmatprep.subr.bf16.mxu0 %v7682
    %8816 = vmatpush1.bf16.msra.mxu0 %v7681
    %8817 = vmatprep.subr.bf16.mxu0 %v7690
    %8818 = vmatpush1.bf16.msra.mxu0 %v7689
    %8819 = vmatprep.subr.bf16.mxu0 %v7698
    %8820 = vmatpush1.bf16.msra.mxu0 %v7697
    %8821 = vmatprep.subr.bf16.mxu0 %v7706
    %8822 = vmatpush1.bf16.msra.mxu0 %v7705
    %8823 = vmatprep.subr.bf16.mxu0 %v7714
    %8824 = vmatpush1.bf16.msra.mxu0 %v7713
    %8825 = vmatprep.subr.bf16.mxu0 %v7722
    %8826 = vmatpush1.bf16.msra.mxu0 %v7721
    %8827 = vmatprep.mubr.bf16.mxu0 %v5248
    %8828 = vmatmul.mubr.bf16.gmra.mrb[0].mxu0 %v5247
    %v8829 = vpop.f32.mrb[0].mxu0
    %v8830 = vadd.f32 %v8787, %v8829
    %v8831 = vpop.f32.mrb[0].mxu0
    %v8832 = vadd.f32 %v8789, %v8831
    %v8833 = vpop.f32.mrb[0].mxu0
    %v8834 = vadd.f32 %v8791, %v8833
    %v8835 = vpop.f32.mrb[0].mxu0
    %v8836 = vadd.f32 %v8793, %v8835
    %8837 = vdwg.mxu0
    %8838 = vmatprep.subr.bf16.mxu0 %v7730
    %8839 = vmatpush1.bf16.msra.mxu0 %v7729
    %8840 = vmatprep.subr.bf16.mxu0 %v7738
    %8841 = vmatpush1.bf16.msra.mxu0 %v7737
    %8842 = vmatprep.subr.bf16.mxu0 %v7746
    %8843 = vmatpush1.bf16.msra.mxu0 %v7745
    %8844 = vmatprep.subr.bf16.mxu0 %v7754
    %8845 = vmatpush1.bf16.msra.mxu0 %v7753
    %8846 = vmatprep.subr.bf16.mxu0 %v7762
    %8847 = vmatpush1.bf16.msra.mxu0 %v7761
    %8848 = vmatprep.subr.bf16.mxu0 %v7770
    %8849 = vmatpush1.bf16.msra.mxu0 %v7769
    %8850 = vmatprep.subr.bf16.mxu0 %v7778
    %8851 = vmatpush1.bf16.msra.mxu0 %v7777
    %8852 = vmatprep.subr.bf16.mxu0 %v7786
    %8853 = vmatpush1.bf16.msra.mxu0 %v7785
    %8854 = vmatprep.subr.bf16.mxu0 %v7794
    %8855 = vmatpush1.bf16.msra.mxu0 %v7793
    %8856 = vmatprep.subr.bf16.mxu0 %v7802
    %8857 = vmatpush1.bf16.msra.mxu0 %v7801
    %8858 = vmatprep.subr.bf16.mxu0 %v7810
    %8859 = vmatpush1.bf16.msra.mxu0 %v7809
    %8860 = vmatprep.subr.bf16.mxu0 %v7818
    %8861 = vmatpush1.bf16.msra.mxu0 %v7817
    %8862 = vmatprep.subr.bf16.mxu0 %v7826
    %8863 = vmatpush1.bf16.msra.mxu0 %v7825
    %8864 = vmatprep.subr.bf16.mxu0 %v7834
    %8865 = vmatpush1.bf16.msra.mxu0 %v7833
    %8866 = vmatprep.subr.bf16.mxu0 %v7842
    %8867 = vmatpush1.bf16.msra.mxu0 %v7841
    %8868 = vmatprep.subr.bf16.mxu0 %v7850
    %8869 = vmatpush1.bf16.msra.mxu0 %v7849
    %8870 = vmatprep.mubr.bf16.mxu0 %v5250
    %8871 = vmatmul.mubr.bf16.gmra.mrb[0].mxu0 %v5249
    %v8872 = vpop.f32.mrb[0].mxu0
    %v8873 = vadd.f32 %v8830, %v8872
    %v8874 = vpop.f32.mrb[0].mxu0
    %v8875 = vadd.f32 %v8832, %v8874
    %v8876 = vpop.f32.mrb[0].mxu0
    %v8877 = vadd.f32 %v8834, %v8876
    %v8878 = vpop.f32.mrb[0].mxu0
    %v8879 = vadd.f32 %v8836, %v8878
    %8880 = vdwg.mxu0
    %8881 = vmatprep.subr.bf16.mxu0 %v7348
    %8882 = vmatpush1.bf16.msra.mxu0 %v7347
    %8883 = vmatprep.subr.bf16.mxu0 %v7356
    %8884 = vmatpush1.bf16.msra.mxu0 %v7355
    %8885 = vmatprep.subr.bf16.mxu0 %v7364
    %8886 = vmatpush1.bf16.msra.mxu0 %v7363
    %8887 = vmatprep.subr.bf16.mxu0 %v7372
    %8888 = vmatpush1.bf16.msra.mxu0 %v7371
    %8889 = vmatprep.subr.bf16.mxu0 %v7380
    %8890 = vmatpush1.bf16.msra.mxu0 %v7379
    %8891 = vmatprep.subr.bf16.mxu0 %v7388
    %8892 = vmatpush1.bf16.msra.mxu0 %v7387
    %8893 = vmatprep.subr.bf16.mxu0 %v7396
    %8894 = vmatpush1.bf16.msra.mxu0 %v7395
    %8895 = vmatprep.subr.bf16.mxu0 %v7404
    %8896 = vmatpush1.bf16.msra.mxu0 %v7403
    %8897 = vmatprep.subr.bf16.mxu0 %v7412
    %8898 = vmatpush1.bf16.msra.mxu0 %v7411
    %8899 = vmatprep.subr.bf16.mxu0 %v7420
    %8900 = vmatpush1.bf16.msra.mxu0 %v7419
    %8901 = vmatprep.subr.bf16.mxu0 %v7428
    %8902 = vmatpush1.bf16.msra.mxu0 %v7427
    %8903 = vmatprep.subr.bf16.mxu0 %v7436
    %8904 = vmatpush1.bf16.msra.mxu0 %v7435
    %8905 = vmatprep.subr.bf16.mxu0 %v7444
    %8906 = vmatpush1.bf16.msra.mxu0 %v7443
    %8907 = vmatprep.subr.bf16.mxu0 %v7452
    %8908 = vmatpush1.bf16.msra.mxu0 %v7451
    %8909 = vmatprep.subr.bf16.mxu0 %v7460
    %8910 = vmatpush1.bf16.msra.mxu0 %v7459
    %8911 = vmatprep.subr.bf16.mxu0 %v7468
    %8912 = vmatpush1.bf16.msra.mxu0 %v7467
    %8913 = vmatprep.mubr.bf16.mxu0 %v5244
    %8914 = vmatmul.mubr.bf16.gmra.mrb[0].mxu0 %v5243
    %v8915 = vpop.f32.mrb[0].mxu0
    %v8916 = vadd.f32 %v5792, %v8915
    %v8917 = vpop.f32.mrb[0].mxu0
    %v8918 = vadd.f32 %v5796, %v8917
    %v8919 = vpop.f32.mrb[0].mxu0
    %v8920 = vadd.f32 %v5792, %v8919
    %v8921 = vpop.f32.mrb[0].mxu0
    %v8922 = vadd.f32 %v5796, %v8921
    %8923 = vdwg.mxu0
    %8924 = vmatprep.subr.bf16.mxu0 %v7476
    %8925 = vmatpush1.bf16.msra.mxu0 %v7475
    %8926 = vmatprep.subr.bf16.mxu0 %v7484
    %8927 = vmatpush1.bf16.msra.mxu0 %v7483
    %8928 = vmatprep.subr.bf16.mxu0 %v7492
    %8929 = vmatpush1.bf16.msra.mxu0 %v7491
    %8930 = vmatprep.subr.bf16.mxu0 %v7500
    %8931 = vmatpush1.bf16.msra.mxu0 %v7499
    %8932 = vmatprep.subr.bf16.mxu0 %v7508
    %8933 = vmatpush1.bf16.msra.mxu0 %v7507
    %8934 = vmatprep.subr.bf16.mxu0 %v7516
    %8935 = vmatpush1.bf16.msra.mxu0 %v7515
    %8936 = vmatprep.subr.bf16.mxu0 %v7524
    %8937 = vmatpush1.bf16.msra.mxu0 %v7523
    %8938 = vmatprep.subr.bf16.mxu0 %v7532
    %8939 = vmatpush1.bf16.msra.mxu0 %v7531
    %8940 = vmatprep.subr.bf16.mxu0 %v7540
    %8941 = vmatpush1.bf16.msra.mxu0 %v7539
    %8942 = vmatprep.subr.bf16.mxu0 %v7548
    %8943 = vmatpush1.bf16.msra.mxu0 %v7547
    %8944 = vmatprep.subr.bf16.mxu0 %v7556
    %8945 = vmatpush1.bf16.msra.mxu0 %v7555
    %8946 = vmatprep.subr.bf16.mxu0 %v7564
    %8947 = vmatpush1.bf16.msra.mxu0 %v7563
    %8948 = vmatprep.subr.bf16.mxu0 %v7572
    %8949 = vmatpush1.bf16.msra.mxu0 %v7571
    %8950 = vmatprep.subr.bf16.mxu0 %v7580
    %8951 = vmatpush1.bf16.msra.mxu0 %v7579
    %8952 = vmatprep.subr.bf16.mxu0 %v7588
    %8953 = vmatpush1.bf16.msra.mxu0 %v7587
    %8954 = vmatprep.subr.bf16.mxu0 %v7596
    %8955 = vmatpush1.bf16.msra.mxu0 %v7595
    %8956 = vmatprep.mubr.bf16.mxu0 %v5246
    %8957 = vmatmul.mubr.bf16.gmra.mrb[0].mxu0 %v5245
    %v8958 = vpop.f32.mrb[0].mxu0
    %v8959 = vadd.f32 %v8916, %v8958
    %v8960 = vpop.f32.mrb[0].mxu0
    %v8961 = vadd.f32 %v8918, %v8960
    %v8962 = vpop.f32.mrb[0].mxu0
    %v8963 = vadd.f32 %v8920, %v8962
    %v8964 = vpop.f32.mrb[0].mxu0
    %v8965 = vadd.f32 %v8922, %v8964
    %8966 = vdwg.mxu0
    %8967 = vmatprep.subr.bf16.mxu0 %v7604
    %8968 = vmatpush1.bf16.msra.mxu0 %v7603
    %8969 = vmatprep.subr.bf16.mxu0 %v7612
    %8970 = vmatpush1.bf16.msra.mxu0 %v7611
    %8971 = vmatprep.subr.bf16.mxu0 %v7620
    %8972 = vmatpush1.bf16.msra.mxu0 %v7619
    %8973 = vmatprep.subr.bf16.mxu0 %v7628
    %8974 = vmatpush1.bf16.msra.mxu0 %v7627
    %8975 = vmatprep.subr.bf16.mxu0 %v7636
    %8976 = vmatpush1.bf16.msra.mxu0 %v7635
    %8977 = vmatprep.subr.bf16.mxu0 %v7644
    %8978 = vmatpush1.bf16.msra.mxu0 %v7643
    %8979 = vmatprep.subr.bf16.mxu0 %v7652
    %8980 = vmatpush1.bf16.msra.mxu0 %v7651
    %8981 = vmatprep.subr.bf16.mxu0 %v7660
    %8982 = vmatpush1.bf16.msra.mxu0 %v7659
    %8983 = vmatprep.subr.bf16.mxu0 %v7668
    %8984 = vmatpush1.bf16.msra.mxu0 %v7667
    %8985 = vmatprep.subr.bf16.mxu0 %v7676
    %8986 = vmatpush1.bf16.msra.mxu0 %v7675
    %8987 = vmatprep.subr.bf16.mxu0 %v7684
    %8988 = vmatpush1.bf16.msra.mxu0 %v7683
    %8989 = vmatprep.subr.bf16.mxu0 %v7692
    %8990 = vmatpush1.bf16.msra.mxu0 %v7691
    %8991 = vmatprep.subr.bf16.mxu0 %v7700
    %8992 = vmatpush1.bf16.msra.mxu0 %v7699
    %8993 = vmatprep.subr.bf16.mxu0 %v7708
    %8994 = vmatpush1.bf16.msra.mxu0 %v7707
    %8995 = vmatprep.subr.bf16.mxu0 %v7716
    %8996 = vmatpush1.bf16.msra.mxu0 %v7715
    %8997 = vmatprep.subr.bf16.mxu0 %v7724
    %8998 = vmatpush1.bf16.msra.mxu0 %v7723
    %8999 = vmatprep.mubr.bf16.mxu0 %v5248
    %9000 = vmatmul.mubr.bf16.gmra.mrb[0].mxu0 %v5247
    %v9001 = vpop.f32.mrb[0].mxu0
    %v9002 = vadd.f32 %v8959, %v9001
    %v9003 = vpop.f32.mrb[0].mxu0
    %v9004 = vadd.f32 %v8961, %v9003
    %v9005 = vpop.f32.mrb[0].mxu0
    %v9006 = vadd.f32 %v8963, %v9005
    %v9007 = vpop.f32.mrb[0].mxu0
    %v9008 = vadd.f32 %v8965, %v9007
    %9009 = vdwg.mxu0
    %9010 = vmatprep.subr.bf16.mxu0 %v7732
    %9011 = vmatpush1.bf16.msra.mxu0 %v7731
    %9012 = vmatprep.subr.bf16.mxu0 %v7740
    %9013 = vmatpush1.bf16.msra.mxu0 %v7739
    %9014 = vmatprep.subr.bf16.mxu0 %v7748
    %9015 = vmatpush1.bf16.msra.mxu0 %v7747
    %9016 = vmatprep.subr.bf16.mxu0 %v7756
    %9017 = vmatpush1.bf16.msra.mxu0 %v7755
    %9018 = vmatprep.subr.bf16.mxu0 %v7764
    %9019 = vmatpush1.bf16.msra.mxu0 %v7763
    %9020 = vmatprep.subr.bf16.mxu0 %v7772
    %9021 = vmatpush1.bf16.msra.mxu0 %v7771
    %9022 = vmatprep.subr.bf16.mxu0 %v7780
    %9023 = vmatpush1.bf16.msra.mxu0 %v7779
    %9024 = vmatprep.subr.bf16.mxu0 %v7788
    %9025 = vmatpush1.bf16.msra.mxu0 %v7787
    %9026 = vmatprep.subr.bf16.mxu0 %v7796
    %9027 = vmatpush1.bf16.msra.mxu0 %v7795
    %9028 = vmatprep.subr.bf16.mxu0 %v7804
    %9029 = vmatpush1.bf16.msra.mxu0 %v7803
    %9030 = vmatprep.subr.bf16.mxu0 %v7812
    %9031 = vmatpush1.bf16.msra.mxu0 %v7811
    %9032 = vmatprep.subr.bf16.mxu0 %v7820
    %9033 = vmatpush1.bf16.msra.mxu0 %v7819
    %9034 = vmatprep.subr.bf16.mxu0 %v7828
    %9035 = vmatpush1.bf16.msra.mxu0 %v7827
    %9036 = vmatprep.subr.bf16.mxu0 %v7836
    %9037 = vmatpush1.bf16.msra.mxu0 %v7835
    %9038 = vmatprep.subr.bf16.mxu0 %v7844
    %9039 = vmatpush1.bf16.msra.mxu0 %v7843
    %9040 = vmatprep.subr.bf16.mxu0 %v7852
    %9041 = vmatpush1.bf16.msra.mxu0 %v7851
    %9042 = vmatprep.mubr.bf16.mxu0 %v5250
    %9043 = vmatmul.mubr.bf16.gmra.mrb[0].mxu0 %v5249
    %v9044 = vpop.f32.mrb[0].mxu0
    %v9045 = vadd.f32 %v9002, %v9044
    %v9046 = vpop.f32.mrb[0].mxu0
    %v9047 = vadd.f32 %v9004, %v9046
    %v9048 = vpop.f32.mrb[0].mxu0
    %v9049 = vadd.f32 %v9006, %v9048
    %v9050 = vpop.f32.mrb[0].mxu0
    %v9051 = vadd.f32 %v9008, %v9050
    %9052 = vdwg.mxu0
    %v9053 = vmul.f32 %v8529, 0.01
    %v9054 = vmul.f32 %v8531, 0.01
    %v9055 = vmul.f32 %v8701, 0.01
    %v9056 = vmul.f32 %v8703, 0.01
    %v9057 = vmul.f32 %v8873, 0.01
    %v9058 = vmul.f32 %v8875, 0.01
    %v9059 = vmul.f32 %v9045, 0.01
    %v9060 = vmul.f32 %v9047, 0.01
    %v9061 = vmul.f32 %v8533, 0.01
    %v9062 = vmul.f32 %v8535, 0.01
    %v9063 = vmul.f32 %v8705, 0.01
    %v9064 = vmul.f32 %v8707, 0.01
    %v9065 = vmul.f32 %v8877, 0.01
    %v9066 = vmul.f32 %v8879, 0.01
    %v9067 = vmul.f32 %v9049, 0.01
    %v9068 = vmul.f32 %v9051, 0.01
    %v9069 = vmax.f32 %v8529, %v9053
    %v9070 = vmax.f32 %v8531, %v9054
    %v9071 = vmax.f32 %v8701, %v9055
    %v9072 = vmax.f32 %v8703, %v9056
    %v9073 = vmax.f32 %v8873, %v9057
    %v9074 = vmax.f32 %v8875, %v9058
    %v9075 = vmax.f32 %v9045, %v9059
    %v9076 = vmax.f32 %v9047, %v9060
    %v9077 = vmax.f32 %v8533, %v9061
    %v9078 = vmax.f32 %v8535, %v9062
    %v9079 = vmax.f32 %v8705, %v9063
    %v9080 = vmax.f32 %v8707, %v9064
    %v9081 = vmax.f32 %v8877, %v9065
    %v9082 = vmax.f32 %v8879, %v9066
    %v9083 = vmax.f32 %v9049, %v9067
    %v9084 = vmax.f32 %v9051, %v9068
    %v9085 = vmax.f32 %v9069, %v9073
    %v9086 = vmax.f32 %v9070, %v9074
    %v9087 = vmax.f32 %v9071, %v9075
    %v9088 = vmax.f32 %v9072, %v9076
    %v9089 = vmax.f32 %v9077, %v9081
    %v9090 = vmax.f32 %v9078, %v9082
    %v9091 = vmax.f32 %v9079, %v9083
    %v9092 = vmax.f32 %v9080, %v9084
    %9093 = vst [vmem:[#allocation14] sm:$0xff] %v9085
    %9094 = vst [vmem:[#allocation14 + $0x8] sm:$0xff] %v9086
    %9095 = vst [vmem:[#allocation14 + $0x10] sm:$0xff] %v9087
    %9096 = vst [vmem:[#allocation14 + $0x18] sm:$0xff] %v9088
    %9097 = vst [vmem:[#allocation14 + $0x20] sm:$0xff] %v9089
    %9098 = vst [vmem:[#allocation14 + $0x28] sm:$0xff] %v9090
    %9099 = vst [vmem:[#allocation14 + $0x30] sm:$0xff] %v9091
    %9100 = vst [vmem:[#allocation14 + $0x38] sm:$0xff] %v9092
    // Predicated region
    $region58: #{tpu_custom_call.1} parent=1 // pred_check
      _
    $region59: #{tpu_custom_call.1} parent=1 // pred_check_branch
      %9102 = sbr.rel (0) target = $region61
    $region60: #{tpu_custom_call.1} parent=1 // pred_region
      %s9104 = ssub.s32 1024, 1024
      %9105 = vsyncadd [#allocation4], %s9104
      %s9106 = sshll.u32 [#allocation14], 4
      %s9107 = int_to_ptr.vmem [resolvable:$true] %s9106
      %9112 = dma.vmem_to_hbm [thread:$0]  %s9107, 1024, %s7, [#allocation4], 512, 512, 32
    $region61: #{tpu_custom_call.1} parent=1 // pred_fallthru
      _
    // Predicated region
    $region62: #{tpu_custom_call.1} parent=1 // pred_check
      _
    $region63: #{tpu_custom_call.1} parent=1 // pred_check_branch
      %9114 = sbr.rel (0) target = $region65
    $region64: #{tpu_custom_call.1} parent=1 // pred_region
      %9115 = dma.done [#allocation4], 1024
    $region65: #{tpu_custom_call.1} parent=1 // pred_fallthru
      _
    %9116 = vsyncpa [#allocation3], 1
    %9117 = vsyncpa [#allocation6], 1
    %9118 = vsyncpa [#allocation9], 1
    %9119 = vsyncpa [#allocation12], 1
    %9120 = vsyncpa [#allocation4], 1

</llo_original>
